<compile_context>
chip_gen: v7x
topology: tpu7x:2x2x1
jax: 0.10.0
libtpu: 0.0.40
codegen_flags: <defaults>
</compile_context>

<pallas_src>
import jax
import jax.numpy as jnp
from jax.experimental import pallas as pl
from jax.experimental.pallas import tpu as pltpu


# ---------------------------------------------------------------------------
# Fused kernel (one sample per grid step)
# ---------------------------------------------------------------------------
def _conv_relu_pool(x, w_ref, b_ref, pool):
    """x: (Cin, L); w_ref: (k, Cout, Cin) tap-major; b_ref: (Cout, 1).

    relu(Conv1d(x, w, b)) followed by MaxPool1d(pool) (floor mode).
    Returns (Cout, (L - k + 1) // pool); the length axis stays on lanes.
    """
    k = w_ref.shape[0]
    L = x.shape[1]
    lout = L - k + 1

    # Conv1d (stride 1, no padding) as a tap-sum of MXU matmuls; the im2col
    # "patches" are just in-kernel stride-1 lane slices of x.
    acc = jnp.dot(w_ref[0], x[:, 0:lout], preferred_element_type=jnp.float32)
    for j in range(1, k):
        acc = acc + jnp.dot(w_ref[j], x[:, j:j + lout],
                            preferred_element_type=jnp.float32)
    y = jnp.maximum(acc + b_ref[...], 0.0)

    # MaxPool1d(pool): stride-1 windowed max over `pool` shifted slices ...
    lm = lout - pool + 1
    m = y[:, 0:lm]
    for i in range(1, pool):
        m = jnp.maximum(m, y[:, i:i + lm])

    # ... then keep every pool-th window with an exact 0/1 selection matmul
    # (products are exact *1.0 / *0.0, so the pooled values are bit-exact).
    lp = lout // pool
    rows = jax.lax.broadcasted_iota(jnp.int32, (lm, lp), 0)
    cols = jax.lax.broadcasted_iota(jnp.int32, (lm, lp), 1)
    sel = (rows == cols * pool).astype(jnp.float32)
    return jnp.dot(m, sel, preferred_element_type=jnp.float32)


def _classifier9_kernel(x_ref, w1_ref, b1_ref, w2_ref, b2_ref, w3_ref, b3_ref,
                        w6_ref, b6_ref, w7_ref, b7_ref, out_ref):
    # TODO(synk): Dropout(0.1) layers are identity here (eval semantics); the
    # training-time stochastic dropout is not reproduced.
    x = x_ref[0]                                        # (3, 1024)
    a1 = _conv_relu_pool(x, w1_ref, b1_ref, pool=4)     # (20, 253)
    a2 = _conv_relu_pool(a1, w2_ref, b2_ref, pool=4)    # (40, 62)
    a3 = _conv_relu_pool(a2, w3_ref, b3_ref, pool=8)    # (80, 7)

    # fc1: torch flatten(1) ordering (f = c*7 + p) is baked into the
    # (7, 224, 80) weight slabs prepared once outside the kernel.
    h = b6_ref[...]                                     # (224, 1)
    for p in range(a3.shape[1]):                        # 7 positions
        h = h + jnp.dot(w6_ref[p], a3[:, p:p + 1],
                        preferred_element_type=jnp.float32)
    h = jnp.maximum(h, 0.0)

    # fc2 + softmax over the 10 classes (exact division for torch parity).
    logits = jnp.dot(w7_ref[...], h, preferred_element_type=jnp.float32)
    logits = logits + b7_ref[...]                       # (10, 1)
    mx = jnp.max(logits, axis=0, keepdims=True)
    e = jnp.exp(logits - mx)
    s = jnp.sum(e, axis=0, keepdims=True)
    out_ref[0] = e / s                                  # (10, 1)


def _full_spec(shape):
    zeros = (0,) * len(shape)
    return pl.BlockSpec(shape, lambda b, _z=zeros: _z)


def classifier9_forward(prepped, data):
    """data: (B, 3, 1024) float32 -> (B, 10) softmax probabilities."""
    B, cin, L = data.shape
    order = ("w1", "b1", "w2", "b2", "w3", "b3", "w6", "b6", "w7", "b7")
    weight_specs = [_full_spec(prepped[name].shape) for name in order]
    out = pl.pallas_call(
        _classifier9_kernel,
        out_shape=jax.ShapeDtypeStruct((B, 10, 1), jnp.float32),
        grid=(B,),
        in_specs=[pl.BlockSpec((1, cin, L), lambda b: (b, 0, 0))] + weight_specs,
        out_specs=pl.BlockSpec((1, 10, 1), lambda b: (b, 0, 0)),
        compiler_params=pltpu.CompilerParams(
            dimension_semantics=("parallel",)),
    )(data, *(prepped[name] for name in order))
    return out[:, :, 0]


# ---------------------------------------------------------------------------
# Parameters
# ---------------------------------------------------------------------------
def init_params(key):
    """PyTorch-native parameter shapes, uniform(-1/sqrt(fan_in), +1/sqrt(fan_in))."""
    def uni(k, shape, fan_in):
        bound = 1.0 / jnp.sqrt(jnp.float32(fan_in))
        return jax.random.uniform(k, shape, jnp.float32, -bound, bound)

    ks = jax.random.split(key, 10)
    return {
        "l1_w": uni(ks[0], (20, 3, 10), 3 * 10),
        "l1_b": uni(ks[1], (20,), 3 * 10),
        "l2_w": uni(ks[2], (40, 20, 5), 20 * 5),
        "l2_b": uni(ks[3], (40,), 20 * 5),
        "l3_w": uni(ks[4], (80, 40, 5), 40 * 5),
        "l3_b": uni(ks[5], (80,), 40 * 5),
        "l6_w": uni(ks[6], (224, 560), 560),
        "l6_b": uni(ks[7], (224,), 560),
        "l7_w": uni(ks[8], (10, 224), 224),
        "l7_b": uni(ks[9], (10,), 224),
    }


def prepare_params(p):
    """One-time relayout of PyTorch-native weights into the kernel's layouts."""
    return {
        "w1": jnp.transpose(p["l1_w"], (2, 0, 1)),                      # (10, 20, 3)
        "b1": p["l1_b"].reshape(20, 1),
        "w2": jnp.transpose(p["l2_w"], (2, 0, 1)),                      # (5, 40, 20)
        "b2": p["l2_b"].reshape(40, 1),
        "w3": jnp.transpose(p["l3_w"], (2, 0, 1)),                      # (5, 80, 40)
        "b3": p["l3_b"].reshape(80, 1),
        "w6": jnp.transpose(p["l6_w"].reshape(224, 80, 7), (2, 0, 1)),  # (7, 224, 80)
        "b6": p["l6_b"].reshape(224, 1),
        "w7": p["l7_w"],                                                # (10, 224)
        "b7": p["l7_b"].reshape(10, 1),
    }


# ---------------------------------------------------------------------------
# Pure-JAX reference (PyTorch semantics) for validation
# ---------------------------------------------------------------------------
def classifier9_reference(params, data):
    def conv_relu_pool(x, w, b, pool):
        y = jax.lax.conv_general_dilated(
            x, w, window_strides=(1,), padding="VALID",
            dimension_numbers=("NCH", "OIH", "NCH"))
        y = jnp.maximum(y + b[None, :, None], 0.0)
        lp = y.shape[-1] // pool
        y = y[..., : lp * pool].reshape(y.shape[0], y.shape[1], lp, pool)
        return jnp.max(y, axis=-1)

    x = conv_relu_pool(data, params["l1_w"], params["l1_b"], 4)
    x = conv_relu_pool(x, params["l2_w"], params["l2_b"], 4)
    x = conv_relu_pool(x, params["l3_w"], params["l3_b"], 8)
    x = x.reshape(x.shape[0], -1)                       # (B, 560), torch flatten(1)
    x = jnp.maximum(x @ params["l6_w"].T + params["l6_b"], 0.0)
    logits = x @ params["l7_w"].T + params["l7_b"]
    return jax.nn.softmax(logits, axis=1)


if __name__ == "__main__":
    key = jax.random.PRNGKey(0)
    pkey, xkey = jax.random.split(key)
    params = init_params(pkey)
    prepped = prepare_params(params)
    # L = 1024 => after the conv/pool stack the flattened feature size is
    # 80 * 7 = 560, matching nn.Linear(560, 224) in the original module.
    x = jax.random.normal(xkey, (2, 3, 1024), jnp.float32)

    out = jax.block_until_ready(jax.jit(classifier9_forward)(prepped, x))

    assert out.shape == (2, 10), out.shape
    assert bool(jnp.all(jnp.isfinite(out)))
    assert bool(jnp.allclose(jnp.sum(out, axis=1), 1.0, atol=1e-5))
    ref = classifier9_reference(params, x)
    assert bool(jnp.allclose(out, ref, atol=1e-3, rtol=1e-3))
    print("KERNEL_OK")
</pallas_src>

<mosaic_0001>
module attributes {stable_mosaic.version = 11 : i64} {
  func.func @_classifier9_kernel(%arg0: i32, %arg1: memref<1x3x1024xf32, #tpu.memory_space<vmem>>, %arg2: memref<10x20x3xf32, #tpu.memory_space<vmem>>, %arg3: memref<20x1xf32, #tpu.memory_space<vmem>>, %arg4: memref<5x40x20xf32, #tpu.memory_space<vmem>>, %arg5: memref<40x1xf32, #tpu.memory_space<vmem>>, %arg6: memref<5x80x40xf32, #tpu.memory_space<vmem>>, %arg7: memref<80x1xf32, #tpu.memory_space<vmem>>, %arg8: memref<7x224x80xf32, #tpu.memory_space<vmem>>, %arg9: memref<224x1xf32, #tpu.memory_space<vmem>>, %arg10: memref<10x224xf32, #tpu.memory_space<vmem>>, %arg11: memref<10x1xf32, #tpu.memory_space<vmem>>, %arg12: memref<1x10x1xf32, #tpu.memory_space<vmem>>) attributes {dimension_semantics = [#tpu.dimension_semantics<parallel>], iteration_bounds = array<i64: 2>, scalar_prefetch = 0 : i64, scratch_operands = 0 : i64, tpu.core_type = #tpu.core_type<tc>, window_params = [{transform_indices = @transform_0, window_bounds = array<i64: 1, 3, 1024>}, {pipeline_mode = #tpu.pipeline_mode<synchronous>, transform_indices = @transform_1, window_bounds = array<i64: 10, 20, 3>}, {pipeline_mode = #tpu.pipeline_mode<synchronous>, transform_indices = @transform_2, window_bounds = array<i64: 20, 1>}, {pipeline_mode = #tpu.pipeline_mode<synchronous>, transform_indices = @transform_3, window_bounds = array<i64: 5, 40, 20>}, {pipeline_mode = #tpu.pipeline_mode<synchronous>, transform_indices = @transform_4, window_bounds = array<i64: 40, 1>}, {pipeline_mode = #tpu.pipeline_mode<synchronous>, transform_indices = @transform_5, window_bounds = array<i64: 5, 80, 40>}, {pipeline_mode = #tpu.pipeline_mode<synchronous>, transform_indices = @transform_6, window_bounds = array<i64: 80, 1>}, {pipeline_mode = #tpu.pipeline_mode<synchronous>, transform_indices = @transform_7, window_bounds = array<i64: 7, 224, 80>}, {pipeline_mode = #tpu.pipeline_mode<synchronous>, transform_indices = @transform_8, window_bounds = array<i64: 224, 1>}, {pipeline_mode = #tpu.pipeline_mode<synchronous>, transform_indices = @transform_9, window_bounds = array<i64: 10, 224>}, {pipeline_mode = #tpu.pipeline_mode<synchronous>, transform_indices = @transform_10, window_bounds = array<i64: 10, 1>}, {transform_indices = @transform_11, window_bounds = array<i64: 1, 10, 1>}]} {
    %c0 = arith.constant 0 : index
    %c0_0 = arith.constant 0 : index
    %c0_1 = arith.constant 0 : index
    %0 = vector.load %arg1[%c0, %c0_0, %c0_1] : memref<1x3x1024xf32, #tpu.memory_space<vmem>>, vector<1x3x1024xf32>
    %1 = vector.shape_cast %0 : vector<1x3x1024xf32> to vector<3x1024xf32>
    %c0_2 = arith.constant 0 : index
    %c0_3 = arith.constant 0 : index
    %c0_4 = arith.constant 0 : index
    %2 = vector.load %arg2[%c0_2, %c0_3, %c0_4] : memref<10x20x3xf32, #tpu.memory_space<vmem>>, vector<1x20x3xf32>
    %3 = vector.shape_cast %2 : vector<1x20x3xf32> to vector<20x3xf32>
    %4 = vector.extract_strided_slice %1 {offsets = [0, 0], sizes = [3, 1015], strides = [1, 1]} : vector<3x1024xf32> to vector<3x1015xf32>
    %cst = arith.constant dense<0.000000e+00> : vector<20x1015xf32>
    %5 = tpu.matmul %3, %4, %cst {dimension_numbers = #tpu.dot_dimension_numbers<[1], [0], [0], [1], [0, 0, 1, 1], [], []>} : vector<20x3xf32>, vector<3x1015xf32>, vector<20x1015xf32> -> vector<20x1015xf32>
    %c1 = arith.constant 1 : index
    %c0_5 = arith.constant 0 : index
    %c0_6 = arith.constant 0 : index
    %6 = vector.load %arg2[%c1, %c0_5, %c0_6] : memref<10x20x3xf32, #tpu.memory_space<vmem>>, vector<1x20x3xf32>
    %7 = vector.shape_cast %6 : vector<1x20x3xf32> to vector<20x3xf32>
    %8 = vector.extract_strided_slice %1 {offsets = [0, 1], sizes = [3, 1015], strides = [1, 1]} : vector<3x1024xf32> to vector<3x1015xf32>
    %cst_7 = arith.constant dense<0.000000e+00> : vector<20x1015xf32>
    %9 = tpu.matmul %7, %8, %cst_7 {dimension_numbers = #tpu.dot_dimension_numbers<[1], [0], [0], [1], [0, 0, 1, 1], [], []>} : vector<20x3xf32>, vector<3x1015xf32>, vector<20x1015xf32> -> vector<20x1015xf32>
    %10 = arith.addf %5, %9 : vector<20x1015xf32>
    %c2 = arith.constant 2 : index
    %c0_8 = arith.constant 0 : index
    %c0_9 = arith.constant 0 : index
    %11 = vector.load %arg2[%c2, %c0_8, %c0_9] : memref<10x20x3xf32, #tpu.memory_space<vmem>>, vector<1x20x3xf32>
    %12 = vector.shape_cast %11 : vector<1x20x3xf32> to vector<20x3xf32>
    %13 = vector.extract_strided_slice %1 {offsets = [0, 2], sizes = [3, 1015], strides = [1, 1]} : vector<3x1024xf32> to vector<3x1015xf32>
    %cst_10 = arith.constant dense<0.000000e+00> : vector<20x1015xf32>
    %14 = tpu.matmul %12, %13, %cst_10 {dimension_numbers = #tpu.dot_dimension_numbers<[1], [0], [0], [1], [0, 0, 1, 1], [], []>} : vector<20x3xf32>, vector<3x1015xf32>, vector<20x1015xf32> -> vector<20x1015xf32>
    %15 = arith.addf %10, %14 : vector<20x1015xf32>
    %c3 = arith.constant 3 : index
    %c0_11 = arith.constant 0 : index
    %c0_12 = arith.constant 0 : index
    %16 = vector.load %arg2[%c3, %c0_11, %c0_12] : memref<10x20x3xf32, #tpu.memory_space<vmem>>, vector<1x20x3xf32>
    %17 = vector.shape_cast %16 : vector<1x20x3xf32> to vector<20x3xf32>
    %18 = vector.extract_strided_slice %1 {offsets = [0, 3], sizes = [3, 1015], strides = [1, 1]} : vector<3x1024xf32> to vector<3x1015xf32>
    %cst_13 = arith.constant dense<0.000000e+00> : vector<20x1015xf32>
    %19 = tpu.matmul %17, %18, %cst_13 {dimension_numbers = #tpu.dot_dimension_numbers<[1], [0], [0], [1], [0, 0, 1, 1], [], []>} : vector<20x3xf32>, vector<3x1015xf32>, vector<20x1015xf32> -> vector<20x1015xf32>
    %20 = arith.addf %15, %19 : vector<20x1015xf32>
    %c4 = arith.constant 4 : index
    %c0_14 = arith.constant 0 : index
    %c0_15 = arith.constant 0 : index
    %21 = vector.load %arg2[%c4, %c0_14, %c0_15] : memref<10x20x3xf32, #tpu.memory_space<vmem>>, vector<1x20x3xf32>
    %22 = vector.shape_cast %21 : vector<1x20x3xf32> to vector<20x3xf32>
    %23 = vector.extract_strided_slice %1 {offsets = [0, 4], sizes = [3, 1015], strides = [1, 1]} : vector<3x1024xf32> to vector<3x1015xf32>
    %cst_16 = arith.constant dense<0.000000e+00> : vector<20x1015xf32>
    %24 = tpu.matmul %22, %23, %cst_16 {dimension_numbers = #tpu.dot_dimension_numbers<[1], [0], [0], [1], [0, 0, 1, 1], [], []>} : vector<20x3xf32>, vector<3x1015xf32>, vector<20x1015xf32> -> vector<20x1015xf32>
    %25 = arith.addf %20, %24 : vector<20x1015xf32>
    %c5 = arith.constant 5 : index
    %c0_17 = arith.constant 0 : index
    %c0_18 = arith.constant 0 : index
    %26 = vector.load %arg2[%c5, %c0_17, %c0_18] : memref<10x20x3xf32, #tpu.memory_space<vmem>>, vector<1x20x3xf32>
    %27 = vector.shape_cast %26 : vector<1x20x3xf32> to vector<20x3xf32>
    %28 = vector.extract_strided_slice %1 {offsets = [0, 5], sizes = [3, 1015], strides = [1, 1]} : vector<3x1024xf32> to vector<3x1015xf32>
    %cst_19 = arith.constant dense<0.000000e+00> : vector<20x1015xf32>
    %29 = tpu.matmul %27, %28, %cst_19 {dimension_numbers = #tpu.dot_dimension_numbers<[1], [0], [0], [1], [0, 0, 1, 1], [], []>} : vector<20x3xf32>, vector<3x1015xf32>, vector<20x1015xf32> -> vector<20x1015xf32>
    %30 = arith.addf %25, %29 : vector<20x1015xf32>
    %c6 = arith.constant 6 : index
    %c0_20 = arith.constant 0 : index
    %c0_21 = arith.constant 0 : index
    %31 = vector.load %arg2[%c6, %c0_20, %c0_21] : memref<10x20x3xf32, #tpu.memory_space<vmem>>, vector<1x20x3xf32>
    %32 = vector.shape_cast %31 : vector<1x20x3xf32> to vector<20x3xf32>
    %33 = vector.extract_strided_slice %1 {offsets = [0, 6], sizes = [3, 1015], strides = [1, 1]} : vector<3x1024xf32> to vector<3x1015xf32>
    %cst_22 = arith.constant dense<0.000000e+00> : vector<20x1015xf32>
    %34 = tpu.matmul %32, %33, %cst_22 {dimension_numbers = #tpu.dot_dimension_numbers<[1], [0], [0], [1], [0, 0, 1, 1], [], []>} : vector<20x3xf32>, vector<3x1015xf32>, vector<20x1015xf32> -> vector<20x1015xf32>
    %35 = arith.addf %30, %34 : vector<20x1015xf32>
    %c7 = arith.constant 7 : index
    %c0_23 = arith.constant 0 : index
    %c0_24 = arith.constant 0 : index
    %36 = vector.load %arg2[%c7, %c0_23, %c0_24] : memref<10x20x3xf32, #tpu.memory_space<vmem>>, vector<1x20x3xf32>
    %37 = vector.shape_cast %36 : vector<1x20x3xf32> to vector<20x3xf32>
    %38 = vector.extract_strided_slice %1 {offsets = [0, 7], sizes = [3, 1015], strides = [1, 1]} : vector<3x1024xf32> to vector<3x1015xf32>
    %cst_25 = arith.constant dense<0.000000e+00> : vector<20x1015xf32>
    %39 = tpu.matmul %37, %38, %cst_25 {dimension_numbers = #tpu.dot_dimension_numbers<[1], [0], [0], [1], [0, 0, 1, 1], [], []>} : vector<20x3xf32>, vector<3x1015xf32>, vector<20x1015xf32> -> vector<20x1015xf32>
    %40 = arith.addf %35, %39 : vector<20x1015xf32>
    %c8 = arith.constant 8 : index
    %c0_26 = arith.constant 0 : index
    %c0_27 = arith.constant 0 : index
    %41 = vector.load %arg2[%c8, %c0_26, %c0_27] : memref<10x20x3xf32, #tpu.memory_space<vmem>>, vector<1x20x3xf32>
    %42 = vector.shape_cast %41 : vector<1x20x3xf32> to vector<20x3xf32>
    %43 = vector.extract_strided_slice %1 {offsets = [0, 8], sizes = [3, 1015], strides = [1, 1]} : vector<3x1024xf32> to vector<3x1015xf32>
    %cst_28 = arith.constant dense<0.000000e+00> : vector<20x1015xf32>
    %44 = tpu.matmul %42, %43, %cst_28 {dimension_numbers = #tpu.dot_dimension_numbers<[1], [0], [0], [1], [0, 0, 1, 1], [], []>} : vector<20x3xf32>, vector<3x1015xf32>, vector<20x1015xf32> -> vector<20x1015xf32>
    %45 = arith.addf %40, %44 : vector<20x1015xf32>
    %c9 = arith.constant 9 : index
    %c0_29 = arith.constant 0 : index
    %c0_30 = arith.constant 0 : index
    %46 = vector.load %arg2[%c9, %c0_29, %c0_30] : memref<10x20x3xf32, #tpu.memory_space<vmem>>, vector<1x20x3xf32>
    %47 = vector.shape_cast %46 : vector<1x20x3xf32> to vector<20x3xf32>
    %48 = vector.extract_strided_slice %1 {offsets = [0, 9], sizes = [3, 1015], strides = [1, 1]} : vector<3x1024xf32> to vector<3x1015xf32>
    %cst_31 = arith.constant dense<0.000000e+00> : vector<20x1015xf32>
    %49 = tpu.matmul %47, %48, %cst_31 {dimension_numbers = #tpu.dot_dimension_numbers<[1], [0], [0], [1], [0, 0, 1, 1], [], []>} : vector<20x3xf32>, vector<3x1015xf32>, vector<20x1015xf32> -> vector<20x1015xf32>
    %50 = arith.addf %45, %49 : vector<20x1015xf32>
    %c0_32 = arith.constant 0 : index
    %c0_33 = arith.constant 0 : index
    %51 = vector.load %arg3[%c0_32, %c0_33] : memref<20x1xf32, #tpu.memory_space<vmem>>, vector<20x1xf32>
    %52 = vector.broadcast %51 : vector<20x1xf32> to vector<20x1015xf32>
    %53 = arith.addf %50, %52 : vector<20x1015xf32>
    %cst_34 = arith.constant 0.000000e+00 : f32
    %54 = vector.broadcast %cst_34 : f32 to vector<20x1015xf32>
    %55 = arith.maximumf %53, %54 : vector<20x1015xf32>
    %56 = vector.extract_strided_slice %55 {offsets = [0, 0], sizes = [20, 1012], strides = [1, 1]} : vector<20x1015xf32> to vector<20x1012xf32>
    %57 = vector.extract_strided_slice %55 {offsets = [0, 1], sizes = [20, 1012], strides = [1, 1]} : vector<20x1015xf32> to vector<20x1012xf32>
    %58 = arith.maximumf %56, %57 : vector<20x1012xf32>
    %59 = vector.extract_strided_slice %55 {offsets = [0, 2], sizes = [20, 1012], strides = [1, 1]} : vector<20x1015xf32> to vector<20x1012xf32>
    %60 = arith.maximumf %58, %59 : vector<20x1012xf32>
    %61 = vector.extract_strided_slice %55 {offsets = [0, 3], sizes = [20, 1012], strides = [1, 1]} : vector<20x1015xf32> to vector<20x1012xf32>
    %62 = arith.maximumf %60, %61 : vector<20x1012xf32>
    %63 = tpu.iota {dimensions = array<i32: 0>} : vector<1012x253xi32>
    %64 = tpu.iota {dimensions = array<i32: 1>} : vector<1012x253xi32>
    %c4_i32 = arith.constant 4 : i32
    %65 = vector.broadcast %c4_i32 : i32 to vector<1012x253xi32>
    %66 = arith.muli %64, %65 : vector<1012x253xi32>
    %67 = arith.cmpi eq, %63, %66 : vector<1012x253xi32>
    %68 = arith.extui %67 : vector<1012x253xi1> to vector<1012x253xi32>
    %69 = arith.sitofp %68 : vector<1012x253xi32> to vector<1012x253xf32>
    %cst_35 = arith.constant dense<0.000000e+00> : vector<20x253xf32>
    %70 = tpu.matmul %62, %69, %cst_35 {dimension_numbers = #tpu.dot_dimension_numbers<[1], [0], [0], [1], [0, 0, 1, 1], [], []>} : vector<20x1012xf32>, vector<1012x253xf32>, vector<20x253xf32> -> vector<20x253xf32>
    %c0_36 = arith.constant 0 : index
    %c0_37 = arith.constant 0 : index
    %c0_38 = arith.constant 0 : index
    %71 = vector.load %arg4[%c0_36, %c0_37, %c0_38] : memref<5x40x20xf32, #tpu.memory_space<vmem>>, vector<1x40x20xf32>
    %72 = vector.shape_cast %71 : vector<1x40x20xf32> to vector<40x20xf32>
    %73 = vector.extract_strided_slice %70 {offsets = [0, 0], sizes = [20, 249], strides = [1, 1]} : vector<20x253xf32> to vector<20x249xf32>
    %cst_39 = arith.constant dense<0.000000e+00> : vector<40x249xf32>
    %74 = tpu.matmul %72, %73, %cst_39 {dimension_numbers = #tpu.dot_dimension_numbers<[1], [0], [0], [1], [0, 0, 1, 1], [], []>} : vector<40x20xf32>, vector<20x249xf32>, vector<40x249xf32> -> vector<40x249xf32>
    %c1_40 = arith.constant 1 : index
    %c0_41 = arith.constant 0 : index
    %c0_42 = arith.constant 0 : index
    %75 = vector.load %arg4[%c1_40, %c0_41, %c0_42] : memref<5x40x20xf32, #tpu.memory_space<vmem>>, vector<1x40x20xf32>
    %76 = vector.shape_cast %75 : vector<1x40x20xf32> to vector<40x20xf32>
    %77 = vector.extract_strided_slice %70 {offsets = [0, 1], sizes = [20, 249], strides = [1, 1]} : vector<20x253xf32> to vector<20x249xf32>
    %cst_43 = arith.constant dense<0.000000e+00> : vector<40x249xf32>
    %78 = tpu.matmul %76, %77, %cst_43 {dimension_numbers = #tpu.dot_dimension_numbers<[1], [0], [0], [1], [0, 0, 1, 1], [], []>} : vector<40x20xf32>, vector<20x249xf32>, vector<40x249xf32> -> vector<40x249xf32>
    %79 = arith.addf %74, %78 : vector<40x249xf32>
    %c2_44 = arith.constant 2 : index
    %c0_45 = arith.constant 0 : index
    %c0_46 = arith.constant 0 : index
    %80 = vector.load %arg4[%c2_44, %c0_45, %c0_46] : memref<5x40x20xf32, #tpu.memory_space<vmem>>, vector<1x40x20xf32>
    %81 = vector.shape_cast %80 : vector<1x40x20xf32> to vector<40x20xf32>
    %82 = vector.extract_strided_slice %70 {offsets = [0, 2], sizes = [20, 249], strides = [1, 1]} : vector<20x253xf32> to vector<20x249xf32>
    %cst_47 = arith.constant dense<0.000000e+00> : vector<40x249xf32>
    %83 = tpu.matmul %81, %82, %cst_47 {dimension_numbers = #tpu.dot_dimension_numbers<[1], [0], [0], [1], [0, 0, 1, 1], [], []>} : vector<40x20xf32>, vector<20x249xf32>, vector<40x249xf32> -> vector<40x249xf32>
    %84 = arith.addf %79, %83 : vector<40x249xf32>
    %c3_48 = arith.constant 3 : index
    %c0_49 = arith.constant 0 : index
    %c0_50 = arith.constant 0 : index
    %85 = vector.load %arg4[%c3_48, %c0_49, %c0_50] : memref<5x40x20xf32, #tpu.memory_space<vmem>>, vector<1x40x20xf32>
    %86 = vector.shape_cast %85 : vector<1x40x20xf32> to vector<40x20xf32>
    %87 = vector.extract_strided_slice %70 {offsets = [0, 3], sizes = [20, 249], strides = [1, 1]} : vector<20x253xf32> to vector<20x249xf32>
    %cst_51 = arith.constant dense<0.000000e+00> : vector<40x249xf32>
    %88 = tpu.matmul %86, %87, %cst_51 {dimension_numbers = #tpu.dot_dimension_numbers<[1], [0], [0], [1], [0, 0, 1, 1], [], []>} : vector<40x20xf32>, vector<20x249xf32>, vector<40x249xf32> -> vector<40x249xf32>
    %89 = arith.addf %84, %88 : vector<40x249xf32>
    %c4_52 = arith.constant 4 : index
    %c0_53 = arith.constant 0 : index
    %c0_54 = arith.constant 0 : index
    %90 = vector.load %arg4[%c4_52, %c0_53, %c0_54] : memref<5x40x20xf32, #tpu.memory_space<vmem>>, vector<1x40x20xf32>
    %91 = vector.shape_cast %90 : vector<1x40x20xf32> to vector<40x20xf32>
    %92 = vector.extract_strided_slice %70 {offsets = [0, 4], sizes = [20, 249], strides = [1, 1]} : vector<20x253xf32> to vector<20x249xf32>
    %cst_55 = arith.constant dense<0.000000e+00> : vector<40x249xf32>
    %93 = tpu.matmul %91, %92, %cst_55 {dimension_numbers = #tpu.dot_dimension_numbers<[1], [0], [0], [1], [0, 0, 1, 1], [], []>} : vector<40x20xf32>, vector<20x249xf32>, vector<40x249xf32> -> vector<40x249xf32>
    %94 = arith.addf %89, %93 : vector<40x249xf32>
    %c0_56 = arith.constant 0 : index
    %c0_57 = arith.constant 0 : index
    %95 = vector.load %arg5[%c0_56, %c0_57] : memref<40x1xf32, #tpu.memory_space<vmem>>, vector<40x1xf32>
    %96 = vector.broadcast %95 : vector<40x1xf32> to vector<40x249xf32>
    %97 = arith.addf %94, %96 : vector<40x249xf32>
    %cst_58 = arith.constant 0.000000e+00 : f32
    %98 = vector.broadcast %cst_58 : f32 to vector<40x249xf32>
    %99 = arith.maximumf %97, %98 : vector<40x249xf32>
    %100 = vector.extract_strided_slice %99 {offsets = [0, 0], sizes = [40, 246], strides = [1, 1]} : vector<40x249xf32> to vector<40x246xf32>
    %101 = vector.extract_strided_slice %99 {offsets = [0, 1], sizes = [40, 246], strides = [1, 1]} : vector<40x249xf32> to vector<40x246xf32>
    %102 = arith.maximumf %100, %101 : vector<40x246xf32>
    %103 = vector.extract_strided_slice %99 {offsets = [0, 2], sizes = [40, 246], strides = [1, 1]} : vector<40x249xf32> to vector<40x246xf32>
    %104 = arith.maximumf %102, %103 : vector<40x246xf32>
    %105 = vector.extract_strided_slice %99 {offsets = [0, 3], sizes = [40, 246], strides = [1, 1]} : vector<40x249xf32> to vector<40x246xf32>
    %106 = arith.maximumf %104, %105 : vector<40x246xf32>
    %107 = tpu.iota {dimensions = array<i32: 0>} : vector<246x62xi32>
    %108 = tpu.iota {dimensions = array<i32: 1>} : vector<246x62xi32>
    %c4_i32_59 = arith.constant 4 : i32
    %109 = vector.broadcast %c4_i32_59 : i32 to vector<246x62xi32>
    %110 = arith.muli %108, %109 : vector<246x62xi32>
    %111 = arith.cmpi eq, %107, %110 : vector<246x62xi32>
    %112 = arith.extui %111 : vector<246x62xi1> to vector<246x62xi32>
    %113 = arith.sitofp %112 : vector<246x62xi32> to vector<246x62xf32>
    %cst_60 = arith.constant dense<0.000000e+00> : vector<40x62xf32>
    %114 = tpu.matmul %106, %113, %cst_60 {dimension_numbers = #tpu.dot_dimension_numbers<[1], [0], [0], [1], [0, 0, 1, 1], [], []>} : vector<40x246xf32>, vector<246x62xf32>, vector<40x62xf32> -> vector<40x62xf32>
    %c0_61 = arith.constant 0 : index
    %c0_62 = arith.constant 0 : index
    %c0_63 = arith.constant 0 : index
    %115 = vector.load %arg6[%c0_61, %c0_62, %c0_63] : memref<5x80x40xf32, #tpu.memory_space<vmem>>, vector<1x80x40xf32>
    %116 = vector.shape_cast %115 : vector<1x80x40xf32> to vector<80x40xf32>
    %117 = vector.extract_strided_slice %114 {offsets = [0, 0], sizes = [40, 58], strides = [1, 1]} : vector<40x62xf32> to vector<40x58xf32>
    %cst_64 = arith.constant dense<0.000000e+00> : vector<80x58xf32>
    %118 = tpu.matmul %116, %117, %cst_64 {dimension_numbers = #tpu.dot_dimension_numbers<[1], [0], [0], [1], [0, 0, 1, 1], [], []>} : vector<80x40xf32>, vector<40x58xf32>, vector<80x58xf32> -> vector<80x58xf32>
    %c1_65 = arith.constant 1 : index
    %c0_66 = arith.constant 0 : index
    %c0_67 = arith.constant 0 : index
    %119 = vector.load %arg6[%c1_65, %c0_66, %c0_67] : memref<5x80x40xf32, #tpu.memory_space<vmem>>, vector<1x80x40xf32>
    %120 = vector.shape_cast %119 : vector<1x80x40xf32> to vector<80x40xf32>
    %121 = vector.extract_strided_slice %114 {offsets = [0, 1], sizes = [40, 58], strides = [1, 1]} : vector<40x62xf32> to vector<40x58xf32>
    %cst_68 = arith.constant dense<0.000000e+00> : vector<80x58xf32>
    %122 = tpu.matmul %120, %121, %cst_68 {dimension_numbers = #tpu.dot_dimension_numbers<[1], [0], [0], [1], [0, 0, 1, 1], [], []>} : vector<80x40xf32>, vector<40x58xf32>, vector<80x58xf32> -> vector<80x58xf32>
    %123 = arith.addf %118, %122 : vector<80x58xf32>
    %c2_69 = arith.constant 2 : index
    %c0_70 = arith.constant 0 : index
    %c0_71 = arith.constant 0 : index
    %124 = vector.load %arg6[%c2_69, %c0_70, %c0_71] : memref<5x80x40xf32, #tpu.memory_space<vmem>>, vector<1x80x40xf32>
    %125 = vector.shape_cast %124 : vector<1x80x40xf32> to vector<80x40xf32>
    %126 = vector.extract_strided_slice %114 {offsets = [0, 2], sizes = [40, 58], strides = [1, 1]} : vector<40x62xf32> to vector<40x58xf32>
    %cst_72 = arith.constant dense<0.000000e+00> : vector<80x58xf32>
    %127 = tpu.matmul %125, %126, %cst_72 {dimension_numbers = #tpu.dot_dimension_numbers<[1], [0], [0], [1], [0, 0, 1, 1], [], []>} : vector<80x40xf32>, vector<40x58xf32>, vector<80x58xf32> -> vector<80x58xf32>
    %128 = arith.addf %123, %127 : vector<80x58xf32>
    %c3_73 = arith.constant 3 : index
    %c0_74 = arith.constant 0 : index
    %c0_75 = arith.constant 0 : index
    %129 = vector.load %arg6[%c3_73, %c0_74, %c0_75] : memref<5x80x40xf32, #tpu.memory_space<vmem>>, vector<1x80x40xf32>
    %130 = vector.shape_cast %129 : vector<1x80x40xf32> to vector<80x40xf32>
    %131 = vector.extract_strided_slice %114 {offsets = [0, 3], sizes = [40, 58], strides = [1, 1]} : vector<40x62xf32> to vector<40x58xf32>
    %cst_76 = arith.constant dense<0.000000e+00> : vector<80x58xf32>
    %132 = tpu.matmul %130, %131, %cst_76 {dimension_numbers = #tpu.dot_dimension_numbers<[1], [0], [0], [1], [0, 0, 1, 1], [], []>} : vector<80x40xf32>, vector<40x58xf32>, vector<80x58xf32> -> vector<80x58xf32>
    %133 = arith.addf %128, %132 : vector<80x58xf32>
    %c4_77 = arith.constant 4 : index
    %c0_78 = arith.constant 0 : index
    %c0_79 = arith.constant 0 : index
    %134 = vector.load %arg6[%c4_77, %c0_78, %c0_79] : memref<5x80x40xf32, #tpu.memory_space<vmem>>, vector<1x80x40xf32>
    %135 = vector.shape_cast %134 : vector<1x80x40xf32> to vector<80x40xf32>
    %136 = vector.extract_strided_slice %114 {offsets = [0, 4], sizes = [40, 58], strides = [1, 1]} : vector<40x62xf32> to vector<40x58xf32>
    %cst_80 = arith.constant dense<0.000000e+00> : vector<80x58xf32>
    %137 = tpu.matmul %135, %136, %cst_80 {dimension_numbers = #tpu.dot_dimension_numbers<[1], [0], [0], [1], [0, 0, 1, 1], [], []>} : vector<80x40xf32>, vector<40x58xf32>, vector<80x58xf32> -> vector<80x58xf32>
    %138 = arith.addf %133, %137 : vector<80x58xf32>
    %c0_81 = arith.constant 0 : index
    %c0_82 = arith.constant 0 : index
    %139 = vector.load %arg7[%c0_81, %c0_82] : memref<80x1xf32, #tpu.memory_space<vmem>>, vector<80x1xf32>
    %140 = vector.broadcast %139 : vector<80x1xf32> to vector<80x58xf32>
    %141 = arith.addf %138, %140 : vector<80x58xf32>
    %cst_83 = arith.constant 0.000000e+00 : f32
    %142 = vector.broadcast %cst_83 : f32 to vector<80x58xf32>
    %143 = arith.maximumf %141, %142 : vector<80x58xf32>
    %144 = vector.extract_strided_slice %143 {offsets = [0, 0], sizes = [80, 51], strides = [1, 1]} : vector<80x58xf32> to vector<80x51xf32>
    %145 = vector.extract_strided_slice %143 {offsets = [0, 1], sizes = [80, 51], strides = [1, 1]} : vector<80x58xf32> to vector<80x51xf32>
    %146 = arith.maximumf %144, %145 : vector<80x51xf32>
    %147 = vector.extract_strided_slice %143 {offsets = [0, 2], sizes = [80, 51], strides = [1, 1]} : vector<80x58xf32> to vector<80x51xf32>
    %148 = arith.maximumf %146, %147 : vector<80x51xf32>
    %149 = vector.extract_strided_slice %143 {offsets = [0, 3], sizes = [80, 51], strides = [1, 1]} : vector<80x58xf32> to vector<80x51xf32>
    %150 = arith.maximumf %148, %149 : vector<80x51xf32>
    %151 = vector.extract_strided_slice %143 {offsets = [0, 4], sizes = [80, 51], strides = [1, 1]} : vector<80x58xf32> to vector<80x51xf32>
    %152 = arith.maximumf %150, %151 : vector<80x51xf32>
    %153 = vector.extract_strided_slice %143 {offsets = [0, 5], sizes = [80, 51], strides = [1, 1]} : vector<80x58xf32> to vector<80x51xf32>
    %154 = arith.maximumf %152, %153 : vector<80x51xf32>
    %155 = vector.extract_strided_slice %143 {offsets = [0, 6], sizes = [80, 51], strides = [1, 1]} : vector<80x58xf32> to vector<80x51xf32>
    %156 = arith.maximumf %154, %155 : vector<80x51xf32>
    %157 = vector.extract_strided_slice %143 {offsets = [0, 7], sizes = [80, 51], strides = [1, 1]} : vector<80x58xf32> to vector<80x51xf32>
    %158 = arith.maximumf %156, %157 : vector<80x51xf32>
    %159 = tpu.iota {dimensions = array<i32: 0>} : vector<51x7xi32>
    %160 = tpu.iota {dimensions = array<i32: 1>} : vector<51x7xi32>
    %c8_i32 = arith.constant 8 : i32
    %161 = vector.broadcast %c8_i32 : i32 to vector<51x7xi32>
    %162 = arith.muli %160, %161 : vector<51x7xi32>
    %163 = arith.cmpi eq, %159, %162 : vector<51x7xi32>
    %164 = arith.extui %163 : vector<51x7xi1> to vector<51x7xi32>
    %165 = arith.sitofp %164 : vector<51x7xi32> to vector<51x7xf32>
    %cst_84 = arith.constant dense<0.000000e+00> : vector<80x7xf32>
    %166 = tpu.matmul %158, %165, %cst_84 {dimension_numbers = #tpu.dot_dimension_numbers<[1], [0], [0], [1], [0, 0, 1, 1], [], []>} : vector<80x51xf32>, vector<51x7xf32>, vector<80x7xf32> -> vector<80x7xf32>
    %c0_85 = arith.constant 0 : index
    %c0_86 = arith.constant 0 : index
    %167 = vector.load %arg9[%c0_85, %c0_86] : memref<224x1xf32, #tpu.memory_space<vmem>>, vector<224x1xf32>
    %c0_87 = arith.constant 0 : index
    %c0_88 = arith.constant 0 : index
    %c0_89 = arith.constant 0 : index
    %168 = vector.load %arg8[%c0_87, %c0_88, %c0_89] : memref<7x224x80xf32, #tpu.memory_space<vmem>>, vector<1x224x80xf32>
    %169 = vector.shape_cast %168 : vector<1x224x80xf32> to vector<224x80xf32>
    %170 = vector.extract_strided_slice %166 {offsets = [0, 0], sizes = [80, 1], strides = [1, 1]} : vector<80x7xf32> to vector<80x1xf32>
    %cst_90 = arith.constant dense<0.000000e+00> : vector<224x1xf32>
    %171 = tpu.matmul %169, %170, %cst_90 {dimension_numbers = #tpu.dot_dimension_numbers<[1], [0], [0], [1], [0, 0, 1, 1], [], []>} : vector<224x80xf32>, vector<80x1xf32>, vector<224x1xf32> -> vector<224x1xf32>
    %172 = arith.addf %167, %171 : vector<224x1xf32>
    %c1_91 = arith.constant 1 : index
    %c0_92 = arith.constant 0 : index
    %c0_93 = arith.constant 0 : index
    %173 = vector.load %arg8[%c1_91, %c0_92, %c0_93] : memref<7x224x80xf32, #tpu.memory_space<vmem>>, vector<1x224x80xf32>
    %174 = vector.shape_cast %173 : vector<1x224x80xf32> to vector<224x80xf32>
    %175 = vector.extract_strided_slice %166 {offsets = [0, 1], sizes = [80, 1], strides = [1, 1]} : vector<80x7xf32> to vector<80x1xf32>
    %cst_94 = arith.constant dense<0.000000e+00> : vector<224x1xf32>
    %176 = tpu.matmul %174, %175, %cst_94 {dimension_numbers = #tpu.dot_dimension_numbers<[1], [0], [0], [1], [0, 0, 1, 1], [], []>} : vector<224x80xf32>, vector<80x1xf32>, vector<224x1xf32> -> vector<224x1xf32>
    %177 = arith.addf %172, %176 : vector<224x1xf32>
    %c2_95 = arith.constant 2 : index
    %c0_96 = arith.constant 0 : index
    %c0_97 = arith.constant 0 : index
    %178 = vector.load %arg8[%c2_95, %c0_96, %c0_97] : memref<7x224x80xf32, #tpu.memory_space<vmem>>, vector<1x224x80xf32>
    %179 = vector.shape_cast %178 : vector<1x224x80xf32> to vector<224x80xf32>
    %180 = vector.extract_strided_slice %166 {offsets = [0, 2], sizes = [80, 1], strides = [1, 1]} : vector<80x7xf32> to vector<80x1xf32>
    %cst_98 = arith.constant dense<0.000000e+00> : vector<224x1xf32>
    %181 = tpu.matmul %179, %180, %cst_98 {dimension_numbers = #tpu.dot_dimension_numbers<[1], [0], [0], [1], [0, 0, 1, 1], [], []>} : vector<224x80xf32>, vector<80x1xf32>, vector<224x1xf32> -> vector<224x1xf32>
    %182 = arith.addf %177, %181 : vector<224x1xf32>
    %c3_99 = arith.constant 3 : index
    %c0_100 = arith.constant 0 : index
    %c0_101 = arith.constant 0 : index
    %183 = vector.load %arg8[%c3_99, %c0_100, %c0_101] : memref<7x224x80xf32, #tpu.memory_space<vmem>>, vector<1x224x80xf32>
    %184 = vector.shape_cast %183 : vector<1x224x80xf32> to vector<224x80xf32>
    %185 = vector.extract_strided_slice %166 {offsets = [0, 3], sizes = [80, 1], strides = [1, 1]} : vector<80x7xf32> to vector<80x1xf32>
    %cst_102 = arith.constant dense<0.000000e+00> : vector<224x1xf32>
    %186 = tpu.matmul %184, %185, %cst_102 {dimension_numbers = #tpu.dot_dimension_numbers<[1], [0], [0], [1], [0, 0, 1, 1], [], []>} : vector<224x80xf32>, vector<80x1xf32>, vector<224x1xf32> -> vector<224x1xf32>
    %187 = arith.addf %182, %186 : vector<224x1xf32>
    %c4_103 = arith.constant 4 : index
    %c0_104 = arith.constant 0 : index
    %c0_105 = arith.constant 0 : index
    %188 = vector.load %arg8[%c4_103, %c0_104, %c0_105] : memref<7x224x80xf32, #tpu.memory_space<vmem>>, vector<1x224x80xf32>
    %189 = vector.shape_cast %188 : vector<1x224x80xf32> to vector<224x80xf32>
    %190 = vector.extract_strided_slice %166 {offsets = [0, 4], sizes = [80, 1], strides = [1, 1]} : vector<80x7xf32> to vector<80x1xf32>
    %cst_106 = arith.constant dense<0.000000e+00> : vector<224x1xf32>
    %191 = tpu.matmul %189, %190, %cst_106 {dimension_numbers = #tpu.dot_dimension_numbers<[1], [0], [0], [1], [0, 0, 1, 1], [], []>} : vector<224x80xf32>, vector<80x1xf32>, vector<224x1xf32> -> vector<224x1xf32>
    %192 = arith.addf %187, %191 : vector<224x1xf32>
    %c5_107 = arith.constant 5 : index
    %c0_108 = arith.constant 0 : index
    %c0_109 = arith.constant 0 : index
    %193 = vector.load %arg8[%c5_107, %c0_108, %c0_109] : memref<7x224x80xf32, #tpu.memory_space<vmem>>, vector<1x224x80xf32>
    %194 = vector.shape_cast %193 : vector<1x224x80xf32> to vector<224x80xf32>
    %195 = vector.extract_strided_slice %166 {offsets = [0, 5], sizes = [80, 1], strides = [1, 1]} : vector<80x7xf32> to vector<80x1xf32>
    %cst_110 = arith.constant dense<0.000000e+00> : vector<224x1xf32>
    %196 = tpu.matmul %194, %195, %cst_110 {dimension_numbers = #tpu.dot_dimension_numbers<[1], [0], [0], [1], [0, 0, 1, 1], [], []>} : vector<224x80xf32>, vector<80x1xf32>, vector<224x1xf32> -> vector<224x1xf32>
    %197 = arith.addf %192, %196 : vector<224x1xf32>
    %c6_111 = arith.constant 6 : index
    %c0_112 = arith.constant 0 : index
    %c0_113 = arith.constant 0 : index
    %198 = vector.load %arg8[%c6_111, %c0_112, %c0_113] : memref<7x224x80xf32, #tpu.memory_space<vmem>>, vector<1x224x80xf32>
    %199 = vector.shape_cast %198 : vector<1x224x80xf32> to vector<224x80xf32>
    %200 = vector.extract_strided_slice %166 {offsets = [0, 6], sizes = [80, 1], strides = [1, 1]} : vector<80x7xf32> to vector<80x1xf32>
    %cst_114 = arith.constant dense<0.000000e+00> : vector<224x1xf32>
    %201 = tpu.matmul %199, %200, %cst_114 {dimension_numbers = #tpu.dot_dimension_numbers<[1], [0], [0], [1], [0, 0, 1, 1], [], []>} : vector<224x80xf32>, vector<80x1xf32>, vector<224x1xf32> -> vector<224x1xf32>
    %202 = arith.addf %197, %201 : vector<224x1xf32>
    %cst_115 = arith.constant 0.000000e+00 : f32
    %203 = vector.broadcast %cst_115 : f32 to vector<224x1xf32>
    %204 = arith.maximumf %202, %203 : vector<224x1xf32>
    %c0_116 = arith.constant 0 : index
    %c0_117 = arith.constant 0 : index
    %205 = vector.load %arg10[%c0_116, %c0_117] : memref<10x224xf32, #tpu.memory_space<vmem>>, vector<10x224xf32>
    %cst_118 = arith.constant dense<0.000000e+00> : vector<10x1xf32>
    %206 = tpu.matmul %205, %204, %cst_118 {dimension_numbers = #tpu.dot_dimension_numbers<[1], [0], [0], [1], [0, 0, 1, 1], [], []>} : vector<10x224xf32>, vector<224x1xf32>, vector<10x1xf32> -> vector<10x1xf32>
    %c0_119 = arith.constant 0 : index
    %c0_120 = arith.constant 0 : index
    %207 = vector.load %arg11[%c0_119, %c0_120] : memref<10x1xf32, #tpu.memory_space<vmem>>, vector<10x1xf32>
    %208 = arith.addf %206, %207 : vector<10x1xf32>
    %cst_121 = arith.constant dense<0xFF800000> : vector<1xf32>
    %209 = vector.multi_reduction <maximumf>, %208, %cst_121 [0] : vector<10x1xf32> to vector<1xf32>
    %210 = vector.shape_cast %209 : vector<1xf32> to vector<1x1xf32>
    %211 = vector.broadcast %210 : vector<1x1xf32> to vector<10x1xf32>
    %212 = arith.subf %208, %211 : vector<10x1xf32>
    %213 = math.exp %212 : vector<10x1xf32>
    %cst_122 = arith.constant dense<0.000000e+00> : vector<1xf32>
    %214 = vector.multi_reduction <add>, %213, %cst_122 [0] : vector<10x1xf32> to vector<1xf32>
    %215 = vector.shape_cast %214 : vector<1xf32> to vector<1x1xf32>
    %216 = vector.broadcast %215 : vector<1x1xf32> to vector<10x1xf32>
    %217 = arith.divf %213, %216 : vector<10x1xf32>
    %c0_123 = arith.constant 0 : index
    %c0_124 = arith.constant 0 : index
    %c0_125 = arith.constant 0 : index
    %218 = vector.load %arg12[%c0_123, %c0_124, %c0_125] : memref<1x10x1xf32, #tpu.memory_space<vmem>>, vector<1x10x1xf32>
    %219 = vector.shape_cast %218 : vector<1x10x1xf32> to vector<10x1xf32>
    %220 = vector.shape_cast %217 : vector<10x1xf32> to vector<1x10x1xf32>
    tpu.vector_store %arg12[%c0_123, %c0_124, %c0_125], %220 {strides = array<i32>} : memref<1x10x1xf32, #tpu.memory_space<vmem>>, vector<1x10x1xf32>,
    return
  }
  func.func @transform_0(%arg0: i32) -> (i32, i32, i32) {
    %c0_i32 = arith.constant 0 : i32
    %c0_i32_0 = arith.constant 0 : i32
    %c0_i32_1 = arith.constant 0 : i32
    return %arg0, %c0_i32, %c0_i32_0 : i32, i32, i32
  }
  func.func @transform_1(%arg0: i32) -> (i32, i32, i32) {
    %c0_i32 = arith.constant 0 : i32
    %c0_i32_0 = arith.constant 0 : i32
    %c0_i32_1 = arith.constant 0 : i32
    %c0_i32_2 = arith.constant 0 : i32
    return %c0_i32, %c0_i32_0, %c0_i32_1 : i32, i32, i32
  }
  func.func @transform_2(%arg0: i32) -> (i32, i32) {
    %c0_i32 = arith.constant 0 : i32
    %c0_i32_0 = arith.constant 0 : i32
    %c0_i32_1 = arith.constant 0 : i32
    return %c0_i32, %c0_i32_0 : i32, i32
  }
  func.func @transform_3(%arg0: i32) -> (i32, i32, i32) {
    %c0_i32 = arith.constant 0 : i32
    %c0_i32_0 = arith.constant 0 : i32
    %c0_i32_1 = arith.constant 0 : i32
    %c0_i32_2 = arith.constant 0 : i32
    return %c0_i32, %c0_i32_0, %c0_i32_1 : i32, i32, i32
  }
  func.func @transform_4(%arg0: i32) -> (i32, i32) {
    %c0_i32 = arith.constant 0 : i32
    %c0_i32_0 = arith.constant 0 : i32
    %c0_i32_1 = arith.constant 0 : i32
    return %c0_i32, %c0_i32_0 : i32, i32
  }
  func.func @transform_5(%arg0: i32) -> (i32, i32, i32) {
    %c0_i32 = arith.constant 0 : i32
    %c0_i32_0 = arith.constant 0 : i32
    %c0_i32_1 = arith.constant 0 : i32
    %c0_i32_2 = arith.constant 0 : i32
    return %c0_i32, %c0_i32_0, %c0_i32_1 : i32, i32, i32
  }
  func.func @transform_6(%arg0: i32) -> (i32, i32) {
    %c0_i32 = arith.constant 0 : i32
    %c0_i32_0 = arith.constant 0 : i32
    %c0_i32_1 = arith.constant 0 : i32
    return %c0_i32, %c0_i32_0 : i32, i32
  }
  func.func @transform_7(%arg0: i32) -> (i32, i32, i32) {
    %c0_i32 = arith.constant 0 : i32
    %c0_i32_0 = arith.constant 0 : i32
    %c0_i32_1 = arith.constant 0 : i32
    %c0_i32_2 = arith.constant 0 : i32
    return %c0_i32, %c0_i32_0, %c0_i32_1 : i32, i32, i32
  }
  func.func @transform_8(%arg0: i32) -> (i32, i32) {
    %c0_i32 = arith.constant 0 : i32
    %c0_i32_0 = arith.constant 0 : i32
    %c0_i32_1 = arith.constant 0 : i32
    return %c0_i32, %c0_i32_0 : i32, i32
  }
  func.func @transform_9(%arg0: i32) -> (i32, i32) {
    %c0_i32 = arith.constant 0 : i32
    %c0_i32_0 = arith.constant 0 : i32
    %c0_i32_1 = arith.constant 0 : i32
    return %c0_i32, %c0_i32_0 : i32, i32
  }
  func.func @transform_10(%arg0: i32) -> (i32, i32) {
    %c0_i32 = arith.constant 0 : i32
    %c0_i32_0 = arith.constant 0 : i32
    %c0_i32_1 = arith.constant 0 : i32
    return %c0_i32, %c0_i32_0 : i32, i32
  }
  func.func @transform_11(%arg0: i32) -> (i32, i32, i32) {
    %c0_i32 = arith.constant 0 : i32
    %c0_i32_0 = arith.constant 0 : i32
    %c0_i32_1 = arith.constant 0 : i32
    return %arg0, %c0_i32, %c0_i32_0 : i32, i32, i32
  }
}

</mosaic_0001>

<llo_original>
// kernel: classifier9_forward.1
$region0: #{classifier9_forward.1}
  #allocation0 [shape = 'u32[]', space=smem, size = 0x4, offset = 0x4, fixed_abs, tag = 'smem constant byte address 0x4 - core index']
  #allocation1 [shape = 'u32[144,128]{1,0:T(1,128)}', space=vmem, size = 0x12000, scoped, tag = 'internal scratch']
  %s0 = inlined_call_operand.vmem [shape: f32[2,3,1024], index: 0, kind: input, shape index: {}]
  %s1 = inlined_call_operand.vmem [shape: f32[10,20,3], index: 1, kind: input, shape index: {}]
  %s2 = inlined_call_operand.vmem [shape: f32[20,1], index: 2, kind: input, shape index: {}]
  %s3 = inlined_call_operand.vmem [shape: f32[5,40,20], index: 3, kind: input, shape index: {}]
  %s4 = inlined_call_operand.vmem [shape: f32[40,1], index: 4, kind: input, shape index: {}]
  %s5 = inlined_call_operand.vmem [shape: f32[5,80,40], index: 5, kind: input, shape index: {}]
  %s6 = inlined_call_operand.vmem [shape: f32[80,1], index: 6, kind: input, shape index: {}]
  %s7 = inlined_call_operand.vmem [shape: f32[7,224,80], index: 7, kind: input, shape index: {}]
  %s8 = inlined_call_operand.vmem [shape: f32[224,1], index: 8, kind: input, shape index: {}]
  %s9 = inlined_call_operand.vmem [shape: f32[10,224], index: 9, kind: input, shape index: {}]
  %s10 = inlined_call_operand.vmem [shape: f32[10,1], index: 10, kind: input, shape index: {}]
  %s11 = inlined_call_operand.vmem [shape: f32[2,10,1], index: 11, kind: output, shape index: {}]
  %s12 = sld [smem:[#allocation0]]
  $region77: #{classifier9_forward.1} parent=0
    _
  %s14 = ssub.s32 1, %s12
  %s15 = scalar_select 0, %s14, %s12
  loop: start=0, step=1, limit=4
  $region2: #{classifier9_forward.1} parent=0 // loop_pre_header
    _
  $region3: #{classifier9_forward.1} parent=0 // loop_header
    %s17 = sphi 0, %s21
    %p18 = scmp.ge.s32.totalorder %s17, 4
    %s27 = sphi 0, %s29
    %s30 = sphi 0, %s27
    %s31 = sphi 0, %s30
    %s47 = sphi 0, %s31
    %s51 = sphi 0, %s51
    %s53 = sphi 0, %s51
    %s54 = sphi 0, %s53
    %s68 = sphi 0, %s54
    %s72 = sphi 0, %s72
    %s74 = sphi 0, %s72
    %s75 = sphi 0, %s74
    %s89 = sphi 0, %s75
    %s93 = sphi 0, %s93
    %s95 = sphi 0, %s93
    %s96 = sphi 0, %s95
    %s110 = sphi 0, %s96
    %s114 = sphi 0, %s114
    %s116 = sphi 0, %s114
    %s117 = sphi 0, %s116
    %s131 = sphi 0, %s117
    %s135 = sphi 0, %s135
    %s137 = sphi 0, %s135
    %s138 = sphi 0, %s137
    %s152 = sphi 0, %s138
    %s156 = sphi 0, %s156
    %s158 = sphi 0, %s156
    %s159 = sphi 0, %s158
    %s173 = sphi 0, %s159
    %s177 = sphi 0, %s177
    %s179 = sphi 0, %s177
    %s180 = sphi 0, %s179
    %s194 = sphi 0, %s180
    %s198 = sphi 0, %s198
    %s200 = sphi 0, %s198
    %s201 = sphi 0, %s200
    %s215 = sphi 0, %s201
    %s219 = sphi 0, %s219
    %s221 = sphi 0, %s219
    %s222 = sphi 0, %s221
    %s236 = sphi 0, %s222
    %s240 = sphi 0, %s240
    %s242 = sphi 0, %s240
    %s243 = sphi 0, %s242
    %s257 = sphi 0, %s243
    %s263 = sphi 0, %s265
    %s266 = sphi 0, %s263
    %s267 = sphi 0, %s266
    %s283 = sphi 0, %s267
  $region4: #{classifier9_forward.1} parent=0 // loop_header_branch
    %20 = sbr.rel (%p18) target = $region8
  $region5: #{classifier9_forward.1} parent=0 // loop_body
    %s22 = ssub.s32 %s17, 1
    %s23 = ssub.s32 %s17, 2
    %s24 = sadd.s32 %s17, 1
    %s25 = ssub.s32 %s17, %s24
    %p26 = scmp.eq.s32.totalorder %s25, 0
    %s28 = sadd.s32 %s27, 1
    %s29 = scalar_select %p26, %s27, %s28
    %p32 = pneg %p26
    %p33 = scmp.eq.s32.totalorder %s17, 1
    %p34 = por %p32, %p33
    %p35 = scmp.ne.s32.totalorder %s27, %s30
    %p36 = scmp.eq.s32.totalorder %s17, 0
    %p37 = por %p35, %p36
    %p38 = scmp.ne.s32.totalorder %s27, %s30
    %p39 = scmp.eq.s32.totalorder %s22, 1
    %p40 = por %p38, %p39
    %p41 = scmp.ne.s32.totalorder %s30, %s31
    %p42 = scmp.eq.s32.totalorder %s22, 0
    %p43 = por %p41, %p42
    %p44 = scmp.ne.s32.totalorder %s30, %s31
    %p45 = scmp.eq.s32.totalorder %s23, 1
    %p46 = por %p44, %p45
    %p48 = scmp.ne.s32.totalorder %s31, %s47
    %p49 = scmp.eq.s32.totalorder %s23, 0
    %p50 = por %p48, %p49
    %s52 = sadd.s32 %s51, 1
    %p55 = scmp.eq.s32.totalorder %s17, 1
    %p56 = scmp.ne.s32.totalorder %s51, %s53
    %p57 = scmp.eq.s32.totalorder %s17, 0
    %p58 = por %p56, %p57
    %p59 = scmp.ne.s32.totalorder %s51, %s53
    %p60 = scmp.eq.s32.totalorder %s22, 1
    %p61 = por %p59, %p60
    %p62 = scmp.ne.s32.totalorder %s53, %s54
    %p63 = scmp.eq.s32.totalorder %s22, 0
    %p64 = por %p62, %p63
    %p65 = scmp.ne.s32.totalorder %s53, %s54
    %p66 = scmp.eq.s32.totalorder %s23, 1
    %p67 = por %p65, %p66
    %p69 = scmp.ne.s32.totalorder %s54, %s68
    %p70 = scmp.eq.s32.totalorder %s23, 0
    %p71 = por %p69, %p70
    %s73 = sadd.s32 %s72, 1
    %p76 = scmp.eq.s32.totalorder %s17, 1
    %p77 = scmp.ne.s32.totalorder %s72, %s74
    %p78 = scmp.eq.s32.totalorder %s17, 0
    %p79 = por %p77, %p78
    %p80 = scmp.ne.s32.totalorder %s72, %s74
    %p81 = scmp.eq.s32.totalorder %s22, 1
    %p82 = por %p80, %p81
    %p83 = scmp.ne.s32.totalorder %s74, %s75
    %p84 = scmp.eq.s32.totalorder %s22, 0
    %p85 = por %p83, %p84
    %p86 = scmp.ne.s32.totalorder %s74, %s75
    %p87 = scmp.eq.s32.totalorder %s23, 1
    %p88 = por %p86, %p87
    %p90 = scmp.ne.s32.totalorder %s75, %s89
    %p91 = scmp.eq.s32.totalorder %s23, 0
    %p92 = por %p90, %p91
    %s94 = sadd.s32 %s93, 1
    %p97 = scmp.eq.s32.totalorder %s17, 1
    %p98 = scmp.ne.s32.totalorder %s93, %s95
    %p99 = scmp.eq.s32.totalorder %s17, 0
    %p100 = por %p98, %p99
    %p101 = scmp.ne.s32.totalorder %s93, %s95
    %p102 = scmp.eq.s32.totalorder %s22, 1
    %p103 = por %p101, %p102
    %p104 = scmp.ne.s32.totalorder %s95, %s96
    %p105 = scmp.eq.s32.totalorder %s22, 0
    %p106 = por %p104, %p105
    %p107 = scmp.ne.s32.totalorder %s95, %s96
    %p108 = scmp.eq.s32.totalorder %s23, 1
    %p109 = por %p107, %p108
    %p111 = scmp.ne.s32.totalorder %s96, %s110
    %p112 = scmp.eq.s32.totalorder %s23, 0
    %p113 = por %p111, %p112
    %s115 = sadd.s32 %s114, 1
    %p118 = scmp.eq.s32.totalorder %s17, 1
    %p119 = scmp.ne.s32.totalorder %s114, %s116
    %p120 = scmp.eq.s32.totalorder %s17, 0
    %p121 = por %p119, %p120
    %p122 = scmp.ne.s32.totalorder %s114, %s116
    %p123 = scmp.eq.s32.totalorder %s22, 1
    %p124 = por %p122, %p123
    %p125 = scmp.ne.s32.totalorder %s116, %s117
    %p126 = scmp.eq.s32.totalorder %s22, 0
    %p127 = por %p125, %p126
    %p128 = scmp.ne.s32.totalorder %s116, %s117
    %p129 = scmp.eq.s32.totalorder %s23, 1
    %p130 = por %p128, %p129
    %p132 = scmp.ne.s32.totalorder %s117, %s131
    %p133 = scmp.eq.s32.totalorder %s23, 0
    %p134 = por %p132, %p133
    %s136 = sadd.s32 %s135, 1
    %p139 = scmp.eq.s32.totalorder %s17, 1
    %p140 = scmp.ne.s32.totalorder %s135, %s137
    %p141 = scmp.eq.s32.totalorder %s17, 0
    %p142 = por %p140, %p141
    %p143 = scmp.ne.s32.totalorder %s135, %s137
    %p144 = scmp.eq.s32.totalorder %s22, 1
    %p145 = por %p143, %p144
    %p146 = scmp.ne.s32.totalorder %s137, %s138
    %p147 = scmp.eq.s32.totalorder %s22, 0
    %p148 = por %p146, %p147
    %p149 = scmp.ne.s32.totalorder %s137, %s138
    %p150 = scmp.eq.s32.totalorder %s23, 1
    %p151 = por %p149, %p150
    %p153 = scmp.ne.s32.totalorder %s138, %s152
    %p154 = scmp.eq.s32.totalorder %s23, 0
    %p155 = por %p153, %p154
    %s157 = sadd.s32 %s156, 1
    %p160 = scmp.eq.s32.totalorder %s17, 1
    %p161 = scmp.ne.s32.totalorder %s156, %s158
    %p162 = scmp.eq.s32.totalorder %s17, 0
    %p163 = por %p161, %p162
    %p164 = scmp.ne.s32.totalorder %s156, %s158
    %p165 = scmp.eq.s32.totalorder %s22, 1
    %p166 = por %p164, %p165
    %p167 = scmp.ne.s32.totalorder %s158, %s159
    %p168 = scmp.eq.s32.totalorder %s22, 0
    %p169 = por %p167, %p168
    %p170 = scmp.ne.s32.totalorder %s158, %s159
    %p171 = scmp.eq.s32.totalorder %s23, 1
    %p172 = por %p170, %p171
    %p174 = scmp.ne.s32.totalorder %s159, %s173
    %p175 = scmp.eq.s32.totalorder %s23, 0
    %p176 = por %p174, %p175
    %s178 = sadd.s32 %s177, 1
    %p181 = scmp.eq.s32.totalorder %s17, 1
    %p182 = scmp.ne.s32.totalorder %s177, %s179
    %p183 = scmp.eq.s32.totalorder %s17, 0
    %p184 = por %p182, %p183
    %p185 = scmp.ne.s32.totalorder %s177, %s179
    %p186 = scmp.eq.s32.totalorder %s22, 1
    %p187 = por %p185, %p186
    %p188 = scmp.ne.s32.totalorder %s179, %s180
    %p189 = scmp.eq.s32.totalorder %s22, 0
    %p190 = por %p188, %p189
    %p191 = scmp.ne.s32.totalorder %s179, %s180
    %p192 = scmp.eq.s32.totalorder %s23, 1
    %p193 = por %p191, %p192
    %p195 = scmp.ne.s32.totalorder %s180, %s194
    %p196 = scmp.eq.s32.totalorder %s23, 0
    %p197 = por %p195, %p196
    %s199 = sadd.s32 %s198, 1
    %p202 = scmp.eq.s32.totalorder %s17, 1
    %p203 = scmp.ne.s32.totalorder %s198, %s200
    %p204 = scmp.eq.s32.totalorder %s17, 0
    %p205 = por %p203, %p204
    %p206 = scmp.ne.s32.totalorder %s198, %s200
    %p207 = scmp.eq.s32.totalorder %s22, 1
    %p208 = por %p206, %p207
    %p209 = scmp.ne.s32.totalorder %s200, %s201
    %p210 = scmp.eq.s32.totalorder %s22, 0
    %p211 = por %p209, %p210
    %p212 = scmp.ne.s32.totalorder %s200, %s201
    %p213 = scmp.eq.s32.totalorder %s23, 1
    %p214 = por %p212, %p213
    %p216 = scmp.ne.s32.totalorder %s201, %s215
    %p217 = scmp.eq.s32.totalorder %s23, 0
    %p218 = por %p216, %p217
    %s220 = sadd.s32 %s219, 1
    %p223 = scmp.eq.s32.totalorder %s17, 1
    %p224 = scmp.ne.s32.totalorder %s219, %s221
    %p225 = scmp.eq.s32.totalorder %s17, 0
    %p226 = por %p224, %p225
    %p227 = scmp.ne.s32.totalorder %s219, %s221
    %p228 = scmp.eq.s32.totalorder %s22, 1
    %p229 = por %p227, %p228
    %p230 = scmp.ne.s32.totalorder %s221, %s222
    %p231 = scmp.eq.s32.totalorder %s22, 0
    %p232 = por %p230, %p231
    %p233 = scmp.ne.s32.totalorder %s221, %s222
    %p234 = scmp.eq.s32.totalorder %s23, 1
    %p235 = por %p233, %p234
    %p237 = scmp.ne.s32.totalorder %s222, %s236
    %p238 = scmp.eq.s32.totalorder %s23, 0
    %p239 = por %p237, %p238
    %s241 = sadd.s32 %s240, 1
    %p244 = scmp.eq.s32.totalorder %s17, 1
    %p245 = scmp.ne.s32.totalorder %s240, %s242
    %p246 = scmp.eq.s32.totalorder %s17, 0
    %p247 = por %p245, %p246
    %p248 = scmp.ne.s32.totalorder %s240, %s242
    %p249 = scmp.eq.s32.totalorder %s22, 1
    %p250 = por %p248, %p249
    %p251 = scmp.ne.s32.totalorder %s242, %s243
    %p252 = scmp.eq.s32.totalorder %s22, 0
    %p253 = por %p251, %p252
    %p254 = scmp.ne.s32.totalorder %s242, %s243
    %p255 = scmp.eq.s32.totalorder %s23, 1
    %p256 = por %p254, %p255
    %p258 = scmp.ne.s32.totalorder %s243, %s257
    %p259 = scmp.eq.s32.totalorder %s23, 0
    %p260 = por %p258, %p259
    %s261 = ssub.s32 %s17, %s24
    %p262 = scmp.eq.s32.totalorder %s261, 0
    %s264 = sadd.s32 %s263, 1
    %s265 = scalar_select %p262, %s263, %s264
    %p268 = pneg %p262
    %p269 = scmp.eq.s32.totalorder %s17, 1
    %p270 = por %p268, %p269
    %p271 = scmp.ne.s32.totalorder %s263, %s266
    %p272 = scmp.eq.s32.totalorder %s17, 0
    %p273 = por %p271, %p272
    %p274 = scmp.ne.s32.totalorder %s263, %s266
    %p275 = scmp.eq.s32.totalorder %s22, 1
    %p276 = por %p274, %p275
    %p277 = scmp.ne.s32.totalorder %s266, %s267
    %p278 = scmp.eq.s32.totalorder %s22, 0
    %p279 = por %p277, %p278
    %p280 = scmp.ne.s32.totalorder %s266, %s267
    %p281 = scmp.eq.s32.totalorder %s23, 1
    %p282 = por %p280, %p281
    %p284 = scmp.ne.s32.totalorder %s267, %s283
    %p285 = scmp.eq.s32.totalorder %s23, 0
    %p286 = por %p284, %p285
    %p287 = scmp.le.s32.totalorder 1, %s17
    %p288 = scmp.lt.s32.totalorder %s17, 3
    %p289 = pnand %p287, %p288
    %p290 = pneg %p289
    // Predicated region
    $region9: #{classifier9_forward.1} parent=5 // pred_check
      _
    $region10: #{classifier9_forward.1} parent=5 // pred_check_branch
      %292 = sbr.rel (%p289) target = $region12
    $region11: #{classifier9_forward.1} parent=5 // pred_region
      %s293 = ssub.s32 %s17, 1
      // Predicated region
      $region13: #{classifier9_forward.1} parent=11 // pred_check
        %p294 = pneg %p64
      $region14: #{classifier9_forward.1} parent=11 // pred_check_branch
        %296 = sbr.rel (%p294) target = $region16
      $region15: #{classifier9_forward.1} parent=11 // pred_region
        _
      $region16: #{classifier9_forward.1} parent=11 // pred_fallthru
        _
      // Predicated region
      $region17: #{classifier9_forward.1} parent=11 // pred_check
        %p297 = pneg %p85
      $region18: #{classifier9_forward.1} parent=11 // pred_check_branch
        %299 = sbr.rel (%p297) target = $region20
      $region19: #{classifier9_forward.1} parent=11 // pred_region
        _
      $region20: #{classifier9_forward.1} parent=11 // pred_fallthru
        _
      // Predicated region
      $region21: #{classifier9_forward.1} parent=11 // pred_check
        %p300 = pneg %p106
      $region22: #{classifier9_forward.1} parent=11 // pred_check_branch
        %302 = sbr.rel (%p300) target = $region24
      $region23: #{classifier9_forward.1} parent=11 // pred_region
        _
      $region24: #{classifier9_forward.1} parent=11 // pred_fallthru
        _
      // Predicated region
      $region25: #{classifier9_forward.1} parent=11 // pred_check
        %p303 = pneg %p127
      $region26: #{classifier9_forward.1} parent=11 // pred_check_branch
        %305 = sbr.rel (%p303) target = $region28
      $region27: #{classifier9_forward.1} parent=11 // pred_region
        _
      $region28: #{classifier9_forward.1} parent=11 // pred_fallthru
        _
      // Predicated region
      $region29: #{classifier9_forward.1} parent=11 // pred_check
        %p306 = pneg %p148
      $region30: #{classifier9_forward.1} parent=11 // pred_check_branch
        %308 = sbr.rel (%p306) target = $region32
      $region31: #{classifier9_forward.1} parent=11 // pred_region
        _
      $region32: #{classifier9_forward.1} parent=11 // pred_fallthru
        _
      // Predicated region
      $region33: #{classifier9_forward.1} parent=11 // pred_check
        %p309 = pneg %p169
      $region34: #{classifier9_forward.1} parent=11 // pred_check_branch
        %311 = sbr.rel (%p309) target = $region36
      $region35: #{classifier9_forward.1} parent=11 // pred_region
        _
      $region36: #{classifier9_forward.1} parent=11 // pred_fallthru
        _
      // Predicated region
      $region37: #{classifier9_forward.1} parent=11 // pred_check
        %p312 = pneg %p190
      $region38: #{classifier9_forward.1} parent=11 // pred_check_branch
        %314 = sbr.rel (%p312) target = $region40
      $region39: #{classifier9_forward.1} parent=11 // pred_region
        _
      $region40: #{classifier9_forward.1} parent=11 // pred_fallthru
        _
      // Predicated region
      $region41: #{classifier9_forward.1} parent=11 // pred_check
        %p315 = pneg %p211
      $region42: #{classifier9_forward.1} parent=11 // pred_check_branch
        %317 = sbr.rel (%p315) target = $region44
      $region43: #{classifier9_forward.1} parent=11 // pred_region
        _
      $region44: #{classifier9_forward.1} parent=11 // pred_fallthru
        _
      // Predicated region
      $region45: #{classifier9_forward.1} parent=11 // pred_check
        %p318 = pneg %p232
      $region46: #{classifier9_forward.1} parent=11 // pred_check_branch
        %320 = sbr.rel (%p318) target = $region48
      $region47: #{classifier9_forward.1} parent=11 // pred_region
        _
      $region48: #{classifier9_forward.1} parent=11 // pred_fallthru
        _
      // Predicated region
      $region49: #{classifier9_forward.1} parent=11 // pred_check
        %p321 = pneg %p253
      $region50: #{classifier9_forward.1} parent=11 // pred_check_branch
        %323 = sbr.rel (%p321) target = $region52
      $region51: #{classifier9_forward.1} parent=11 // pred_region
        _
      $region52: #{classifier9_forward.1} parent=11 // pred_fallthru
        _
    $region12: #{classifier9_forward.1} parent=5 // pred_fallthru
      _
    %p324 = scmp.lt.s32.totalorder %s17, 2
    // Predicated region
    $region53: #{classifier9_forward.1} parent=5 // pred_check
      %p325 = pneg %p324
    $region54: #{classifier9_forward.1} parent=5 // pred_check_branch
      %327 = sbr.rel (%p325) target = $region56
    $region55: #{classifier9_forward.1} parent=5 // pred_region
      // Predicated region
      $region57: #{classifier9_forward.1} parent=55 // pred_check
        %p328 = pneg %p37
      $region58: #{classifier9_forward.1} parent=55 // pred_check_branch
        %330 = sbr.rel (%p328) target = $region60
      $region59: #{classifier9_forward.1} parent=55 // pred_region
        %p331 = scmp.lt.s32.totalorder %s17, 1
        %s332 = scalar_select %p331, %s17, 1
        %s333 = smul.addr %s332, 8
        %s334 = smul.addr %s333, 4
        %s335 = scalar_lea.vmem %s0, %s334
      $region60: #{classifier9_forward.1} parent=55 // pred_fallthru
        _
    $region56: #{classifier9_forward.1} parent=5 // pred_fallthru
      _
    %p336 = scmp.le.s32.totalorder 1, %s17
    %p337 = scmp.lt.s32.totalorder %s17, 3
    %p338 = pnand %p336, %p337
    %p339 = pneg %p338
    // Predicated region
    $region61: #{classifier9_forward.1} parent=5 // pred_check
      _
    $region62: #{classifier9_forward.1} parent=5 // pred_check_branch
      %341 = sbr.rel (%p338) target = $region64
    $region63: #{classifier9_forward.1} parent=5 // pred_region
      %s342 = ssub.s32 %s17, 1
      %p343 = scmp.lt.s32.totalorder %s22, 1
      %s344 = scalar_select %p343, %s22, 1
      %s345 = smul.addr %s344, 8
      %s346 = smul.addr %s345, 4
      %s347 = scalar_lea.vmem %s0, %s346
      %p348 = pneg %p43
      %p349 = pneg %p40
      %p350 = pneg %p64
      %p351 = pneg %p61
      %p352 = pneg %p85
      %p353 = pneg %p82
      %p354 = pneg %p106
      %p355 = pneg %p103
      %p356 = pneg %p127
      %p357 = pneg %p124
      %p358 = pneg %p148
      %p359 = pneg %p145
      %p360 = pneg %p169
      %p361 = pneg %p166
      %p362 = pneg %p190
      %p363 = pneg %p187
      %p364 = pneg %p211
      %p365 = pneg %p208
      %p366 = pneg %p232
      %p367 = pneg %p229
      %p368 = pneg %p253
      %p369 = pneg %p250
      %p370 = pneg %p279
      %p371 = pneg %p276
      %p372 = scmp.lt.s32.totalorder %s22, 1
      %s373 = scalar_select %p372, %s22, 1
      %s374 = smul.addr %s373, 2
      %s375 = smul.addr %s374, 8
      %s376 = scalar_lea.vmem %s11, %s375
      %p377 = scmp.lt.s32.totalorder %s22, 1
      %s378 = scalar_select %p377, %s22, 1
      %s379 = smul.addr %s378, 8
      %s380 = smul.addr %s379, 4
      %s381 = scalar_lea.vmem %s0, %s380
      %p382 = scmp.lt.s32.totalorder %s22, 1
      %s383 = scalar_select %p382, %s22, 1
      %s384 = smul.addr %s383, 2
      %s385 = smul.addr %s384, 8
      %s386 = scalar_lea.vmem %s11, %s385
      %v387 = vld [vmem:[%s381] sm:$0x77]
      %v388 = vld [vmem:[%s381 + $0x8] sm:$0x77]
      %v389 = vld [vmem:[%s381 + $0x10] sm:$0x77]
      %v390 = vld [vmem:[%s381 + $0x18] sm:$0x77]
      %v391 = vld [vmem:[%s1] sm:$0xff]
      %v392 = vld [vmem:[%s1 + $0x8] sm:$0xff]
      %v393 = vld [vmem:[%s1 + $0x10] sm:$0xf]
      %s394 = scalar_lea.vmem %s1, 24
      %v395 = vld [vmem:[%s394] sm:$0xff]
      %v396 = vld [vmem:[%s394 + $0x8] sm:$0xff]
      %v397 = vld [vmem:[%s394 + $0x10] sm:$0xf]
      %v402 = vcombine.high %v387, %v387
      %v403 = vcombine.high %v388, %v388
      %v404 = vcombine.high %v389, %v389
      %v405 = vcombine.high %v390, %v390
      %406 = vrot.lane.b32.xlu0 %v387, 127
      %v407 = vpop.permute.xlu0 %406
      %408 = vrot.lane.b32.xlu0 %v402, 127
      %v409 = vpop.permute.xlu0 %408
      %410 = vrot.lane.b32.xlu0 %v388, 127
      %v411 = vpop.permute.xlu0 %410
      %412 = vrot.lane.b32.xlu0 %v403, 127
      %v413 = vpop.permute.xlu0 %412
      %414 = vrot.lane.b32.xlu0 %v389, 127
      %v415 = vpop.permute.xlu0 %414
      %416 = vrot.lane.b32.xlu0 %v404, 127
      %v417 = vpop.permute.xlu0 %416
      %418 = vrot.lane.b32.xlu0 %v390, 127
      %v419 = vpop.permute.xlu0 %418
      %420 = vrot.lane.b32.xlu0 %v405, 127
      %v421 = vpop.permute.xlu0 %420
      %vm422 = vcmask 1039360
      %v423 = vsel %vm422, %v407, %v409
      %v424 = vsel %vm422, %v409, %v411
      %v425 = vsel %vm422, %v411, %v413
      %v426 = vsel %vm422, %v413, %v415
      %v427 = vsel %vm422, %v415, %v417
      %v428 = vsel %vm422, %v417, %v419
      %v429 = vsel %vm422, %v419, %v421
      %vm430 = vcmask 23552
      %v432 = vsel %vm430, %v395, 0
      %v435 = vsel %vm430, %v396, 0
      %v438 = vsel %vm430, %v397, 0
      %vm440 = vcmask 1042432
      %v441 = vsel %vm440, %v423, 0
      %v443 = vsel %vm440, %v424, 0
      %v445 = vsel %vm440, %v425, 0
      %v447 = vsel %vm440, %v426, 0
      %v449 = vsel %vm440, %v427, 0
      %v451 = vsel %vm440, %v428, 0
      %v453 = vsel %vm440, %v429, 0
      %v455 = vsel %vm440, %v421, 0
      %457 = vmatprep.subr.mxu0 %v443
      %458 = vmatpush1.msra.mxu0 %v441
      %459 = vmatprep.subr.mxu0 0.0
      %460 = vmatpush1.msra.mxu0 0.0
      %461 = vmatprep.subr.mxu0 0.0
      %462 = vmatpush1.msra.mxu0 0.0
      %463 = vmatprep.subr.mxu0 0.0
      %464 = vmatpush1.msra.mxu0 0.0
      %465 = vmatprep.subr.mxu0 0.0
      %466 = vmatpush1.msra.mxu0 0.0
      %467 = vmatprep.subr.mxu0 0.0
      %468 = vmatpush1.msra.mxu0 0.0
      %469 = vmatprep.subr.mxu0 0.0
      %470 = vmatpush1.msra.mxu0 0.0
      %471 = vmatprep.subr.mxu0 0.0
      %472 = vmatpush1.msra.mxu0 0.0
      %473 = vmatprep.subr.mxu0 0.0
      %474 = vmatpush1.msra.mxu0 0.0
      %475 = vmatprep.subr.mxu0 0.0
      %476 = vmatpush1.msra.mxu0 0.0
      %477 = vmatprep.subr.mxu0 0.0
      %478 = vmatpush1.msra.mxu0 0.0
      %479 = vmatprep.subr.mxu0 0.0
      %480 = vmatpush1.msra.mxu0 0.0
      %481 = vmatprep.subr.mxu0 0.0
      %482 = vmatpush1.msra.mxu0 0.0
      %483 = vmatprep.subr.mxu0 0.0
      %484 = vmatpush1.msra.mxu0 0.0
      %485 = vmatprep.subr.mxu0 0.0
      %486 = vmatpush1.msra.mxu0 0.0
      %487 = vmatprep.subr.mxu0 0.0
      %488 = vmatpush1.msra.mxu0 0.0
      %489 = vmatprep.subr.mxu0 0.0
      %490 = vmatpush1.msra.mxu0 0.0
      %491 = vmatprep.subr.mxu0 0.0
      %492 = vmatpush1.msra.mxu0 0.0
      %493 = vmatprep.subr.mxu0 0.0
      %494 = vmatpush1.msra.mxu0 0.0
      %495 = vmatprep.subr.mxu0 0.0
      %496 = vmatpush1.msra.mxu0 0.0
      %497 = vmatprep.subr.mxu0 0.0
      %498 = vmatpush1.msra.mxu0 0.0
      %499 = vmatprep.subr.mxu0 0.0
      %500 = vmatpush1.msra.mxu0 0.0
      %501 = vmatprep.subr.mxu0 0.0
      %502 = vmatpush1.msra.mxu0 0.0
      %503 = vmatprep.subr.mxu0 0.0
      %504 = vmatpush1.msra.mxu0 0.0
      %505 = vmatprep.subr.mxu0 0.0
      %506 = vmatpush1.msra.mxu0 0.0
      %507 = vmatprep.subr.mxu0 0.0
      %508 = vmatpush1.msra.mxu0 0.0
      %509 = vmatprep.subr.mxu0 0.0
      %510 = vmatpush1.msra.mxu0 0.0
      %511 = vmatprep.subr.mxu0 0.0
      %512 = vmatpush1.msra.mxu0 0.0
      %513 = vmatprep.subr.mxu0 0.0
      %514 = vmatpush1.msra.mxu0 0.0
      %515 = vmatprep.subr.mxu0 0.0
      %516 = vmatpush1.msra.mxu0 0.0
      %517 = vmatprep.subr.mxu0 0.0
      %518 = vmatpush1.msra.mxu0 0.0
      %519 = vmatprep.subr.mxu0 0.0
      %520 = vmatpush1.msra.mxu0 0.0
      %521 = vmatprep.mubr.f32.mxu0 0.0
      %522 = vmatmul.mubr.f32.gmra.mrb[0].mxu0 %v432
      %v523 = vpop.f32.mrb[0].mxu0
      %v524 = vadd.f32 0.0, %v523
      %v525 = vpop.f32.mrb[0].mxu0
      %v526 = vadd.f32 0.0, %v525
      %527 = vmatprep.mubr.f32.mxu0 0.0
      %528 = vmatmul.mubr.f32.gmra.mrb[0].mxu0 %v435
      %v529 = vpop.f32.mrb[0].mxu0
      %v530 = vadd.f32 0.0, %v529
      %v531 = vpop.f32.mrb[0].mxu0
      %v532 = vadd.f32 0.0, %v531
      %533 = vmatprep.mubr.f32.mxu0 0.0
      %534 = vmatmul.mubr.f32.gmra.mrb[0].mxu0 %v438
      %v535 = vpop.f32.mrb[0].mxu0
      %v536 = vadd.f32 0.0, %v535
      %v537 = vpop.f32.mrb[0].mxu0
      %v538 = vadd.f32 0.0, %v537
      %539 = vdwg.mxu0
      %540 = vmatprep.subr.mxu0 %v447
      %541 = vmatpush1.msra.mxu0 %v445
      %542 = vmatprep.subr.mxu0 0.0
      %543 = vmatpush1.msra.mxu0 0.0
      %544 = vmatprep.subr.mxu0 0.0
      %545 = vmatpush1.msra.mxu0 0.0
      %546 = vmatprep.subr.mxu0 0.0
      %547 = vmatpush1.msra.mxu0 0.0
      %548 = vmatprep.subr.mxu0 0.0
      %549 = vmatpush1.msra.mxu0 0.0
      %550 = vmatprep.subr.mxu0 0.0
      %551 = vmatpush1.msra.mxu0 0.0
      %552 = vmatprep.subr.mxu0 0.0
      %553 = vmatpush1.msra.mxu0 0.0
      %554 = vmatprep.subr.mxu0 0.0
      %555 = vmatpush1.msra.mxu0 0.0
      %556 = vmatprep.subr.mxu0 0.0
      %557 = vmatpush1.msra.mxu0 0.0
      %558 = vmatprep.subr.mxu0 0.0
      %559 = vmatpush1.msra.mxu0 0.0
      %560 = vmatprep.subr.mxu0 0.0
      %561 = vmatpush1.msra.mxu0 0.0
      %562 = vmatprep.subr.mxu0 0.0
      %563 = vmatpush1.msra.mxu0 0.0
      %564 = vmatprep.subr.mxu0 0.0
      %565 = vmatpush1.msra.mxu0 0.0
      %566 = vmatprep.subr.mxu0 0.0
      %567 = vmatpush1.msra.mxu0 0.0
      %568 = vmatprep.subr.mxu0 0.0
      %569 = vmatpush1.msra.mxu0 0.0
      %570 = vmatprep.subr.mxu0 0.0
      %571 = vmatpush1.msra.mxu0 0.0
      %572 = vmatprep.subr.mxu0 0.0
      %573 = vmatpush1.msra.mxu0 0.0
      %574 = vmatprep.subr.mxu0 0.0
      %575 = vmatpush1.msra.mxu0 0.0
      %576 = vmatprep.subr.mxu0 0.0
      %577 = vmatpush1.msra.mxu0 0.0
      %578 = vmatprep.subr.mxu0 0.0
      %579 = vmatpush1.msra.mxu0 0.0
      %580 = vmatprep.subr.mxu0 0.0
      %581 = vmatpush1.msra.mxu0 0.0
      %582 = vmatprep.subr.mxu0 0.0
      %583 = vmatpush1.msra.mxu0 0.0
      %584 = vmatprep.subr.mxu0 0.0
      %585 = vmatpush1.msra.mxu0 0.0
      %586 = vmatprep.subr.mxu0 0.0
      %587 = vmatpush1.msra.mxu0 0.0
      %588 = vmatprep.subr.mxu0 0.0
      %589 = vmatpush1.msra.mxu0 0.0
      %590 = vmatprep.subr.mxu0 0.0
      %591 = vmatpush1.msra.mxu0 0.0
      %592 = vmatprep.subr.mxu0 0.0
      %593 = vmatpush1.msra.mxu0 0.0
      %594 = vmatprep.subr.mxu0 0.0
      %595 = vmatpush1.msra.mxu0 0.0
      %596 = vmatprep.subr.mxu0 0.0
      %597 = vmatpush1.msra.mxu0 0.0
      %598 = vmatprep.subr.mxu0 0.0
      %599 = vmatpush1.msra.mxu0 0.0
      %600 = vmatprep.subr.mxu0 0.0
      %601 = vmatpush1.msra.mxu0 0.0
      %602 = vmatprep.subr.mxu0 0.0
      %603 = vmatpush1.msra.mxu0 0.0
      %604 = vmatprep.mubr.f32.mxu0 0.0
      %605 = vmatmul.mubr.f32.gmra.mrb[0].mxu0 %v432
      %v606 = vpop.f32.mrb[0].mxu0
      %v607 = vadd.f32 0.0, %v606
      %v608 = vpop.f32.mrb[0].mxu0
      %v609 = vadd.f32 0.0, %v608
      %610 = vmatprep.mubr.f32.mxu0 0.0
      %611 = vmatmul.mubr.f32.gmra.mrb[0].mxu0 %v435
      %v612 = vpop.f32.mrb[0].mxu0
      %v613 = vadd.f32 0.0, %v612
      %v614 = vpop.f32.mrb[0].mxu0
      %v615 = vadd.f32 0.0, %v614
      %616 = vmatprep.mubr.f32.mxu0 0.0
      %617 = vmatmul.mubr.f32.gmra.mrb[0].mxu0 %v438
      %v618 = vpop.f32.mrb[0].mxu0
      %v619 = vadd.f32 0.0, %v618
      %v620 = vpop.f32.mrb[0].mxu0
      %v621 = vadd.f32 0.0, %v620
      %622 = vdwg.mxu0
      %623 = vmatprep.subr.mxu0 %v451
      %624 = vmatpush1.msra.mxu0 %v449
      %625 = vmatprep.subr.mxu0 0.0
      %626 = vmatpush1.msra.mxu0 0.0
      %627 = vmatprep.subr.mxu0 0.0
      %628 = vmatpush1.msra.mxu0 0.0
      %629 = vmatprep.subr.mxu0 0.0
      %630 = vmatpush1.msra.mxu0 0.0
      %631 = vmatprep.subr.mxu0 0.0
      %632 = vmatpush1.msra.mxu0 0.0
      %633 = vmatprep.subr.mxu0 0.0
      %634 = vmatpush1.msra.mxu0 0.0
      %635 = vmatprep.subr.mxu0 0.0
      %636 = vmatpush1.msra.mxu0 0.0
      %637 = vmatprep.subr.mxu0 0.0
      %638 = vmatpush1.msra.mxu0 0.0
      %639 = vmatprep.subr.mxu0 0.0
      %640 = vmatpush1.msra.mxu0 0.0
      %641 = vmatprep.subr.mxu0 0.0
      %642 = vmatpush1.msra.mxu0 0.0
      %643 = vmatprep.subr.mxu0 0.0
      %644 = vmatpush1.msra.mxu0 0.0
      %645 = vmatprep.subr.mxu0 0.0
      %646 = vmatpush1.msra.mxu0 0.0
      %647 = vmatprep.subr.mxu0 0.0
      %648 = vmatpush1.msra.mxu0 0.0
      %649 = vmatprep.subr.mxu0 0.0
      %650 = vmatpush1.msra.mxu0 0.0
      %651 = vmatprep.subr.mxu0 0.0
      %652 = vmatpush1.msra.mxu0 0.0
      %653 = vmatprep.subr.mxu0 0.0
      %654 = vmatpush1.msra.mxu0 0.0
      %655 = vmatprep.subr.mxu0 0.0
      %656 = vmatpush1.msra.mxu0 0.0
      %657 = vmatprep.subr.mxu0 0.0
      %658 = vmatpush1.msra.mxu0 0.0
      %659 = vmatprep.subr.mxu0 0.0
      %660 = vmatpush1.msra.mxu0 0.0
      %661 = vmatprep.subr.mxu0 0.0
      %662 = vmatpush1.msra.mxu0 0.0
      %663 = vmatprep.subr.mxu0 0.0
      %664 = vmatpush1.msra.mxu0 0.0
      %665 = vmatprep.subr.mxu0 0.0
      %666 = vmatpush1.msra.mxu0 0.0
      %667 = vmatprep.subr.mxu0 0.0
      %668 = vmatpush1.msra.mxu0 0.0
      %669 = vmatprep.subr.mxu0 0.0
      %670 = vmatpush1.msra.mxu0 0.0
      %671 = vmatprep.subr.mxu0 0.0
      %672 = vmatpush1.msra.mxu0 0.0
      %673 = vmatprep.subr.mxu0 0.0
      %674 = vmatpush1.msra.mxu0 0.0
      %675 = vmatprep.subr.mxu0 0.0
      %676 = vmatpush1.msra.mxu0 0.0
      %677 = vmatprep.subr.mxu0 0.0
      %678 = vmatpush1.msra.mxu0 0.0
      %679 = vmatprep.subr.mxu0 0.0
      %680 = vmatpush1.msra.mxu0 0.0
      %681 = vmatprep.subr.mxu0 0.0
      %682 = vmatpush1.msra.mxu0 0.0
      %683 = vmatprep.subr.mxu0 0.0
      %684 = vmatpush1.msra.mxu0 0.0
      %685 = vmatprep.subr.mxu0 0.0
      %686 = vmatpush1.msra.mxu0 0.0
      %687 = vmatprep.mubr.f32.mxu0 0.0
      %688 = vmatmul.mubr.f32.gmra.mrb[0].mxu0 %v432
      %v689 = vpop.f32.mrb[0].mxu0
      %v690 = vadd.f32 0.0, %v689
      %v691 = vpop.f32.mrb[0].mxu0
      %v692 = vadd.f32 0.0, %v691
      %693 = vmatprep.mubr.f32.mxu0 0.0
      %694 = vmatmul.mubr.f32.gmra.mrb[0].mxu0 %v435
      %v695 = vpop.f32.mrb[0].mxu0
      %v696 = vadd.f32 0.0, %v695
      %v697 = vpop.f32.mrb[0].mxu0
      %v698 = vadd.f32 0.0, %v697
      %699 = vmatprep.mubr.f32.mxu0 0.0
      %700 = vmatmul.mubr.f32.gmra.mrb[0].mxu0 %v438
      %v701 = vpop.f32.mrb[0].mxu0
      %v702 = vadd.f32 0.0, %v701
      %v703 = vpop.f32.mrb[0].mxu0
      %v704 = vadd.f32 0.0, %v703
      %705 = vdwg.mxu0
      %706 = vmatprep.subr.mxu0 %v455
      %707 = vmatpush1.msra.mxu0 %v453
      %708 = vmatprep.subr.mxu0 0.0
      %709 = vmatpush1.msra.mxu0 0.0
      %710 = vmatprep.subr.mxu0 0.0
      %711 = vmatpush1.msra.mxu0 0.0
      %712 = vmatprep.subr.mxu0 0.0
      %713 = vmatpush1.msra.mxu0 0.0
      %714 = vmatprep.subr.mxu0 0.0
      %715 = vmatpush1.msra.mxu0 0.0
      %716 = vmatprep.subr.mxu0 0.0
      %717 = vmatpush1.msra.mxu0 0.0
      %718 = vmatprep.subr.mxu0 0.0
      %719 = vmatpush1.msra.mxu0 0.0
      %720 = vmatprep.subr.mxu0 0.0
      %721 = vmatpush1.msra.mxu0 0.0
      %722 = vmatprep.subr.mxu0 0.0
      %723 = vmatpush1.msra.mxu0 0.0
      %724 = vmatprep.subr.mxu0 0.0
      %725 = vmatpush1.msra.mxu0 0.0
      %726 = vmatprep.subr.mxu0 0.0
      %727 = vmatpush1.msra.mxu0 0.0
      %728 = vmatprep.subr.mxu0 0.0
      %729 = vmatpush1.msra.mxu0 0.0
      %730 = vmatprep.subr.mxu0 0.0
      %731 = vmatpush1.msra.mxu0 0.0
      %732 = vmatprep.subr.mxu0 0.0
      %733 = vmatpush1.msra.mxu0 0.0
      %734 = vmatprep.subr.mxu0 0.0
      %735 = vmatpush1.msra.mxu0 0.0
      %736 = vmatprep.subr.mxu0 0.0
      %737 = vmatpush1.msra.mxu0 0.0
      %738 = vmatprep.subr.mxu0 0.0
      %739 = vmatpush1.msra.mxu0 0.0
      %740 = vmatprep.subr.mxu0 0.0
      %741 = vmatpush1.msra.mxu0 0.0
      %742 = vmatprep.subr.mxu0 0.0
      %743 = vmatpush1.msra.mxu0 0.0
      %744 = vmatprep.subr.mxu0 0.0
      %745 = vmatpush1.msra.mxu0 0.0
      %746 = vmatprep.subr.mxu0 0.0
      %747 = vmatpush1.msra.mxu0 0.0
      %748 = vmatprep.subr.mxu0 0.0
      %749 = vmatpush1.msra.mxu0 0.0
      %750 = vmatprep.subr.mxu0 0.0
      %751 = vmatpush1.msra.mxu0 0.0
      %752 = vmatprep.subr.mxu0 0.0
      %753 = vmatpush1.msra.mxu0 0.0
      %754 = vmatprep.subr.mxu0 0.0
      %755 = vmatpush1.msra.mxu0 0.0
      %756 = vmatprep.subr.mxu0 0.0
      %757 = vmatpush1.msra.mxu0 0.0
      %758 = vmatprep.subr.mxu0 0.0
      %759 = vmatpush1.msra.mxu0 0.0
      %760 = vmatprep.subr.mxu0 0.0
      %761 = vmatpush1.msra.mxu0 0.0
      %762 = vmatprep.subr.mxu0 0.0
      %763 = vmatpush1.msra.mxu0 0.0
      %764 = vmatprep.subr.mxu0 0.0
      %765 = vmatpush1.msra.mxu0 0.0
      %766 = vmatprep.subr.mxu0 0.0
      %767 = vmatpush1.msra.mxu0 0.0
      %768 = vmatprep.subr.mxu0 0.0
      %769 = vmatpush1.msra.mxu0 0.0
      %770 = vmatprep.mubr.f32.mxu0 0.0
      %771 = vmatmul.mubr.f32.gmra.mrb[0].mxu0 %v432
      %v772 = vpop.f32.mrb[0].mxu0
      %v773 = vadd.f32 0.0, %v772
      %v774 = vpop.f32.mrb[0].mxu0
      %v775 = vadd.f32 0.0, %v774
      %776 = vmatprep.mubr.f32.mxu0 0.0
      %777 = vmatmul.mubr.f32.gmra.mrb[0].mxu0 %v435
      %v778 = vpop.f32.mrb[0].mxu0
      %v779 = vadd.f32 0.0, %v778
      %v780 = vpop.f32.mrb[0].mxu0
      %v781 = vadd.f32 0.0, %v780
      %782 = vmatprep.mubr.f32.mxu0 0.0
      %783 = vmatmul.mubr.f32.gmra.mrb[0].mxu0 %v438
      %v784 = vpop.f32.mrb[0].mxu0
      %v785 = vadd.f32 0.0, %v784
      %v786 = vpop.f32.mrb[0].mxu0
      %v787 = vadd.f32 0.0, %v786
      %788 = vdwg.mxu0
      %v790 = vsel %vm430, %v391, 0
      %v793 = vsel %vm430, %v392, 0
      %v796 = vsel %vm430, %v393, 0
      %v798 = vsel %vm440, %v387, 0
      %v800 = vsel %vm440, %v402, 0
      %v802 = vsel %vm440, %v388, 0
      %v804 = vsel %vm440, %v403, 0
      %v806 = vsel %vm440, %v389, 0
      %v808 = vsel %vm440, %v404, 0
      %v810 = vsel %vm440, %v390, 0
      %v812 = vsel %vm440, %v405, 0
      %814 = vmatprep.subr.mxu0 %v800
      %815 = vmatpush1.msra.mxu0 %v798
      %816 = vmatprep.subr.mxu0 0.0
      %817 = vmatpush1.msra.mxu0 0.0
      %818 = vmatprep.subr.mxu0 0.0
      %819 = vmatpush1.msra.mxu0 0.0
      %820 = vmatprep.subr.mxu0 0.0
      %821 = vmatpush1.msra.mxu0 0.0
      %822 = vmatprep.subr.mxu0 0.0
      %823 = vmatpush1.msra.mxu0 0.0
      %824 = vmatprep.subr.mxu0 0.0
      %825 = vmatpush1.msra.mxu0 0.0
      %826 = vmatprep.subr.mxu0 0.0
      %827 = vmatpush1.msra.mxu0 0.0
      %828 = vmatprep.subr.mxu0 0.0
      %829 = vmatpush1.msra.mxu0 0.0
      %830 = vmatprep.subr.mxu0 0.0
      %831 = vmatpush1.msra.mxu0 0.0
      %832 = vmatprep.subr.mxu0 0.0
      %833 = vmatpush1.msra.mxu0 0.0
      %834 = vmatprep.subr.mxu0 0.0
      %835 = vmatpush1.msra.mxu0 0.0
      %836 = vmatprep.subr.mxu0 0.0
      %837 = vmatpush1.msra.mxu0 0.0
      %838 = vmatprep.subr.mxu0 0.0
      %839 = vmatpush1.msra.mxu0 0.0
      %840 = vmatprep.subr.mxu0 0.0
      %841 = vmatpush1.msra.mxu0 0.0
      %842 = vmatprep.subr.mxu0 0.0
      %843 = vmatpush1.msra.mxu0 0.0
      %844 = vmatprep.subr.mxu0 0.0
      %845 = vmatpush1.msra.mxu0 0.0
      %846 = vmatprep.subr.mxu0 0.0
      %847 = vmatpush1.msra.mxu0 0.0
      %848 = vmatprep.subr.mxu0 0.0
      %849 = vmatpush1.msra.mxu0 0.0
      %850 = vmatprep.subr.mxu0 0.0
      %851 = vmatpush1.msra.mxu0 0.0
      %852 = vmatprep.subr.mxu0 0.0
      %853 = vmatpush1.msra.mxu0 0.0
      %854 = vmatprep.subr.mxu0 0.0
      %855 = vmatpush1.msra.mxu0 0.0
      %856 = vmatprep.subr.mxu0 0.0
      %857 = vmatpush1.msra.mxu0 0.0
      %858 = vmatprep.subr.mxu0 0.0
      %859 = vmatpush1.msra.mxu0 0.0
      %860 = vmatprep.subr.mxu0 0.0
      %861 = vmatpush1.msra.mxu0 0.0
      %862 = vmatprep.subr.mxu0 0.0
      %863 = vmatpush1.msra.mxu0 0.0
      %864 = vmatprep.subr.mxu0 0.0
      %865 = vmatpush1.msra.mxu0 0.0
      %866 = vmatprep.subr.mxu0 0.0
      %867 = vmatpush1.msra.mxu0 0.0
      %868 = vmatprep.subr.mxu0 0.0
      %869 = vmatpush1.msra.mxu0 0.0
      %870 = vmatprep.subr.mxu0 0.0
      %871 = vmatpush1.msra.mxu0 0.0
      %872 = vmatprep.subr.mxu0 0.0
      %873 = vmatpush1.msra.mxu0 0.0
      %874 = vmatprep.subr.mxu0 0.0
      %875 = vmatpush1.msra.mxu0 0.0
      %876 = vmatprep.subr.mxu0 0.0
      %877 = vmatpush1.msra.mxu0 0.0
      %878 = vmatprep.mubr.f32.mxu0 0.0
      %879 = vmatmul.mubr.f32.gmra.mrb[0].mxu0 %v790
      %v880 = vpop.f32.mrb[0].mxu0
      %v881 = vadd.f32 %v524, %v880
      %v882 = vpop.f32.mrb[0].mxu0
      %v883 = vadd.f32 %v526, %v882
      %884 = vmatprep.mubr.f32.mxu0 0.0
      %885 = vmatmul.mubr.f32.gmra.mrb[0].mxu0 %v793
      %v886 = vpop.f32.mrb[0].mxu0
      %v887 = vadd.f32 %v530, %v886
      %v888 = vpop.f32.mrb[0].mxu0
      %v889 = vadd.f32 %v532, %v888
      %890 = vmatprep.mubr.f32.mxu0 0.0
      %891 = vmatmul.mubr.f32.gmra.mrb[0].mxu0 %v796
      %v892 = vpop.f32.mrb[0].mxu0
      %v893 = vadd.f32 %v536, %v892
      %v894 = vpop.f32.mrb[0].mxu0
      %v895 = vadd.f32 %v538, %v894
      %896 = vdwg.mxu0
      %897 = vmatprep.subr.mxu0 %v804
      %898 = vmatpush1.msra.mxu0 %v802
      %899 = vmatprep.subr.mxu0 0.0
      %900 = vmatpush1.msra.mxu0 0.0
      %901 = vmatprep.subr.mxu0 0.0
      %902 = vmatpush1.msra.mxu0 0.0
      %903 = vmatprep.subr.mxu0 0.0
      %904 = vmatpush1.msra.mxu0 0.0
      %905 = vmatprep.subr.mxu0 0.0
      %906 = vmatpush1.msra.mxu0 0.0
      %907 = vmatprep.subr.mxu0 0.0
      %908 = vmatpush1.msra.mxu0 0.0
      %909 = vmatprep.subr.mxu0 0.0
      %910 = vmatpush1.msra.mxu0 0.0
      %911 = vmatprep.subr.mxu0 0.0
      %912 = vmatpush1.msra.mxu0 0.0
      %913 = vmatprep.subr.mxu0 0.0
      %914 = vmatpush1.msra.mxu0 0.0
      %915 = vmatprep.subr.mxu0 0.0
      %916 = vmatpush1.msra.mxu0 0.0
      %917 = vmatprep.subr.mxu0 0.0
      %918 = vmatpush1.msra.mxu0 0.0
      %919 = vmatprep.subr.mxu0 0.0
      %920 = vmatpush1.msra.mxu0 0.0
      %921 = vmatprep.subr.mxu0 0.0
      %922 = vmatpush1.msra.mxu0 0.0
      %923 = vmatprep.subr.mxu0 0.0
      %924 = vmatpush1.msra.mxu0 0.0
      %925 = vmatprep.subr.mxu0 0.0
      %926 = vmatpush1.msra.mxu0 0.0
      %927 = vmatprep.subr.mxu0 0.0
      %928 = vmatpush1.msra.mxu0 0.0
      %929 = vmatprep.subr.mxu0 0.0
      %930 = vmatpush1.msra.mxu0 0.0
      %931 = vmatprep.subr.mxu0 0.0
      %932 = vmatpush1.msra.mxu0 0.0
      %933 = vmatprep.subr.mxu0 0.0
      %934 = vmatpush1.msra.mxu0 0.0
      %935 = vmatprep.subr.mxu0 0.0
      %936 = vmatpush1.msra.mxu0 0.0
      %937 = vmatprep.subr.mxu0 0.0
      %938 = vmatpush1.msra.mxu0 0.0
      %939 = vmatprep.subr.mxu0 0.0
      %940 = vmatpush1.msra.mxu0 0.0
      %941 = vmatprep.subr.mxu0 0.0
      %942 = vmatpush1.msra.mxu0 0.0
      %943 = vmatprep.subr.mxu0 0.0
      %944 = vmatpush1.msra.mxu0 0.0
      %945 = vmatprep.subr.mxu0 0.0
      %946 = vmatpush1.msra.mxu0 0.0
      %947 = vmatprep.subr.mxu0 0.0
      %948 = vmatpush1.msra.mxu0 0.0
      %949 = vmatprep.subr.mxu0 0.0
      %950 = vmatpush1.msra.mxu0 0.0
      %951 = vmatprep.subr.mxu0 0.0
      %952 = vmatpush1.msra.mxu0 0.0
      %953 = vmatprep.subr.mxu0 0.0
      %954 = vmatpush1.msra.mxu0 0.0
      %955 = vmatprep.subr.mxu0 0.0
      %956 = vmatpush1.msra.mxu0 0.0
      %957 = vmatprep.subr.mxu0 0.0
      %958 = vmatpush1.msra.mxu0 0.0
      %959 = vmatprep.subr.mxu0 0.0
      %960 = vmatpush1.msra.mxu0 0.0
      %961 = vmatprep.mubr.f32.mxu0 0.0
      %962 = vmatmul.mubr.f32.gmra.mrb[0].mxu0 %v790
      %v963 = vpop.f32.mrb[0].mxu0
      %v964 = vadd.f32 %v607, %v963
      %v965 = vpop.f32.mrb[0].mxu0
      %v966 = vadd.f32 %v609, %v965
      %967 = vmatprep.mubr.f32.mxu0 0.0
      %968 = vmatmul.mubr.f32.gmra.mrb[0].mxu0 %v793
      %v969 = vpop.f32.mrb[0].mxu0
      %v970 = vadd.f32 %v613, %v969
      %v971 = vpop.f32.mrb[0].mxu0
      %v972 = vadd.f32 %v615, %v971
      %973 = vmatprep.mubr.f32.mxu0 0.0
      %974 = vmatmul.mubr.f32.gmra.mrb[0].mxu0 %v796
      %v975 = vpop.f32.mrb[0].mxu0
      %v976 = vadd.f32 %v619, %v975
      %v977 = vpop.f32.mrb[0].mxu0
      %v978 = vadd.f32 %v621, %v977
      %979 = vdwg.mxu0
      %980 = vmatprep.subr.mxu0 %v808
      %981 = vmatpush1.msra.mxu0 %v806
      %982 = vmatprep.subr.mxu0 0.0
      %983 = vmatpush1.msra.mxu0 0.0
      %984 = vmatprep.subr.mxu0 0.0
      %985 = vmatpush1.msra.mxu0 0.0
      %986 = vmatprep.subr.mxu0 0.0
      %987 = vmatpush1.msra.mxu0 0.0
      %988 = vmatprep.subr.mxu0 0.0
      %989 = vmatpush1.msra.mxu0 0.0
      %990 = vmatprep.subr.mxu0 0.0
      %991 = vmatpush1.msra.mxu0 0.0
      %992 = vmatprep.subr.mxu0 0.0
      %993 = vmatpush1.msra.mxu0 0.0
      %994 = vmatprep.subr.mxu0 0.0
      %995 = vmatpush1.msra.mxu0 0.0
      %996 = vmatprep.subr.mxu0 0.0
      %997 = vmatpush1.msra.mxu0 0.0
      %998 = vmatprep.subr.mxu0 0.0
      %999 = vmatpush1.msra.mxu0 0.0
      %1000 = vmatprep.subr.mxu0 0.0
      %1001 = vmatpush1.msra.mxu0 0.0
      %1002 = vmatprep.subr.mxu0 0.0
      %1003 = vmatpush1.msra.mxu0 0.0
      %1004 = vmatprep.subr.mxu0 0.0
      %1005 = vmatpush1.msra.mxu0 0.0
      %1006 = vmatprep.subr.mxu0 0.0
      %1007 = vmatpush1.msra.mxu0 0.0
      %1008 = vmatprep.subr.mxu0 0.0
      %1009 = vmatpush1.msra.mxu0 0.0
      %1010 = vmatprep.subr.mxu0 0.0
      %1011 = vmatpush1.msra.mxu0 0.0
      %1012 = vmatprep.subr.mxu0 0.0
      %1013 = vmatpush1.msra.mxu0 0.0
      %1014 = vmatprep.subr.mxu0 0.0
      %1015 = vmatpush1.msra.mxu0 0.0
      %1016 = vmatprep.subr.mxu0 0.0
      %1017 = vmatpush1.msra.mxu0 0.0
      %1018 = vmatprep.subr.mxu0 0.0
      %1019 = vmatpush1.msra.mxu0 0.0
      %1020 = vmatprep.subr.mxu0 0.0
      %1021 = vmatpush1.msra.mxu0 0.0
      %1022 = vmatprep.subr.mxu0 0.0
      %1023 = vmatpush1.msra.mxu0 0.0
      %1024 = vmatprep.subr.mxu0 0.0
      %1025 = vmatpush1.msra.mxu0 0.0
      %1026 = vmatprep.subr.mxu0 0.0
      %1027 = vmatpush1.msra.mxu0 0.0
      %1028 = vmatprep.subr.mxu0 0.0
      %1029 = vmatpush1.msra.mxu0 0.0
      %1030 = vmatprep.subr.mxu0 0.0
      %1031 = vmatpush1.msra.mxu0 0.0
      %1032 = vmatprep.subr.mxu0 0.0
      %1033 = vmatpush1.msra.mxu0 0.0
      %1034 = vmatprep.subr.mxu0 0.0
      %1035 = vmatpush1.msra.mxu0 0.0
      %1036 = vmatprep.subr.mxu0 0.0
      %1037 = vmatpush1.msra.mxu0 0.0
      %1038 = vmatprep.subr.mxu0 0.0
      %1039 = vmatpush1.msra.mxu0 0.0
      %1040 = vmatprep.subr.mxu0 0.0
      %1041 = vmatpush1.msra.mxu0 0.0
      %1042 = vmatprep.subr.mxu0 0.0
      %1043 = vmatpush1.msra.mxu0 0.0
      %1044 = vmatprep.mubr.f32.mxu0 0.0
      %1045 = vmatmul.mubr.f32.gmra.mrb[0].mxu0 %v790
      %v1046 = vpop.f32.mrb[0].mxu0
      %v1047 = vadd.f32 %v690, %v1046
      %v1048 = vpop.f32.mrb[0].mxu0
      %v1049 = vadd.f32 %v692, %v1048
      %1050 = vmatprep.mubr.f32.mxu0 0.0
      %1051 = vmatmul.mubr.f32.gmra.mrb[0].mxu0 %v793
      %v1052 = vpop.f32.mrb[0].mxu0
      %v1053 = vadd.f32 %v696, %v1052
      %v1054 = vpop.f32.mrb[0].mxu0
      %v1055 = vadd.f32 %v698, %v1054
      %1056 = vmatprep.mubr.f32.mxu0 0.0
      %1057 = vmatmul.mubr.f32.gmra.mrb[0].mxu0 %v796
      %v1058 = vpop.f32.mrb[0].mxu0
      %v1059 = vadd.f32 %v702, %v1058
      %v1060 = vpop.f32.mrb[0].mxu0
      %v1061 = vadd.f32 %v704, %v1060
      %1062 = vdwg.mxu0
      %1063 = vmatprep.subr.mxu0 %v812
      %1064 = vmatpush1.msra.mxu0 %v810
      %1065 = vmatprep.subr.mxu0 0.0
      %1066 = vmatpush1.msra.mxu0 0.0
      %1067 = vmatprep.subr.mxu0 0.0
      %1068 = vmatpush1.msra.mxu0 0.0
      %1069 = vmatprep.subr.mxu0 0.0
      %1070 = vmatpush1.msra.mxu0 0.0
      %1071 = vmatprep.subr.mxu0 0.0
      %1072 = vmatpush1.msra.mxu0 0.0
      %1073 = vmatprep.subr.mxu0 0.0
      %1074 = vmatpush1.msra.mxu0 0.0
      %1075 = vmatprep.subr.mxu0 0.0
      %1076 = vmatpush1.msra.mxu0 0.0
      %1077 = vmatprep.subr.mxu0 0.0
      %1078 = vmatpush1.msra.mxu0 0.0
      %1079 = vmatprep.subr.mxu0 0.0
      %1080 = vmatpush1.msra.mxu0 0.0
      %1081 = vmatprep.subr.mxu0 0.0
      %1082 = vmatpush1.msra.mxu0 0.0
      %1083 = vmatprep.subr.mxu0 0.0
      %1084 = vmatpush1.msra.mxu0 0.0
      %1085 = vmatprep.subr.mxu0 0.0
      %1086 = vmatpush1.msra.mxu0 0.0
      %1087 = vmatprep.subr.mxu0 0.0
      %1088 = vmatpush1.msra.mxu0 0.0
      %1089 = vmatprep.subr.mxu0 0.0
      %1090 = vmatpush1.msra.mxu0 0.0
      %1091 = vmatprep.subr.mxu0 0.0
      %1092 = vmatpush1.msra.mxu0 0.0
      %1093 = vmatprep.subr.mxu0 0.0
      %1094 = vmatpush1.msra.mxu0 0.0
      %1095 = vmatprep.subr.mxu0 0.0
      %1096 = vmatpush1.msra.mxu0 0.0
      %1097 = vmatprep.subr.mxu0 0.0
      %1098 = vmatpush1.msra.mxu0 0.0
      %1099 = vmatprep.subr.mxu0 0.0
      %1100 = vmatpush1.msra.mxu0 0.0
      %1101 = vmatprep.subr.mxu0 0.0
      %1102 = vmatpush1.msra.mxu0 0.0
      %1103 = vmatprep.subr.mxu0 0.0
      %1104 = vmatpush1.msra.mxu0 0.0
      %1105 = vmatprep.subr.mxu0 0.0
      %1106 = vmatpush1.msra.mxu0 0.0
      %1107 = vmatprep.subr.mxu0 0.0
      %1108 = vmatpush1.msra.mxu0 0.0
      %1109 = vmatprep.subr.mxu0 0.0
      %1110 = vmatpush1.msra.mxu0 0.0
      %1111 = vmatprep.subr.mxu0 0.0
      %1112 = vmatpush1.msra.mxu0 0.0
      %1113 = vmatprep.subr.mxu0 0.0
      %1114 = vmatpush1.msra.mxu0 0.0
      %1115 = vmatprep.subr.mxu0 0.0
      %1116 = vmatpush1.msra.mxu0 0.0
      %1117 = vmatprep.subr.mxu0 0.0
      %1118 = vmatpush1.msra.mxu0 0.0
      %1119 = vmatprep.subr.mxu0 0.0
      %1120 = vmatpush1.msra.mxu0 0.0
      %1121 = vmatprep.subr.mxu0 0.0
      %1122 = vmatpush1.msra.mxu0 0.0
      %1123 = vmatprep.subr.mxu0 0.0
      %1124 = vmatpush1.msra.mxu0 0.0
      %1125 = vmatprep.subr.mxu0 0.0
      %1126 = vmatpush1.msra.mxu0 0.0
      %1127 = vmatprep.mubr.f32.mxu0 0.0
      %1128 = vmatmul.mubr.f32.gmra.mrb[0].mxu0 %v790
      %v1129 = vpop.f32.mrb[0].mxu0
      %v1130 = vadd.f32 %v773, %v1129
      %v1131 = vpop.f32.mrb[0].mxu0
      %v1132 = vadd.f32 %v775, %v1131
      %1133 = vmatprep.mubr.f32.mxu0 0.0
      %1134 = vmatmul.mubr.f32.gmra.mrb[0].mxu0 %v793
      %v1135 = vpop.f32.mrb[0].mxu0
      %v1136 = vadd.f32 %v779, %v1135
      %v1137 = vpop.f32.mrb[0].mxu0
      %v1138 = vadd.f32 %v781, %v1137
      %1139 = vmatprep.mubr.f32.mxu0 0.0
      %1140 = vmatmul.mubr.f32.gmra.mrb[0].mxu0 %v796
      %v1141 = vpop.f32.mrb[0].mxu0
      %v1142 = vadd.f32 %v785, %v1141
      %v1143 = vpop.f32.mrb[0].mxu0
      %v1144 = vadd.f32 %v787, %v1143
      %1145 = vdwg.mxu0
      %s1146 = scalar_lea.vmem %s1, 48
      %v1147 = vld [vmem:[%s1146] sm:$0xff]
      %v1148 = vld [vmem:[%s1146 + $0x8] sm:$0xff]
      %v1149 = vld [vmem:[%s1146 + $0x10] sm:$0xf]
      %1150 = vrot.lane.b32.xlu0 %v387, 126
      %v1151 = vpop.permute.xlu0 %1150
      %1152 = vrot.lane.b32.xlu0 %v402, 126
      %v1153 = vpop.permute.xlu0 %1152
      %1154 = vrot.lane.b32.xlu0 %v388, 126
      %v1155 = vpop.permute.xlu0 %1154
      %1156 = vrot.lane.b32.xlu0 %v403, 126
      %v1157 = vpop.permute.xlu0 %1156
      %1158 = vrot.lane.b32.xlu0 %v389, 126
      %v1159 = vpop.permute.xlu0 %1158
      %1160 = vrot.lane.b32.xlu0 %v404, 126
      %v1161 = vpop.permute.xlu0 %1160
      %1162 = vrot.lane.b32.xlu0 %v390, 126
      %v1163 = vpop.permute.xlu0 %1162
      %1164 = vrot.lane.b32.xlu0 %v405, 126
      %v1165 = vpop.permute.xlu0 %1164
      %vm1166 = vcmask 1031168
      %v1167 = vsel %vm1166, %v1151, %v1153
      %v1168 = vsel %vm1166, %v1153, %v1155
      %v1169 = vsel %vm1166, %v1155, %v1157
      %v1170 = vsel %vm1166, %v1157, %v1159
      %v1171 = vsel %vm1166, %v1159, %v1161
      %v1172 = vsel %vm1166, %v1161, %v1163
      %v1173 = vsel %vm1166, %v1163, %v1165
      %v1175 = vsel %vm430, %v1147, 0
      %v1178 = vsel %vm430, %v1148, 0
      %v1181 = vsel %vm430, %v1149, 0
      %v1183 = vsel %vm440, %v1167, 0
      %v1185 = vsel %vm440, %v1168, 0
      %v1187 = vsel %vm440, %v1169, 0
      %v1189 = vsel %vm440, %v1170, 0
      %v1191 = vsel %vm440, %v1171, 0
      %v1193 = vsel %vm440, %v1172, 0
      %v1195 = vsel %vm440, %v1173, 0
      %v1197 = vsel %vm440, %v1165, 0
      %1199 = vmatprep.subr.mxu0 %v1185
      %1200 = vmatpush1.msra.mxu0 %v1183
      %1201 = vmatprep.subr.mxu0 0.0
      %1202 = vmatpush1.msra.mxu0 0.0
      %1203 = vmatprep.subr.mxu0 0.0
      %1204 = vmatpush1.msra.mxu0 0.0
      %1205 = vmatprep.subr.mxu0 0.0
      %1206 = vmatpush1.msra.mxu0 0.0
      %1207 = vmatprep.subr.mxu0 0.0
      %1208 = vmatpush1.msra.mxu0 0.0
      %1209 = vmatprep.subr.mxu0 0.0
      %1210 = vmatpush1.msra.mxu0 0.0
      %1211 = vmatprep.subr.mxu0 0.0
      %1212 = vmatpush1.msra.mxu0 0.0
      %1213 = vmatprep.subr.mxu0 0.0
      %1214 = vmatpush1.msra.mxu0 0.0
      %1215 = vmatprep.subr.mxu0 0.0
      %1216 = vmatpush1.msra.mxu0 0.0
      %1217 = vmatprep.subr.mxu0 0.0
      %1218 = vmatpush1.msra.mxu0 0.0
      %1219 = vmatprep.subr.mxu0 0.0
      %1220 = vmatpush1.msra.mxu0 0.0
      %1221 = vmatprep.subr.mxu0 0.0
      %1222 = vmatpush1.msra.mxu0 0.0
      %1223 = vmatprep.subr.mxu0 0.0
      %1224 = vmatpush1.msra.mxu0 0.0
      %1225 = vmatprep.subr.mxu0 0.0
      %1226 = vmatpush1.msra.mxu0 0.0
      %1227 = vmatprep.subr.mxu0 0.0
      %1228 = vmatpush1.msra.mxu0 0.0
      %1229 = vmatprep.subr.mxu0 0.0
      %1230 = vmatpush1.msra.mxu0 0.0
      %1231 = vmatprep.subr.mxu0 0.0
      %1232 = vmatpush1.msra.mxu0 0.0
      %1233 = vmatprep.subr.mxu0 0.0
      %1234 = vmatpush1.msra.mxu0 0.0
      %1235 = vmatprep.subr.mxu0 0.0
      %1236 = vmatpush1.msra.mxu0 0.0
      %1237 = vmatprep.subr.mxu0 0.0
      %1238 = vmatpush1.msra.mxu0 0.0
      %1239 = vmatprep.subr.mxu0 0.0
      %1240 = vmatpush1.msra.mxu0 0.0
      %1241 = vmatprep.subr.mxu0 0.0
      %1242 = vmatpush1.msra.mxu0 0.0
      %1243 = vmatprep.subr.mxu0 0.0
      %1244 = vmatpush1.msra.mxu0 0.0
      %1245 = vmatprep.subr.mxu0 0.0
      %1246 = vmatpush1.msra.mxu0 0.0
      %1247 = vmatprep.subr.mxu0 0.0
      %1248 = vmatpush1.msra.mxu0 0.0
      %1249 = vmatprep.subr.mxu0 0.0
      %1250 = vmatpush1.msra.mxu0 0.0
      %1251 = vmatprep.subr.mxu0 0.0
      %1252 = vmatpush1.msra.mxu0 0.0
      %1253 = vmatprep.subr.mxu0 0.0
      %1254 = vmatpush1.msra.mxu0 0.0
      %1255 = vmatprep.subr.mxu0 0.0
      %1256 = vmatpush1.msra.mxu0 0.0
      %1257 = vmatprep.subr.mxu0 0.0
      %1258 = vmatpush1.msra.mxu0 0.0
      %1259 = vmatprep.subr.mxu0 0.0
      %1260 = vmatpush1.msra.mxu0 0.0
      %1261 = vmatprep.subr.mxu0 0.0
      %1262 = vmatpush1.msra.mxu0 0.0
      %1263 = vmatprep.mubr.f32.mxu0 0.0
      %1264 = vmatmul.mubr.f32.gmra.mrb[0].mxu0 %v1175
      %v1265 = vpop.f32.mrb[0].mxu0
      %v1266 = vadd.f32 0.0, %v1265
      %v1267 = vpop.f32.mrb[0].mxu0
      %v1268 = vadd.f32 0.0, %v1267
      %1269 = vmatprep.mubr.f32.mxu0 0.0
      %1270 = vmatmul.mubr.f32.gmra.mrb[0].mxu0 %v1178
      %v1271 = vpop.f32.mrb[0].mxu0
      %v1272 = vadd.f32 0.0, %v1271
      %v1273 = vpop.f32.mrb[0].mxu0
      %v1274 = vadd.f32 0.0, %v1273
      %1275 = vmatprep.mubr.f32.mxu0 0.0
      %1276 = vmatmul.mubr.f32.gmra.mrb[0].mxu0 %v1181
      %v1277 = vpop.f32.mrb[0].mxu0
      %v1278 = vadd.f32 0.0, %v1277
      %v1279 = vpop.f32.mrb[0].mxu0
      %v1280 = vadd.f32 0.0, %v1279
      %1281 = vdwg.mxu0
      %1282 = vmatprep.subr.mxu0 %v1189
      %1283 = vmatpush1.msra.mxu0 %v1187
      %1284 = vmatprep.subr.mxu0 0.0
      %1285 = vmatpush1.msra.mxu0 0.0
      %1286 = vmatprep.subr.mxu0 0.0
      %1287 = vmatpush1.msra.mxu0 0.0
      %1288 = vmatprep.subr.mxu0 0.0
      %1289 = vmatpush1.msra.mxu0 0.0
      %1290 = vmatprep.subr.mxu0 0.0
      %1291 = vmatpush1.msra.mxu0 0.0
      %1292 = vmatprep.subr.mxu0 0.0
      %1293 = vmatpush1.msra.mxu0 0.0
      %1294 = vmatprep.subr.mxu0 0.0
      %1295 = vmatpush1.msra.mxu0 0.0
      %1296 = vmatprep.subr.mxu0 0.0
      %1297 = vmatpush1.msra.mxu0 0.0
      %1298 = vmatprep.subr.mxu0 0.0
      %1299 = vmatpush1.msra.mxu0 0.0
      %1300 = vmatprep.subr.mxu0 0.0
      %1301 = vmatpush1.msra.mxu0 0.0
      %1302 = vmatprep.subr.mxu0 0.0
      %1303 = vmatpush1.msra.mxu0 0.0
      %1304 = vmatprep.subr.mxu0 0.0
      %1305 = vmatpush1.msra.mxu0 0.0
      %1306 = vmatprep.subr.mxu0 0.0
      %1307 = vmatpush1.msra.mxu0 0.0
      %1308 = vmatprep.subr.mxu0 0.0
      %1309 = vmatpush1.msra.mxu0 0.0
      %1310 = vmatprep.subr.mxu0 0.0
      %1311 = vmatpush1.msra.mxu0 0.0
      %1312 = vmatprep.subr.mxu0 0.0
      %1313 = vmatpush1.msra.mxu0 0.0
      %1314 = vmatprep.subr.mxu0 0.0
      %1315 = vmatpush1.msra.mxu0 0.0
      %1316 = vmatprep.subr.mxu0 0.0
      %1317 = vmatpush1.msra.mxu0 0.0
      %1318 = vmatprep.subr.mxu0 0.0
      %1319 = vmatpush1.msra.mxu0 0.0
      %1320 = vmatprep.subr.mxu0 0.0
      %1321 = vmatpush1.msra.mxu0 0.0
      %1322 = vmatprep.subr.mxu0 0.0
      %1323 = vmatpush1.msra.mxu0 0.0
      %1324 = vmatprep.subr.mxu0 0.0
      %1325 = vmatpush1.msra.mxu0 0.0
      %1326 = vmatprep.subr.mxu0 0.0
      %1327 = vmatpush1.msra.mxu0 0.0
      %1328 = vmatprep.subr.mxu0 0.0
      %1329 = vmatpush1.msra.mxu0 0.0
      %1330 = vmatprep.subr.mxu0 0.0
      %1331 = vmatpush1.msra.mxu0 0.0
      %1332 = vmatprep.subr.mxu0 0.0
      %1333 = vmatpush1.msra.mxu0 0.0
      %1334 = vmatprep.subr.mxu0 0.0
      %1335 = vmatpush1.msra.mxu0 0.0
      %1336 = vmatprep.subr.mxu0 0.0
      %1337 = vmatpush1.msra.mxu0 0.0
      %1338 = vmatprep.subr.mxu0 0.0
      %1339 = vmatpush1.msra.mxu0 0.0
      %1340 = vmatprep.subr.mxu0 0.0
      %1341 = vmatpush1.msra.mxu0 0.0
      %1342 = vmatprep.subr.mxu0 0.0
      %1343 = vmatpush1.msra.mxu0 0.0
      %1344 = vmatprep.subr.mxu0 0.0
      %1345 = vmatpush1.msra.mxu0 0.0
      %1346 = vmatprep.mubr.f32.mxu0 0.0
      %1347 = vmatmul.mubr.f32.gmra.mrb[0].mxu0 %v1175
      %v1348 = vpop.f32.mrb[0].mxu0
      %v1349 = vadd.f32 0.0, %v1348
      %v1350 = vpop.f32.mrb[0].mxu0
      %v1351 = vadd.f32 0.0, %v1350
      %1352 = vmatprep.mubr.f32.mxu0 0.0
      %1353 = vmatmul.mubr.f32.gmra.mrb[0].mxu0 %v1178
      %v1354 = vpop.f32.mrb[0].mxu0
      %v1355 = vadd.f32 0.0, %v1354
      %v1356 = vpop.f32.mrb[0].mxu0
      %v1357 = vadd.f32 0.0, %v1356
      %1358 = vmatprep.mubr.f32.mxu0 0.0
      %1359 = vmatmul.mubr.f32.gmra.mrb[0].mxu0 %v1181
      %v1360 = vpop.f32.mrb[0].mxu0
      %v1361 = vadd.f32 0.0, %v1360
      %v1362 = vpop.f32.mrb[0].mxu0
      %v1363 = vadd.f32 0.0, %v1362
      %1364 = vdwg.mxu0
      %1365 = vmatprep.subr.mxu0 %v1193
      %1366 = vmatpush1.msra.mxu0 %v1191
      %1367 = vmatprep.subr.mxu0 0.0
      %1368 = vmatpush1.msra.mxu0 0.0
      %1369 = vmatprep.subr.mxu0 0.0
      %1370 = vmatpush1.msra.mxu0 0.0
      %1371 = vmatprep.subr.mxu0 0.0
      %1372 = vmatpush1.msra.mxu0 0.0
      %1373 = vmatprep.subr.mxu0 0.0
      %1374 = vmatpush1.msra.mxu0 0.0
      %1375 = vmatprep.subr.mxu0 0.0
      %1376 = vmatpush1.msra.mxu0 0.0
      %1377 = vmatprep.subr.mxu0 0.0
      %1378 = vmatpush1.msra.mxu0 0.0
      %1379 = vmatprep.subr.mxu0 0.0
      %1380 = vmatpush1.msra.mxu0 0.0
      %1381 = vmatprep.subr.mxu0 0.0
      %1382 = vmatpush1.msra.mxu0 0.0
      %1383 = vmatprep.subr.mxu0 0.0
      %1384 = vmatpush1.msra.mxu0 0.0
      %1385 = vmatprep.subr.mxu0 0.0
      %1386 = vmatpush1.msra.mxu0 0.0
      %1387 = vmatprep.subr.mxu0 0.0
      %1388 = vmatpush1.msra.mxu0 0.0
      %1389 = vmatprep.subr.mxu0 0.0
      %1390 = vmatpush1.msra.mxu0 0.0
      %1391 = vmatprep.subr.mxu0 0.0
      %1392 = vmatpush1.msra.mxu0 0.0
      %1393 = vmatprep.subr.mxu0 0.0
      %1394 = vmatpush1.msra.mxu0 0.0
      %1395 = vmatprep.subr.mxu0 0.0
      %1396 = vmatpush1.msra.mxu0 0.0
      %1397 = vmatprep.subr.mxu0 0.0
      %1398 = vmatpush1.msra.mxu0 0.0
      %1399 = vmatprep.subr.mxu0 0.0
      %1400 = vmatpush1.msra.mxu0 0.0
      %1401 = vmatprep.subr.mxu0 0.0
      %1402 = vmatpush1.msra.mxu0 0.0
      %1403 = vmatprep.subr.mxu0 0.0
      %1404 = vmatpush1.msra.mxu0 0.0
      %1405 = vmatprep.subr.mxu0 0.0
      %1406 = vmatpush1.msra.mxu0 0.0
      %1407 = vmatprep.subr.mxu0 0.0
      %1408 = vmatpush1.msra.mxu0 0.0
      %1409 = vmatprep.subr.mxu0 0.0
      %1410 = vmatpush1.msra.mxu0 0.0
      %1411 = vmatprep.subr.mxu0 0.0
      %1412 = vmatpush1.msra.mxu0 0.0
      %1413 = vmatprep.subr.mxu0 0.0
      %1414 = vmatpush1.msra.mxu0 0.0
      %1415 = vmatprep.subr.mxu0 0.0
      %1416 = vmatpush1.msra.mxu0 0.0
      %1417 = vmatprep.subr.mxu0 0.0
      %1418 = vmatpush1.msra.mxu0 0.0
      %1419 = vmatprep.subr.mxu0 0.0
      %1420 = vmatpush1.msra.mxu0 0.0
      %1421 = vmatprep.subr.mxu0 0.0
      %1422 = vmatpush1.msra.mxu0 0.0
      %1423 = vmatprep.subr.mxu0 0.0
      %1424 = vmatpush1.msra.mxu0 0.0
      %1425 = vmatprep.subr.mxu0 0.0
      %1426 = vmatpush1.msra.mxu0 0.0
      %1427 = vmatprep.subr.mxu0 0.0
      %1428 = vmatpush1.msra.mxu0 0.0
      %1429 = vmatprep.mubr.f32.mxu0 0.0
      %1430 = vmatmul.mubr.f32.gmra.mrb[0].mxu0 %v1175
      %v1431 = vpop.f32.mrb[0].mxu0
      %v1432 = vadd.f32 0.0, %v1431
      %v1433 = vpop.f32.mrb[0].mxu0
      %v1434 = vadd.f32 0.0, %v1433
      %1435 = vmatprep.mubr.f32.mxu0 0.0
      %1436 = vmatmul.mubr.f32.gmra.mrb[0].mxu0 %v1178
      %v1437 = vpop.f32.mrb[0].mxu0
      %v1438 = vadd.f32 0.0, %v1437
      %v1439 = vpop.f32.mrb[0].mxu0
      %v1440 = vadd.f32 0.0, %v1439
      %1441 = vmatprep.mubr.f32.mxu0 0.0
      %1442 = vmatmul.mubr.f32.gmra.mrb[0].mxu0 %v1181
      %v1443 = vpop.f32.mrb[0].mxu0
      %v1444 = vadd.f32 0.0, %v1443
      %v1445 = vpop.f32.mrb[0].mxu0
      %v1446 = vadd.f32 0.0, %v1445
      %1447 = vdwg.mxu0
      %1448 = vmatprep.subr.mxu0 %v1197
      %1449 = vmatpush1.msra.mxu0 %v1195
      %1450 = vmatprep.subr.mxu0 0.0
      %1451 = vmatpush1.msra.mxu0 0.0
      %1452 = vmatprep.subr.mxu0 0.0
      %1453 = vmatpush1.msra.mxu0 0.0
      %1454 = vmatprep.subr.mxu0 0.0
      %1455 = vmatpush1.msra.mxu0 0.0
      %1456 = vmatprep.subr.mxu0 0.0
      %1457 = vmatpush1.msra.mxu0 0.0
      %1458 = vmatprep.subr.mxu0 0.0
      %1459 = vmatpush1.msra.mxu0 0.0
      %1460 = vmatprep.subr.mxu0 0.0
      %1461 = vmatpush1.msra.mxu0 0.0
      %1462 = vmatprep.subr.mxu0 0.0
      %1463 = vmatpush1.msra.mxu0 0.0
      %1464 = vmatprep.subr.mxu0 0.0
      %1465 = vmatpush1.msra.mxu0 0.0
      %1466 = vmatprep.subr.mxu0 0.0
      %1467 = vmatpush1.msra.mxu0 0.0
      %1468 = vmatprep.subr.mxu0 0.0
      %1469 = vmatpush1.msra.mxu0 0.0
      %1470 = vmatprep.subr.mxu0 0.0
      %1471 = vmatpush1.msra.mxu0 0.0
      %1472 = vmatprep.subr.mxu0 0.0
      %1473 = vmatpush1.msra.mxu0 0.0
      %1474 = vmatprep.subr.mxu0 0.0
      %1475 = vmatpush1.msra.mxu0 0.0
      %1476 = vmatprep.subr.mxu0 0.0
      %1477 = vmatpush1.msra.mxu0 0.0
      %1478 = vmatprep.subr.mxu0 0.0
      %1479 = vmatpush1.msra.mxu0 0.0
      %1480 = vmatprep.subr.mxu0 0.0
      %1481 = vmatpush1.msra.mxu0 0.0
      %1482 = vmatprep.subr.mxu0 0.0
      %1483 = vmatpush1.msra.mxu0 0.0
      %1484 = vmatprep.subr.mxu0 0.0
      %1485 = vmatpush1.msra.mxu0 0.0
      %1486 = vmatprep.subr.mxu0 0.0
      %1487 = vmatpush1.msra.mxu0 0.0
      %1488 = vmatprep.subr.mxu0 0.0
      %1489 = vmatpush1.msra.mxu0 0.0
      %1490 = vmatprep.subr.mxu0 0.0
      %1491 = vmatpush1.msra.mxu0 0.0
      %1492 = vmatprep.subr.mxu0 0.0
      %1493 = vmatpush1.msra.mxu0 0.0
      %1494 = vmatprep.subr.mxu0 0.0
      %1495 = vmatpush1.msra.mxu0 0.0
      %1496 = vmatprep.subr.mxu0 0.0
      %1497 = vmatpush1.msra.mxu0 0.0
      %1498 = vmatprep.subr.mxu0 0.0
      %1499 = vmatpush1.msra.mxu0 0.0
      %1500 = vmatprep.subr.mxu0 0.0
      %1501 = vmatpush1.msra.mxu0 0.0
      %1502 = vmatprep.subr.mxu0 0.0
      %1503 = vmatpush1.msra.mxu0 0.0
      %1504 = vmatprep.subr.mxu0 0.0
      %1505 = vmatpush1.msra.mxu0 0.0
      %1506 = vmatprep.subr.mxu0 0.0
      %1507 = vmatpush1.msra.mxu0 0.0
      %1508 = vmatprep.subr.mxu0 0.0
      %1509 = vmatpush1.msra.mxu0 0.0
      %1510 = vmatprep.subr.mxu0 0.0
      %1511 = vmatpush1.msra.mxu0 0.0
      %1512 = vmatprep.mubr.f32.mxu0 0.0
      %1513 = vmatmul.mubr.f32.gmra.mrb[0].mxu0 %v1175
      %v1514 = vpop.f32.mrb[0].mxu0
      %v1515 = vadd.f32 0.0, %v1514
      %v1516 = vpop.f32.mrb[0].mxu0
      %v1517 = vadd.f32 0.0, %v1516
      %1518 = vmatprep.mubr.f32.mxu0 0.0
      %1519 = vmatmul.mubr.f32.gmra.mrb[0].mxu0 %v1178
      %v1520 = vpop.f32.mrb[0].mxu0
      %v1521 = vadd.f32 0.0, %v1520
      %v1522 = vpop.f32.mrb[0].mxu0
      %v1523 = vadd.f32 0.0, %v1522
      %1524 = vmatprep.mubr.f32.mxu0 0.0
      %1525 = vmatmul.mubr.f32.gmra.mrb[0].mxu0 %v1181
      %v1526 = vpop.f32.mrb[0].mxu0
      %v1527 = vadd.f32 0.0, %v1526
      %v1528 = vpop.f32.mrb[0].mxu0
      %v1529 = vadd.f32 0.0, %v1528
      %1530 = vdwg.mxu0
      %v1531 = vadd.f32 %v881, %v1266
      %v1532 = vadd.f32 %v883, %v1268
      %v1533 = vadd.f32 %v964, %v1349
      %v1534 = vadd.f32 %v966, %v1351
      %v1535 = vadd.f32 %v1047, %v1432
      %v1536 = vadd.f32 %v1049, %v1434
      %v1537 = vadd.f32 %v1130, %v1515
      %v1538 = vadd.f32 %v1132, %v1517
      %v1539 = vadd.f32 %v887, %v1272
      %v1540 = vadd.f32 %v889, %v1274
      %v1541 = vadd.f32 %v970, %v1355
      %v1542 = vadd.f32 %v972, %v1357
      %v1543 = vadd.f32 %v1053, %v1438
      %v1544 = vadd.f32 %v1055, %v1440
      %v1545 = vadd.f32 %v1136, %v1521
      %v1546 = vadd.f32 %v1138, %v1523
      %v1547 = vadd.f32 %v893, %v1278
      %v1548 = vadd.f32 %v895, %v1280
      %v1549 = vadd.f32 %v976, %v1361
      %v1550 = vadd.f32 %v978, %v1363
      %v1551 = vadd.f32 %v1059, %v1444
      %v1552 = vadd.f32 %v1061, %v1446
      %v1553 = vadd.f32 %v1142, %v1527
      %v1554 = vadd.f32 %v1144, %v1529
      %s1555 = scalar_lea.vmem %s1, 72
      %v1556 = vld [vmem:[%s1555] sm:$0xff]
      %v1557 = vld [vmem:[%s1555 + $0x8] sm:$0xff]
      %v1558 = vld [vmem:[%s1555 + $0x10] sm:$0xf]
      %1559 = vrot.lane.b32.xlu0 %v387, 125
      %v1560 = vpop.permute.xlu0 %1559
      %1561 = vrot.lane.b32.xlu0 %v402, 125
      %v1562 = vpop.permute.xlu0 %1561
      %1563 = vrot.lane.b32.xlu0 %v388, 125
      %v1564 = vpop.permute.xlu0 %1563
      %1565 = vrot.lane.b32.xlu0 %v403, 125
      %v1566 = vpop.permute.xlu0 %1565
      %1567 = vrot.lane.b32.xlu0 %v389, 125
      %v1568 = vpop.permute.xlu0 %1567
      %1569 = vrot.lane.b32.xlu0 %v404, 125
      %v1570 = vpop.permute.xlu0 %1569
      %1571 = vrot.lane.b32.xlu0 %v390, 125
      %v1572 = vpop.permute.xlu0 %1571
      %1573 = vrot.lane.b32.xlu0 %v405, 125
      %v1574 = vpop.permute.xlu0 %1573
      %vm1575 = vcmask 1022976
      %v1576 = vsel %vm1575, %v1560, %v1562
      %v1577 = vsel %vm1575, %v1562, %v1564
      %v1578 = vsel %vm1575, %v1564, %v1566
      %v1579 = vsel %vm1575, %v1566, %v1568
      %v1580 = vsel %vm1575, %v1568, %v1570
      %v1581 = vsel %vm1575, %v1570, %v1572
      %v1582 = vsel %vm1575, %v1572, %v1574
      %v1584 = vsel %vm430, %v1556, 0
      %v1587 = vsel %vm430, %v1557, 0
      %v1590 = vsel %vm430, %v1558, 0
      %v1592 = vsel %vm440, %v1576, 0
      %v1594 = vsel %vm440, %v1577, 0
      %v1596 = vsel %vm440, %v1578, 0
      %v1598 = vsel %vm440, %v1579, 0
      %v1600 = vsel %vm440, %v1580, 0
      %v1602 = vsel %vm440, %v1581, 0
      %v1604 = vsel %vm440, %v1582, 0
      %v1606 = vsel %vm440, %v1574, 0
      %1608 = vmatprep.subr.mxu0 %v1594
      %1609 = vmatpush1.msra.mxu0 %v1592
      %1610 = vmatprep.subr.mxu0 0.0
      %1611 = vmatpush1.msra.mxu0 0.0
      %1612 = vmatprep.subr.mxu0 0.0
      %1613 = vmatpush1.msra.mxu0 0.0
      %1614 = vmatprep.subr.mxu0 0.0
      %1615 = vmatpush1.msra.mxu0 0.0
      %1616 = vmatprep.subr.mxu0 0.0
      %1617 = vmatpush1.msra.mxu0 0.0
      %1618 = vmatprep.subr.mxu0 0.0
      %1619 = vmatpush1.msra.mxu0 0.0
      %1620 = vmatprep.subr.mxu0 0.0
      %1621 = vmatpush1.msra.mxu0 0.0
      %1622 = vmatprep.subr.mxu0 0.0
      %1623 = vmatpush1.msra.mxu0 0.0
      %1624 = vmatprep.subr.mxu0 0.0
      %1625 = vmatpush1.msra.mxu0 0.0
      %1626 = vmatprep.subr.mxu0 0.0
      %1627 = vmatpush1.msra.mxu0 0.0
      %1628 = vmatprep.subr.mxu0 0.0
      %1629 = vmatpush1.msra.mxu0 0.0
      %1630 = vmatprep.subr.mxu0 0.0
      %1631 = vmatpush1.msra.mxu0 0.0
      %1632 = vmatprep.subr.mxu0 0.0
      %1633 = vmatpush1.msra.mxu0 0.0
      %1634 = vmatprep.subr.mxu0 0.0
      %1635 = vmatpush1.msra.mxu0 0.0
      %1636 = vmatprep.subr.mxu0 0.0
      %1637 = vmatpush1.msra.mxu0 0.0
      %1638 = vmatprep.subr.mxu0 0.0
      %1639 = vmatpush1.msra.mxu0 0.0
      %1640 = vmatprep.subr.mxu0 0.0
      %1641 = vmatpush1.msra.mxu0 0.0
      %1642 = vmatprep.subr.mxu0 0.0
      %1643 = vmatpush1.msra.mxu0 0.0
      %1644 = vmatprep.subr.mxu0 0.0
      %1645 = vmatpush1.msra.mxu0 0.0
      %1646 = vmatprep.subr.mxu0 0.0
      %1647 = vmatpush1.msra.mxu0 0.0
      %1648 = vmatprep.subr.mxu0 0.0
      %1649 = vmatpush1.msra.mxu0 0.0
      %1650 = vmatprep.subr.mxu0 0.0
      %1651 = vmatpush1.msra.mxu0 0.0
      %1652 = vmatprep.subr.mxu0 0.0
      %1653 = vmatpush1.msra.mxu0 0.0
      %1654 = vmatprep.subr.mxu0 0.0
      %1655 = vmatpush1.msra.mxu0 0.0
      %1656 = vmatprep.subr.mxu0 0.0
      %1657 = vmatpush1.msra.mxu0 0.0
      %1658 = vmatprep.subr.mxu0 0.0
      %1659 = vmatpush1.msra.mxu0 0.0
      %1660 = vmatprep.subr.mxu0 0.0
      %1661 = vmatpush1.msra.mxu0 0.0
      %1662 = vmatprep.subr.mxu0 0.0
      %1663 = vmatpush1.msra.mxu0 0.0
      %1664 = vmatprep.subr.mxu0 0.0
      %1665 = vmatpush1.msra.mxu0 0.0
      %1666 = vmatprep.subr.mxu0 0.0
      %1667 = vmatpush1.msra.mxu0 0.0
      %1668 = vmatprep.subr.mxu0 0.0
      %1669 = vmatpush1.msra.mxu0 0.0
      %1670 = vmatprep.subr.mxu0 0.0
      %1671 = vmatpush1.msra.mxu0 0.0
      %1672 = vmatprep.mubr.f32.mxu0 0.0
      %1673 = vmatmul.mubr.f32.gmra.mrb[0].mxu0 %v1584
      %v1674 = vpop.f32.mrb[0].mxu0
      %v1675 = vadd.f32 0.0, %v1674
      %v1676 = vpop.f32.mrb[0].mxu0
      %v1677 = vadd.f32 0.0, %v1676
      %1678 = vmatprep.mubr.f32.mxu0 0.0
      %1679 = vmatmul.mubr.f32.gmra.mrb[0].mxu0 %v1587
      %v1680 = vpop.f32.mrb[0].mxu0
      %v1681 = vadd.f32 0.0, %v1680
      %v1682 = vpop.f32.mrb[0].mxu0
      %v1683 = vadd.f32 0.0, %v1682
      %1684 = vmatprep.mubr.f32.mxu0 0.0
      %1685 = vmatmul.mubr.f32.gmra.mrb[0].mxu0 %v1590
      %v1686 = vpop.f32.mrb[0].mxu0
      %v1687 = vadd.f32 0.0, %v1686
      %v1688 = vpop.f32.mrb[0].mxu0
      %v1689 = vadd.f32 0.0, %v1688
      %1690 = vdwg.mxu0
      %1691 = vmatprep.subr.mxu0 %v1598
      %1692 = vmatpush1.msra.mxu0 %v1596
      %1693 = vmatprep.subr.mxu0 0.0
      %1694 = vmatpush1.msra.mxu0 0.0
      %1695 = vmatprep.subr.mxu0 0.0
      %1696 = vmatpush1.msra.mxu0 0.0
      %1697 = vmatprep.subr.mxu0 0.0
      %1698 = vmatpush1.msra.mxu0 0.0
      %1699 = vmatprep.subr.mxu0 0.0
      %1700 = vmatpush1.msra.mxu0 0.0
      %1701 = vmatprep.subr.mxu0 0.0
      %1702 = vmatpush1.msra.mxu0 0.0
      %1703 = vmatprep.subr.mxu0 0.0
      %1704 = vmatpush1.msra.mxu0 0.0
      %1705 = vmatprep.subr.mxu0 0.0
      %1706 = vmatpush1.msra.mxu0 0.0
      %1707 = vmatprep.subr.mxu0 0.0
      %1708 = vmatpush1.msra.mxu0 0.0
      %1709 = vmatprep.subr.mxu0 0.0
      %1710 = vmatpush1.msra.mxu0 0.0
      %1711 = vmatprep.subr.mxu0 0.0
      %1712 = vmatpush1.msra.mxu0 0.0
      %1713 = vmatprep.subr.mxu0 0.0
      %1714 = vmatpush1.msra.mxu0 0.0
      %1715 = vmatprep.subr.mxu0 0.0
      %1716 = vmatpush1.msra.mxu0 0.0
      %1717 = vmatprep.subr.mxu0 0.0
      %1718 = vmatpush1.msra.mxu0 0.0
      %1719 = vmatprep.subr.mxu0 0.0
      %1720 = vmatpush1.msra.mxu0 0.0
      %1721 = vmatprep.subr.mxu0 0.0
      %1722 = vmatpush1.msra.mxu0 0.0
      %1723 = vmatprep.subr.mxu0 0.0
      %1724 = vmatpush1.msra.mxu0 0.0
      %1725 = vmatprep.subr.mxu0 0.0
      %1726 = vmatpush1.msra.mxu0 0.0
      %1727 = vmatprep.subr.mxu0 0.0
      %1728 = vmatpush1.msra.mxu0 0.0
      %1729 = vmatprep.subr.mxu0 0.0
      %1730 = vmatpush1.msra.mxu0 0.0
      %1731 = vmatprep.subr.mxu0 0.0
      %1732 = vmatpush1.msra.mxu0 0.0
      %1733 = vmatprep.subr.mxu0 0.0
      %1734 = vmatpush1.msra.mxu0 0.0
      %1735 = vmatprep.subr.mxu0 0.0
      %1736 = vmatpush1.msra.mxu0 0.0
      %1737 = vmatprep.subr.mxu0 0.0
      %1738 = vmatpush1.msra.mxu0 0.0
      %1739 = vmatprep.subr.mxu0 0.0
      %1740 = vmatpush1.msra.mxu0 0.0
      %1741 = vmatprep.subr.mxu0 0.0
      %1742 = vmatpush1.msra.mxu0 0.0
      %1743 = vmatprep.subr.mxu0 0.0
      %1744 = vmatpush1.msra.mxu0 0.0
      %1745 = vmatprep.subr.mxu0 0.0
      %1746 = vmatpush1.msra.mxu0 0.0
      %1747 = vmatprep.subr.mxu0 0.0
      %1748 = vmatpush1.msra.mxu0 0.0
      %1749 = vmatprep.subr.mxu0 0.0
      %1750 = vmatpush1.msra.mxu0 0.0
      %1751 = vmatprep.subr.mxu0 0.0
      %1752 = vmatpush1.msra.mxu0 0.0
      %1753 = vmatprep.subr.mxu0 0.0
      %1754 = vmatpush1.msra.mxu0 0.0
      %1755 = vmatprep.mubr.f32.mxu0 0.0
      %1756 = vmatmul.mubr.f32.gmra.mrb[0].mxu0 %v1584
      %v1757 = vpop.f32.mrb[0].mxu0
      %v1758 = vadd.f32 0.0, %v1757
      %v1759 = vpop.f32.mrb[0].mxu0
      %v1760 = vadd.f32 0.0, %v1759
      %1761 = vmatprep.mubr.f32.mxu0 0.0
      %1762 = vmatmul.mubr.f32.gmra.mrb[0].mxu0 %v1587
      %v1763 = vpop.f32.mrb[0].mxu0
      %v1764 = vadd.f32 0.0, %v1763
      %v1765 = vpop.f32.mrb[0].mxu0
      %v1766 = vadd.f32 0.0, %v1765
      %1767 = vmatprep.mubr.f32.mxu0 0.0
      %1768 = vmatmul.mubr.f32.gmra.mrb[0].mxu0 %v1590
      %v1769 = vpop.f32.mrb[0].mxu0
      %v1770 = vadd.f32 0.0, %v1769
      %v1771 = vpop.f32.mrb[0].mxu0
      %v1772 = vadd.f32 0.0, %v1771
      %1773 = vdwg.mxu0
      %1774 = vmatprep.subr.mxu0 %v1602
      %1775 = vmatpush1.msra.mxu0 %v1600
      %1776 = vmatprep.subr.mxu0 0.0
      %1777 = vmatpush1.msra.mxu0 0.0
      %1778 = vmatprep.subr.mxu0 0.0
      %1779 = vmatpush1.msra.mxu0 0.0
      %1780 = vmatprep.subr.mxu0 0.0
      %1781 = vmatpush1.msra.mxu0 0.0
      %1782 = vmatprep.subr.mxu0 0.0
      %1783 = vmatpush1.msra.mxu0 0.0
      %1784 = vmatprep.subr.mxu0 0.0
      %1785 = vmatpush1.msra.mxu0 0.0
      %1786 = vmatprep.subr.mxu0 0.0
      %1787 = vmatpush1.msra.mxu0 0.0
      %1788 = vmatprep.subr.mxu0 0.0
      %1789 = vmatpush1.msra.mxu0 0.0
      %1790 = vmatprep.subr.mxu0 0.0
      %1791 = vmatpush1.msra.mxu0 0.0
      %1792 = vmatprep.subr.mxu0 0.0
      %1793 = vmatpush1.msra.mxu0 0.0
      %1794 = vmatprep.subr.mxu0 0.0
      %1795 = vmatpush1.msra.mxu0 0.0
      %1796 = vmatprep.subr.mxu0 0.0
      %1797 = vmatpush1.msra.mxu0 0.0
      %1798 = vmatprep.subr.mxu0 0.0
      %1799 = vmatpush1.msra.mxu0 0.0
      %1800 = vmatprep.subr.mxu0 0.0
      %1801 = vmatpush1.msra.mxu0 0.0
      %1802 = vmatprep.subr.mxu0 0.0
      %1803 = vmatpush1.msra.mxu0 0.0
      %1804 = vmatprep.subr.mxu0 0.0
      %1805 = vmatpush1.msra.mxu0 0.0
      %1806 = vmatprep.subr.mxu0 0.0
      %1807 = vmatpush1.msra.mxu0 0.0
      %1808 = vmatprep.subr.mxu0 0.0
      %1809 = vmatpush1.msra.mxu0 0.0
      %1810 = vmatprep.subr.mxu0 0.0
      %1811 = vmatpush1.msra.mxu0 0.0
      %1812 = vmatprep.subr.mxu0 0.0
      %1813 = vmatpush1.msra.mxu0 0.0
      %1814 = vmatprep.subr.mxu0 0.0
      %1815 = vmatpush1.msra.mxu0 0.0
      %1816 = vmatprep.subr.mxu0 0.0
      %1817 = vmatpush1.msra.mxu0 0.0
      %1818 = vmatprep.subr.mxu0 0.0
      %1819 = vmatpush1.msra.mxu0 0.0
      %1820 = vmatprep.subr.mxu0 0.0
      %1821 = vmatpush1.msra.mxu0 0.0
      %1822 = vmatprep.subr.mxu0 0.0
      %1823 = vmatpush1.msra.mxu0 0.0
      %1824 = vmatprep.subr.mxu0 0.0
      %1825 = vmatpush1.msra.mxu0 0.0
      %1826 = vmatprep.subr.mxu0 0.0
      %1827 = vmatpush1.msra.mxu0 0.0
      %1828 = vmatprep.subr.mxu0 0.0
      %1829 = vmatpush1.msra.mxu0 0.0
      %1830 = vmatprep.subr.mxu0 0.0
      %1831 = vmatpush1.msra.mxu0 0.0
      %1832 = vmatprep.subr.mxu0 0.0
      %1833 = vmatpush1.msra.mxu0 0.0
      %1834 = vmatprep.subr.mxu0 0.0
      %1835 = vmatpush1.msra.mxu0 0.0
      %1836 = vmatprep.subr.mxu0 0.0
      %1837 = vmatpush1.msra.mxu0 0.0
      %1838 = vmatprep.mubr.f32.mxu0 0.0
      %1839 = vmatmul.mubr.f32.gmra.mrb[0].mxu0 %v1584
      %v1840 = vpop.f32.mrb[0].mxu0
      %v1841 = vadd.f32 0.0, %v1840
      %v1842 = vpop.f32.mrb[0].mxu0
      %v1843 = vadd.f32 0.0, %v1842
      %1844 = vmatprep.mubr.f32.mxu0 0.0
      %1845 = vmatmul.mubr.f32.gmra.mrb[0].mxu0 %v1587
      %v1846 = vpop.f32.mrb[0].mxu0
      %v1847 = vadd.f32 0.0, %v1846
      %v1848 = vpop.f32.mrb[0].mxu0
      %v1849 = vadd.f32 0.0, %v1848
      %1850 = vmatprep.mubr.f32.mxu0 0.0
      %1851 = vmatmul.mubr.f32.gmra.mrb[0].mxu0 %v1590
      %v1852 = vpop.f32.mrb[0].mxu0
      %v1853 = vadd.f32 0.0, %v1852
      %v1854 = vpop.f32.mrb[0].mxu0
      %v1855 = vadd.f32 0.0, %v1854
      %1856 = vdwg.mxu0
      %1857 = vmatprep.subr.mxu0 %v1606
      %1858 = vmatpush1.msra.mxu0 %v1604
      %1859 = vmatprep.subr.mxu0 0.0
      %1860 = vmatpush1.msra.mxu0 0.0
      %1861 = vmatprep.subr.mxu0 0.0
      %1862 = vmatpush1.msra.mxu0 0.0
      %1863 = vmatprep.subr.mxu0 0.0
      %1864 = vmatpush1.msra.mxu0 0.0
      %1865 = vmatprep.subr.mxu0 0.0
      %1866 = vmatpush1.msra.mxu0 0.0
      %1867 = vmatprep.subr.mxu0 0.0
      %1868 = vmatpush1.msra.mxu0 0.0
      %1869 = vmatprep.subr.mxu0 0.0
      %1870 = vmatpush1.msra.mxu0 0.0
      %1871 = vmatprep.subr.mxu0 0.0
      %1872 = vmatpush1.msra.mxu0 0.0
      %1873 = vmatprep.subr.mxu0 0.0
      %1874 = vmatpush1.msra.mxu0 0.0
      %1875 = vmatprep.subr.mxu0 0.0
      %1876 = vmatpush1.msra.mxu0 0.0
      %1877 = vmatprep.subr.mxu0 0.0
      %1878 = vmatpush1.msra.mxu0 0.0
      %1879 = vmatprep.subr.mxu0 0.0
      %1880 = vmatpush1.msra.mxu0 0.0
      %1881 = vmatprep.subr.mxu0 0.0
      %1882 = vmatpush1.msra.mxu0 0.0
      %1883 = vmatprep.subr.mxu0 0.0
      %1884 = vmatpush1.msra.mxu0 0.0
      %1885 = vmatprep.subr.mxu0 0.0
      %1886 = vmatpush1.msra.mxu0 0.0
      %1887 = vmatprep.subr.mxu0 0.0
      %1888 = vmatpush1.msra.mxu0 0.0
      %1889 = vmatprep.subr.mxu0 0.0
      %1890 = vmatpush1.msra.mxu0 0.0
      %1891 = vmatprep.subr.mxu0 0.0
      %1892 = vmatpush1.msra.mxu0 0.0
      %1893 = vmatprep.subr.mxu0 0.0
      %1894 = vmatpush1.msra.mxu0 0.0
      %1895 = vmatprep.subr.mxu0 0.0
      %1896 = vmatpush1.msra.mxu0 0.0
      %1897 = vmatprep.subr.mxu0 0.0
      %1898 = vmatpush1.msra.mxu0 0.0
      %1899 = vmatprep.subr.mxu0 0.0
      %1900 = vmatpush1.msra.mxu0 0.0
      %1901 = vmatprep.subr.mxu0 0.0
      %1902 = vmatpush1.msra.mxu0 0.0
      %1903 = vmatprep.subr.mxu0 0.0
      %1904 = vmatpush1.msra.mxu0 0.0
      %1905 = vmatprep.subr.mxu0 0.0
      %1906 = vmatpush1.msra.mxu0 0.0
      %1907 = vmatprep.subr.mxu0 0.0
      %1908 = vmatpush1.msra.mxu0 0.0
      %1909 = vmatprep.subr.mxu0 0.0
      %1910 = vmatpush1.msra.mxu0 0.0
      %1911 = vmatprep.subr.mxu0 0.0
      %1912 = vmatpush1.msra.mxu0 0.0
      %1913 = vmatprep.subr.mxu0 0.0
      %1914 = vmatpush1.msra.mxu0 0.0
      %1915 = vmatprep.subr.mxu0 0.0
      %1916 = vmatpush1.msra.mxu0 0.0
      %1917 = vmatprep.subr.mxu0 0.0
      %1918 = vmatpush1.msra.mxu0 0.0
      %1919 = vmatprep.subr.mxu0 0.0
      %1920 = vmatpush1.msra.mxu0 0.0
      %1921 = vmatprep.mubr.f32.mxu0 0.0
      %1922 = vmatmul.mubr.f32.gmra.mrb[0].mxu0 %v1584
      %v1923 = vpop.f32.mrb[0].mxu0
      %v1924 = vadd.f32 0.0, %v1923
      %v1925 = vpop.f32.mrb[0].mxu0
      %v1926 = vadd.f32 0.0, %v1925
      %1927 = vmatprep.mubr.f32.mxu0 0.0
      %1928 = vmatmul.mubr.f32.gmra.mrb[0].mxu0 %v1587
      %v1929 = vpop.f32.mrb[0].mxu0
      %v1930 = vadd.f32 0.0, %v1929
      %v1931 = vpop.f32.mrb[0].mxu0
      %v1932 = vadd.f32 0.0, %v1931
      %1933 = vmatprep.mubr.f32.mxu0 0.0
      %1934 = vmatmul.mubr.f32.gmra.mrb[0].mxu0 %v1590
      %v1935 = vpop.f32.mrb[0].mxu0
      %v1936 = vadd.f32 0.0, %v1935
      %v1937 = vpop.f32.mrb[0].mxu0
      %v1938 = vadd.f32 0.0, %v1937
      %1939 = vdwg.mxu0
      %v1940 = vadd.f32 %v1531, %v1675
      %v1941 = vadd.f32 %v1532, %v1677
      %v1942 = vadd.f32 %v1533, %v1758
      %v1943 = vadd.f32 %v1534, %v1760
      %v1944 = vadd.f32 %v1535, %v1841
      %v1945 = vadd.f32 %v1536, %v1843
      %v1946 = vadd.f32 %v1537, %v1924
      %v1947 = vadd.f32 %v1538, %v1926
      %v1948 = vadd.f32 %v1539, %v1681
      %v1949 = vadd.f32 %v1540, %v1683
      %v1950 = vadd.f32 %v1541, %v1764
      %v1951 = vadd.f32 %v1542, %v1766
      %v1952 = vadd.f32 %v1543, %v1847
      %v1953 = vadd.f32 %v1544, %v1849
      %v1954 = vadd.f32 %v1545, %v1930
      %v1955 = vadd.f32 %v1546, %v1932
      %v1956 = vadd.f32 %v1547, %v1687
      %v1957 = vadd.f32 %v1548, %v1689
      %v1958 = vadd.f32 %v1549, %v1770
      %v1959 = vadd.f32 %v1550, %v1772
      %v1960 = vadd.f32 %v1551, %v1853
      %v1961 = vadd.f32 %v1552, %v1855
      %v1962 = vadd.f32 %v1553, %v1936
      %v1963 = vadd.f32 %v1554, %v1938
      %s1964 = scalar_lea.vmem %s1, 96
      %v1965 = vld [vmem:[%s1964] sm:$0xff]
      %v1966 = vld [vmem:[%s1964 + $0x8] sm:$0xff]
      %v1967 = vld [vmem:[%s1964 + $0x10] sm:$0xf]
      %1968 = vrot.lane.b32.xlu0 %v387, 124
      %v1969 = vpop.permute.xlu0 %1968
      %1970 = vrot.lane.b32.xlu0 %v402, 124
      %v1971 = vpop.permute.xlu0 %1970
      %1972 = vrot.lane.b32.xlu0 %v388, 124
      %v1973 = vpop.permute.xlu0 %1972
      %1974 = vrot.lane.b32.xlu0 %v403, 124
      %v1975 = vpop.permute.xlu0 %1974
      %1976 = vrot.lane.b32.xlu0 %v389, 124
      %v1977 = vpop.permute.xlu0 %1976
      %1978 = vrot.lane.b32.xlu0 %v404, 124
      %v1979 = vpop.permute.xlu0 %1978
      %1980 = vrot.lane.b32.xlu0 %v390, 124
      %v1981 = vpop.permute.xlu0 %1980
      %1982 = vrot.lane.b32.xlu0 %v405, 124
      %v1983 = vpop.permute.xlu0 %1982
      %vm1984 = vcmask 1014784
      %v1985 = vsel %vm1984, %v1969, %v1971
      %v1986 = vsel %vm1984, %v1971, %v1973
      %v1987 = vsel %vm1984, %v1973, %v1975
      %v1988 = vsel %vm1984, %v1975, %v1977
      %v1989 = vsel %vm1984, %v1977, %v1979
      %v1990 = vsel %vm1984, %v1979, %v1981
      %v1991 = vsel %vm1984, %v1981, %v1983
      %v1993 = vsel %vm430, %v1965, 0
      %v1996 = vsel %vm430, %v1966, 0
      %v1999 = vsel %vm430, %v1967, 0
      %v2001 = vsel %vm440, %v1985, 0
      %v2003 = vsel %vm440, %v1986, 0
      %v2005 = vsel %vm440, %v1987, 0
      %v2007 = vsel %vm440, %v1988, 0
      %v2009 = vsel %vm440, %v1989, 0
      %v2011 = vsel %vm440, %v1990, 0
      %v2013 = vsel %vm440, %v1991, 0
      %v2015 = vsel %vm440, %v1983, 0
      %2017 = vmatprep.subr.mxu0 %v2003
      %2018 = vmatpush1.msra.mxu0 %v2001
      %2019 = vmatprep.subr.mxu0 0.0
      %2020 = vmatpush1.msra.mxu0 0.0
      %2021 = vmatprep.subr.mxu0 0.0
      %2022 = vmatpush1.msra.mxu0 0.0
      %2023 = vmatprep.subr.mxu0 0.0
      %2024 = vmatpush1.msra.mxu0 0.0
      %2025 = vmatprep.subr.mxu0 0.0
      %2026 = vmatpush1.msra.mxu0 0.0
      %2027 = vmatprep.subr.mxu0 0.0
      %2028 = vmatpush1.msra.mxu0 0.0
      %2029 = vmatprep.subr.mxu0 0.0
      %2030 = vmatpush1.msra.mxu0 0.0
      %2031 = vmatprep.subr.mxu0 0.0
      %2032 = vmatpush1.msra.mxu0 0.0
      %2033 = vmatprep.subr.mxu0 0.0
      %2034 = vmatpush1.msra.mxu0 0.0
      %2035 = vmatprep.subr.mxu0 0.0
      %2036 = vmatpush1.msra.mxu0 0.0
      %2037 = vmatprep.subr.mxu0 0.0
      %2038 = vmatpush1.msra.mxu0 0.0
      %2039 = vmatprep.subr.mxu0 0.0
      %2040 = vmatpush1.msra.mxu0 0.0
      %2041 = vmatprep.subr.mxu0 0.0
      %2042 = vmatpush1.msra.mxu0 0.0
      %2043 = vmatprep.subr.mxu0 0.0
      %2044 = vmatpush1.msra.mxu0 0.0
      %2045 = vmatprep.subr.mxu0 0.0
      %2046 = vmatpush1.msra.mxu0 0.0
      %2047 = vmatprep.subr.mxu0 0.0
      %2048 = vmatpush1.msra.mxu0 0.0
      %2049 = vmatprep.subr.mxu0 0.0
      %2050 = vmatpush1.msra.mxu0 0.0
      %2051 = vmatprep.subr.mxu0 0.0
      %2052 = vmatpush1.msra.mxu0 0.0
      %2053 = vmatprep.subr.mxu0 0.0
      %2054 = vmatpush1.msra.mxu0 0.0
      %2055 = vmatprep.subr.mxu0 0.0
      %2056 = vmatpush1.msra.mxu0 0.0
      %2057 = vmatprep.subr.mxu0 0.0
      %2058 = vmatpush1.msra.mxu0 0.0
      %2059 = vmatprep.subr.mxu0 0.0
      %2060 = vmatpush1.msra.mxu0 0.0
      %2061 = vmatprep.subr.mxu0 0.0
      %2062 = vmatpush1.msra.mxu0 0.0
      %2063 = vmatprep.subr.mxu0 0.0
      %2064 = vmatpush1.msra.mxu0 0.0
      %2065 = vmatprep.subr.mxu0 0.0
      %2066 = vmatpush1.msra.mxu0 0.0
      %2067 = vmatprep.subr.mxu0 0.0
      %2068 = vmatpush1.msra.mxu0 0.0
      %2069 = vmatprep.subr.mxu0 0.0
      %2070 = vmatpush1.msra.mxu0 0.0
      %2071 = vmatprep.subr.mxu0 0.0
      %2072 = vmatpush1.msra.mxu0 0.0
      %2073 = vmatprep.subr.mxu0 0.0
      %2074 = vmatpush1.msra.mxu0 0.0
      %2075 = vmatprep.subr.mxu0 0.0
      %2076 = vmatpush1.msra.mxu0 0.0
      %2077 = vmatprep.subr.mxu0 0.0
      %2078 = vmatpush1.msra.mxu0 0.0
      %2079 = vmatprep.subr.mxu0 0.0
      %2080 = vmatpush1.msra.mxu0 0.0
      %2081 = vmatprep.mubr.f32.mxu0 0.0
      %2082 = vmatmul.mubr.f32.gmra.mrb[0].mxu0 %v1993
      %v2083 = vpop.f32.mrb[0].mxu0
      %v2084 = vadd.f32 0.0, %v2083
      %v2085 = vpop.f32.mrb[0].mxu0
      %v2086 = vadd.f32 0.0, %v2085
      %2087 = vmatprep.mubr.f32.mxu0 0.0
      %2088 = vmatmul.mubr.f32.gmra.mrb[0].mxu0 %v1996
      %v2089 = vpop.f32.mrb[0].mxu0
      %v2090 = vadd.f32 0.0, %v2089
      %v2091 = vpop.f32.mrb[0].mxu0
      %v2092 = vadd.f32 0.0, %v2091
      %2093 = vmatprep.mubr.f32.mxu0 0.0
      %2094 = vmatmul.mubr.f32.gmra.mrb[0].mxu0 %v1999
      %v2095 = vpop.f32.mrb[0].mxu0
      %v2096 = vadd.f32 0.0, %v2095
      %v2097 = vpop.f32.mrb[0].mxu0
      %v2098 = vadd.f32 0.0, %v2097
      %2099 = vdwg.mxu0
      %2100 = vmatprep.subr.mxu0 %v2007
      %2101 = vmatpush1.msra.mxu0 %v2005
      %2102 = vmatprep.subr.mxu0 0.0
      %2103 = vmatpush1.msra.mxu0 0.0
      %2104 = vmatprep.subr.mxu0 0.0
      %2105 = vmatpush1.msra.mxu0 0.0
      %2106 = vmatprep.subr.mxu0 0.0
      %2107 = vmatpush1.msra.mxu0 0.0
      %2108 = vmatprep.subr.mxu0 0.0
      %2109 = vmatpush1.msra.mxu0 0.0
      %2110 = vmatprep.subr.mxu0 0.0
      %2111 = vmatpush1.msra.mxu0 0.0
      %2112 = vmatprep.subr.mxu0 0.0
      %2113 = vmatpush1.msra.mxu0 0.0
      %2114 = vmatprep.subr.mxu0 0.0
      %2115 = vmatpush1.msra.mxu0 0.0
      %2116 = vmatprep.subr.mxu0 0.0
      %2117 = vmatpush1.msra.mxu0 0.0
      %2118 = vmatprep.subr.mxu0 0.0
      %2119 = vmatpush1.msra.mxu0 0.0
      %2120 = vmatprep.subr.mxu0 0.0
      %2121 = vmatpush1.msra.mxu0 0.0
      %2122 = vmatprep.subr.mxu0 0.0
      %2123 = vmatpush1.msra.mxu0 0.0
      %2124 = vmatprep.subr.mxu0 0.0
      %2125 = vmatpush1.msra.mxu0 0.0
      %2126 = vmatprep.subr.mxu0 0.0
      %2127 = vmatpush1.msra.mxu0 0.0
      %2128 = vmatprep.subr.mxu0 0.0
      %2129 = vmatpush1.msra.mxu0 0.0
      %2130 = vmatprep.subr.mxu0 0.0
      %2131 = vmatpush1.msra.mxu0 0.0
      %2132 = vmatprep.subr.mxu0 0.0
      %2133 = vmatpush1.msra.mxu0 0.0
      %2134 = vmatprep.subr.mxu0 0.0
      %2135 = vmatpush1.msra.mxu0 0.0
      %2136 = vmatprep.subr.mxu0 0.0
      %2137 = vmatpush1.msra.mxu0 0.0
      %2138 = vmatprep.subr.mxu0 0.0
      %2139 = vmatpush1.msra.mxu0 0.0
      %2140 = vmatprep.subr.mxu0 0.0
      %2141 = vmatpush1.msra.mxu0 0.0
      %2142 = vmatprep.subr.mxu0 0.0
      %2143 = vmatpush1.msra.mxu0 0.0
      %2144 = vmatprep.subr.mxu0 0.0
      %2145 = vmatpush1.msra.mxu0 0.0
      %2146 = vmatprep.subr.mxu0 0.0
      %2147 = vmatpush1.msra.mxu0 0.0
      %2148 = vmatprep.subr.mxu0 0.0
      %2149 = vmatpush1.msra.mxu0 0.0
      %2150 = vmatprep.subr.mxu0 0.0
      %2151 = vmatpush1.msra.mxu0 0.0
      %2152 = vmatprep.subr.mxu0 0.0
      %2153 = vmatpush1.msra.mxu0 0.0
      %2154 = vmatprep.subr.mxu0 0.0
      %2155 = vmatpush1.msra.mxu0 0.0
      %2156 = vmatprep.subr.mxu0 0.0
      %2157 = vmatpush1.msra.mxu0 0.0
      %2158 = vmatprep.subr.mxu0 0.0
      %2159 = vmatpush1.msra.mxu0 0.0
      %2160 = vmatprep.subr.mxu0 0.0
      %2161 = vmatpush1.msra.mxu0 0.0
      %2162 = vmatprep.subr.mxu0 0.0
      %2163 = vmatpush1.msra.mxu0 0.0
      %2164 = vmatprep.mubr.f32.mxu0 0.0
      %2165 = vmatmul.mubr.f32.gmra.mrb[0].mxu0 %v1993
      %v2166 = vpop.f32.mrb[0].mxu0
      %v2167 = vadd.f32 0.0, %v2166
      %v2168 = vpop.f32.mrb[0].mxu0
      %v2169 = vadd.f32 0.0, %v2168
      %2170 = vmatprep.mubr.f32.mxu0 0.0
      %2171 = vmatmul.mubr.f32.gmra.mrb[0].mxu0 %v1996
      %v2172 = vpop.f32.mrb[0].mxu0
      %v2173 = vadd.f32 0.0, %v2172
      %v2174 = vpop.f32.mrb[0].mxu0
      %v2175 = vadd.f32 0.0, %v2174
      %2176 = vmatprep.mubr.f32.mxu0 0.0
      %2177 = vmatmul.mubr.f32.gmra.mrb[0].mxu0 %v1999
      %v2178 = vpop.f32.mrb[0].mxu0
      %v2179 = vadd.f32 0.0, %v2178
      %v2180 = vpop.f32.mrb[0].mxu0
      %v2181 = vadd.f32 0.0, %v2180
      %2182 = vdwg.mxu0
      %2183 = vmatprep.subr.mxu0 %v2011
      %2184 = vmatpush1.msra.mxu0 %v2009
      %2185 = vmatprep.subr.mxu0 0.0
      %2186 = vmatpush1.msra.mxu0 0.0
      %2187 = vmatprep.subr.mxu0 0.0
      %2188 = vmatpush1.msra.mxu0 0.0
      %2189 = vmatprep.subr.mxu0 0.0
      %2190 = vmatpush1.msra.mxu0 0.0
      %2191 = vmatprep.subr.mxu0 0.0
      %2192 = vmatpush1.msra.mxu0 0.0
      %2193 = vmatprep.subr.mxu0 0.0
      %2194 = vmatpush1.msra.mxu0 0.0
      %2195 = vmatprep.subr.mxu0 0.0
      %2196 = vmatpush1.msra.mxu0 0.0
      %2197 = vmatprep.subr.mxu0 0.0
      %2198 = vmatpush1.msra.mxu0 0.0
      %2199 = vmatprep.subr.mxu0 0.0
      %2200 = vmatpush1.msra.mxu0 0.0
      %2201 = vmatprep.subr.mxu0 0.0
      %2202 = vmatpush1.msra.mxu0 0.0
      %2203 = vmatprep.subr.mxu0 0.0
      %2204 = vmatpush1.msra.mxu0 0.0
      %2205 = vmatprep.subr.mxu0 0.0
      %2206 = vmatpush1.msra.mxu0 0.0
      %2207 = vmatprep.subr.mxu0 0.0
      %2208 = vmatpush1.msra.mxu0 0.0
      %2209 = vmatprep.subr.mxu0 0.0
      %2210 = vmatpush1.msra.mxu0 0.0
      %2211 = vmatprep.subr.mxu0 0.0
      %2212 = vmatpush1.msra.mxu0 0.0
      %2213 = vmatprep.subr.mxu0 0.0
      %2214 = vmatpush1.msra.mxu0 0.0
      %2215 = vmatprep.subr.mxu0 0.0
      %2216 = vmatpush1.msra.mxu0 0.0
      %2217 = vmatprep.subr.mxu0 0.0
      %2218 = vmatpush1.msra.mxu0 0.0
      %2219 = vmatprep.subr.mxu0 0.0
      %2220 = vmatpush1.msra.mxu0 0.0
      %2221 = vmatprep.subr.mxu0 0.0
      %2222 = vmatpush1.msra.mxu0 0.0
      %2223 = vmatprep.subr.mxu0 0.0
      %2224 = vmatpush1.msra.mxu0 0.0
      %2225 = vmatprep.subr.mxu0 0.0
      %2226 = vmatpush1.msra.mxu0 0.0
      %2227 = vmatprep.subr.mxu0 0.0
      %2228 = vmatpush1.msra.mxu0 0.0
      %2229 = vmatprep.subr.mxu0 0.0
      %2230 = vmatpush1.msra.mxu0 0.0
      %2231 = vmatprep.subr.mxu0 0.0
      %2232 = vmatpush1.msra.mxu0 0.0
      %2233 = vmatprep.subr.mxu0 0.0
      %2234 = vmatpush1.msra.mxu0 0.0
      %2235 = vmatprep.subr.mxu0 0.0
      %2236 = vmatpush1.msra.mxu0 0.0
      %2237 = vmatprep.subr.mxu0 0.0
      %2238 = vmatpush1.msra.mxu0 0.0
      %2239 = vmatprep.subr.mxu0 0.0
      %2240 = vmatpush1.msra.mxu0 0.0
      %2241 = vmatprep.subr.mxu0 0.0
      %2242 = vmatpush1.msra.mxu0 0.0
      %2243 = vmatprep.subr.mxu0 0.0
      %2244 = vmatpush1.msra.mxu0 0.0
      %2245 = vmatprep.subr.mxu0 0.0
      %2246 = vmatpush1.msra.mxu0 0.0
      %2247 = vmatprep.mubr.f32.mxu0 0.0
      %2248 = vmatmul.mubr.f32.gmra.mrb[0].mxu0 %v1993
      %v2249 = vpop.f32.mrb[0].mxu0
      %v2250 = vadd.f32 0.0, %v2249
      %v2251 = vpop.f32.mrb[0].mxu0
      %v2252 = vadd.f32 0.0, %v2251
      %2253 = vmatprep.mubr.f32.mxu0 0.0
      %2254 = vmatmul.mubr.f32.gmra.mrb[0].mxu0 %v1996
      %v2255 = vpop.f32.mrb[0].mxu0
      %v2256 = vadd.f32 0.0, %v2255
      %v2257 = vpop.f32.mrb[0].mxu0
      %v2258 = vadd.f32 0.0, %v2257
      %2259 = vmatprep.mubr.f32.mxu0 0.0
      %2260 = vmatmul.mubr.f32.gmra.mrb[0].mxu0 %v1999
      %v2261 = vpop.f32.mrb[0].mxu0
      %v2262 = vadd.f32 0.0, %v2261
      %v2263 = vpop.f32.mrb[0].mxu0
      %v2264 = vadd.f32 0.0, %v2263
      %2265 = vdwg.mxu0
      %2266 = vmatprep.subr.mxu0 %v2015
      %2267 = vmatpush1.msra.mxu0 %v2013
      %2268 = vmatprep.subr.mxu0 0.0
      %2269 = vmatpush1.msra.mxu0 0.0
      %2270 = vmatprep.subr.mxu0 0.0
      %2271 = vmatpush1.msra.mxu0 0.0
      %2272 = vmatprep.subr.mxu0 0.0
      %2273 = vmatpush1.msra.mxu0 0.0
      %2274 = vmatprep.subr.mxu0 0.0
      %2275 = vmatpush1.msra.mxu0 0.0
      %2276 = vmatprep.subr.mxu0 0.0
      %2277 = vmatpush1.msra.mxu0 0.0
      %2278 = vmatprep.subr.mxu0 0.0
      %2279 = vmatpush1.msra.mxu0 0.0
      %2280 = vmatprep.subr.mxu0 0.0
      %2281 = vmatpush1.msra.mxu0 0.0
      %2282 = vmatprep.subr.mxu0 0.0
      %2283 = vmatpush1.msra.mxu0 0.0
      %2284 = vmatprep.subr.mxu0 0.0
      %2285 = vmatpush1.msra.mxu0 0.0
      %2286 = vmatprep.subr.mxu0 0.0
      %2287 = vmatpush1.msra.mxu0 0.0
      %2288 = vmatprep.subr.mxu0 0.0
      %2289 = vmatpush1.msra.mxu0 0.0
      %2290 = vmatprep.subr.mxu0 0.0
      %2291 = vmatpush1.msra.mxu0 0.0
      %2292 = vmatprep.subr.mxu0 0.0
      %2293 = vmatpush1.msra.mxu0 0.0
      %2294 = vmatprep.subr.mxu0 0.0
      %2295 = vmatpush1.msra.mxu0 0.0
      %2296 = vmatprep.subr.mxu0 0.0
      %2297 = vmatpush1.msra.mxu0 0.0
      %2298 = vmatprep.subr.mxu0 0.0
      %2299 = vmatpush1.msra.mxu0 0.0
      %2300 = vmatprep.subr.mxu0 0.0
      %2301 = vmatpush1.msra.mxu0 0.0
      %2302 = vmatprep.subr.mxu0 0.0
      %2303 = vmatpush1.msra.mxu0 0.0
      %2304 = vmatprep.subr.mxu0 0.0
      %2305 = vmatpush1.msra.mxu0 0.0
      %2306 = vmatprep.subr.mxu0 0.0
      %2307 = vmatpush1.msra.mxu0 0.0
      %2308 = vmatprep.subr.mxu0 0.0
      %2309 = vmatpush1.msra.mxu0 0.0
      %2310 = vmatprep.subr.mxu0 0.0
      %2311 = vmatpush1.msra.mxu0 0.0
      %2312 = vmatprep.subr.mxu0 0.0
      %2313 = vmatpush1.msra.mxu0 0.0
      %2314 = vmatprep.subr.mxu0 0.0
      %2315 = vmatpush1.msra.mxu0 0.0
      %2316 = vmatprep.subr.mxu0 0.0
      %2317 = vmatpush1.msra.mxu0 0.0
      %2318 = vmatprep.subr.mxu0 0.0
      %2319 = vmatpush1.msra.mxu0 0.0
      %2320 = vmatprep.subr.mxu0 0.0
      %2321 = vmatpush1.msra.mxu0 0.0
      %2322 = vmatprep.subr.mxu0 0.0
      %2323 = vmatpush1.msra.mxu0 0.0
      %2324 = vmatprep.subr.mxu0 0.0
      %2325 = vmatpush1.msra.mxu0 0.0
      %2326 = vmatprep.subr.mxu0 0.0
      %2327 = vmatpush1.msra.mxu0 0.0
      %2328 = vmatprep.subr.mxu0 0.0
      %2329 = vmatpush1.msra.mxu0 0.0
      %2330 = vmatprep.mubr.f32.mxu0 0.0
      %2331 = vmatmul.mubr.f32.gmra.mrb[0].mxu0 %v1993
      %v2332 = vpop.f32.mrb[0].mxu0
      %v2333 = vadd.f32 0.0, %v2332
      %v2334 = vpop.f32.mrb[0].mxu0
      %v2335 = vadd.f32 0.0, %v2334
      %2336 = vmatprep.mubr.f32.mxu0 0.0
      %2337 = vmatmul.mubr.f32.gmra.mrb[0].mxu0 %v1996
      %v2338 = vpop.f32.mrb[0].mxu0
      %v2339 = vadd.f32 0.0, %v2338
      %v2340 = vpop.f32.mrb[0].mxu0
      %v2341 = vadd.f32 0.0, %v2340
      %2342 = vmatprep.mubr.f32.mxu0 0.0
      %2343 = vmatmul.mubr.f32.gmra.mrb[0].mxu0 %v1999
      %v2344 = vpop.f32.mrb[0].mxu0
      %v2345 = vadd.f32 0.0, %v2344
      %v2346 = vpop.f32.mrb[0].mxu0
      %v2347 = vadd.f32 0.0, %v2346
      %2348 = vdwg.mxu0
      %v2349 = vadd.f32 %v1940, %v2084
      %v2350 = vadd.f32 %v1941, %v2086
      %v2351 = vadd.f32 %v1942, %v2167
      %v2352 = vadd.f32 %v1943, %v2169
      %v2353 = vadd.f32 %v1944, %v2250
      %v2354 = vadd.f32 %v1945, %v2252
      %v2355 = vadd.f32 %v1946, %v2333
      %v2356 = vadd.f32 %v1947, %v2335
      %v2357 = vadd.f32 %v1948, %v2090
      %v2358 = vadd.f32 %v1949, %v2092
      %v2359 = vadd.f32 %v1950, %v2173
      %v2360 = vadd.f32 %v1951, %v2175
      %v2361 = vadd.f32 %v1952, %v2256
      %v2362 = vadd.f32 %v1953, %v2258
      %v2363 = vadd.f32 %v1954, %v2339
      %v2364 = vadd.f32 %v1955, %v2341
      %v2365 = vadd.f32 %v1956, %v2096
      %v2366 = vadd.f32 %v1957, %v2098
      %v2367 = vadd.f32 %v1958, %v2179
      %v2368 = vadd.f32 %v1959, %v2181
      %v2369 = vadd.f32 %v1960, %v2262
      %v2370 = vadd.f32 %v1961, %v2264
      %v2371 = vadd.f32 %v1962, %v2345
      %v2372 = vadd.f32 %v1963, %v2347
      %s2373 = scalar_lea.vmem %s1, 120
      %v2374 = vld [vmem:[%s2373] sm:$0xff]
      %v2375 = vld [vmem:[%s2373 + $0x8] sm:$0xff]
      %v2376 = vld [vmem:[%s2373 + $0x10] sm:$0xf]
      %2377 = vrot.lane.b32.xlu0 %v387, 123
      %v2378 = vpop.permute.xlu0 %2377
      %2379 = vrot.lane.b32.xlu0 %v402, 123
      %v2380 = vpop.permute.xlu0 %2379
      %2381 = vrot.lane.b32.xlu0 %v388, 123
      %v2382 = vpop.permute.xlu0 %2381
      %2383 = vrot.lane.b32.xlu0 %v403, 123
      %v2384 = vpop.permute.xlu0 %2383
      %2385 = vrot.lane.b32.xlu0 %v389, 123
      %v2386 = vpop.permute.xlu0 %2385
      %2387 = vrot.lane.b32.xlu0 %v404, 123
      %v2388 = vpop.permute.xlu0 %2387
      %2389 = vrot.lane.b32.xlu0 %v390, 123
      %v2390 = vpop.permute.xlu0 %2389
      %2391 = vrot.lane.b32.xlu0 %v405, 123
      %v2392 = vpop.permute.xlu0 %2391
      %vm2393 = vcmask 1006592
      %v2394 = vsel %vm2393, %v2378, %v2380
      %v2395 = vsel %vm2393, %v2380, %v2382
      %v2396 = vsel %vm2393, %v2382, %v2384
      %v2397 = vsel %vm2393, %v2384, %v2386
      %v2398 = vsel %vm2393, %v2386, %v2388
      %v2399 = vsel %vm2393, %v2388, %v2390
      %v2400 = vsel %vm2393, %v2390, %v2392
      %v2402 = vsel %vm430, %v2374, 0
      %v2405 = vsel %vm430, %v2375, 0
      %v2408 = vsel %vm430, %v2376, 0
      %v2410 = vsel %vm440, %v2394, 0
      %v2412 = vsel %vm440, %v2395, 0
      %v2414 = vsel %vm440, %v2396, 0
      %v2416 = vsel %vm440, %v2397, 0
      %v2418 = vsel %vm440, %v2398, 0
      %v2420 = vsel %vm440, %v2399, 0
      %v2422 = vsel %vm440, %v2400, 0
      %v2424 = vsel %vm440, %v2392, 0
      %2426 = vmatprep.subr.mxu0 %v2412
      %2427 = vmatpush1.msra.mxu0 %v2410
      %2428 = vmatprep.subr.mxu0 0.0
      %2429 = vmatpush1.msra.mxu0 0.0
      %2430 = vmatprep.subr.mxu0 0.0
      %2431 = vmatpush1.msra.mxu0 0.0
      %2432 = vmatprep.subr.mxu0 0.0
      %2433 = vmatpush1.msra.mxu0 0.0
      %2434 = vmatprep.subr.mxu0 0.0
      %2435 = vmatpush1.msra.mxu0 0.0
      %2436 = vmatprep.subr.mxu0 0.0
      %2437 = vmatpush1.msra.mxu0 0.0
      %2438 = vmatprep.subr.mxu0 0.0
      %2439 = vmatpush1.msra.mxu0 0.0
      %2440 = vmatprep.subr.mxu0 0.0
      %2441 = vmatpush1.msra.mxu0 0.0
      %2442 = vmatprep.subr.mxu0 0.0
      %2443 = vmatpush1.msra.mxu0 0.0
      %2444 = vmatprep.subr.mxu0 0.0
      %2445 = vmatpush1.msra.mxu0 0.0
      %2446 = vmatprep.subr.mxu0 0.0
      %2447 = vmatpush1.msra.mxu0 0.0
      %2448 = vmatprep.subr.mxu0 0.0
      %2449 = vmatpush1.msra.mxu0 0.0
      %2450 = vmatprep.subr.mxu0 0.0
      %2451 = vmatpush1.msra.mxu0 0.0
      %2452 = vmatprep.subr.mxu0 0.0
      %2453 = vmatpush1.msra.mxu0 0.0
      %2454 = vmatprep.subr.mxu0 0.0
      %2455 = vmatpush1.msra.mxu0 0.0
      %2456 = vmatprep.subr.mxu0 0.0
      %2457 = vmatpush1.msra.mxu0 0.0
      %2458 = vmatprep.subr.mxu0 0.0
      %2459 = vmatpush1.msra.mxu0 0.0
      %2460 = vmatprep.subr.mxu0 0.0
      %2461 = vmatpush1.msra.mxu0 0.0
      %2462 = vmatprep.subr.mxu0 0.0
      %2463 = vmatpush1.msra.mxu0 0.0
      %2464 = vmatprep.subr.mxu0 0.0
      %2465 = vmatpush1.msra.mxu0 0.0
      %2466 = vmatprep.subr.mxu0 0.0
      %2467 = vmatpush1.msra.mxu0 0.0
      %2468 = vmatprep.subr.mxu0 0.0
      %2469 = vmatpush1.msra.mxu0 0.0
      %2470 = vmatprep.subr.mxu0 0.0
      %2471 = vmatpush1.msra.mxu0 0.0
      %2472 = vmatprep.subr.mxu0 0.0
      %2473 = vmatpush1.msra.mxu0 0.0
      %2474 = vmatprep.subr.mxu0 0.0
      %2475 = vmatpush1.msra.mxu0 0.0
      %2476 = vmatprep.subr.mxu0 0.0
      %2477 = vmatpush1.msra.mxu0 0.0
      %2478 = vmatprep.subr.mxu0 0.0
      %2479 = vmatpush1.msra.mxu0 0.0
      %2480 = vmatprep.subr.mxu0 0.0
      %2481 = vmatpush1.msra.mxu0 0.0
      %2482 = vmatprep.subr.mxu0 0.0
      %2483 = vmatpush1.msra.mxu0 0.0
      %2484 = vmatprep.subr.mxu0 0.0
      %2485 = vmatpush1.msra.mxu0 0.0
      %2486 = vmatprep.subr.mxu0 0.0
      %2487 = vmatpush1.msra.mxu0 0.0
      %2488 = vmatprep.subr.mxu0 0.0
      %2489 = vmatpush1.msra.mxu0 0.0
      %2490 = vmatprep.mubr.f32.mxu0 0.0
      %2491 = vmatmul.mubr.f32.gmra.mrb[0].mxu0 %v2402
      %v2492 = vpop.f32.mrb[0].mxu0
      %v2493 = vadd.f32 0.0, %v2492
      %v2494 = vpop.f32.mrb[0].mxu0
      %v2495 = vadd.f32 0.0, %v2494
      %2496 = vmatprep.mubr.f32.mxu0 0.0
      %2497 = vmatmul.mubr.f32.gmra.mrb[0].mxu0 %v2405
      %v2498 = vpop.f32.mrb[0].mxu0
      %v2499 = vadd.f32 0.0, %v2498
      %v2500 = vpop.f32.mrb[0].mxu0
      %v2501 = vadd.f32 0.0, %v2500
      %2502 = vmatprep.mubr.f32.mxu0 0.0
      %2503 = vmatmul.mubr.f32.gmra.mrb[0].mxu0 %v2408
      %v2504 = vpop.f32.mrb[0].mxu0
      %v2505 = vadd.f32 0.0, %v2504
      %v2506 = vpop.f32.mrb[0].mxu0
      %v2507 = vadd.f32 0.0, %v2506
      %2508 = vdwg.mxu0
      %2509 = vmatprep.subr.mxu0 %v2416
      %2510 = vmatpush1.msra.mxu0 %v2414
      %2511 = vmatprep.subr.mxu0 0.0
      %2512 = vmatpush1.msra.mxu0 0.0
      %2513 = vmatprep.subr.mxu0 0.0
      %2514 = vmatpush1.msra.mxu0 0.0
      %2515 = vmatprep.subr.mxu0 0.0
      %2516 = vmatpush1.msra.mxu0 0.0
      %2517 = vmatprep.subr.mxu0 0.0
      %2518 = vmatpush1.msra.mxu0 0.0
      %2519 = vmatprep.subr.mxu0 0.0
      %2520 = vmatpush1.msra.mxu0 0.0
      %2521 = vmatprep.subr.mxu0 0.0
      %2522 = vmatpush1.msra.mxu0 0.0
      %2523 = vmatprep.subr.mxu0 0.0
      %2524 = vmatpush1.msra.mxu0 0.0
      %2525 = vmatprep.subr.mxu0 0.0
      %2526 = vmatpush1.msra.mxu0 0.0
      %2527 = vmatprep.subr.mxu0 0.0
      %2528 = vmatpush1.msra.mxu0 0.0
      %2529 = vmatprep.subr.mxu0 0.0
      %2530 = vmatpush1.msra.mxu0 0.0
      %2531 = vmatprep.subr.mxu0 0.0
      %2532 = vmatpush1.msra.mxu0 0.0
      %2533 = vmatprep.subr.mxu0 0.0
      %2534 = vmatpush1.msra.mxu0 0.0
      %2535 = vmatprep.subr.mxu0 0.0
      %2536 = vmatpush1.msra.mxu0 0.0
      %2537 = vmatprep.subr.mxu0 0.0
      %2538 = vmatpush1.msra.mxu0 0.0
      %2539 = vmatprep.subr.mxu0 0.0
      %2540 = vmatpush1.msra.mxu0 0.0
      %2541 = vmatprep.subr.mxu0 0.0
      %2542 = vmatpush1.msra.mxu0 0.0
      %2543 = vmatprep.subr.mxu0 0.0
      %2544 = vmatpush1.msra.mxu0 0.0
      %2545 = vmatprep.subr.mxu0 0.0
      %2546 = vmatpush1.msra.mxu0 0.0
      %2547 = vmatprep.subr.mxu0 0.0
      %2548 = vmatpush1.msra.mxu0 0.0
      %2549 = vmatprep.subr.mxu0 0.0
      %2550 = vmatpush1.msra.mxu0 0.0
      %2551 = vmatprep.subr.mxu0 0.0
      %2552 = vmatpush1.msra.mxu0 0.0
      %2553 = vmatprep.subr.mxu0 0.0
      %2554 = vmatpush1.msra.mxu0 0.0
      %2555 = vmatprep.subr.mxu0 0.0
      %2556 = vmatpush1.msra.mxu0 0.0
      %2557 = vmatprep.subr.mxu0 0.0
      %2558 = vmatpush1.msra.mxu0 0.0
      %2559 = vmatprep.subr.mxu0 0.0
      %2560 = vmatpush1.msra.mxu0 0.0
      %2561 = vmatprep.subr.mxu0 0.0
      %2562 = vmatpush1.msra.mxu0 0.0
      %2563 = vmatprep.subr.mxu0 0.0
      %2564 = vmatpush1.msra.mxu0 0.0
      %2565 = vmatprep.subr.mxu0 0.0
      %2566 = vmatpush1.msra.mxu0 0.0
      %2567 = vmatprep.subr.mxu0 0.0
      %2568 = vmatpush1.msra.mxu0 0.0
      %2569 = vmatprep.subr.mxu0 0.0
      %2570 = vmatpush1.msra.mxu0 0.0
      %2571 = vmatprep.subr.mxu0 0.0
      %2572 = vmatpush1.msra.mxu0 0.0
      %2573 = vmatprep.mubr.f32.mxu0 0.0
      %2574 = vmatmul.mubr.f32.gmra.mrb[0].mxu0 %v2402
      %v2575 = vpop.f32.mrb[0].mxu0
      %v2576 = vadd.f32 0.0, %v2575
      %v2577 = vpop.f32.mrb[0].mxu0
      %v2578 = vadd.f32 0.0, %v2577
      %2579 = vmatprep.mubr.f32.mxu0 0.0
      %2580 = vmatmul.mubr.f32.gmra.mrb[0].mxu0 %v2405
      %v2581 = vpop.f32.mrb[0].mxu0
      %v2582 = vadd.f32 0.0, %v2581
      %v2583 = vpop.f32.mrb[0].mxu0
      %v2584 = vadd.f32 0.0, %v2583
      %2585 = vmatprep.mubr.f32.mxu0 0.0
      %2586 = vmatmul.mubr.f32.gmra.mrb[0].mxu0 %v2408
      %v2587 = vpop.f32.mrb[0].mxu0
      %v2588 = vadd.f32 0.0, %v2587
      %v2589 = vpop.f32.mrb[0].mxu0
      %v2590 = vadd.f32 0.0, %v2589
      %2591 = vdwg.mxu0
      %2592 = vmatprep.subr.mxu0 %v2420
      %2593 = vmatpush1.msra.mxu0 %v2418
      %2594 = vmatprep.subr.mxu0 0.0
      %2595 = vmatpush1.msra.mxu0 0.0
      %2596 = vmatprep.subr.mxu0 0.0
      %2597 = vmatpush1.msra.mxu0 0.0
      %2598 = vmatprep.subr.mxu0 0.0
      %2599 = vmatpush1.msra.mxu0 0.0
      %2600 = vmatprep.subr.mxu0 0.0
      %2601 = vmatpush1.msra.mxu0 0.0
      %2602 = vmatprep.subr.mxu0 0.0
      %2603 = vmatpush1.msra.mxu0 0.0
      %2604 = vmatprep.subr.mxu0 0.0
      %2605 = vmatpush1.msra.mxu0 0.0
      %2606 = vmatprep.subr.mxu0 0.0
      %2607 = vmatpush1.msra.mxu0 0.0
      %2608 = vmatprep.subr.mxu0 0.0
      %2609 = vmatpush1.msra.mxu0 0.0
      %2610 = vmatprep.subr.mxu0 0.0
      %2611 = vmatpush1.msra.mxu0 0.0
      %2612 = vmatprep.subr.mxu0 0.0
      %2613 = vmatpush1.msra.mxu0 0.0
      %2614 = vmatprep.subr.mxu0 0.0
      %2615 = vmatpush1.msra.mxu0 0.0
      %2616 = vmatprep.subr.mxu0 0.0
      %2617 = vmatpush1.msra.mxu0 0.0
      %2618 = vmatprep.subr.mxu0 0.0
      %2619 = vmatpush1.msra.mxu0 0.0
      %2620 = vmatprep.subr.mxu0 0.0
      %2621 = vmatpush1.msra.mxu0 0.0
      %2622 = vmatprep.subr.mxu0 0.0
      %2623 = vmatpush1.msra.mxu0 0.0
      %2624 = vmatprep.subr.mxu0 0.0
      %2625 = vmatpush1.msra.mxu0 0.0
      %2626 = vmatprep.subr.mxu0 0.0
      %2627 = vmatpush1.msra.mxu0 0.0
      %2628 = vmatprep.subr.mxu0 0.0
      %2629 = vmatpush1.msra.mxu0 0.0
      %2630 = vmatprep.subr.mxu0 0.0
      %2631 = vmatpush1.msra.mxu0 0.0
      %2632 = vmatprep.subr.mxu0 0.0
      %2633 = vmatpush1.msra.mxu0 0.0
      %2634 = vmatprep.subr.mxu0 0.0
      %2635 = vmatpush1.msra.mxu0 0.0
      %2636 = vmatprep.subr.mxu0 0.0
      %2637 = vmatpush1.msra.mxu0 0.0
      %2638 = vmatprep.subr.mxu0 0.0
      %2639 = vmatpush1.msra.mxu0 0.0
      %2640 = vmatprep.subr.mxu0 0.0
      %2641 = vmatpush1.msra.mxu0 0.0
      %2642 = vmatprep.subr.mxu0 0.0
      %2643 = vmatpush1.msra.mxu0 0.0
      %2644 = vmatprep.subr.mxu0 0.0
      %2645 = vmatpush1.msra.mxu0 0.0
      %2646 = vmatprep.subr.mxu0 0.0
      %2647 = vmatpush1.msra.mxu0 0.0
      %2648 = vmatprep.subr.mxu0 0.0
      %2649 = vmatpush1.msra.mxu0 0.0
      %2650 = vmatprep.subr.mxu0 0.0
      %2651 = vmatpush1.msra.mxu0 0.0
      %2652 = vmatprep.subr.mxu0 0.0
      %2653 = vmatpush1.msra.mxu0 0.0
      %2654 = vmatprep.subr.mxu0 0.0
      %2655 = vmatpush1.msra.mxu0 0.0
      %2656 = vmatprep.mubr.f32.mxu0 0.0
      %2657 = vmatmul.mubr.f32.gmra.mrb[0].mxu0 %v2402
      %v2658 = vpop.f32.mrb[0].mxu0
      %v2659 = vadd.f32 0.0, %v2658
      %v2660 = vpop.f32.mrb[0].mxu0
      %v2661 = vadd.f32 0.0, %v2660
      %2662 = vmatprep.mubr.f32.mxu0 0.0
      %2663 = vmatmul.mubr.f32.gmra.mrb[0].mxu0 %v2405
      %v2664 = vpop.f32.mrb[0].mxu0
      %v2665 = vadd.f32 0.0, %v2664
      %v2666 = vpop.f32.mrb[0].mxu0
      %v2667 = vadd.f32 0.0, %v2666
      %2668 = vmatprep.mubr.f32.mxu0 0.0
      %2669 = vmatmul.mubr.f32.gmra.mrb[0].mxu0 %v2408
      %v2670 = vpop.f32.mrb[0].mxu0
      %v2671 = vadd.f32 0.0, %v2670
      %v2672 = vpop.f32.mrb[0].mxu0
      %v2673 = vadd.f32 0.0, %v2672
      %2674 = vdwg.mxu0
      %2675 = vmatprep.subr.mxu0 %v2424
      %2676 = vmatpush1.msra.mxu0 %v2422
      %2677 = vmatprep.subr.mxu0 0.0
      %2678 = vmatpush1.msra.mxu0 0.0
      %2679 = vmatprep.subr.mxu0 0.0
      %2680 = vmatpush1.msra.mxu0 0.0
      %2681 = vmatprep.subr.mxu0 0.0
      %2682 = vmatpush1.msra.mxu0 0.0
      %2683 = vmatprep.subr.mxu0 0.0
      %2684 = vmatpush1.msra.mxu0 0.0
      %2685 = vmatprep.subr.mxu0 0.0
      %2686 = vmatpush1.msra.mxu0 0.0
      %2687 = vmatprep.subr.mxu0 0.0
      %2688 = vmatpush1.msra.mxu0 0.0
      %2689 = vmatprep.subr.mxu0 0.0
      %2690 = vmatpush1.msra.mxu0 0.0
      %2691 = vmatprep.subr.mxu0 0.0
      %2692 = vmatpush1.msra.mxu0 0.0
      %2693 = vmatprep.subr.mxu0 0.0
      %2694 = vmatpush1.msra.mxu0 0.0
      %2695 = vmatprep.subr.mxu0 0.0
      %2696 = vmatpush1.msra.mxu0 0.0
      %2697 = vmatprep.subr.mxu0 0.0
      %2698 = vmatpush1.msra.mxu0 0.0
      %2699 = vmatprep.subr.mxu0 0.0
      %2700 = vmatpush1.msra.mxu0 0.0
      %2701 = vmatprep.subr.mxu0 0.0
      %2702 = vmatpush1.msra.mxu0 0.0
      %2703 = vmatprep.subr.mxu0 0.0
      %2704 = vmatpush1.msra.mxu0 0.0
      %2705 = vmatprep.subr.mxu0 0.0
      %2706 = vmatpush1.msra.mxu0 0.0
      %2707 = vmatprep.subr.mxu0 0.0
      %2708 = vmatpush1.msra.mxu0 0.0
      %2709 = vmatprep.subr.mxu0 0.0
      %2710 = vmatpush1.msra.mxu0 0.0
      %2711 = vmatprep.subr.mxu0 0.0
      %2712 = vmatpush1.msra.mxu0 0.0
      %2713 = vmatprep.subr.mxu0 0.0
      %2714 = vmatpush1.msra.mxu0 0.0
      %2715 = vmatprep.subr.mxu0 0.0
      %2716 = vmatpush1.msra.mxu0 0.0
      %2717 = vmatprep.subr.mxu0 0.0
      %2718 = vmatpush1.msra.mxu0 0.0
      %2719 = vmatprep.subr.mxu0 0.0
      %2720 = vmatpush1.msra.mxu0 0.0
      %2721 = vmatprep.subr.mxu0 0.0
      %2722 = vmatpush1.msra.mxu0 0.0
      %2723 = vmatprep.subr.mxu0 0.0
      %2724 = vmatpush1.msra.mxu0 0.0
      %2725 = vmatprep.subr.mxu0 0.0
      %2726 = vmatpush1.msra.mxu0 0.0
      %2727 = vmatprep.subr.mxu0 0.0
      %2728 = vmatpush1.msra.mxu0 0.0
      %2729 = vmatprep.subr.mxu0 0.0
      %2730 = vmatpush1.msra.mxu0 0.0
      %2731 = vmatprep.subr.mxu0 0.0
      %2732 = vmatpush1.msra.mxu0 0.0
      %2733 = vmatprep.subr.mxu0 0.0
      %2734 = vmatpush1.msra.mxu0 0.0
      %2735 = vmatprep.subr.mxu0 0.0
      %2736 = vmatpush1.msra.mxu0 0.0
      %2737 = vmatprep.subr.mxu0 0.0
      %2738 = vmatpush1.msra.mxu0 0.0
      %2739 = vmatprep.mubr.f32.mxu0 0.0
      %2740 = vmatmul.mubr.f32.gmra.mrb[0].mxu0 %v2402
      %v2741 = vpop.f32.mrb[0].mxu0
      %v2742 = vadd.f32 0.0, %v2741
      %v2743 = vpop.f32.mrb[0].mxu0
      %v2744 = vadd.f32 0.0, %v2743
      %2745 = vmatprep.mubr.f32.mxu0 0.0
      %2746 = vmatmul.mubr.f32.gmra.mrb[0].mxu0 %v2405
      %v2747 = vpop.f32.mrb[0].mxu0
      %v2748 = vadd.f32 0.0, %v2747
      %v2749 = vpop.f32.mrb[0].mxu0
      %v2750 = vadd.f32 0.0, %v2749
      %2751 = vmatprep.mubr.f32.mxu0 0.0
      %2752 = vmatmul.mubr.f32.gmra.mrb[0].mxu0 %v2408
      %v2753 = vpop.f32.mrb[0].mxu0
      %v2754 = vadd.f32 0.0, %v2753
      %v2755 = vpop.f32.mrb[0].mxu0
      %v2756 = vadd.f32 0.0, %v2755
      %2757 = vdwg.mxu0
      %v2758 = vadd.f32 %v2349, %v2493
      %v2759 = vadd.f32 %v2350, %v2495
      %v2760 = vadd.f32 %v2351, %v2576
      %v2761 = vadd.f32 %v2352, %v2578
      %v2762 = vadd.f32 %v2353, %v2659
      %v2763 = vadd.f32 %v2354, %v2661
      %v2764 = vadd.f32 %v2355, %v2742
      %v2765 = vadd.f32 %v2356, %v2744
      %v2766 = vadd.f32 %v2357, %v2499
      %v2767 = vadd.f32 %v2358, %v2501
      %v2768 = vadd.f32 %v2359, %v2582
      %v2769 = vadd.f32 %v2360, %v2584
      %v2770 = vadd.f32 %v2361, %v2665
      %v2771 = vadd.f32 %v2362, %v2667
      %v2772 = vadd.f32 %v2363, %v2748
      %v2773 = vadd.f32 %v2364, %v2750
      %v2774 = vadd.f32 %v2365, %v2505
      %v2775 = vadd.f32 %v2366, %v2507
      %v2776 = vadd.f32 %v2367, %v2588
      %v2777 = vadd.f32 %v2368, %v2590
      %v2778 = vadd.f32 %v2369, %v2671
      %v2779 = vadd.f32 %v2370, %v2673
      %v2780 = vadd.f32 %v2371, %v2754
      %v2781 = vadd.f32 %v2372, %v2756
      %s2782 = scalar_lea.vmem %s1, 144
      %v2783 = vld [vmem:[%s2782] sm:$0xff]
      %v2784 = vld [vmem:[%s2782 + $0x8] sm:$0xff]
      %v2785 = vld [vmem:[%s2782 + $0x10] sm:$0xf]
      %2786 = vrot.lane.b32.xlu0 %v387, 122
      %v2787 = vpop.permute.xlu0 %2786
      %2788 = vrot.lane.b32.xlu0 %v402, 122
      %v2789 = vpop.permute.xlu0 %2788
      %2790 = vrot.lane.b32.xlu0 %v388, 122
      %v2791 = vpop.permute.xlu0 %2790
      %2792 = vrot.lane.b32.xlu0 %v403, 122
      %v2793 = vpop.permute.xlu0 %2792
      %2794 = vrot.lane.b32.xlu0 %v389, 122
      %v2795 = vpop.permute.xlu0 %2794
      %2796 = vrot.lane.b32.xlu0 %v404, 122
      %v2797 = vpop.permute.xlu0 %2796
      %2798 = vrot.lane.b32.xlu0 %v390, 122
      %v2799 = vpop.permute.xlu0 %2798
      %2800 = vrot.lane.b32.xlu0 %v405, 122
      %v2801 = vpop.permute.xlu0 %2800
      %vm2802 = vcmask 998400
      %v2803 = vsel %vm2802, %v2787, %v2789
      %v2804 = vsel %vm2802, %v2789, %v2791
      %v2805 = vsel %vm2802, %v2791, %v2793
      %v2806 = vsel %vm2802, %v2793, %v2795
      %v2807 = vsel %vm2802, %v2795, %v2797
      %v2808 = vsel %vm2802, %v2797, %v2799
      %v2809 = vsel %vm2802, %v2799, %v2801
      %v2811 = vsel %vm430, %v2783, 0
      %v2814 = vsel %vm430, %v2784, 0
      %v2817 = vsel %vm430, %v2785, 0
      %v2819 = vsel %vm440, %v2803, 0
      %v2821 = vsel %vm440, %v2804, 0
      %v2823 = vsel %vm440, %v2805, 0
      %v2825 = vsel %vm440, %v2806, 0
      %v2827 = vsel %vm440, %v2807, 0
      %v2829 = vsel %vm440, %v2808, 0
      %v2831 = vsel %vm440, %v2809, 0
      %v2833 = vsel %vm440, %v2801, 0
      %2835 = vmatprep.subr.mxu0 %v2821
      %2836 = vmatpush1.msra.mxu0 %v2819
      %2837 = vmatprep.subr.mxu0 0.0
      %2838 = vmatpush1.msra.mxu0 0.0
      %2839 = vmatprep.subr.mxu0 0.0
      %2840 = vmatpush1.msra.mxu0 0.0
      %2841 = vmatprep.subr.mxu0 0.0
      %2842 = vmatpush1.msra.mxu0 0.0
      %2843 = vmatprep.subr.mxu0 0.0
      %2844 = vmatpush1.msra.mxu0 0.0
      %2845 = vmatprep.subr.mxu0 0.0
      %2846 = vmatpush1.msra.mxu0 0.0
      %2847 = vmatprep.subr.mxu0 0.0
      %2848 = vmatpush1.msra.mxu0 0.0
      %2849 = vmatprep.subr.mxu0 0.0
      %2850 = vmatpush1.msra.mxu0 0.0
      %2851 = vmatprep.subr.mxu0 0.0
      %2852 = vmatpush1.msra.mxu0 0.0
      %2853 = vmatprep.subr.mxu0 0.0
      %2854 = vmatpush1.msra.mxu0 0.0
      %2855 = vmatprep.subr.mxu0 0.0
      %2856 = vmatpush1.msra.mxu0 0.0
      %2857 = vmatprep.subr.mxu0 0.0
      %2858 = vmatpush1.msra.mxu0 0.0
      %2859 = vmatprep.subr.mxu0 0.0
      %2860 = vmatpush1.msra.mxu0 0.0
      %2861 = vmatprep.subr.mxu0 0.0
      %2862 = vmatpush1.msra.mxu0 0.0
      %2863 = vmatprep.subr.mxu0 0.0
      %2864 = vmatpush1.msra.mxu0 0.0
      %2865 = vmatprep.subr.mxu0 0.0
      %2866 = vmatpush1.msra.mxu0 0.0
      %2867 = vmatprep.subr.mxu0 0.0
      %2868 = vmatpush1.msra.mxu0 0.0
      %2869 = vmatprep.subr.mxu0 0.0
      %2870 = vmatpush1.msra.mxu0 0.0
      %2871 = vmatprep.subr.mxu0 0.0
      %2872 = vmatpush1.msra.mxu0 0.0
      %2873 = vmatprep.subr.mxu0 0.0
      %2874 = vmatpush1.msra.mxu0 0.0
      %2875 = vmatprep.subr.mxu0 0.0
      %2876 = vmatpush1.msra.mxu0 0.0
      %2877 = vmatprep.subr.mxu0 0.0
      %2878 = vmatpush1.msra.mxu0 0.0
      %2879 = vmatprep.subr.mxu0 0.0
      %2880 = vmatpush1.msra.mxu0 0.0
      %2881 = vmatprep.subr.mxu0 0.0
      %2882 = vmatpush1.msra.mxu0 0.0
      %2883 = vmatprep.subr.mxu0 0.0
      %2884 = vmatpush1.msra.mxu0 0.0
      %2885 = vmatprep.subr.mxu0 0.0
      %2886 = vmatpush1.msra.mxu0 0.0
      %2887 = vmatprep.subr.mxu0 0.0
      %2888 = vmatpush1.msra.mxu0 0.0
      %2889 = vmatprep.subr.mxu0 0.0
      %2890 = vmatpush1.msra.mxu0 0.0
      %2891 = vmatprep.subr.mxu0 0.0
      %2892 = vmatpush1.msra.mxu0 0.0
      %2893 = vmatprep.subr.mxu0 0.0
      %2894 = vmatpush1.msra.mxu0 0.0
      %2895 = vmatprep.subr.mxu0 0.0
      %2896 = vmatpush1.msra.mxu0 0.0
      %2897 = vmatprep.subr.mxu0 0.0
      %2898 = vmatpush1.msra.mxu0 0.0
      %2899 = vmatprep.mubr.f32.mxu0 0.0
      %2900 = vmatmul.mubr.f32.gmra.mrb[0].mxu0 %v2811
      %v2901 = vpop.f32.mrb[0].mxu0
      %v2902 = vadd.f32 0.0, %v2901
      %v2903 = vpop.f32.mrb[0].mxu0
      %v2904 = vadd.f32 0.0, %v2903
      %2905 = vmatprep.mubr.f32.mxu0 0.0
      %2906 = vmatmul.mubr.f32.gmra.mrb[0].mxu0 %v2814
      %v2907 = vpop.f32.mrb[0].mxu0
      %v2908 = vadd.f32 0.0, %v2907
      %v2909 = vpop.f32.mrb[0].mxu0
      %v2910 = vadd.f32 0.0, %v2909
      %2911 = vmatprep.mubr.f32.mxu0 0.0
      %2912 = vmatmul.mubr.f32.gmra.mrb[0].mxu0 %v2817
      %v2913 = vpop.f32.mrb[0].mxu0
      %v2914 = vadd.f32 0.0, %v2913
      %v2915 = vpop.f32.mrb[0].mxu0
      %v2916 = vadd.f32 0.0, %v2915
      %2917 = vdwg.mxu0
      %2918 = vmatprep.subr.mxu0 %v2825
      %2919 = vmatpush1.msra.mxu0 %v2823
      %2920 = vmatprep.subr.mxu0 0.0
      %2921 = vmatpush1.msra.mxu0 0.0
      %2922 = vmatprep.subr.mxu0 0.0
      %2923 = vmatpush1.msra.mxu0 0.0
      %2924 = vmatprep.subr.mxu0 0.0
      %2925 = vmatpush1.msra.mxu0 0.0
      %2926 = vmatprep.subr.mxu0 0.0
      %2927 = vmatpush1.msra.mxu0 0.0
      %2928 = vmatprep.subr.mxu0 0.0
      %2929 = vmatpush1.msra.mxu0 0.0
      %2930 = vmatprep.subr.mxu0 0.0
      %2931 = vmatpush1.msra.mxu0 0.0
      %2932 = vmatprep.subr.mxu0 0.0
      %2933 = vmatpush1.msra.mxu0 0.0
      %2934 = vmatprep.subr.mxu0 0.0
      %2935 = vmatpush1.msra.mxu0 0.0
      %2936 = vmatprep.subr.mxu0 0.0
      %2937 = vmatpush1.msra.mxu0 0.0
      %2938 = vmatprep.subr.mxu0 0.0
      %2939 = vmatpush1.msra.mxu0 0.0
      %2940 = vmatprep.subr.mxu0 0.0
      %2941 = vmatpush1.msra.mxu0 0.0
      %2942 = vmatprep.subr.mxu0 0.0
      %2943 = vmatpush1.msra.mxu0 0.0
      %2944 = vmatprep.subr.mxu0 0.0
      %2945 = vmatpush1.msra.mxu0 0.0
      %2946 = vmatprep.subr.mxu0 0.0
      %2947 = vmatpush1.msra.mxu0 0.0
      %2948 = vmatprep.subr.mxu0 0.0
      %2949 = vmatpush1.msra.mxu0 0.0
      %2950 = vmatprep.subr.mxu0 0.0
      %2951 = vmatpush1.msra.mxu0 0.0
      %2952 = vmatprep.subr.mxu0 0.0
      %2953 = vmatpush1.msra.mxu0 0.0
      %2954 = vmatprep.subr.mxu0 0.0
      %2955 = vmatpush1.msra.mxu0 0.0
      %2956 = vmatprep.subr.mxu0 0.0
      %2957 = vmatpush1.msra.mxu0 0.0
      %2958 = vmatprep.subr.mxu0 0.0
      %2959 = vmatpush1.msra.mxu0 0.0
      %2960 = vmatprep.subr.mxu0 0.0
      %2961 = vmatpush1.msra.mxu0 0.0
      %2962 = vmatprep.subr.mxu0 0.0
      %2963 = vmatpush1.msra.mxu0 0.0
      %2964 = vmatprep.subr.mxu0 0.0
      %2965 = vmatpush1.msra.mxu0 0.0
      %2966 = vmatprep.subr.mxu0 0.0
      %2967 = vmatpush1.msra.mxu0 0.0
      %2968 = vmatprep.subr.mxu0 0.0
      %2969 = vmatpush1.msra.mxu0 0.0
      %2970 = vmatprep.subr.mxu0 0.0
      %2971 = vmatpush1.msra.mxu0 0.0
      %2972 = vmatprep.subr.mxu0 0.0
      %2973 = vmatpush1.msra.mxu0 0.0
      %2974 = vmatprep.subr.mxu0 0.0
      %2975 = vmatpush1.msra.mxu0 0.0
      %2976 = vmatprep.subr.mxu0 0.0
      %2977 = vmatpush1.msra.mxu0 0.0
      %2978 = vmatprep.subr.mxu0 0.0
      %2979 = vmatpush1.msra.mxu0 0.0
      %2980 = vmatprep.subr.mxu0 0.0
      %2981 = vmatpush1.msra.mxu0 0.0
      %2982 = vmatprep.mubr.f32.mxu0 0.0
      %2983 = vmatmul.mubr.f32.gmra.mrb[0].mxu0 %v2811
      %v2984 = vpop.f32.mrb[0].mxu0
      %v2985 = vadd.f32 0.0, %v2984
      %v2986 = vpop.f32.mrb[0].mxu0
      %v2987 = vadd.f32 0.0, %v2986
      %2988 = vmatprep.mubr.f32.mxu0 0.0
      %2989 = vmatmul.mubr.f32.gmra.mrb[0].mxu0 %v2814
      %v2990 = vpop.f32.mrb[0].mxu0
      %v2991 = vadd.f32 0.0, %v2990
      %v2992 = vpop.f32.mrb[0].mxu0
      %v2993 = vadd.f32 0.0, %v2992
      %2994 = vmatprep.mubr.f32.mxu0 0.0
      %2995 = vmatmul.mubr.f32.gmra.mrb[0].mxu0 %v2817
      %v2996 = vpop.f32.mrb[0].mxu0
      %v2997 = vadd.f32 0.0, %v2996
      %v2998 = vpop.f32.mrb[0].mxu0
      %v2999 = vadd.f32 0.0, %v2998
      %3000 = vdwg.mxu0
      %3001 = vmatprep.subr.mxu0 %v2829
      %3002 = vmatpush1.msra.mxu0 %v2827
      %3003 = vmatprep.subr.mxu0 0.0
      %3004 = vmatpush1.msra.mxu0 0.0
      %3005 = vmatprep.subr.mxu0 0.0
      %3006 = vmatpush1.msra.mxu0 0.0
      %3007 = vmatprep.subr.mxu0 0.0
      %3008 = vmatpush1.msra.mxu0 0.0
      %3009 = vmatprep.subr.mxu0 0.0
      %3010 = vmatpush1.msra.mxu0 0.0
      %3011 = vmatprep.subr.mxu0 0.0
      %3012 = vmatpush1.msra.mxu0 0.0
      %3013 = vmatprep.subr.mxu0 0.0
      %3014 = vmatpush1.msra.mxu0 0.0
      %3015 = vmatprep.subr.mxu0 0.0
      %3016 = vmatpush1.msra.mxu0 0.0
      %3017 = vmatprep.subr.mxu0 0.0
      %3018 = vmatpush1.msra.mxu0 0.0
      %3019 = vmatprep.subr.mxu0 0.0
      %3020 = vmatpush1.msra.mxu0 0.0
      %3021 = vmatprep.subr.mxu0 0.0
      %3022 = vmatpush1.msra.mxu0 0.0
      %3023 = vmatprep.subr.mxu0 0.0
      %3024 = vmatpush1.msra.mxu0 0.0
      %3025 = vmatprep.subr.mxu0 0.0
      %3026 = vmatpush1.msra.mxu0 0.0
      %3027 = vmatprep.subr.mxu0 0.0
      %3028 = vmatpush1.msra.mxu0 0.0
      %3029 = vmatprep.subr.mxu0 0.0
      %3030 = vmatpush1.msra.mxu0 0.0
      %3031 = vmatprep.subr.mxu0 0.0
      %3032 = vmatpush1.msra.mxu0 0.0
      %3033 = vmatprep.subr.mxu0 0.0
      %3034 = vmatpush1.msra.mxu0 0.0
      %3035 = vmatprep.subr.mxu0 0.0
      %3036 = vmatpush1.msra.mxu0 0.0
      %3037 = vmatprep.subr.mxu0 0.0
      %3038 = vmatpush1.msra.mxu0 0.0
      %3039 = vmatprep.subr.mxu0 0.0
      %3040 = vmatpush1.msra.mxu0 0.0
      %3041 = vmatprep.subr.mxu0 0.0
      %3042 = vmatpush1.msra.mxu0 0.0
      %3043 = vmatprep.subr.mxu0 0.0
      %3044 = vmatpush1.msra.mxu0 0.0
      %3045 = vmatprep.subr.mxu0 0.0
      %3046 = vmatpush1.msra.mxu0 0.0
      %3047 = vmatprep.subr.mxu0 0.0
      %3048 = vmatpush1.msra.mxu0 0.0
      %3049 = vmatprep.subr.mxu0 0.0
      %3050 = vmatpush1.msra.mxu0 0.0
      %3051 = vmatprep.subr.mxu0 0.0
      %3052 = vmatpush1.msra.mxu0 0.0
      %3053 = vmatprep.subr.mxu0 0.0
      %3054 = vmatpush1.msra.mxu0 0.0
      %3055 = vmatprep.subr.mxu0 0.0
      %3056 = vmatpush1.msra.mxu0 0.0
      %3057 = vmatprep.subr.mxu0 0.0
      %3058 = vmatpush1.msra.mxu0 0.0
      %3059 = vmatprep.subr.mxu0 0.0
      %3060 = vmatpush1.msra.mxu0 0.0
      %3061 = vmatprep.subr.mxu0 0.0
      %3062 = vmatpush1.msra.mxu0 0.0
      %3063 = vmatprep.subr.mxu0 0.0
      %3064 = vmatpush1.msra.mxu0 0.0
      %3065 = vmatprep.mubr.f32.mxu0 0.0
      %3066 = vmatmul.mubr.f32.gmra.mrb[0].mxu0 %v2811
      %v3067 = vpop.f32.mrb[0].mxu0
      %v3068 = vadd.f32 0.0, %v3067
      %v3069 = vpop.f32.mrb[0].mxu0
      %v3070 = vadd.f32 0.0, %v3069
      %3071 = vmatprep.mubr.f32.mxu0 0.0
      %3072 = vmatmul.mubr.f32.gmra.mrb[0].mxu0 %v2814
      %v3073 = vpop.f32.mrb[0].mxu0
      %v3074 = vadd.f32 0.0, %v3073
      %v3075 = vpop.f32.mrb[0].mxu0
      %v3076 = vadd.f32 0.0, %v3075
      %3077 = vmatprep.mubr.f32.mxu0 0.0
      %3078 = vmatmul.mubr.f32.gmra.mrb[0].mxu0 %v2817
      %v3079 = vpop.f32.mrb[0].mxu0
      %v3080 = vadd.f32 0.0, %v3079
      %v3081 = vpop.f32.mrb[0].mxu0
      %v3082 = vadd.f32 0.0, %v3081
      %3083 = vdwg.mxu0
      %3084 = vmatprep.subr.mxu0 %v2833
      %3085 = vmatpush1.msra.mxu0 %v2831
      %3086 = vmatprep.subr.mxu0 0.0
      %3087 = vmatpush1.msra.mxu0 0.0
      %3088 = vmatprep.subr.mxu0 0.0
      %3089 = vmatpush1.msra.mxu0 0.0
      %3090 = vmatprep.subr.mxu0 0.0
      %3091 = vmatpush1.msra.mxu0 0.0
      %3092 = vmatprep.subr.mxu0 0.0
      %3093 = vmatpush1.msra.mxu0 0.0
      %3094 = vmatprep.subr.mxu0 0.0
      %3095 = vmatpush1.msra.mxu0 0.0
      %3096 = vmatprep.subr.mxu0 0.0
      %3097 = vmatpush1.msra.mxu0 0.0
      %3098 = vmatprep.subr.mxu0 0.0
      %3099 = vmatpush1.msra.mxu0 0.0
      %3100 = vmatprep.subr.mxu0 0.0
      %3101 = vmatpush1.msra.mxu0 0.0
      %3102 = vmatprep.subr.mxu0 0.0
      %3103 = vmatpush1.msra.mxu0 0.0
      %3104 = vmatprep.subr.mxu0 0.0
      %3105 = vmatpush1.msra.mxu0 0.0
      %3106 = vmatprep.subr.mxu0 0.0
      %3107 = vmatpush1.msra.mxu0 0.0
      %3108 = vmatprep.subr.mxu0 0.0
      %3109 = vmatpush1.msra.mxu0 0.0
      %3110 = vmatprep.subr.mxu0 0.0
      %3111 = vmatpush1.msra.mxu0 0.0
      %3112 = vmatprep.subr.mxu0 0.0
      %3113 = vmatpush1.msra.mxu0 0.0
      %3114 = vmatprep.subr.mxu0 0.0
      %3115 = vmatpush1.msra.mxu0 0.0
      %3116 = vmatprep.subr.mxu0 0.0
      %3117 = vmatpush1.msra.mxu0 0.0
      %3118 = vmatprep.subr.mxu0 0.0
      %3119 = vmatpush1.msra.mxu0 0.0
      %3120 = vmatprep.subr.mxu0 0.0
      %3121 = vmatpush1.msra.mxu0 0.0
      %3122 = vmatprep.subr.mxu0 0.0
      %3123 = vmatpush1.msra.mxu0 0.0
      %3124 = vmatprep.subr.mxu0 0.0
      %3125 = vmatpush1.msra.mxu0 0.0
      %3126 = vmatprep.subr.mxu0 0.0
      %3127 = vmatpush1.msra.mxu0 0.0
      %3128 = vmatprep.subr.mxu0 0.0
      %3129 = vmatpush1.msra.mxu0 0.0
      %3130 = vmatprep.subr.mxu0 0.0
      %3131 = vmatpush1.msra.mxu0 0.0
      %3132 = vmatprep.subr.mxu0 0.0
      %3133 = vmatpush1.msra.mxu0 0.0
      %3134 = vmatprep.subr.mxu0 0.0
      %3135 = vmatpush1.msra.mxu0 0.0
      %3136 = vmatprep.subr.mxu0 0.0
      %3137 = vmatpush1.msra.mxu0 0.0
      %3138 = vmatprep.subr.mxu0 0.0
      %3139 = vmatpush1.msra.mxu0 0.0
      %3140 = vmatprep.subr.mxu0 0.0
      %3141 = vmatpush1.msra.mxu0 0.0
      %3142 = vmatprep.subr.mxu0 0.0
      %3143 = vmatpush1.msra.mxu0 0.0
      %3144 = vmatprep.subr.mxu0 0.0
      %3145 = vmatpush1.msra.mxu0 0.0
      %3146 = vmatprep.subr.mxu0 0.0
      %3147 = vmatpush1.msra.mxu0 0.0
      %3148 = vmatprep.mubr.f32.mxu0 0.0
      %3149 = vmatmul.mubr.f32.gmra.mrb[0].mxu0 %v2811
      %v3150 = vpop.f32.mrb[0].mxu0
      %v3151 = vadd.f32 0.0, %v3150
      %v3152 = vpop.f32.mrb[0].mxu0
      %v3153 = vadd.f32 0.0, %v3152
      %3154 = vmatprep.mubr.f32.mxu0 0.0
      %3155 = vmatmul.mubr.f32.gmra.mrb[0].mxu0 %v2814
      %v3156 = vpop.f32.mrb[0].mxu0
      %v3157 = vadd.f32 0.0, %v3156
      %v3158 = vpop.f32.mrb[0].mxu0
      %v3159 = vadd.f32 0.0, %v3158
      %3160 = vmatprep.mubr.f32.mxu0 0.0
      %3161 = vmatmul.mubr.f32.gmra.mrb[0].mxu0 %v2817
      %v3162 = vpop.f32.mrb[0].mxu0
      %v3163 = vadd.f32 0.0, %v3162
      %v3164 = vpop.f32.mrb[0].mxu0
      %v3165 = vadd.f32 0.0, %v3164
      %3166 = vdwg.mxu0
      %v3167 = vadd.f32 %v2758, %v2902
      %v3168 = vadd.f32 %v2759, %v2904
      %v3169 = vadd.f32 %v2760, %v2985
      %v3170 = vadd.f32 %v2761, %v2987
      %v3171 = vadd.f32 %v2762, %v3068
      %v3172 = vadd.f32 %v2763, %v3070
      %v3173 = vadd.f32 %v2764, %v3151
      %v3174 = vadd.f32 %v2765, %v3153
      %v3175 = vadd.f32 %v2766, %v2908
      %v3176 = vadd.f32 %v2767, %v2910
      %v3177 = vadd.f32 %v2768, %v2991
      %v3178 = vadd.f32 %v2769, %v2993
      %v3179 = vadd.f32 %v2770, %v3074
      %v3180 = vadd.f32 %v2771, %v3076
      %v3181 = vadd.f32 %v2772, %v3157
      %v3182 = vadd.f32 %v2773, %v3159
      %v3183 = vadd.f32 %v2774, %v2914
      %v3184 = vadd.f32 %v2775, %v2916
      %v3185 = vadd.f32 %v2776, %v2997
      %v3186 = vadd.f32 %v2777, %v2999
      %v3187 = vadd.f32 %v2778, %v3080
      %v3188 = vadd.f32 %v2779, %v3082
      %v3189 = vadd.f32 %v2780, %v3163
      %v3190 = vadd.f32 %v2781, %v3165
      %s3191 = scalar_lea.vmem %s1, 168
      %v3192 = vld [vmem:[%s3191] sm:$0xff]
      %v3193 = vld [vmem:[%s3191 + $0x8] sm:$0xff]
      %v3194 = vld [vmem:[%s3191 + $0x10] sm:$0xf]
      %3195 = vrot.lane.b32.xlu0 %v387, 121
      %v3196 = vpop.permute.xlu0 %3195
      %3197 = vrot.lane.b32.xlu0 %v402, 121
      %v3198 = vpop.permute.xlu0 %3197
      %3199 = vrot.lane.b32.xlu0 %v388, 121
      %v3200 = vpop.permute.xlu0 %3199
      %3201 = vrot.lane.b32.xlu0 %v403, 121
      %v3202 = vpop.permute.xlu0 %3201
      %3203 = vrot.lane.b32.xlu0 %v389, 121
      %v3204 = vpop.permute.xlu0 %3203
      %3205 = vrot.lane.b32.xlu0 %v404, 121
      %v3206 = vpop.permute.xlu0 %3205
      %3207 = vrot.lane.b32.xlu0 %v390, 121
      %v3208 = vpop.permute.xlu0 %3207
      %3209 = vrot.lane.b32.xlu0 %v405, 121
      %v3210 = vpop.permute.xlu0 %3209
      %vm3211 = vcmask 990208
      %v3212 = vsel %vm3211, %v3196, %v3198
      %v3213 = vsel %vm3211, %v3198, %v3200
      %v3214 = vsel %vm3211, %v3200, %v3202
      %v3215 = vsel %vm3211, %v3202, %v3204
      %v3216 = vsel %vm3211, %v3204, %v3206
      %v3217 = vsel %vm3211, %v3206, %v3208
      %v3218 = vsel %vm3211, %v3208, %v3210
      %v3220 = vsel %vm430, %v3192, 0
      %v3223 = vsel %vm430, %v3193, 0
      %v3226 = vsel %vm430, %v3194, 0
      %v3228 = vsel %vm440, %v3212, 0
      %v3230 = vsel %vm440, %v3213, 0
      %v3232 = vsel %vm440, %v3214, 0
      %v3234 = vsel %vm440, %v3215, 0
      %v3236 = vsel %vm440, %v3216, 0
      %v3238 = vsel %vm440, %v3217, 0
      %v3240 = vsel %vm440, %v3218, 0
      %v3242 = vsel %vm440, %v3210, 0
      %3244 = vmatprep.subr.mxu0 %v3230
      %3245 = vmatpush1.msra.mxu0 %v3228
      %3246 = vmatprep.subr.mxu0 0.0
      %3247 = vmatpush1.msra.mxu0 0.0
      %3248 = vmatprep.subr.mxu0 0.0
      %3249 = vmatpush1.msra.mxu0 0.0
      %3250 = vmatprep.subr.mxu0 0.0
      %3251 = vmatpush1.msra.mxu0 0.0
      %3252 = vmatprep.subr.mxu0 0.0
      %3253 = vmatpush1.msra.mxu0 0.0
      %3254 = vmatprep.subr.mxu0 0.0
      %3255 = vmatpush1.msra.mxu0 0.0
      %3256 = vmatprep.subr.mxu0 0.0
      %3257 = vmatpush1.msra.mxu0 0.0
      %3258 = vmatprep.subr.mxu0 0.0
      %3259 = vmatpush1.msra.mxu0 0.0
      %3260 = vmatprep.subr.mxu0 0.0
      %3261 = vmatpush1.msra.mxu0 0.0
      %3262 = vmatprep.subr.mxu0 0.0
      %3263 = vmatpush1.msra.mxu0 0.0
      %3264 = vmatprep.subr.mxu0 0.0
      %3265 = vmatpush1.msra.mxu0 0.0
      %3266 = vmatprep.subr.mxu0 0.0
      %3267 = vmatpush1.msra.mxu0 0.0
      %3268 = vmatprep.subr.mxu0 0.0
      %3269 = vmatpush1.msra.mxu0 0.0
      %3270 = vmatprep.subr.mxu0 0.0
      %3271 = vmatpush1.msra.mxu0 0.0
      %3272 = vmatprep.subr.mxu0 0.0
      %3273 = vmatpush1.msra.mxu0 0.0
      %3274 = vmatprep.subr.mxu0 0.0
      %3275 = vmatpush1.msra.mxu0 0.0
      %3276 = vmatprep.subr.mxu0 0.0
      %3277 = vmatpush1.msra.mxu0 0.0
      %3278 = vmatprep.subr.mxu0 0.0
      %3279 = vmatpush1.msra.mxu0 0.0
      %3280 = vmatprep.subr.mxu0 0.0
      %3281 = vmatpush1.msra.mxu0 0.0
      %3282 = vmatprep.subr.mxu0 0.0
      %3283 = vmatpush1.msra.mxu0 0.0
      %3284 = vmatprep.subr.mxu0 0.0
      %3285 = vmatpush1.msra.mxu0 0.0
      %3286 = vmatprep.subr.mxu0 0.0
      %3287 = vmatpush1.msra.mxu0 0.0
      %3288 = vmatprep.subr.mxu0 0.0
      %3289 = vmatpush1.msra.mxu0 0.0
      %3290 = vmatprep.subr.mxu0 0.0
      %3291 = vmatpush1.msra.mxu0 0.0
      %3292 = vmatprep.subr.mxu0 0.0
      %3293 = vmatpush1.msra.mxu0 0.0
      %3294 = vmatprep.subr.mxu0 0.0
      %3295 = vmatpush1.msra.mxu0 0.0
      %3296 = vmatprep.subr.mxu0 0.0
      %3297 = vmatpush1.msra.mxu0 0.0
      %3298 = vmatprep.subr.mxu0 0.0
      %3299 = vmatpush1.msra.mxu0 0.0
      %3300 = vmatprep.subr.mxu0 0.0
      %3301 = vmatpush1.msra.mxu0 0.0
      %3302 = vmatprep.subr.mxu0 0.0
      %3303 = vmatpush1.msra.mxu0 0.0
      %3304 = vmatprep.subr.mxu0 0.0
      %3305 = vmatpush1.msra.mxu0 0.0
      %3306 = vmatprep.subr.mxu0 0.0
      %3307 = vmatpush1.msra.mxu0 0.0
      %3308 = vmatprep.mubr.f32.mxu0 0.0
      %3309 = vmatmul.mubr.f32.gmra.mrb[0].mxu0 %v3220
      %v3310 = vpop.f32.mrb[0].mxu0
      %v3311 = vadd.f32 0.0, %v3310
      %v3312 = vpop.f32.mrb[0].mxu0
      %v3313 = vadd.f32 0.0, %v3312
      %3314 = vmatprep.mubr.f32.mxu0 0.0
      %3315 = vmatmul.mubr.f32.gmra.mrb[0].mxu0 %v3223
      %v3316 = vpop.f32.mrb[0].mxu0
      %v3317 = vadd.f32 0.0, %v3316
      %v3318 = vpop.f32.mrb[0].mxu0
      %v3319 = vadd.f32 0.0, %v3318
      %3320 = vmatprep.mubr.f32.mxu0 0.0
      %3321 = vmatmul.mubr.f32.gmra.mrb[0].mxu0 %v3226
      %v3322 = vpop.f32.mrb[0].mxu0
      %v3323 = vadd.f32 0.0, %v3322
      %v3324 = vpop.f32.mrb[0].mxu0
      %v3325 = vadd.f32 0.0, %v3324
      %3326 = vdwg.mxu0
      %3327 = vmatprep.subr.mxu0 %v3234
      %3328 = vmatpush1.msra.mxu0 %v3232
      %3329 = vmatprep.subr.mxu0 0.0
      %3330 = vmatpush1.msra.mxu0 0.0
      %3331 = vmatprep.subr.mxu0 0.0
      %3332 = vmatpush1.msra.mxu0 0.0
      %3333 = vmatprep.subr.mxu0 0.0
      %3334 = vmatpush1.msra.mxu0 0.0
      %3335 = vmatprep.subr.mxu0 0.0
      %3336 = vmatpush1.msra.mxu0 0.0
      %3337 = vmatprep.subr.mxu0 0.0
      %3338 = vmatpush1.msra.mxu0 0.0
      %3339 = vmatprep.subr.mxu0 0.0
      %3340 = vmatpush1.msra.mxu0 0.0
      %3341 = vmatprep.subr.mxu0 0.0
      %3342 = vmatpush1.msra.mxu0 0.0
      %3343 = vmatprep.subr.mxu0 0.0
      %3344 = vmatpush1.msra.mxu0 0.0
      %3345 = vmatprep.subr.mxu0 0.0
      %3346 = vmatpush1.msra.mxu0 0.0
      %3347 = vmatprep.subr.mxu0 0.0
      %3348 = vmatpush1.msra.mxu0 0.0
      %3349 = vmatprep.subr.mxu0 0.0
      %3350 = vmatpush1.msra.mxu0 0.0
      %3351 = vmatprep.subr.mxu0 0.0
      %3352 = vmatpush1.msra.mxu0 0.0
      %3353 = vmatprep.subr.mxu0 0.0
      %3354 = vmatpush1.msra.mxu0 0.0
      %3355 = vmatprep.subr.mxu0 0.0
      %3356 = vmatpush1.msra.mxu0 0.0
      %3357 = vmatprep.subr.mxu0 0.0
      %3358 = vmatpush1.msra.mxu0 0.0
      %3359 = vmatprep.subr.mxu0 0.0
      %3360 = vmatpush1.msra.mxu0 0.0
      %3361 = vmatprep.subr.mxu0 0.0
      %3362 = vmatpush1.msra.mxu0 0.0
      %3363 = vmatprep.subr.mxu0 0.0
      %3364 = vmatpush1.msra.mxu0 0.0
      %3365 = vmatprep.subr.mxu0 0.0
      %3366 = vmatpush1.msra.mxu0 0.0
      %3367 = vmatprep.subr.mxu0 0.0
      %3368 = vmatpush1.msra.mxu0 0.0
      %3369 = vmatprep.subr.mxu0 0.0
      %3370 = vmatpush1.msra.mxu0 0.0
      %3371 = vmatprep.subr.mxu0 0.0
      %3372 = vmatpush1.msra.mxu0 0.0
      %3373 = vmatprep.subr.mxu0 0.0
      %3374 = vmatpush1.msra.mxu0 0.0
      %3375 = vmatprep.subr.mxu0 0.0
      %3376 = vmatpush1.msra.mxu0 0.0
      %3377 = vmatprep.subr.mxu0 0.0
      %3378 = vmatpush1.msra.mxu0 0.0
      %3379 = vmatprep.subr.mxu0 0.0
      %3380 = vmatpush1.msra.mxu0 0.0
      %3381 = vmatprep.subr.mxu0 0.0
      %3382 = vmatpush1.msra.mxu0 0.0
      %3383 = vmatprep.subr.mxu0 0.0
      %3384 = vmatpush1.msra.mxu0 0.0
      %3385 = vmatprep.subr.mxu0 0.0
      %3386 = vmatpush1.msra.mxu0 0.0
      %3387 = vmatprep.subr.mxu0 0.0
      %3388 = vmatpush1.msra.mxu0 0.0
      %3389 = vmatprep.subr.mxu0 0.0
      %3390 = vmatpush1.msra.mxu0 0.0
      %3391 = vmatprep.mubr.f32.mxu0 0.0
      %3392 = vmatmul.mubr.f32.gmra.mrb[0].mxu0 %v3220
      %v3393 = vpop.f32.mrb[0].mxu0
      %v3394 = vadd.f32 0.0, %v3393
      %v3395 = vpop.f32.mrb[0].mxu0
      %v3396 = vadd.f32 0.0, %v3395
      %3397 = vmatprep.mubr.f32.mxu0 0.0
      %3398 = vmatmul.mubr.f32.gmra.mrb[0].mxu0 %v3223
      %v3399 = vpop.f32.mrb[0].mxu0
      %v3400 = vadd.f32 0.0, %v3399
      %v3401 = vpop.f32.mrb[0].mxu0
      %v3402 = vadd.f32 0.0, %v3401
      %3403 = vmatprep.mubr.f32.mxu0 0.0
      %3404 = vmatmul.mubr.f32.gmra.mrb[0].mxu0 %v3226
      %v3405 = vpop.f32.mrb[0].mxu0
      %v3406 = vadd.f32 0.0, %v3405
      %v3407 = vpop.f32.mrb[0].mxu0
      %v3408 = vadd.f32 0.0, %v3407
      %3409 = vdwg.mxu0
      %3410 = vmatprep.subr.mxu0 %v3238
      %3411 = vmatpush1.msra.mxu0 %v3236
      %3412 = vmatprep.subr.mxu0 0.0
      %3413 = vmatpush1.msra.mxu0 0.0
      %3414 = vmatprep.subr.mxu0 0.0
      %3415 = vmatpush1.msra.mxu0 0.0
      %3416 = vmatprep.subr.mxu0 0.0
      %3417 = vmatpush1.msra.mxu0 0.0
      %3418 = vmatprep.subr.mxu0 0.0
      %3419 = vmatpush1.msra.mxu0 0.0
      %3420 = vmatprep.subr.mxu0 0.0
      %3421 = vmatpush1.msra.mxu0 0.0
      %3422 = vmatprep.subr.mxu0 0.0
      %3423 = vmatpush1.msra.mxu0 0.0
      %3424 = vmatprep.subr.mxu0 0.0
      %3425 = vmatpush1.msra.mxu0 0.0
      %3426 = vmatprep.subr.mxu0 0.0
      %3427 = vmatpush1.msra.mxu0 0.0
      %3428 = vmatprep.subr.mxu0 0.0
      %3429 = vmatpush1.msra.mxu0 0.0
      %3430 = vmatprep.subr.mxu0 0.0
      %3431 = vmatpush1.msra.mxu0 0.0
      %3432 = vmatprep.subr.mxu0 0.0
      %3433 = vmatpush1.msra.mxu0 0.0
      %3434 = vmatprep.subr.mxu0 0.0
      %3435 = vmatpush1.msra.mxu0 0.0
      %3436 = vmatprep.subr.mxu0 0.0
      %3437 = vmatpush1.msra.mxu0 0.0
      %3438 = vmatprep.subr.mxu0 0.0
      %3439 = vmatpush1.msra.mxu0 0.0
      %3440 = vmatprep.subr.mxu0 0.0
      %3441 = vmatpush1.msra.mxu0 0.0
      %3442 = vmatprep.subr.mxu0 0.0
      %3443 = vmatpush1.msra.mxu0 0.0
      %3444 = vmatprep.subr.mxu0 0.0
      %3445 = vmatpush1.msra.mxu0 0.0
      %3446 = vmatprep.subr.mxu0 0.0
      %3447 = vmatpush1.msra.mxu0 0.0
      %3448 = vmatprep.subr.mxu0 0.0
      %3449 = vmatpush1.msra.mxu0 0.0
      %3450 = vmatprep.subr.mxu0 0.0
      %3451 = vmatpush1.msra.mxu0 0.0
      %3452 = vmatprep.subr.mxu0 0.0
      %3453 = vmatpush1.msra.mxu0 0.0
      %3454 = vmatprep.subr.mxu0 0.0
      %3455 = vmatpush1.msra.mxu0 0.0
      %3456 = vmatprep.subr.mxu0 0.0
      %3457 = vmatpush1.msra.mxu0 0.0
      %3458 = vmatprep.subr.mxu0 0.0
      %3459 = vmatpush1.msra.mxu0 0.0
      %3460 = vmatprep.subr.mxu0 0.0
      %3461 = vmatpush1.msra.mxu0 0.0
      %3462 = vmatprep.subr.mxu0 0.0
      %3463 = vmatpush1.msra.mxu0 0.0
      %3464 = vmatprep.subr.mxu0 0.0
      %3465 = vmatpush1.msra.mxu0 0.0
      %3466 = vmatprep.subr.mxu0 0.0
      %3467 = vmatpush1.msra.mxu0 0.0
      %3468 = vmatprep.subr.mxu0 0.0
      %3469 = vmatpush1.msra.mxu0 0.0
      %3470 = vmatprep.subr.mxu0 0.0
      %3471 = vmatpush1.msra.mxu0 0.0
      %3472 = vmatprep.subr.mxu0 0.0
      %3473 = vmatpush1.msra.mxu0 0.0
      %3474 = vmatprep.mubr.f32.mxu0 0.0
      %3475 = vmatmul.mubr.f32.gmra.mrb[0].mxu0 %v3220
      %v3476 = vpop.f32.mrb[0].mxu0
      %v3477 = vadd.f32 0.0, %v3476
      %v3478 = vpop.f32.mrb[0].mxu0
      %v3479 = vadd.f32 0.0, %v3478
      %3480 = vmatprep.mubr.f32.mxu0 0.0
      %3481 = vmatmul.mubr.f32.gmra.mrb[0].mxu0 %v3223
      %v3482 = vpop.f32.mrb[0].mxu0
      %v3483 = vadd.f32 0.0, %v3482
      %v3484 = vpop.f32.mrb[0].mxu0
      %v3485 = vadd.f32 0.0, %v3484
      %3486 = vmatprep.mubr.f32.mxu0 0.0
      %3487 = vmatmul.mubr.f32.gmra.mrb[0].mxu0 %v3226
      %v3488 = vpop.f32.mrb[0].mxu0
      %v3489 = vadd.f32 0.0, %v3488
      %v3490 = vpop.f32.mrb[0].mxu0
      %v3491 = vadd.f32 0.0, %v3490
      %3492 = vdwg.mxu0
      %3493 = vmatprep.subr.mxu0 %v3242
      %3494 = vmatpush1.msra.mxu0 %v3240
      %3495 = vmatprep.subr.mxu0 0.0
      %3496 = vmatpush1.msra.mxu0 0.0
      %3497 = vmatprep.subr.mxu0 0.0
      %3498 = vmatpush1.msra.mxu0 0.0
      %3499 = vmatprep.subr.mxu0 0.0
      %3500 = vmatpush1.msra.mxu0 0.0
      %3501 = vmatprep.subr.mxu0 0.0
      %3502 = vmatpush1.msra.mxu0 0.0
      %3503 = vmatprep.subr.mxu0 0.0
      %3504 = vmatpush1.msra.mxu0 0.0
      %3505 = vmatprep.subr.mxu0 0.0
      %3506 = vmatpush1.msra.mxu0 0.0
      %3507 = vmatprep.subr.mxu0 0.0
      %3508 = vmatpush1.msra.mxu0 0.0
      %3509 = vmatprep.subr.mxu0 0.0
      %3510 = vmatpush1.msra.mxu0 0.0
      %3511 = vmatprep.subr.mxu0 0.0
      %3512 = vmatpush1.msra.mxu0 0.0
      %3513 = vmatprep.subr.mxu0 0.0
      %3514 = vmatpush1.msra.mxu0 0.0
      %3515 = vmatprep.subr.mxu0 0.0
      %3516 = vmatpush1.msra.mxu0 0.0
      %3517 = vmatprep.subr.mxu0 0.0
      %3518 = vmatpush1.msra.mxu0 0.0
      %3519 = vmatprep.subr.mxu0 0.0
      %3520 = vmatpush1.msra.mxu0 0.0
      %3521 = vmatprep.subr.mxu0 0.0
      %3522 = vmatpush1.msra.mxu0 0.0
      %3523 = vmatprep.subr.mxu0 0.0
      %3524 = vmatpush1.msra.mxu0 0.0
      %3525 = vmatprep.subr.mxu0 0.0
      %3526 = vmatpush1.msra.mxu0 0.0
      %3527 = vmatprep.subr.mxu0 0.0
      %3528 = vmatpush1.msra.mxu0 0.0
      %3529 = vmatprep.subr.mxu0 0.0
      %3530 = vmatpush1.msra.mxu0 0.0
      %3531 = vmatprep.subr.mxu0 0.0
      %3532 = vmatpush1.msra.mxu0 0.0
      %3533 = vmatprep.subr.mxu0 0.0
      %3534 = vmatpush1.msra.mxu0 0.0
      %3535 = vmatprep.subr.mxu0 0.0
      %3536 = vmatpush1.msra.mxu0 0.0
      %3537 = vmatprep.subr.mxu0 0.0
      %3538 = vmatpush1.msra.mxu0 0.0
      %3539 = vmatprep.subr.mxu0 0.0
      %3540 = vmatpush1.msra.mxu0 0.0
      %3541 = vmatprep.subr.mxu0 0.0
      %3542 = vmatpush1.msra.mxu0 0.0
      %3543 = vmatprep.subr.mxu0 0.0
      %3544 = vmatpush1.msra.mxu0 0.0
      %3545 = vmatprep.subr.mxu0 0.0
      %3546 = vmatpush1.msra.mxu0 0.0
      %3547 = vmatprep.subr.mxu0 0.0
      %3548 = vmatpush1.msra.mxu0 0.0
      %3549 = vmatprep.subr.mxu0 0.0
      %3550 = vmatpush1.msra.mxu0 0.0
      %3551 = vmatprep.subr.mxu0 0.0
      %3552 = vmatpush1.msra.mxu0 0.0
      %3553 = vmatprep.subr.mxu0 0.0
      %3554 = vmatpush1.msra.mxu0 0.0
      %3555 = vmatprep.subr.mxu0 0.0
      %3556 = vmatpush1.msra.mxu0 0.0
      %3557 = vmatprep.mubr.f32.mxu0 0.0
      %3558 = vmatmul.mubr.f32.gmra.mrb[0].mxu0 %v3220
      %v3559 = vpop.f32.mrb[0].mxu0
      %v3560 = vadd.f32 0.0, %v3559
      %v3561 = vpop.f32.mrb[0].mxu0
      %v3562 = vadd.f32 0.0, %v3561
      %3563 = vmatprep.mubr.f32.mxu0 0.0
      %3564 = vmatmul.mubr.f32.gmra.mrb[0].mxu0 %v3223
      %v3565 = vpop.f32.mrb[0].mxu0
      %v3566 = vadd.f32 0.0, %v3565
      %v3567 = vpop.f32.mrb[0].mxu0
      %v3568 = vadd.f32 0.0, %v3567
      %3569 = vmatprep.mubr.f32.mxu0 0.0
      %3570 = vmatmul.mubr.f32.gmra.mrb[0].mxu0 %v3226
      %v3571 = vpop.f32.mrb[0].mxu0
      %v3572 = vadd.f32 0.0, %v3571
      %v3573 = vpop.f32.mrb[0].mxu0
      %v3574 = vadd.f32 0.0, %v3573
      %3575 = vdwg.mxu0
      %v3576 = vadd.f32 %v3167, %v3311
      %v3577 = vadd.f32 %v3168, %v3313
      %v3578 = vadd.f32 %v3169, %v3394
      %v3579 = vadd.f32 %v3170, %v3396
      %v3580 = vadd.f32 %v3171, %v3477
      %v3581 = vadd.f32 %v3172, %v3479
      %v3582 = vadd.f32 %v3173, %v3560
      %v3583 = vadd.f32 %v3174, %v3562
      %v3584 = vadd.f32 %v3175, %v3317
      %v3585 = vadd.f32 %v3176, %v3319
      %v3586 = vadd.f32 %v3177, %v3400
      %v3587 = vadd.f32 %v3178, %v3402
      %v3588 = vadd.f32 %v3179, %v3483
      %v3589 = vadd.f32 %v3180, %v3485
      %v3590 = vadd.f32 %v3181, %v3566
      %v3591 = vadd.f32 %v3182, %v3568
      %v3592 = vadd.f32 %v3183, %v3323
      %v3593 = vadd.f32 %v3184, %v3325
      %v3594 = vadd.f32 %v3185, %v3406
      %v3595 = vadd.f32 %v3186, %v3408
      %v3596 = vadd.f32 %v3187, %v3489
      %v3597 = vadd.f32 %v3188, %v3491
      %v3598 = vadd.f32 %v3189, %v3572
      %v3599 = vadd.f32 %v3190, %v3574
      %s3600 = scalar_lea.vmem %s1, 192
      %v3601 = vld [vmem:[%s3600] sm:$0xff]
      %v3602 = vld [vmem:[%s3600 + $0x8] sm:$0xff]
      %v3603 = vld [vmem:[%s3600 + $0x10] sm:$0xf]
      %3604 = vrot.lane.b32.xlu0 %v387, 120
      %v3605 = vpop.permute.xlu0 %3604
      %3606 = vrot.lane.b32.xlu0 %v402, 120
      %v3607 = vpop.permute.xlu0 %3606
      %3608 = vrot.lane.b32.xlu0 %v388, 120
      %v3609 = vpop.permute.xlu0 %3608
      %3610 = vrot.lane.b32.xlu0 %v403, 120
      %v3611 = vpop.permute.xlu0 %3610
      %3612 = vrot.lane.b32.xlu0 %v389, 120
      %v3613 = vpop.permute.xlu0 %3612
      %3614 = vrot.lane.b32.xlu0 %v404, 120
      %v3615 = vpop.permute.xlu0 %3614
      %3616 = vrot.lane.b32.xlu0 %v390, 120
      %v3617 = vpop.permute.xlu0 %3616
      %3618 = vrot.lane.b32.xlu0 %v405, 120
      %v3619 = vpop.permute.xlu0 %3618
      %vm3620 = vcmask 982016
      %v3621 = vsel %vm3620, %v3605, %v3607
      %v3622 = vsel %vm3620, %v3607, %v3609
      %v3623 = vsel %vm3620, %v3609, %v3611
      %v3624 = vsel %vm3620, %v3611, %v3613
      %v3625 = vsel %vm3620, %v3613, %v3615
      %v3626 = vsel %vm3620, %v3615, %v3617
      %v3627 = vsel %vm3620, %v3617, %v3619
      %v3629 = vsel %vm430, %v3601, 0
      %v3632 = vsel %vm430, %v3602, 0
      %v3635 = vsel %vm430, %v3603, 0
      %v3637 = vsel %vm440, %v3621, 0
      %v3639 = vsel %vm440, %v3622, 0
      %v3641 = vsel %vm440, %v3623, 0
      %v3643 = vsel %vm440, %v3624, 0
      %v3645 = vsel %vm440, %v3625, 0
      %v3647 = vsel %vm440, %v3626, 0
      %v3649 = vsel %vm440, %v3627, 0
      %v3651 = vsel %vm440, %v3619, 0
      %3653 = vmatprep.subr.mxu0 %v3639
      %3654 = vmatpush1.msra.mxu0 %v3637
      %3655 = vmatprep.subr.mxu0 0.0
      %3656 = vmatpush1.msra.mxu0 0.0
      %3657 = vmatprep.subr.mxu0 0.0
      %3658 = vmatpush1.msra.mxu0 0.0
      %3659 = vmatprep.subr.mxu0 0.0
      %3660 = vmatpush1.msra.mxu0 0.0
      %3661 = vmatprep.subr.mxu0 0.0
      %3662 = vmatpush1.msra.mxu0 0.0
      %3663 = vmatprep.subr.mxu0 0.0
      %3664 = vmatpush1.msra.mxu0 0.0
      %3665 = vmatprep.subr.mxu0 0.0
      %3666 = vmatpush1.msra.mxu0 0.0
      %3667 = vmatprep.subr.mxu0 0.0
      %3668 = vmatpush1.msra.mxu0 0.0
      %3669 = vmatprep.subr.mxu0 0.0
      %3670 = vmatpush1.msra.mxu0 0.0
      %3671 = vmatprep.subr.mxu0 0.0
      %3672 = vmatpush1.msra.mxu0 0.0
      %3673 = vmatprep.subr.mxu0 0.0
      %3674 = vmatpush1.msra.mxu0 0.0
      %3675 = vmatprep.subr.mxu0 0.0
      %3676 = vmatpush1.msra.mxu0 0.0
      %3677 = vmatprep.subr.mxu0 0.0
      %3678 = vmatpush1.msra.mxu0 0.0
      %3679 = vmatprep.subr.mxu0 0.0
      %3680 = vmatpush1.msra.mxu0 0.0
      %3681 = vmatprep.subr.mxu0 0.0
      %3682 = vmatpush1.msra.mxu0 0.0
      %3683 = vmatprep.subr.mxu0 0.0
      %3684 = vmatpush1.msra.mxu0 0.0
      %3685 = vmatprep.subr.mxu0 0.0
      %3686 = vmatpush1.msra.mxu0 0.0
      %3687 = vmatprep.subr.mxu0 0.0
      %3688 = vmatpush1.msra.mxu0 0.0
      %3689 = vmatprep.subr.mxu0 0.0
      %3690 = vmatpush1.msra.mxu0 0.0
      %3691 = vmatprep.subr.mxu0 0.0
      %3692 = vmatpush1.msra.mxu0 0.0
      %3693 = vmatprep.subr.mxu0 0.0
      %3694 = vmatpush1.msra.mxu0 0.0
      %3695 = vmatprep.subr.mxu0 0.0
      %3696 = vmatpush1.msra.mxu0 0.0
      %3697 = vmatprep.subr.mxu0 0.0
      %3698 = vmatpush1.msra.mxu0 0.0
      %3699 = vmatprep.subr.mxu0 0.0
      %3700 = vmatpush1.msra.mxu0 0.0
      %3701 = vmatprep.subr.mxu0 0.0
      %3702 = vmatpush1.msra.mxu0 0.0
      %3703 = vmatprep.subr.mxu0 0.0
      %3704 = vmatpush1.msra.mxu0 0.0
      %3705 = vmatprep.subr.mxu0 0.0
      %3706 = vmatpush1.msra.mxu0 0.0
      %3707 = vmatprep.subr.mxu0 0.0
      %3708 = vmatpush1.msra.mxu0 0.0
      %3709 = vmatprep.subr.mxu0 0.0
      %3710 = vmatpush1.msra.mxu0 0.0
      %3711 = vmatprep.subr.mxu0 0.0
      %3712 = vmatpush1.msra.mxu0 0.0
      %3713 = vmatprep.subr.mxu0 0.0
      %3714 = vmatpush1.msra.mxu0 0.0
      %3715 = vmatprep.subr.mxu0 0.0
      %3716 = vmatpush1.msra.mxu0 0.0
      %3717 = vmatprep.mubr.f32.mxu0 0.0
      %3718 = vmatmul.mubr.f32.gmra.mrb[0].mxu0 %v3629
      %v3719 = vpop.f32.mrb[0].mxu0
      %v3720 = vadd.f32 0.0, %v3719
      %v3721 = vpop.f32.mrb[0].mxu0
      %v3722 = vadd.f32 0.0, %v3721
      %3723 = vmatprep.mubr.f32.mxu0 0.0
      %3724 = vmatmul.mubr.f32.gmra.mrb[0].mxu0 %v3632
      %v3725 = vpop.f32.mrb[0].mxu0
      %v3726 = vadd.f32 0.0, %v3725
      %v3727 = vpop.f32.mrb[0].mxu0
      %v3728 = vadd.f32 0.0, %v3727
      %3729 = vmatprep.mubr.f32.mxu0 0.0
      %3730 = vmatmul.mubr.f32.gmra.mrb[0].mxu0 %v3635
      %v3731 = vpop.f32.mrb[0].mxu0
      %v3732 = vadd.f32 0.0, %v3731
      %v3733 = vpop.f32.mrb[0].mxu0
      %v3734 = vadd.f32 0.0, %v3733
      %3735 = vdwg.mxu0
      %3736 = vmatprep.subr.mxu0 %v3643
      %3737 = vmatpush1.msra.mxu0 %v3641
      %3738 = vmatprep.subr.mxu0 0.0
      %3739 = vmatpush1.msra.mxu0 0.0
      %3740 = vmatprep.subr.mxu0 0.0
      %3741 = vmatpush1.msra.mxu0 0.0
      %3742 = vmatprep.subr.mxu0 0.0
      %3743 = vmatpush1.msra.mxu0 0.0
      %3744 = vmatprep.subr.mxu0 0.0
      %3745 = vmatpush1.msra.mxu0 0.0
      %3746 = vmatprep.subr.mxu0 0.0
      %3747 = vmatpush1.msra.mxu0 0.0
      %3748 = vmatprep.subr.mxu0 0.0
      %3749 = vmatpush1.msra.mxu0 0.0
      %3750 = vmatprep.subr.mxu0 0.0
      %3751 = vmatpush1.msra.mxu0 0.0
      %3752 = vmatprep.subr.mxu0 0.0
      %3753 = vmatpush1.msra.mxu0 0.0
      %3754 = vmatprep.subr.mxu0 0.0
      %3755 = vmatpush1.msra.mxu0 0.0
      %3756 = vmatprep.subr.mxu0 0.0
      %3757 = vmatpush1.msra.mxu0 0.0
      %3758 = vmatprep.subr.mxu0 0.0
      %3759 = vmatpush1.msra.mxu0 0.0
      %3760 = vmatprep.subr.mxu0 0.0
      %3761 = vmatpush1.msra.mxu0 0.0
      %3762 = vmatprep.subr.mxu0 0.0
      %3763 = vmatpush1.msra.mxu0 0.0
      %3764 = vmatprep.subr.mxu0 0.0
      %3765 = vmatpush1.msra.mxu0 0.0
      %3766 = vmatprep.subr.mxu0 0.0
      %3767 = vmatpush1.msra.mxu0 0.0
      %3768 = vmatprep.subr.mxu0 0.0
      %3769 = vmatpush1.msra.mxu0 0.0
      %3770 = vmatprep.subr.mxu0 0.0
      %3771 = vmatpush1.msra.mxu0 0.0
      %3772 = vmatprep.subr.mxu0 0.0
      %3773 = vmatpush1.msra.mxu0 0.0
      %3774 = vmatprep.subr.mxu0 0.0
      %3775 = vmatpush1.msra.mxu0 0.0
      %3776 = vmatprep.subr.mxu0 0.0
      %3777 = vmatpush1.msra.mxu0 0.0
      %3778 = vmatprep.subr.mxu0 0.0
      %3779 = vmatpush1.msra.mxu0 0.0
      %3780 = vmatprep.subr.mxu0 0.0
      %3781 = vmatpush1.msra.mxu0 0.0
      %3782 = vmatprep.subr.mxu0 0.0
      %3783 = vmatpush1.msra.mxu0 0.0
      %3784 = vmatprep.subr.mxu0 0.0
      %3785 = vmatpush1.msra.mxu0 0.0
      %3786 = vmatprep.subr.mxu0 0.0
      %3787 = vmatpush1.msra.mxu0 0.0
      %3788 = vmatprep.subr.mxu0 0.0
      %3789 = vmatpush1.msra.mxu0 0.0
      %3790 = vmatprep.subr.mxu0 0.0
      %3791 = vmatpush1.msra.mxu0 0.0
      %3792 = vmatprep.subr.mxu0 0.0
      %3793 = vmatpush1.msra.mxu0 0.0
      %3794 = vmatprep.subr.mxu0 0.0
      %3795 = vmatpush1.msra.mxu0 0.0
      %3796 = vmatprep.subr.mxu0 0.0
      %3797 = vmatpush1.msra.mxu0 0.0
      %3798 = vmatprep.subr.mxu0 0.0
      %3799 = vmatpush1.msra.mxu0 0.0
      %3800 = vmatprep.mubr.f32.mxu0 0.0
      %3801 = vmatmul.mubr.f32.gmra.mrb[0].mxu0 %v3629
      %v3802 = vpop.f32.mrb[0].mxu0
      %v3803 = vadd.f32 0.0, %v3802
      %v3804 = vpop.f32.mrb[0].mxu0
      %v3805 = vadd.f32 0.0, %v3804
      %3806 = vmatprep.mubr.f32.mxu0 0.0
      %3807 = vmatmul.mubr.f32.gmra.mrb[0].mxu0 %v3632
      %v3808 = vpop.f32.mrb[0].mxu0
      %v3809 = vadd.f32 0.0, %v3808
      %v3810 = vpop.f32.mrb[0].mxu0
      %v3811 = vadd.f32 0.0, %v3810
      %3812 = vmatprep.mubr.f32.mxu0 0.0
      %3813 = vmatmul.mubr.f32.gmra.mrb[0].mxu0 %v3635
      %v3814 = vpop.f32.mrb[0].mxu0
      %v3815 = vadd.f32 0.0, %v3814
      %v3816 = vpop.f32.mrb[0].mxu0
      %v3817 = vadd.f32 0.0, %v3816
      %3818 = vdwg.mxu0
      %3819 = vmatprep.subr.mxu0 %v3647
      %3820 = vmatpush1.msra.mxu0 %v3645
      %3821 = vmatprep.subr.mxu0 0.0
      %3822 = vmatpush1.msra.mxu0 0.0
      %3823 = vmatprep.subr.mxu0 0.0
      %3824 = vmatpush1.msra.mxu0 0.0
      %3825 = vmatprep.subr.mxu0 0.0
      %3826 = vmatpush1.msra.mxu0 0.0
      %3827 = vmatprep.subr.mxu0 0.0
      %3828 = vmatpush1.msra.mxu0 0.0
      %3829 = vmatprep.subr.mxu0 0.0
      %3830 = vmatpush1.msra.mxu0 0.0
      %3831 = vmatprep.subr.mxu0 0.0
      %3832 = vmatpush1.msra.mxu0 0.0
      %3833 = vmatprep.subr.mxu0 0.0
      %3834 = vmatpush1.msra.mxu0 0.0
      %3835 = vmatprep.subr.mxu0 0.0
      %3836 = vmatpush1.msra.mxu0 0.0
      %3837 = vmatprep.subr.mxu0 0.0
      %3838 = vmatpush1.msra.mxu0 0.0
      %3839 = vmatprep.subr.mxu0 0.0
      %3840 = vmatpush1.msra.mxu0 0.0
      %3841 = vmatprep.subr.mxu0 0.0
      %3842 = vmatpush1.msra.mxu0 0.0
      %3843 = vmatprep.subr.mxu0 0.0
      %3844 = vmatpush1.msra.mxu0 0.0
      %3845 = vmatprep.subr.mxu0 0.0
      %3846 = vmatpush1.msra.mxu0 0.0
      %3847 = vmatprep.subr.mxu0 0.0
      %3848 = vmatpush1.msra.mxu0 0.0
      %3849 = vmatprep.subr.mxu0 0.0
      %3850 = vmatpush1.msra.mxu0 0.0
      %3851 = vmatprep.subr.mxu0 0.0
      %3852 = vmatpush1.msra.mxu0 0.0
      %3853 = vmatprep.subr.mxu0 0.0
      %3854 = vmatpush1.msra.mxu0 0.0
      %3855 = vmatprep.subr.mxu0 0.0
      %3856 = vmatpush1.msra.mxu0 0.0
      %3857 = vmatprep.subr.mxu0 0.0
      %3858 = vmatpush1.msra.mxu0 0.0
      %3859 = vmatprep.subr.mxu0 0.0
      %3860 = vmatpush1.msra.mxu0 0.0
      %3861 = vmatprep.subr.mxu0 0.0
      %3862 = vmatpush1.msra.mxu0 0.0
      %3863 = vmatprep.subr.mxu0 0.0
      %3864 = vmatpush1.msra.mxu0 0.0
      %3865 = vmatprep.subr.mxu0 0.0
      %3866 = vmatpush1.msra.mxu0 0.0
      %3867 = vmatprep.subr.mxu0 0.0
      %3868 = vmatpush1.msra.mxu0 0.0
      %3869 = vmatprep.subr.mxu0 0.0
      %3870 = vmatpush1.msra.mxu0 0.0
      %3871 = vmatprep.subr.mxu0 0.0
      %3872 = vmatpush1.msra.mxu0 0.0
      %3873 = vmatprep.subr.mxu0 0.0
      %3874 = vmatpush1.msra.mxu0 0.0
      %3875 = vmatprep.subr.mxu0 0.0
      %3876 = vmatpush1.msra.mxu0 0.0
      %3877 = vmatprep.subr.mxu0 0.0
      %3878 = vmatpush1.msra.mxu0 0.0
      %3879 = vmatprep.subr.mxu0 0.0
      %3880 = vmatpush1.msra.mxu0 0.0
      %3881 = vmatprep.subr.mxu0 0.0
      %3882 = vmatpush1.msra.mxu0 0.0
      %3883 = vmatprep.mubr.f32.mxu0 0.0
      %3884 = vmatmul.mubr.f32.gmra.mrb[0].mxu0 %v3629
      %v3885 = vpop.f32.mrb[0].mxu0
      %v3886 = vadd.f32 0.0, %v3885
      %v3887 = vpop.f32.mrb[0].mxu0
      %v3888 = vadd.f32 0.0, %v3887
      %3889 = vmatprep.mubr.f32.mxu0 0.0
      %3890 = vmatmul.mubr.f32.gmra.mrb[0].mxu0 %v3632
      %v3891 = vpop.f32.mrb[0].mxu0
      %v3892 = vadd.f32 0.0, %v3891
      %v3893 = vpop.f32.mrb[0].mxu0
      %v3894 = vadd.f32 0.0, %v3893
      %3895 = vmatprep.mubr.f32.mxu0 0.0
      %3896 = vmatmul.mubr.f32.gmra.mrb[0].mxu0 %v3635
      %v3897 = vpop.f32.mrb[0].mxu0
      %v3898 = vadd.f32 0.0, %v3897
      %v3899 = vpop.f32.mrb[0].mxu0
      %v3900 = vadd.f32 0.0, %v3899
      %3901 = vdwg.mxu0
      %3902 = vmatprep.subr.mxu0 %v3651
      %3903 = vmatpush1.msra.mxu0 %v3649
      %3904 = vmatprep.subr.mxu0 0.0
      %3905 = vmatpush1.msra.mxu0 0.0
      %3906 = vmatprep.subr.mxu0 0.0
      %3907 = vmatpush1.msra.mxu0 0.0
      %3908 = vmatprep.subr.mxu0 0.0
      %3909 = vmatpush1.msra.mxu0 0.0
      %3910 = vmatprep.subr.mxu0 0.0
      %3911 = vmatpush1.msra.mxu0 0.0
      %3912 = vmatprep.subr.mxu0 0.0
      %3913 = vmatpush1.msra.mxu0 0.0
      %3914 = vmatprep.subr.mxu0 0.0
      %3915 = vmatpush1.msra.mxu0 0.0
      %3916 = vmatprep.subr.mxu0 0.0
      %3917 = vmatpush1.msra.mxu0 0.0
      %3918 = vmatprep.subr.mxu0 0.0
      %3919 = vmatpush1.msra.mxu0 0.0
      %3920 = vmatprep.subr.mxu0 0.0
      %3921 = vmatpush1.msra.mxu0 0.0
      %3922 = vmatprep.subr.mxu0 0.0
      %3923 = vmatpush1.msra.mxu0 0.0
      %3924 = vmatprep.subr.mxu0 0.0
      %3925 = vmatpush1.msra.mxu0 0.0
      %3926 = vmatprep.subr.mxu0 0.0
      %3927 = vmatpush1.msra.mxu0 0.0
      %3928 = vmatprep.subr.mxu0 0.0
      %3929 = vmatpush1.msra.mxu0 0.0
      %3930 = vmatprep.subr.mxu0 0.0
      %3931 = vmatpush1.msra.mxu0 0.0
      %3932 = vmatprep.subr.mxu0 0.0
      %3933 = vmatpush1.msra.mxu0 0.0
      %3934 = vmatprep.subr.mxu0 0.0
      %3935 = vmatpush1.msra.mxu0 0.0
      %3936 = vmatprep.subr.mxu0 0.0
      %3937 = vmatpush1.msra.mxu0 0.0
      %3938 = vmatprep.subr.mxu0 0.0
      %3939 = vmatpush1.msra.mxu0 0.0
      %3940 = vmatprep.subr.mxu0 0.0
      %3941 = vmatpush1.msra.mxu0 0.0
      %3942 = vmatprep.subr.mxu0 0.0
      %3943 = vmatpush1.msra.mxu0 0.0
      %3944 = vmatprep.subr.mxu0 0.0
      %3945 = vmatpush1.msra.mxu0 0.0
      %3946 = vmatprep.subr.mxu0 0.0
      %3947 = vmatpush1.msra.mxu0 0.0
      %3948 = vmatprep.subr.mxu0 0.0
      %3949 = vmatpush1.msra.mxu0 0.0
      %3950 = vmatprep.subr.mxu0 0.0
      %3951 = vmatpush1.msra.mxu0 0.0
      %3952 = vmatprep.subr.mxu0 0.0
      %3953 = vmatpush1.msra.mxu0 0.0
      %3954 = vmatprep.subr.mxu0 0.0
      %3955 = vmatpush1.msra.mxu0 0.0
      %3956 = vmatprep.subr.mxu0 0.0
      %3957 = vmatpush1.msra.mxu0 0.0
      %3958 = vmatprep.subr.mxu0 0.0
      %3959 = vmatpush1.msra.mxu0 0.0
      %3960 = vmatprep.subr.mxu0 0.0
      %3961 = vmatpush1.msra.mxu0 0.0
      %3962 = vmatprep.subr.mxu0 0.0
      %3963 = vmatpush1.msra.mxu0 0.0
      %3964 = vmatprep.subr.mxu0 0.0
      %3965 = vmatpush1.msra.mxu0 0.0
      %3966 = vmatprep.mubr.f32.mxu0 0.0
      %3967 = vmatmul.mubr.f32.gmra.mrb[0].mxu0 %v3629
      %v3968 = vpop.f32.mrb[0].mxu0
      %v3969 = vadd.f32 0.0, %v3968
      %v3970 = vpop.f32.mrb[0].mxu0
      %v3971 = vadd.f32 0.0, %v3970
      %3972 = vmatprep.mubr.f32.mxu0 0.0
      %3973 = vmatmul.mubr.f32.gmra.mrb[0].mxu0 %v3632
      %v3974 = vpop.f32.mrb[0].mxu0
      %v3975 = vadd.f32 0.0, %v3974
      %v3976 = vpop.f32.mrb[0].mxu0
      %v3977 = vadd.f32 0.0, %v3976
      %3978 = vmatprep.mubr.f32.mxu0 0.0
      %3979 = vmatmul.mubr.f32.gmra.mrb[0].mxu0 %v3635
      %v3980 = vpop.f32.mrb[0].mxu0
      %v3981 = vadd.f32 0.0, %v3980
      %v3982 = vpop.f32.mrb[0].mxu0
      %v3983 = vadd.f32 0.0, %v3982
      %3984 = vdwg.mxu0
      %v3985 = vadd.f32 %v3576, %v3720
      %v3986 = vadd.f32 %v3577, %v3722
      %v3987 = vadd.f32 %v3578, %v3803
      %v3988 = vadd.f32 %v3579, %v3805
      %v3989 = vadd.f32 %v3580, %v3886
      %v3990 = vadd.f32 %v3581, %v3888
      %v3991 = vadd.f32 %v3582, %v3969
      %v3992 = vadd.f32 %v3583, %v3971
      %v3993 = vadd.f32 %v3584, %v3726
      %v3994 = vadd.f32 %v3585, %v3728
      %v3995 = vadd.f32 %v3586, %v3809
      %v3996 = vadd.f32 %v3587, %v3811
      %v3997 = vadd.f32 %v3588, %v3892
      %v3998 = vadd.f32 %v3589, %v3894
      %v3999 = vadd.f32 %v3590, %v3975
      %v4000 = vadd.f32 %v3591, %v3977
      %v4001 = vadd.f32 %v3592, %v3732
      %v4002 = vadd.f32 %v3593, %v3734
      %v4003 = vadd.f32 %v3594, %v3815
      %v4004 = vadd.f32 %v3595, %v3817
      %v4005 = vadd.f32 %v3596, %v3898
      %v4006 = vadd.f32 %v3597, %v3900
      %v4007 = vadd.f32 %v3598, %v3981
      %v4008 = vadd.f32 %v3599, %v3983
      %s4009 = scalar_lea.vmem %s1, 216
      %v4010 = vld [vmem:[%s4009] sm:$0xff]
      %v4011 = vld [vmem:[%s4009 + $0x8] sm:$0xff]
      %v4012 = vld [vmem:[%s4009 + $0x10] sm:$0xf]
      %4013 = vrot.lane.b32.xlu0 %v387, 119
      %v4014 = vpop.permute.xlu0 %4013
      %4015 = vrot.lane.b32.xlu0 %v402, 119
      %v4016 = vpop.permute.xlu0 %4015
      %4017 = vrot.lane.b32.xlu0 %v388, 119
      %v4018 = vpop.permute.xlu0 %4017
      %4019 = vrot.lane.b32.xlu0 %v403, 119
      %v4020 = vpop.permute.xlu0 %4019
      %4021 = vrot.lane.b32.xlu0 %v389, 119
      %v4022 = vpop.permute.xlu0 %4021
      %4023 = vrot.lane.b32.xlu0 %v404, 119
      %v4024 = vpop.permute.xlu0 %4023
      %4025 = vrot.lane.b32.xlu0 %v390, 119
      %v4026 = vpop.permute.xlu0 %4025
      %4027 = vrot.lane.b32.xlu0 %v405, 119
      %v4028 = vpop.permute.xlu0 %4027
      %vm4029 = vcmask 973824
      %v4030 = vsel %vm4029, %v4014, %v4016
      %v4031 = vsel %vm4029, %v4016, %v4018
      %v4032 = vsel %vm4029, %v4018, %v4020
      %v4033 = vsel %vm4029, %v4020, %v4022
      %v4034 = vsel %vm4029, %v4022, %v4024
      %v4035 = vsel %vm4029, %v4024, %v4026
      %v4036 = vsel %vm4029, %v4026, %v4028
      %v4038 = vsel %vm430, %v4010, 0
      %v4041 = vsel %vm430, %v4011, 0
      %v4044 = vsel %vm430, %v4012, 0
      %v4046 = vsel %vm440, %v4030, 0
      %v4048 = vsel %vm440, %v4031, 0
      %v4050 = vsel %vm440, %v4032, 0
      %v4052 = vsel %vm440, %v4033, 0
      %v4054 = vsel %vm440, %v4034, 0
      %v4056 = vsel %vm440, %v4035, 0
      %v4058 = vsel %vm440, %v4036, 0
      %v4060 = vsel %vm440, %v4028, 0
      %4062 = vmatprep.subr.mxu0 %v4048
      %4063 = vmatpush1.msra.mxu0 %v4046
      %4064 = vmatprep.subr.mxu0 0.0
      %4065 = vmatpush1.msra.mxu0 0.0
      %4066 = vmatprep.subr.mxu0 0.0
      %4067 = vmatpush1.msra.mxu0 0.0
      %4068 = vmatprep.subr.mxu0 0.0
      %4069 = vmatpush1.msra.mxu0 0.0
      %4070 = vmatprep.subr.mxu0 0.0
      %4071 = vmatpush1.msra.mxu0 0.0
      %4072 = vmatprep.subr.mxu0 0.0
      %4073 = vmatpush1.msra.mxu0 0.0
      %4074 = vmatprep.subr.mxu0 0.0
      %4075 = vmatpush1.msra.mxu0 0.0
      %4076 = vmatprep.subr.mxu0 0.0
      %4077 = vmatpush1.msra.mxu0 0.0
      %4078 = vmatprep.subr.mxu0 0.0
      %4079 = vmatpush1.msra.mxu0 0.0
      %4080 = vmatprep.subr.mxu0 0.0
      %4081 = vmatpush1.msra.mxu0 0.0
      %4082 = vmatprep.subr.mxu0 0.0
      %4083 = vmatpush1.msra.mxu0 0.0
      %4084 = vmatprep.subr.mxu0 0.0
      %4085 = vmatpush1.msra.mxu0 0.0
      %4086 = vmatprep.subr.mxu0 0.0
      %4087 = vmatpush1.msra.mxu0 0.0
      %4088 = vmatprep.subr.mxu0 0.0
      %4089 = vmatpush1.msra.mxu0 0.0
      %4090 = vmatprep.subr.mxu0 0.0
      %4091 = vmatpush1.msra.mxu0 0.0
      %4092 = vmatprep.subr.mxu0 0.0
      %4093 = vmatpush1.msra.mxu0 0.0
      %4094 = vmatprep.subr.mxu0 0.0
      %4095 = vmatpush1.msra.mxu0 0.0
      %4096 = vmatprep.subr.mxu0 0.0
      %4097 = vmatpush1.msra.mxu0 0.0
      %4098 = vmatprep.subr.mxu0 0.0
      %4099 = vmatpush1.msra.mxu0 0.0
      %4100 = vmatprep.subr.mxu0 0.0
      %4101 = vmatpush1.msra.mxu0 0.0
      %4102 = vmatprep.subr.mxu0 0.0
      %4103 = vmatpush1.msra.mxu0 0.0
      %4104 = vmatprep.subr.mxu0 0.0
      %4105 = vmatpush1.msra.mxu0 0.0
      %4106 = vmatprep.subr.mxu0 0.0
      %4107 = vmatpush1.msra.mxu0 0.0
      %4108 = vmatprep.subr.mxu0 0.0
      %4109 = vmatpush1.msra.mxu0 0.0
      %4110 = vmatprep.subr.mxu0 0.0
      %4111 = vmatpush1.msra.mxu0 0.0
      %4112 = vmatprep.subr.mxu0 0.0
      %4113 = vmatpush1.msra.mxu0 0.0
      %4114 = vmatprep.subr.mxu0 0.0
      %4115 = vmatpush1.msra.mxu0 0.0
      %4116 = vmatprep.subr.mxu0 0.0
      %4117 = vmatpush1.msra.mxu0 0.0
      %4118 = vmatprep.subr.mxu0 0.0
      %4119 = vmatpush1.msra.mxu0 0.0
      %4120 = vmatprep.subr.mxu0 0.0
      %4121 = vmatpush1.msra.mxu0 0.0
      %4122 = vmatprep.subr.mxu0 0.0
      %4123 = vmatpush1.msra.mxu0 0.0
      %4124 = vmatprep.subr.mxu0 0.0
      %4125 = vmatpush1.msra.mxu0 0.0
      %4126 = vmatprep.mubr.f32.mxu0 0.0
      %4127 = vmatmul.mubr.f32.gmra.mrb[0].mxu0 %v4038
      %v4128 = vpop.f32.mrb[0].mxu0
      %v4129 = vadd.f32 0.0, %v4128
      %v4130 = vpop.f32.mrb[0].mxu0
      %v4131 = vadd.f32 0.0, %v4130
      %4132 = vmatprep.mubr.f32.mxu0 0.0
      %4133 = vmatmul.mubr.f32.gmra.mrb[0].mxu0 %v4041
      %v4134 = vpop.f32.mrb[0].mxu0
      %v4135 = vadd.f32 0.0, %v4134
      %v4136 = vpop.f32.mrb[0].mxu0
      %v4137 = vadd.f32 0.0, %v4136
      %4138 = vmatprep.mubr.f32.mxu0 0.0
      %4139 = vmatmul.mubr.f32.gmra.mrb[0].mxu0 %v4044
      %v4140 = vpop.f32.mrb[0].mxu0
      %v4141 = vadd.f32 0.0, %v4140
      %v4142 = vpop.f32.mrb[0].mxu0
      %v4143 = vadd.f32 0.0, %v4142
      %4144 = vdwg.mxu0
      %4145 = vmatprep.subr.mxu0 %v4052
      %4146 = vmatpush1.msra.mxu0 %v4050
      %4147 = vmatprep.subr.mxu0 0.0
      %4148 = vmatpush1.msra.mxu0 0.0
      %4149 = vmatprep.subr.mxu0 0.0
      %4150 = vmatpush1.msra.mxu0 0.0
      %4151 = vmatprep.subr.mxu0 0.0
      %4152 = vmatpush1.msra.mxu0 0.0
      %4153 = vmatprep.subr.mxu0 0.0
      %4154 = vmatpush1.msra.mxu0 0.0
      %4155 = vmatprep.subr.mxu0 0.0
      %4156 = vmatpush1.msra.mxu0 0.0
      %4157 = vmatprep.subr.mxu0 0.0
      %4158 = vmatpush1.msra.mxu0 0.0
      %4159 = vmatprep.subr.mxu0 0.0
      %4160 = vmatpush1.msra.mxu0 0.0
      %4161 = vmatprep.subr.mxu0 0.0
      %4162 = vmatpush1.msra.mxu0 0.0
      %4163 = vmatprep.subr.mxu0 0.0
      %4164 = vmatpush1.msra.mxu0 0.0
      %4165 = vmatprep.subr.mxu0 0.0
      %4166 = vmatpush1.msra.mxu0 0.0
      %4167 = vmatprep.subr.mxu0 0.0
      %4168 = vmatpush1.msra.mxu0 0.0
      %4169 = vmatprep.subr.mxu0 0.0
      %4170 = vmatpush1.msra.mxu0 0.0
      %4171 = vmatprep.subr.mxu0 0.0
      %4172 = vmatpush1.msra.mxu0 0.0
      %4173 = vmatprep.subr.mxu0 0.0
      %4174 = vmatpush1.msra.mxu0 0.0
      %4175 = vmatprep.subr.mxu0 0.0
      %4176 = vmatpush1.msra.mxu0 0.0
      %4177 = vmatprep.subr.mxu0 0.0
      %4178 = vmatpush1.msra.mxu0 0.0
      %4179 = vmatprep.subr.mxu0 0.0
      %4180 = vmatpush1.msra.mxu0 0.0
      %4181 = vmatprep.subr.mxu0 0.0
      %4182 = vmatpush1.msra.mxu0 0.0
      %4183 = vmatprep.subr.mxu0 0.0
      %4184 = vmatpush1.msra.mxu0 0.0
      %4185 = vmatprep.subr.mxu0 0.0
      %4186 = vmatpush1.msra.mxu0 0.0
      %4187 = vmatprep.subr.mxu0 0.0
      %4188 = vmatpush1.msra.mxu0 0.0
      %4189 = vmatprep.subr.mxu0 0.0
      %4190 = vmatpush1.msra.mxu0 0.0
      %4191 = vmatprep.subr.mxu0 0.0
      %4192 = vmatpush1.msra.mxu0 0.0
      %4193 = vmatprep.subr.mxu0 0.0
      %4194 = vmatpush1.msra.mxu0 0.0
      %4195 = vmatprep.subr.mxu0 0.0
      %4196 = vmatpush1.msra.mxu0 0.0
      %4197 = vmatprep.subr.mxu0 0.0
      %4198 = vmatpush1.msra.mxu0 0.0
      %4199 = vmatprep.subr.mxu0 0.0
      %4200 = vmatpush1.msra.mxu0 0.0
      %4201 = vmatprep.subr.mxu0 0.0
      %4202 = vmatpush1.msra.mxu0 0.0
      %4203 = vmatprep.subr.mxu0 0.0
      %4204 = vmatpush1.msra.mxu0 0.0
      %4205 = vmatprep.subr.mxu0 0.0
      %4206 = vmatpush1.msra.mxu0 0.0
      %4207 = vmatprep.subr.mxu0 0.0
      %4208 = vmatpush1.msra.mxu0 0.0
      %4209 = vmatprep.mubr.f32.mxu0 0.0
      %4210 = vmatmul.mubr.f32.gmra.mrb[0].mxu0 %v4038
      %v4211 = vpop.f32.mrb[0].mxu0
      %v4212 = vadd.f32 0.0, %v4211
      %v4213 = vpop.f32.mrb[0].mxu0
      %v4214 = vadd.f32 0.0, %v4213
      %4215 = vmatprep.mubr.f32.mxu0 0.0
      %4216 = vmatmul.mubr.f32.gmra.mrb[0].mxu0 %v4041
      %v4217 = vpop.f32.mrb[0].mxu0
      %v4218 = vadd.f32 0.0, %v4217
      %v4219 = vpop.f32.mrb[0].mxu0
      %v4220 = vadd.f32 0.0, %v4219
      %4221 = vmatprep.mubr.f32.mxu0 0.0
      %4222 = vmatmul.mubr.f32.gmra.mrb[0].mxu0 %v4044
      %v4223 = vpop.f32.mrb[0].mxu0
      %v4224 = vadd.f32 0.0, %v4223
      %v4225 = vpop.f32.mrb[0].mxu0
      %v4226 = vadd.f32 0.0, %v4225
      %4227 = vdwg.mxu0
      %4228 = vmatprep.subr.mxu0 %v4056
      %4229 = vmatpush1.msra.mxu0 %v4054
      %4230 = vmatprep.subr.mxu0 0.0
      %4231 = vmatpush1.msra.mxu0 0.0
      %4232 = vmatprep.subr.mxu0 0.0
      %4233 = vmatpush1.msra.mxu0 0.0
      %4234 = vmatprep.subr.mxu0 0.0
      %4235 = vmatpush1.msra.mxu0 0.0
      %4236 = vmatprep.subr.mxu0 0.0
      %4237 = vmatpush1.msra.mxu0 0.0
      %4238 = vmatprep.subr.mxu0 0.0
      %4239 = vmatpush1.msra.mxu0 0.0
      %4240 = vmatprep.subr.mxu0 0.0
      %4241 = vmatpush1.msra.mxu0 0.0
      %4242 = vmatprep.subr.mxu0 0.0
      %4243 = vmatpush1.msra.mxu0 0.0
      %4244 = vmatprep.subr.mxu0 0.0
      %4245 = vmatpush1.msra.mxu0 0.0
      %4246 = vmatprep.subr.mxu0 0.0
      %4247 = vmatpush1.msra.mxu0 0.0
      %4248 = vmatprep.subr.mxu0 0.0
      %4249 = vmatpush1.msra.mxu0 0.0
      %4250 = vmatprep.subr.mxu0 0.0
      %4251 = vmatpush1.msra.mxu0 0.0
      %4252 = vmatprep.subr.mxu0 0.0
      %4253 = vmatpush1.msra.mxu0 0.0
      %4254 = vmatprep.subr.mxu0 0.0
      %4255 = vmatpush1.msra.mxu0 0.0
      %4256 = vmatprep.subr.mxu0 0.0
      %4257 = vmatpush1.msra.mxu0 0.0
      %4258 = vmatprep.subr.mxu0 0.0
      %4259 = vmatpush1.msra.mxu0 0.0
      %4260 = vmatprep.subr.mxu0 0.0
      %4261 = vmatpush1.msra.mxu0 0.0
      %4262 = vmatprep.subr.mxu0 0.0
      %4263 = vmatpush1.msra.mxu0 0.0
      %4264 = vmatprep.subr.mxu0 0.0
      %4265 = vmatpush1.msra.mxu0 0.0
      %4266 = vmatprep.subr.mxu0 0.0
      %4267 = vmatpush1.msra.mxu0 0.0
      %4268 = vmatprep.subr.mxu0 0.0
      %4269 = vmatpush1.msra.mxu0 0.0
      %4270 = vmatprep.subr.mxu0 0.0
      %4271 = vmatpush1.msra.mxu0 0.0
      %4272 = vmatprep.subr.mxu0 0.0
      %4273 = vmatpush1.msra.mxu0 0.0
      %4274 = vmatprep.subr.mxu0 0.0
      %4275 = vmatpush1.msra.mxu0 0.0
      %4276 = vmatprep.subr.mxu0 0.0
      %4277 = vmatpush1.msra.mxu0 0.0
      %4278 = vmatprep.subr.mxu0 0.0
      %4279 = vmatpush1.msra.mxu0 0.0
      %4280 = vmatprep.subr.mxu0 0.0
      %4281 = vmatpush1.msra.mxu0 0.0
      %4282 = vmatprep.subr.mxu0 0.0
      %4283 = vmatpush1.msra.mxu0 0.0
      %4284 = vmatprep.subr.mxu0 0.0
      %4285 = vmatpush1.msra.mxu0 0.0
      %4286 = vmatprep.subr.mxu0 0.0
      %4287 = vmatpush1.msra.mxu0 0.0
      %4288 = vmatprep.subr.mxu0 0.0
      %4289 = vmatpush1.msra.mxu0 0.0
      %4290 = vmatprep.subr.mxu0 0.0
      %4291 = vmatpush1.msra.mxu0 0.0
      %4292 = vmatprep.mubr.f32.mxu0 0.0
      %4293 = vmatmul.mubr.f32.gmra.mrb[0].mxu0 %v4038
      %v4294 = vpop.f32.mrb[0].mxu0
      %v4295 = vadd.f32 0.0, %v4294
      %v4296 = vpop.f32.mrb[0].mxu0
      %v4297 = vadd.f32 0.0, %v4296
      %4298 = vmatprep.mubr.f32.mxu0 0.0
      %4299 = vmatmul.mubr.f32.gmra.mrb[0].mxu0 %v4041
      %v4300 = vpop.f32.mrb[0].mxu0
      %v4301 = vadd.f32 0.0, %v4300
      %v4302 = vpop.f32.mrb[0].mxu0
      %v4303 = vadd.f32 0.0, %v4302
      %4304 = vmatprep.mubr.f32.mxu0 0.0
      %4305 = vmatmul.mubr.f32.gmra.mrb[0].mxu0 %v4044
      %v4306 = vpop.f32.mrb[0].mxu0
      %v4307 = vadd.f32 0.0, %v4306
      %v4308 = vpop.f32.mrb[0].mxu0
      %v4309 = vadd.f32 0.0, %v4308
      %4310 = vdwg.mxu0
      %4311 = vmatprep.subr.mxu0 %v4060
      %4312 = vmatpush1.msra.mxu0 %v4058
      %4313 = vmatprep.subr.mxu0 0.0
      %4314 = vmatpush1.msra.mxu0 0.0
      %4315 = vmatprep.subr.mxu0 0.0
      %4316 = vmatpush1.msra.mxu0 0.0
      %4317 = vmatprep.subr.mxu0 0.0
      %4318 = vmatpush1.msra.mxu0 0.0
      %4319 = vmatprep.subr.mxu0 0.0
      %4320 = vmatpush1.msra.mxu0 0.0
      %4321 = vmatprep.subr.mxu0 0.0
      %4322 = vmatpush1.msra.mxu0 0.0
      %4323 = vmatprep.subr.mxu0 0.0
      %4324 = vmatpush1.msra.mxu0 0.0
      %4325 = vmatprep.subr.mxu0 0.0
      %4326 = vmatpush1.msra.mxu0 0.0
      %4327 = vmatprep.subr.mxu0 0.0
      %4328 = vmatpush1.msra.mxu0 0.0
      %4329 = vmatprep.subr.mxu0 0.0
      %4330 = vmatpush1.msra.mxu0 0.0
      %4331 = vmatprep.subr.mxu0 0.0
      %4332 = vmatpush1.msra.mxu0 0.0
      %4333 = vmatprep.subr.mxu0 0.0
      %4334 = vmatpush1.msra.mxu0 0.0
      %4335 = vmatprep.subr.mxu0 0.0
      %4336 = vmatpush1.msra.mxu0 0.0
      %4337 = vmatprep.subr.mxu0 0.0
      %4338 = vmatpush1.msra.mxu0 0.0
      %4339 = vmatprep.subr.mxu0 0.0
      %4340 = vmatpush1.msra.mxu0 0.0
      %4341 = vmatprep.subr.mxu0 0.0
      %4342 = vmatpush1.msra.mxu0 0.0
      %4343 = vmatprep.subr.mxu0 0.0
      %4344 = vmatpush1.msra.mxu0 0.0
      %4345 = vmatprep.subr.mxu0 0.0
      %4346 = vmatpush1.msra.mxu0 0.0
      %4347 = vmatprep.subr.mxu0 0.0
      %4348 = vmatpush1.msra.mxu0 0.0
      %4349 = vmatprep.subr.mxu0 0.0
      %4350 = vmatpush1.msra.mxu0 0.0
      %4351 = vmatprep.subr.mxu0 0.0
      %4352 = vmatpush1.msra.mxu0 0.0
      %4353 = vmatprep.subr.mxu0 0.0
      %4354 = vmatpush1.msra.mxu0 0.0
      %4355 = vmatprep.subr.mxu0 0.0
      %4356 = vmatpush1.msra.mxu0 0.0
      %4357 = vmatprep.subr.mxu0 0.0
      %4358 = vmatpush1.msra.mxu0 0.0
      %4359 = vmatprep.subr.mxu0 0.0
      %4360 = vmatpush1.msra.mxu0 0.0
      %4361 = vmatprep.subr.mxu0 0.0
      %4362 = vmatpush1.msra.mxu0 0.0
      %4363 = vmatprep.subr.mxu0 0.0
      %4364 = vmatpush1.msra.mxu0 0.0
      %4365 = vmatprep.subr.mxu0 0.0
      %4366 = vmatpush1.msra.mxu0 0.0
      %4367 = vmatprep.subr.mxu0 0.0
      %4368 = vmatpush1.msra.mxu0 0.0
      %4369 = vmatprep.subr.mxu0 0.0
      %4370 = vmatpush1.msra.mxu0 0.0
      %4371 = vmatprep.subr.mxu0 0.0
      %4372 = vmatpush1.msra.mxu0 0.0
      %4373 = vmatprep.subr.mxu0 0.0
      %4374 = vmatpush1.msra.mxu0 0.0
      %4375 = vmatprep.mubr.f32.mxu0 0.0
      %4376 = vmatmul.mubr.f32.gmra.mrb[0].mxu0 %v4038
      %v4377 = vpop.f32.mrb[0].mxu0
      %v4378 = vadd.f32 0.0, %v4377
      %v4379 = vpop.f32.mrb[0].mxu0
      %v4380 = vadd.f32 0.0, %v4379
      %4381 = vmatprep.mubr.f32.mxu0 0.0
      %4382 = vmatmul.mubr.f32.gmra.mrb[0].mxu0 %v4041
      %v4383 = vpop.f32.mrb[0].mxu0
      %v4384 = vadd.f32 0.0, %v4383
      %v4385 = vpop.f32.mrb[0].mxu0
      %v4386 = vadd.f32 0.0, %v4385
      %4387 = vmatprep.mubr.f32.mxu0 0.0
      %4388 = vmatmul.mubr.f32.gmra.mrb[0].mxu0 %v4044
      %v4389 = vpop.f32.mrb[0].mxu0
      %v4390 = vadd.f32 0.0, %v4389
      %v4391 = vpop.f32.mrb[0].mxu0
      %v4392 = vadd.f32 0.0, %v4391
      %4393 = vdwg.mxu0
      %v4394 = vadd.f32 %v3985, %v4129
      %v4395 = vadd.f32 %v3986, %v4131
      %v4396 = vadd.f32 %v3987, %v4212
      %v4397 = vadd.f32 %v3988, %v4214
      %v4398 = vadd.f32 %v3989, %v4295
      %v4399 = vadd.f32 %v3990, %v4297
      %v4400 = vadd.f32 %v3991, %v4378
      %v4401 = vadd.f32 %v3992, %v4380
      %v4402 = vadd.f32 %v3993, %v4135
      %v4403 = vadd.f32 %v3994, %v4137
      %v4404 = vadd.f32 %v3995, %v4218
      %v4405 = vadd.f32 %v3996, %v4220
      %v4406 = vadd.f32 %v3997, %v4301
      %v4407 = vadd.f32 %v3998, %v4303
      %v4408 = vadd.f32 %v3999, %v4384
      %v4409 = vadd.f32 %v4000, %v4386
      %v4410 = vadd.f32 %v4001, %v4141
      %v4411 = vadd.f32 %v4002, %v4143
      %v4412 = vadd.f32 %v4003, %v4224
      %v4413 = vadd.f32 %v4004, %v4226
      %v4414 = vadd.f32 %v4005, %v4307
      %v4415 = vadd.f32 %v4006, %v4309
      %v4416 = vadd.f32 %v4007, %v4390
      %v4417 = vadd.f32 %v4008, %v4392
      %v4418 = vld [vmem:[%s2] sm:$0xff]
      %v4419 = vld [vmem:[%s2 + $0x8] sm:$0xff]
      %v4420 = vld [vmem:[%s2 + $0x10] sm:$0xf]
      %4422 = vset.pattern.permute.xlu0 0
      %4423 = vperm.xlu0 %4422, %v4418
      %v4424 = vpop.permute.xlu0 %4423
      %4427 = vset.pattern.permute.xlu0 0
      %4428 = vperm.xlu0 %4427, %v4419
      %v4429 = vpop.permute.xlu0 %4428
      %4432 = vset.pattern.permute.xlu0 0
      %4433 = vperm.xlu0 %4432, %v4420
      %v4434 = vpop.permute.xlu0 %4433
      %v4436 = vadd.f32 %v4394, %v4424
      %v4437 = vadd.f32 %v4395, %v4424
      %v4438 = vadd.f32 %v4396, %v4424
      %v4439 = vadd.f32 %v4397, %v4424
      %v4440 = vadd.f32 %v4398, %v4424
      %v4441 = vadd.f32 %v4399, %v4424
      %v4442 = vadd.f32 %v4400, %v4424
      %v4443 = vadd.f32 %v4401, %v4424
      %v4444 = vadd.f32 %v4402, %v4429
      %v4445 = vadd.f32 %v4403, %v4429
      %v4446 = vadd.f32 %v4404, %v4429
      %v4447 = vadd.f32 %v4405, %v4429
      %v4448 = vadd.f32 %v4406, %v4429
      %v4449 = vadd.f32 %v4407, %v4429
      %v4450 = vadd.f32 %v4408, %v4429
      %v4451 = vadd.f32 %v4409, %v4429
      %v4452 = vadd.f32 %v4410, %v4434
      %v4453 = vadd.f32 %v4411, %v4434
      %v4454 = vadd.f32 %v4412, %v4434
      %v4455 = vadd.f32 %v4413, %v4434
      %v4456 = vadd.f32 %v4414, %v4434
      %v4457 = vadd.f32 %v4415, %v4434
      %v4458 = vadd.f32 %v4416, %v4434
      %v4459 = vadd.f32 %v4417, %v4434
      %v4460 = vmax.f32 %v4436, 0.0
      %v4461 = vmax.f32 %v4437, 0.0
      %v4462 = vmax.f32 %v4438, 0.0
      %v4463 = vmax.f32 %v4439, 0.0
      %v4464 = vmax.f32 %v4440, 0.0
      %v4465 = vmax.f32 %v4441, 0.0
      %v4466 = vmax.f32 %v4442, 0.0
      %v4467 = vmax.f32 %v4443, 0.0
      %v4468 = vmax.f32 %v4444, 0.0
      %v4469 = vmax.f32 %v4445, 0.0
      %v4470 = vmax.f32 %v4446, 0.0
      %v4471 = vmax.f32 %v4447, 0.0
      %v4472 = vmax.f32 %v4448, 0.0
      %v4473 = vmax.f32 %v4449, 0.0
      %v4474 = vmax.f32 %v4450, 0.0
      %v4475 = vmax.f32 %v4451, 0.0
      %v4476 = vmax.f32 %v4452, 0.0
      %v4477 = vmax.f32 %v4453, 0.0
      %v4478 = vmax.f32 %v4454, 0.0
      %v4479 = vmax.f32 %v4455, 0.0
      %v4480 = vmax.f32 %v4456, 0.0
      %v4481 = vmax.f32 %v4457, 0.0
      %v4482 = vmax.f32 %v4458, 0.0
      %v4483 = vmax.f32 %v4459, 0.0
      %4508 = vrot.lane.b32.xlu0 %v4460, 127
      %v4509 = vpop.permute.xlu0 %4508
      %4510 = vrot.lane.b32.xlu0 %v4461, 127
      %v4511 = vpop.permute.xlu0 %4510
      %4512 = vrot.lane.b32.xlu0 %v4462, 127
      %v4513 = vpop.permute.xlu0 %4512
      %4514 = vrot.lane.b32.xlu0 %v4463, 127
      %v4515 = vpop.permute.xlu0 %4514
      %4516 = vrot.lane.b32.xlu0 %v4464, 127
      %v4517 = vpop.permute.xlu0 %4516
      %4518 = vrot.lane.b32.xlu0 %v4465, 127
      %v4519 = vpop.permute.xlu0 %4518
      %4520 = vrot.lane.b32.xlu0 %v4466, 127
      %v4521 = vpop.permute.xlu0 %4520
      %4522 = vrot.lane.b32.xlu0 %v4467, 127
      %v4523 = vpop.permute.xlu0 %4522
      %4524 = vrot.lane.b32.xlu0 %v4468, 127
      %v4525 = vpop.permute.xlu0 %4524
      %4526 = vrot.lane.b32.xlu0 %v4469, 127
      %v4527 = vpop.permute.xlu0 %4526
      %4528 = vrot.lane.b32.xlu0 %v4470, 127
      %v4529 = vpop.permute.xlu0 %4528
      %4530 = vrot.lane.b32.xlu0 %v4471, 127
      %v4531 = vpop.permute.xlu0 %4530
      %4532 = vrot.lane.b32.xlu0 %v4472, 127
      %v4533 = vpop.permute.xlu0 %4532
      %4534 = vrot.lane.b32.xlu0 %v4473, 127
      %v4535 = vpop.permute.xlu0 %4534
      %4536 = vrot.lane.b32.xlu0 %v4474, 127
      %v4537 = vpop.permute.xlu0 %4536
      %4538 = vrot.lane.b32.xlu0 %v4475, 127
      %v4539 = vpop.permute.xlu0 %4538
      %4540 = vrot.lane.b32.xlu0 %v4476, 127
      %v4541 = vpop.permute.xlu0 %4540
      %4542 = vrot.lane.b32.xlu0 %v4477, 127
      %v4543 = vpop.permute.xlu0 %4542
      %4544 = vrot.lane.b32.xlu0 %v4478, 127
      %v4545 = vpop.permute.xlu0 %4544
      %4546 = vrot.lane.b32.xlu0 %v4479, 127
      %v4547 = vpop.permute.xlu0 %4546
      %4548 = vrot.lane.b32.xlu0 %v4480, 127
      %v4549 = vpop.permute.xlu0 %4548
      %4550 = vrot.lane.b32.xlu0 %v4481, 127
      %v4551 = vpop.permute.xlu0 %4550
      %4552 = vrot.lane.b32.xlu0 %v4482, 127
      %v4553 = vpop.permute.xlu0 %4552
      %4554 = vrot.lane.b32.xlu0 %v4483, 127
      %v4555 = vpop.permute.xlu0 %4554
      %v4556 = vsel %vm422, %v4509, %v4511
      %v4557 = vsel %vm422, %v4511, %v4513
      %v4558 = vsel %vm422, %v4513, %v4515
      %v4559 = vsel %vm422, %v4515, %v4517
      %v4560 = vsel %vm422, %v4517, %v4519
      %v4561 = vsel %vm422, %v4519, %v4521
      %v4562 = vsel %vm422, %v4521, %v4523
      %v4563 = vsel %vm422, %v4525, %v4527
      %v4564 = vsel %vm422, %v4527, %v4529
      %v4565 = vsel %vm422, %v4529, %v4531
      %v4566 = vsel %vm422, %v4531, %v4533
      %v4567 = vsel %vm422, %v4533, %v4535
      %v4568 = vsel %vm422, %v4535, %v4537
      %v4569 = vsel %vm422, %v4537, %v4539
      %v4570 = vsel %vm422, %v4541, %v4543
      %v4571 = vsel %vm422, %v4543, %v4545
      %v4572 = vsel %vm422, %v4545, %v4547
      %v4573 = vsel %vm422, %v4547, %v4549
      %v4574 = vsel %vm422, %v4549, %v4551
      %v4575 = vsel %vm422, %v4551, %v4553
      %v4576 = vsel %vm422, %v4553, %v4555
      %v4601 = vmax.f32 %v4460, %v4556
      %v4602 = vmax.f32 %v4461, %v4557
      %v4603 = vmax.f32 %v4462, %v4558
      %v4604 = vmax.f32 %v4463, %v4559
      %v4605 = vmax.f32 %v4464, %v4560
      %v4606 = vmax.f32 %v4465, %v4561
      %v4607 = vmax.f32 %v4466, %v4562
      %v4608 = vmax.f32 %v4467, %v4523
      %v4609 = vmax.f32 %v4468, %v4563
      %v4610 = vmax.f32 %v4469, %v4564
      %v4611 = vmax.f32 %v4470, %v4565
      %v4612 = vmax.f32 %v4471, %v4566
      %v4613 = vmax.f32 %v4472, %v4567
      %v4614 = vmax.f32 %v4473, %v4568
      %v4615 = vmax.f32 %v4474, %v4569
      %v4616 = vmax.f32 %v4475, %v4539
      %v4617 = vmax.f32 %v4476, %v4570
      %v4618 = vmax.f32 %v4477, %v4571
      %v4619 = vmax.f32 %v4478, %v4572
      %v4620 = vmax.f32 %v4479, %v4573
      %v4621 = vmax.f32 %v4480, %v4574
      %v4622 = vmax.f32 %v4481, %v4575
      %v4623 = vmax.f32 %v4482, %v4576
      %v4624 = vmax.f32 %v4483, %v4555
      %4625 = vrot.lane.b32.xlu0 %v4460, 126
      %v4626 = vpop.permute.xlu0 %4625
      %4627 = vrot.lane.b32.xlu0 %v4461, 126
      %v4628 = vpop.permute.xlu0 %4627
      %4629 = vrot.lane.b32.xlu0 %v4462, 126
      %v4630 = vpop.permute.xlu0 %4629
      %4631 = vrot.lane.b32.xlu0 %v4463, 126
      %v4632 = vpop.permute.xlu0 %4631
      %4633 = vrot.lane.b32.xlu0 %v4464, 126
      %v4634 = vpop.permute.xlu0 %4633
      %4635 = vrot.lane.b32.xlu0 %v4465, 126
      %v4636 = vpop.permute.xlu0 %4635
      %4637 = vrot.lane.b32.xlu0 %v4466, 126
      %v4638 = vpop.permute.xlu0 %4637
      %4639 = vrot.lane.b32.xlu0 %v4467, 126
      %v4640 = vpop.permute.xlu0 %4639
      %4641 = vrot.lane.b32.xlu0 %v4468, 126
      %v4642 = vpop.permute.xlu0 %4641
      %4643 = vrot.lane.b32.xlu0 %v4469, 126
      %v4644 = vpop.permute.xlu0 %4643
      %4645 = vrot.lane.b32.xlu0 %v4470, 126
      %v4646 = vpop.permute.xlu0 %4645
      %4647 = vrot.lane.b32.xlu0 %v4471, 126
      %v4648 = vpop.permute.xlu0 %4647
      %4649 = vrot.lane.b32.xlu0 %v4472, 126
      %v4650 = vpop.permute.xlu0 %4649
      %4651 = vrot.lane.b32.xlu0 %v4473, 126
      %v4652 = vpop.permute.xlu0 %4651
      %4653 = vrot.lane.b32.xlu0 %v4474, 126
      %v4654 = vpop.permute.xlu0 %4653
      %4655 = vrot.lane.b32.xlu0 %v4475, 126
      %v4656 = vpop.permute.xlu0 %4655
      %4657 = vrot.lane.b32.xlu0 %v4476, 126
      %v4658 = vpop.permute.xlu0 %4657
      %4659 = vrot.lane.b32.xlu0 %v4477, 126
      %v4660 = vpop.permute.xlu0 %4659
      %4661 = vrot.lane.b32.xlu0 %v4478, 126
      %v4662 = vpop.permute.xlu0 %4661
      %4663 = vrot.lane.b32.xlu0 %v4479, 126
      %v4664 = vpop.permute.xlu0 %4663
      %4665 = vrot.lane.b32.xlu0 %v4480, 126
      %v4666 = vpop.permute.xlu0 %4665
      %4667 = vrot.lane.b32.xlu0 %v4481, 126
      %v4668 = vpop.permute.xlu0 %4667
      %4669 = vrot.lane.b32.xlu0 %v4482, 126
      %v4670 = vpop.permute.xlu0 %4669
      %4671 = vrot.lane.b32.xlu0 %v4483, 126
      %v4672 = vpop.permute.xlu0 %4671
      %v4673 = vsel %vm1166, %v4626, %v4628
      %v4674 = vsel %vm1166, %v4628, %v4630
      %v4675 = vsel %vm1166, %v4630, %v4632
      %v4676 = vsel %vm1166, %v4632, %v4634
      %v4677 = vsel %vm1166, %v4634, %v4636
      %v4678 = vsel %vm1166, %v4636, %v4638
      %v4679 = vsel %vm1166, %v4638, %v4640
      %v4680 = vsel %vm1166, %v4642, %v4644
      %v4681 = vsel %vm1166, %v4644, %v4646
      %v4682 = vsel %vm1166, %v4646, %v4648
      %v4683 = vsel %vm1166, %v4648, %v4650
      %v4684 = vsel %vm1166, %v4650, %v4652
      %v4685 = vsel %vm1166, %v4652, %v4654
      %v4686 = vsel %vm1166, %v4654, %v4656
      %v4687 = vsel %vm1166, %v4658, %v4660
      %v4688 = vsel %vm1166, %v4660, %v4662
      %v4689 = vsel %vm1166, %v4662, %v4664
      %v4690 = vsel %vm1166, %v4664, %v4666
      %v4691 = vsel %vm1166, %v4666, %v4668
      %v4692 = vsel %vm1166, %v4668, %v4670
      %v4693 = vsel %vm1166, %v4670, %v4672
      %v4718 = vmax.f32 %v4601, %v4673
      %v4719 = vmax.f32 %v4602, %v4674
      %v4720 = vmax.f32 %v4603, %v4675
      %v4721 = vmax.f32 %v4604, %v4676
      %v4722 = vmax.f32 %v4605, %v4677
      %v4723 = vmax.f32 %v4606, %v4678
      %v4724 = vmax.f32 %v4607, %v4679
      %v4725 = vmax.f32 %v4608, %v4640
      %v4726 = vmax.f32 %v4609, %v4680
      %v4727 = vmax.f32 %v4610, %v4681
      %v4728 = vmax.f32 %v4611, %v4682
      %v4729 = vmax.f32 %v4612, %v4683
      %v4730 = vmax.f32 %v4613, %v4684
      %v4731 = vmax.f32 %v4614, %v4685
      %v4732 = vmax.f32 %v4615, %v4686
      %v4733 = vmax.f32 %v4616, %v4656
      %v4734 = vmax.f32 %v4617, %v4687
      %v4735 = vmax.f32 %v4618, %v4688
      %v4736 = vmax.f32 %v4619, %v4689
      %v4737 = vmax.f32 %v4620, %v4690
      %v4738 = vmax.f32 %v4621, %v4691
      %v4739 = vmax.f32 %v4622, %v4692
      %v4740 = vmax.f32 %v4623, %v4693
      %v4741 = vmax.f32 %v4624, %v4672
      %4742 = vrot.lane.b32.xlu0 %v4460, 125
      %v4743 = vpop.permute.xlu0 %4742
      %4744 = vrot.lane.b32.xlu0 %v4461, 125
      %v4745 = vpop.permute.xlu0 %4744
      %4746 = vrot.lane.b32.xlu0 %v4462, 125
      %v4747 = vpop.permute.xlu0 %4746
      %4748 = vrot.lane.b32.xlu0 %v4463, 125
      %v4749 = vpop.permute.xlu0 %4748
      %4750 = vrot.lane.b32.xlu0 %v4464, 125
      %v4751 = vpop.permute.xlu0 %4750
      %4752 = vrot.lane.b32.xlu0 %v4465, 125
      %v4753 = vpop.permute.xlu0 %4752
      %4754 = vrot.lane.b32.xlu0 %v4466, 125
      %v4755 = vpop.permute.xlu0 %4754
      %4756 = vrot.lane.b32.xlu0 %v4467, 125
      %v4757 = vpop.permute.xlu0 %4756
      %4758 = vrot.lane.b32.xlu0 %v4468, 125
      %v4759 = vpop.permute.xlu0 %4758
      %4760 = vrot.lane.b32.xlu0 %v4469, 125
      %v4761 = vpop.permute.xlu0 %4760
      %4762 = vrot.lane.b32.xlu0 %v4470, 125
      %v4763 = vpop.permute.xlu0 %4762
      %4764 = vrot.lane.b32.xlu0 %v4471, 125
      %v4765 = vpop.permute.xlu0 %4764
      %4766 = vrot.lane.b32.xlu0 %v4472, 125
      %v4767 = vpop.permute.xlu0 %4766
      %4768 = vrot.lane.b32.xlu0 %v4473, 125
      %v4769 = vpop.permute.xlu0 %4768
      %4770 = vrot.lane.b32.xlu0 %v4474, 125
      %v4771 = vpop.permute.xlu0 %4770
      %4772 = vrot.lane.b32.xlu0 %v4475, 125
      %v4773 = vpop.permute.xlu0 %4772
      %4774 = vrot.lane.b32.xlu0 %v4476, 125
      %v4775 = vpop.permute.xlu0 %4774
      %4776 = vrot.lane.b32.xlu0 %v4477, 125
      %v4777 = vpop.permute.xlu0 %4776
      %4778 = vrot.lane.b32.xlu0 %v4478, 125
      %v4779 = vpop.permute.xlu0 %4778
      %4780 = vrot.lane.b32.xlu0 %v4479, 125
      %v4781 = vpop.permute.xlu0 %4780
      %4782 = vrot.lane.b32.xlu0 %v4480, 125
      %v4783 = vpop.permute.xlu0 %4782
      %4784 = vrot.lane.b32.xlu0 %v4481, 125
      %v4785 = vpop.permute.xlu0 %4784
      %4786 = vrot.lane.b32.xlu0 %v4482, 125
      %v4787 = vpop.permute.xlu0 %4786
      %4788 = vrot.lane.b32.xlu0 %v4483, 125
      %v4789 = vpop.permute.xlu0 %4788
      %v4790 = vsel %vm1575, %v4743, %v4745
      %v4791 = vsel %vm1575, %v4745, %v4747
      %v4792 = vsel %vm1575, %v4747, %v4749
      %v4793 = vsel %vm1575, %v4749, %v4751
      %v4794 = vsel %vm1575, %v4751, %v4753
      %v4795 = vsel %vm1575, %v4753, %v4755
      %v4796 = vsel %vm1575, %v4755, %v4757
      %v4797 = vsel %vm1575, %v4759, %v4761
      %v4798 = vsel %vm1575, %v4761, %v4763
      %v4799 = vsel %vm1575, %v4763, %v4765
      %v4800 = vsel %vm1575, %v4765, %v4767
      %v4801 = vsel %vm1575, %v4767, %v4769
      %v4802 = vsel %vm1575, %v4769, %v4771
      %v4803 = vsel %vm1575, %v4771, %v4773
      %v4804 = vsel %vm1575, %v4775, %v4777
      %v4805 = vsel %vm1575, %v4777, %v4779
      %v4806 = vsel %vm1575, %v4779, %v4781
      %v4807 = vsel %vm1575, %v4781, %v4783
      %v4808 = vsel %vm1575, %v4783, %v4785
      %v4809 = vsel %vm1575, %v4785, %v4787
      %v4810 = vsel %vm1575, %v4787, %v4789
      %v4835 = vmax.f32 %v4718, %v4790
      %v4836 = vmax.f32 %v4719, %v4791
      %v4837 = vmax.f32 %v4720, %v4792
      %v4838 = vmax.f32 %v4721, %v4793
      %v4839 = vmax.f32 %v4722, %v4794
      %v4840 = vmax.f32 %v4723, %v4795
      %v4841 = vmax.f32 %v4724, %v4796
      %v4842 = vmax.f32 %v4725, %v4757
      %v4843 = vmax.f32 %v4726, %v4797
      %v4844 = vmax.f32 %v4727, %v4798
      %v4845 = vmax.f32 %v4728, %v4799
      %v4846 = vmax.f32 %v4729, %v4800
      %v4847 = vmax.f32 %v4730, %v4801
      %v4848 = vmax.f32 %v4731, %v4802
      %v4849 = vmax.f32 %v4732, %v4803
      %v4850 = vmax.f32 %v4733, %v4773
      %v4851 = vmax.f32 %v4734, %v4804
      %v4852 = vmax.f32 %v4735, %v4805
      %v4853 = vmax.f32 %v4736, %v4806
      %v4854 = vmax.f32 %v4737, %v4807
      %v4855 = vmax.f32 %v4738, %v4808
      %v4856 = vmax.f32 %v4739, %v4809
      %v4857 = vmax.f32 %v4740, %v4810
      %v4858 = vmax.f32 %v4741, %v4789
      %v4859 = vlaneseq
      %v4860 = vshrl.u32 %v4859, 7
      %v4861 = vadd.s32 %v4860, 8
      %v4862 = vadd.s32 %v4860, 16
      %v4863 = vadd.s32 %v4860, 24
      %v4864 = vadd.s32 %v4860, 32
      %v4865 = vadd.s32 %v4860, 40
      %v4866 = vadd.s32 %v4860, 48
      %v4867 = vadd.s32 %v4860, 56
      %v4868 = vadd.s32 %v4860, 64
      %v4869 = vadd.s32 %v4860, 72
      %v4870 = vadd.s32 %v4860, 80
      %v4871 = vadd.s32 %v4860, 88
      %v4872 = vadd.s32 %v4860, 96
      %v4873 = vadd.s32 %v4860, 104
      %v4874 = vadd.s32 %v4860, 112
      %v4875 = vadd.s32 %v4860, 120
      %v4876 = vadd.s32 %v4860, 128
      %v4877 = vadd.s32 %v4860, 136
      %v4878 = vadd.s32 %v4860, 144
      %v4879 = vadd.s32 %v4860, 152
      %v4880 = vadd.s32 %v4860, 160
      %v4881 = vadd.s32 %v4860, 168
      %v4882 = vadd.s32 %v4860, 176
      %v4883 = vadd.s32 %v4860, 184
      %v4884 = vadd.s32 %v4860, 192
      %v4885 = vadd.s32 %v4860, 200
      %v4886 = vadd.s32 %v4860, 208
      %v4887 = vadd.s32 %v4860, 216
      %v4888 = vadd.s32 %v4860, 224
      %v4889 = vadd.s32 %v4860, 232
      %v4890 = vadd.s32 %v4860, 240
      %v4891 = vadd.s32 %v4860, 248
      %v4892 = vadd.s32 %v4860, 256
      %v4893 = vadd.s32 %v4860, 264
      %v4894 = vadd.s32 %v4860, 272
      %v4895 = vadd.s32 %v4860, 280
      %v4896 = vadd.s32 %v4860, 288
      %v4897 = vadd.s32 %v4860, 296
      %v4898 = vadd.s32 %v4860, 304
      %v4899 = vadd.s32 %v4860, 312
      %v4900 = vadd.s32 %v4860, 320
      %v4901 = vadd.s32 %v4860, 328
      %v4902 = vadd.s32 %v4860, 336
      %v4903 = vadd.s32 %v4860, 344
      %v4904 = vadd.s32 %v4860, 352
      %v4905 = vadd.s32 %v4860, 360
      %v4906 = vadd.s32 %v4860, 368
      %v4907 = vadd.s32 %v4860, 376
      %v4908 = vadd.s32 %v4860, 384
      %v4909 = vadd.s32 %v4860, 392
      %v4910 = vadd.s32 %v4860, 400
      %v4911 = vadd.s32 %v4860, 408
      %v4912 = vadd.s32 %v4860, 416
      %v4913 = vadd.s32 %v4860, 424
      %v4914 = vadd.s32 %v4860, 432
      %v4915 = vadd.s32 %v4860, 440
      %v4916 = vadd.s32 %v4860, 448
      %v4917 = vadd.s32 %v4860, 456
      %v4918 = vadd.s32 %v4860, 464
      %v4919 = vadd.s32 %v4860, 472
      %v4920 = vadd.s32 %v4860, 480
      %v4921 = vadd.s32 %v4860, 488
      %v4922 = vadd.s32 %v4860, 496
      %v4923 = vadd.s32 %v4860, 504
      %v4924 = vadd.s32 %v4860, 512
      %v4925 = vadd.s32 %v4860, 520
      %v4926 = vadd.s32 %v4860, 528
      %v4927 = vadd.s32 %v4860, 536
      %v4928 = vadd.s32 %v4860, 544
      %v4929 = vadd.s32 %v4860, 552
      %v4930 = vadd.s32 %v4860, 560
      %v4931 = vadd.s32 %v4860, 568
      %v4932 = vadd.s32 %v4860, 576
      %v4933 = vadd.s32 %v4860, 584
      %v4934 = vadd.s32 %v4860, 592
      %v4935 = vadd.s32 %v4860, 600
      %v4936 = vadd.s32 %v4860, 608
      %v4937 = vadd.s32 %v4860, 616
      %v4938 = vadd.s32 %v4860, 624
      %v4939 = vadd.s32 %v4860, 632
      %v4940 = vadd.s32 %v4860, 640
      %v4941 = vadd.s32 %v4860, 648
      %v4942 = vadd.s32 %v4860, 656
      %v4943 = vadd.s32 %v4860, 664
      %v4944 = vadd.s32 %v4860, 672
      %v4945 = vadd.s32 %v4860, 680
      %v4946 = vadd.s32 %v4860, 688
      %v4947 = vadd.s32 %v4860, 696
      %v4948 = vadd.s32 %v4860, 704
      %v4949 = vadd.s32 %v4860, 712
      %v4950 = vadd.s32 %v4860, 720
      %v4951 = vadd.s32 %v4860, 728
      %v4952 = vadd.s32 %v4860, 736
      %v4953 = vadd.s32 %v4860, 744
      %v4954 = vadd.s32 %v4860, 752
      %v4955 = vadd.s32 %v4860, 760
      %v4956 = vadd.s32 %v4860, 768
      %v4957 = vadd.s32 %v4860, 776
      %v4958 = vadd.s32 %v4860, 784
      %v4959 = vadd.s32 %v4860, 792
      %v4960 = vadd.s32 %v4860, 800
      %v4961 = vadd.s32 %v4860, 808
      %v4962 = vadd.s32 %v4860, 816
      %v4963 = vadd.s32 %v4860, 824
      %v4964 = vadd.s32 %v4860, 832
      %v4965 = vadd.s32 %v4860, 840
      %v4966 = vadd.s32 %v4860, 848
      %v4967 = vadd.s32 %v4860, 856
      %v4968 = vadd.s32 %v4860, 864
      %v4969 = vadd.s32 %v4860, 872
      %v4970 = vadd.s32 %v4860, 880
      %v4971 = vadd.s32 %v4860, 888
      %v4972 = vadd.s32 %v4860, 896
      %v4973 = vadd.s32 %v4860, 904
      %v4974 = vadd.s32 %v4860, 912
      %v4975 = vadd.s32 %v4860, 920
      %v4976 = vadd.s32 %v4860, 928
      %v4977 = vadd.s32 %v4860, 936
      %v4978 = vadd.s32 %v4860, 944
      %v4979 = vadd.s32 %v4860, 952
      %v4980 = vadd.s32 %v4860, 960
      %v4981 = vadd.s32 %v4860, 968
      %v4982 = vadd.s32 %v4860, 976
      %v4983 = vadd.s32 %v4860, 984
      %v4984 = vadd.s32 %v4860, 992
      %v4985 = vadd.s32 %v4860, 1000
      %v4986 = vadd.s32 %v4860, 1008
      %v4987 = vlaneseq
      %v4988 = vand.u32 %v4987, 127
      %v4989 = vadd.s32 %v4988, 128
      %v4990 = vmul.u32 %v4988, 4
      %v4991 = vmul.u32 %v4989, 4
      %vm4992 = vcmp.eq.s32.totalorder %v4860, %v4990
      %vm4993 = vcmp.eq.s32.totalorder %v4860, %v4991
      %vm4994 = vcmp.eq.s32.totalorder %v4861, %v4990
      %vm4995 = vcmp.eq.s32.totalorder %v4861, %v4991
      %vm4996 = vcmp.eq.s32.totalorder %v4862, %v4990
      %vm4997 = vcmp.eq.s32.totalorder %v4862, %v4991
      %vm4998 = vcmp.eq.s32.totalorder %v4863, %v4990
      %vm4999 = vcmp.eq.s32.totalorder %v4863, %v4991
      %vm5000 = vcmp.eq.s32.totalorder %v4864, %v4990
      %vm5001 = vcmp.eq.s32.totalorder %v4864, %v4991
      %vm5002 = vcmp.eq.s32.totalorder %v4865, %v4990
      %vm5003 = vcmp.eq.s32.totalorder %v4865, %v4991
      %vm5004 = vcmp.eq.s32.totalorder %v4866, %v4990
      %vm5005 = vcmp.eq.s32.totalorder %v4866, %v4991
      %vm5006 = vcmp.eq.s32.totalorder %v4867, %v4990
      %vm5007 = vcmp.eq.s32.totalorder %v4867, %v4991
      %vm5008 = vcmp.eq.s32.totalorder %v4868, %v4990
      %vm5009 = vcmp.eq.s32.totalorder %v4868, %v4991
      %vm5010 = vcmp.eq.s32.totalorder %v4869, %v4990
      %vm5011 = vcmp.eq.s32.totalorder %v4869, %v4991
      %vm5012 = vcmp.eq.s32.totalorder %v4870, %v4990
      %vm5013 = vcmp.eq.s32.totalorder %v4870, %v4991
      %vm5014 = vcmp.eq.s32.totalorder %v4871, %v4990
      %vm5015 = vcmp.eq.s32.totalorder %v4871, %v4991
      %vm5016 = vcmp.eq.s32.totalorder %v4872, %v4990
      %vm5017 = vcmp.eq.s32.totalorder %v4872, %v4991
      %vm5018 = vcmp.eq.s32.totalorder %v4873, %v4990
      %vm5019 = vcmp.eq.s32.totalorder %v4873, %v4991
      %vm5020 = vcmp.eq.s32.totalorder %v4874, %v4990
      %vm5021 = vcmp.eq.s32.totalorder %v4874, %v4991
      %vm5022 = vcmp.eq.s32.totalorder %v4875, %v4990
      %vm5023 = vcmp.eq.s32.totalorder %v4875, %v4991
      %vm5024 = vcmp.eq.s32.totalorder %v4876, %v4990
      %vm5025 = vcmp.eq.s32.totalorder %v4876, %v4991
      %vm5026 = vcmp.eq.s32.totalorder %v4877, %v4990
      %vm5027 = vcmp.eq.s32.totalorder %v4877, %v4991
      %vm5028 = vcmp.eq.s32.totalorder %v4878, %v4990
      %vm5029 = vcmp.eq.s32.totalorder %v4878, %v4991
      %vm5030 = vcmp.eq.s32.totalorder %v4879, %v4990
      %vm5031 = vcmp.eq.s32.totalorder %v4879, %v4991
      %vm5032 = vcmp.eq.s32.totalorder %v4880, %v4990
      %vm5033 = vcmp.eq.s32.totalorder %v4880, %v4991
      %vm5034 = vcmp.eq.s32.totalorder %v4881, %v4990
      %vm5035 = vcmp.eq.s32.totalorder %v4881, %v4991
      %vm5036 = vcmp.eq.s32.totalorder %v4882, %v4990
      %vm5037 = vcmp.eq.s32.totalorder %v4882, %v4991
      %vm5038 = vcmp.eq.s32.totalorder %v4883, %v4990
      %vm5039 = vcmp.eq.s32.totalorder %v4883, %v4991
      %vm5040 = vcmp.eq.s32.totalorder %v4884, %v4990
      %vm5041 = vcmp.eq.s32.totalorder %v4884, %v4991
      %vm5042 = vcmp.eq.s32.totalorder %v4885, %v4990
      %vm5043 = vcmp.eq.s32.totalorder %v4885, %v4991
      %vm5044 = vcmp.eq.s32.totalorder %v4886, %v4990
      %vm5045 = vcmp.eq.s32.totalorder %v4886, %v4991
      %vm5046 = vcmp.eq.s32.totalorder %v4887, %v4990
      %vm5047 = vcmp.eq.s32.totalorder %v4887, %v4991
      %vm5048 = vcmp.eq.s32.totalorder %v4888, %v4990
      %vm5049 = vcmp.eq.s32.totalorder %v4888, %v4991
      %vm5050 = vcmp.eq.s32.totalorder %v4889, %v4990
      %vm5051 = vcmp.eq.s32.totalorder %v4889, %v4991
      %vm5052 = vcmp.eq.s32.totalorder %v4890, %v4990
      %vm5053 = vcmp.eq.s32.totalorder %v4890, %v4991
      %vm5054 = vcmp.eq.s32.totalorder %v4891, %v4990
      %vm5055 = vcmp.eq.s32.totalorder %v4891, %v4991
      %vm5056 = vcmp.eq.s32.totalorder %v4892, %v4990
      %vm5057 = vcmp.eq.s32.totalorder %v4892, %v4991
      %vm5058 = vcmp.eq.s32.totalorder %v4893, %v4990
      %vm5059 = vcmp.eq.s32.totalorder %v4893, %v4991
      %vm5060 = vcmp.eq.s32.totalorder %v4894, %v4990
      %vm5061 = vcmp.eq.s32.totalorder %v4894, %v4991
      %vm5062 = vcmp.eq.s32.totalorder %v4895, %v4990
      %vm5063 = vcmp.eq.s32.totalorder %v4895, %v4991
      %vm5064 = vcmp.eq.s32.totalorder %v4896, %v4990
      %vm5065 = vcmp.eq.s32.totalorder %v4896, %v4991
      %vm5066 = vcmp.eq.s32.totalorder %v4897, %v4990
      %vm5067 = vcmp.eq.s32.totalorder %v4897, %v4991
      %vm5068 = vcmp.eq.s32.totalorder %v4898, %v4990
      %vm5069 = vcmp.eq.s32.totalorder %v4898, %v4991
      %vm5070 = vcmp.eq.s32.totalorder %v4899, %v4990
      %vm5071 = vcmp.eq.s32.totalorder %v4899, %v4991
      %vm5072 = vcmp.eq.s32.totalorder %v4900, %v4990
      %vm5073 = vcmp.eq.s32.totalorder %v4900, %v4991
      %vm5074 = vcmp.eq.s32.totalorder %v4901, %v4990
      %vm5075 = vcmp.eq.s32.totalorder %v4901, %v4991
      %vm5076 = vcmp.eq.s32.totalorder %v4902, %v4990
      %vm5077 = vcmp.eq.s32.totalorder %v4902, %v4991
      %vm5078 = vcmp.eq.s32.totalorder %v4903, %v4990
      %vm5079 = vcmp.eq.s32.totalorder %v4903, %v4991
      %vm5080 = vcmp.eq.s32.totalorder %v4904, %v4990
      %vm5081 = vcmp.eq.s32.totalorder %v4904, %v4991
      %vm5082 = vcmp.eq.s32.totalorder %v4905, %v4990
      %vm5083 = vcmp.eq.s32.totalorder %v4905, %v4991
      %vm5084 = vcmp.eq.s32.totalorder %v4906, %v4990
      %vm5085 = vcmp.eq.s32.totalorder %v4906, %v4991
      %vm5086 = vcmp.eq.s32.totalorder %v4907, %v4990
      %vm5087 = vcmp.eq.s32.totalorder %v4907, %v4991
      %vm5088 = vcmp.eq.s32.totalorder %v4908, %v4990
      %vm5089 = vcmp.eq.s32.totalorder %v4908, %v4991
      %vm5090 = vcmp.eq.s32.totalorder %v4909, %v4990
      %vm5091 = vcmp.eq.s32.totalorder %v4909, %v4991
      %vm5092 = vcmp.eq.s32.totalorder %v4910, %v4990
      %vm5093 = vcmp.eq.s32.totalorder %v4910, %v4991
      %vm5094 = vcmp.eq.s32.totalorder %v4911, %v4990
      %vm5095 = vcmp.eq.s32.totalorder %v4911, %v4991
      %vm5096 = vcmp.eq.s32.totalorder %v4912, %v4990
      %vm5097 = vcmp.eq.s32.totalorder %v4912, %v4991
      %vm5098 = vcmp.eq.s32.totalorder %v4913, %v4990
      %vm5099 = vcmp.eq.s32.totalorder %v4913, %v4991
      %vm5100 = vcmp.eq.s32.totalorder %v4914, %v4990
      %vm5101 = vcmp.eq.s32.totalorder %v4914, %v4991
      %vm5102 = vcmp.eq.s32.totalorder %v4915, %v4990
      %vm5103 = vcmp.eq.s32.totalorder %v4915, %v4991
      %vm5104 = vcmp.eq.s32.totalorder %v4916, %v4990
      %vm5105 = vcmp.eq.s32.totalorder %v4916, %v4991
      %vm5106 = vcmp.eq.s32.totalorder %v4917, %v4990
      %vm5107 = vcmp.eq.s32.totalorder %v4917, %v4991
      %vm5108 = vcmp.eq.s32.totalorder %v4918, %v4990
      %vm5109 = vcmp.eq.s32.totalorder %v4918, %v4991
      %vm5110 = vcmp.eq.s32.totalorder %v4919, %v4990
      %vm5111 = vcmp.eq.s32.totalorder %v4919, %v4991
      %vm5112 = vcmp.eq.s32.totalorder %v4920, %v4990
      %vm5113 = vcmp.eq.s32.totalorder %v4920, %v4991
      %vm5114 = vcmp.eq.s32.totalorder %v4921, %v4990
      %vm5115 = vcmp.eq.s32.totalorder %v4921, %v4991
      %vm5116 = vcmp.eq.s32.totalorder %v4922, %v4990
      %vm5117 = vcmp.eq.s32.totalorder %v4922, %v4991
      %vm5118 = vcmp.eq.s32.totalorder %v4923, %v4990
      %vm5119 = vcmp.eq.s32.totalorder %v4923, %v4991
      %vm5120 = vcmp.eq.s32.totalorder %v4924, %v4990
      %vm5121 = vcmp.eq.s32.totalorder %v4924, %v4991
      %vm5122 = vcmp.eq.s32.totalorder %v4925, %v4990
      %vm5123 = vcmp.eq.s32.totalorder %v4925, %v4991
      %vm5124 = vcmp.eq.s32.totalorder %v4926, %v4990
      %vm5125 = vcmp.eq.s32.totalorder %v4926, %v4991
      %vm5126 = vcmp.eq.s32.totalorder %v4927, %v4990
      %vm5127 = vcmp.eq.s32.totalorder %v4927, %v4991
      %vm5128 = vcmp.eq.s32.totalorder %v4928, %v4990
      %vm5129 = vcmp.eq.s32.totalorder %v4928, %v4991
      %vm5130 = vcmp.eq.s32.totalorder %v4929, %v4990
      %vm5131 = vcmp.eq.s32.totalorder %v4929, %v4991
      %vm5132 = vcmp.eq.s32.totalorder %v4930, %v4990
      %vm5133 = vcmp.eq.s32.totalorder %v4930, %v4991
      %vm5134 = vcmp.eq.s32.totalorder %v4931, %v4990
      %vm5135 = vcmp.eq.s32.totalorder %v4931, %v4991
      %vm5136 = vcmp.eq.s32.totalorder %v4932, %v4990
      %vm5137 = vcmp.eq.s32.totalorder %v4932, %v4991
      %vm5138 = vcmp.eq.s32.totalorder %v4933, %v4990
      %vm5139 = vcmp.eq.s32.totalorder %v4933, %v4991
      %vm5140 = vcmp.eq.s32.totalorder %v4934, %v4990
      %vm5141 = vcmp.eq.s32.totalorder %v4934, %v4991
      %vm5142 = vcmp.eq.s32.totalorder %v4935, %v4990
      %vm5143 = vcmp.eq.s32.totalorder %v4935, %v4991
      %vm5144 = vcmp.eq.s32.totalorder %v4936, %v4990
      %vm5145 = vcmp.eq.s32.totalorder %v4936, %v4991
      %vm5146 = vcmp.eq.s32.totalorder %v4937, %v4990
      %vm5147 = vcmp.eq.s32.totalorder %v4937, %v4991
      %vm5148 = vcmp.eq.s32.totalorder %v4938, %v4990
      %vm5149 = vcmp.eq.s32.totalorder %v4938, %v4991
      %vm5150 = vcmp.eq.s32.totalorder %v4939, %v4990
      %vm5151 = vcmp.eq.s32.totalorder %v4939, %v4991
      %vm5152 = vcmp.eq.s32.totalorder %v4940, %v4990
      %vm5153 = vcmp.eq.s32.totalorder %v4940, %v4991
      %vm5154 = vcmp.eq.s32.totalorder %v4941, %v4990
      %vm5155 = vcmp.eq.s32.totalorder %v4941, %v4991
      %vm5156 = vcmp.eq.s32.totalorder %v4942, %v4990
      %vm5157 = vcmp.eq.s32.totalorder %v4942, %v4991
      %vm5158 = vcmp.eq.s32.totalorder %v4943, %v4990
      %vm5159 = vcmp.eq.s32.totalorder %v4943, %v4991
      %vm5160 = vcmp.eq.s32.totalorder %v4944, %v4990
      %vm5161 = vcmp.eq.s32.totalorder %v4944, %v4991
      %vm5162 = vcmp.eq.s32.totalorder %v4945, %v4990
      %vm5163 = vcmp.eq.s32.totalorder %v4945, %v4991
      %vm5164 = vcmp.eq.s32.totalorder %v4946, %v4990
      %vm5165 = vcmp.eq.s32.totalorder %v4946, %v4991
      %vm5166 = vcmp.eq.s32.totalorder %v4947, %v4990
      %vm5167 = vcmp.eq.s32.totalorder %v4947, %v4991
      %vm5168 = vcmp.eq.s32.totalorder %v4948, %v4990
      %vm5169 = vcmp.eq.s32.totalorder %v4948, %v4991
      %vm5170 = vcmp.eq.s32.totalorder %v4949, %v4990
      %vm5171 = vcmp.eq.s32.totalorder %v4949, %v4991
      %vm5172 = vcmp.eq.s32.totalorder %v4950, %v4990
      %vm5173 = vcmp.eq.s32.totalorder %v4950, %v4991
      %vm5174 = vcmp.eq.s32.totalorder %v4951, %v4990
      %vm5175 = vcmp.eq.s32.totalorder %v4951, %v4991
      %vm5176 = vcmp.eq.s32.totalorder %v4952, %v4990
      %vm5177 = vcmp.eq.s32.totalorder %v4952, %v4991
      %vm5178 = vcmp.eq.s32.totalorder %v4953, %v4990
      %vm5179 = vcmp.eq.s32.totalorder %v4953, %v4991
      %vm5180 = vcmp.eq.s32.totalorder %v4954, %v4990
      %vm5181 = vcmp.eq.s32.totalorder %v4954, %v4991
      %vm5182 = vcmp.eq.s32.totalorder %v4955, %v4990
      %vm5183 = vcmp.eq.s32.totalorder %v4955, %v4991
      %vm5184 = vcmp.eq.s32.totalorder %v4956, %v4990
      %vm5185 = vcmp.eq.s32.totalorder %v4956, %v4991
      %vm5186 = vcmp.eq.s32.totalorder %v4957, %v4990
      %vm5187 = vcmp.eq.s32.totalorder %v4957, %v4991
      %vm5188 = vcmp.eq.s32.totalorder %v4958, %v4990
      %vm5189 = vcmp.eq.s32.totalorder %v4958, %v4991
      %vm5190 = vcmp.eq.s32.totalorder %v4959, %v4990
      %vm5191 = vcmp.eq.s32.totalorder %v4959, %v4991
      %vm5192 = vcmp.eq.s32.totalorder %v4960, %v4990
      %vm5193 = vcmp.eq.s32.totalorder %v4960, %v4991
      %vm5194 = vcmp.eq.s32.totalorder %v4961, %v4990
      %vm5195 = vcmp.eq.s32.totalorder %v4961, %v4991
      %vm5196 = vcmp.eq.s32.totalorder %v4962, %v4990
      %vm5197 = vcmp.eq.s32.totalorder %v4962, %v4991
      %vm5198 = vcmp.eq.s32.totalorder %v4963, %v4990
      %vm5199 = vcmp.eq.s32.totalorder %v4963, %v4991
      %vm5200 = vcmp.eq.s32.totalorder %v4964, %v4990
      %vm5201 = vcmp.eq.s32.totalorder %v4964, %v4991
      %vm5202 = vcmp.eq.s32.totalorder %v4965, %v4990
      %vm5203 = vcmp.eq.s32.totalorder %v4965, %v4991
      %vm5204 = vcmp.eq.s32.totalorder %v4966, %v4990
      %vm5205 = vcmp.eq.s32.totalorder %v4966, %v4991
      %vm5206 = vcmp.eq.s32.totalorder %v4967, %v4990
      %vm5207 = vcmp.eq.s32.totalorder %v4967, %v4991
      %vm5208 = vcmp.eq.s32.totalorder %v4968, %v4990
      %vm5209 = vcmp.eq.s32.totalorder %v4968, %v4991
      %vm5210 = vcmp.eq.s32.totalorder %v4969, %v4990
      %vm5211 = vcmp.eq.s32.totalorder %v4969, %v4991
      %vm5212 = vcmp.eq.s32.totalorder %v4970, %v4990
      %vm5213 = vcmp.eq.s32.totalorder %v4970, %v4991
      %vm5214 = vcmp.eq.s32.totalorder %v4971, %v4990
      %vm5215 = vcmp.eq.s32.totalorder %v4971, %v4991
      %vm5216 = vcmp.eq.s32.totalorder %v4972, %v4990
      %vm5217 = vcmp.eq.s32.totalorder %v4972, %v4991
      %vm5218 = vcmp.eq.s32.totalorder %v4973, %v4990
      %vm5219 = vcmp.eq.s32.totalorder %v4973, %v4991
      %vm5220 = vcmp.eq.s32.totalorder %v4974, %v4990
      %vm5221 = vcmp.eq.s32.totalorder %v4974, %v4991
      %vm5222 = vcmp.eq.s32.totalorder %v4975, %v4990
      %vm5223 = vcmp.eq.s32.totalorder %v4975, %v4991
      %vm5224 = vcmp.eq.s32.totalorder %v4976, %v4990
      %vm5225 = vcmp.eq.s32.totalorder %v4976, %v4991
      %vm5226 = vcmp.eq.s32.totalorder %v4977, %v4990
      %vm5227 = vcmp.eq.s32.totalorder %v4977, %v4991
      %vm5228 = vcmp.eq.s32.totalorder %v4978, %v4990
      %vm5229 = vcmp.eq.s32.totalorder %v4978, %v4991
      %vm5230 = vcmp.eq.s32.totalorder %v4979, %v4990
      %vm5231 = vcmp.eq.s32.totalorder %v4979, %v4991
      %vm5232 = vcmp.eq.s32.totalorder %v4980, %v4990
      %vm5233 = vcmp.eq.s32.totalorder %v4980, %v4991
      %vm5234 = vcmp.eq.s32.totalorder %v4981, %v4990
      %vm5235 = vcmp.eq.s32.totalorder %v4981, %v4991
      %vm5236 = vcmp.eq.s32.totalorder %v4982, %v4990
      %vm5237 = vcmp.eq.s32.totalorder %v4982, %v4991
      %vm5238 = vcmp.eq.s32.totalorder %v4983, %v4990
      %vm5239 = vcmp.eq.s32.totalorder %v4983, %v4991
      %vm5240 = vcmp.eq.s32.totalorder %v4984, %v4990
      %vm5241 = vcmp.eq.s32.totalorder %v4984, %v4991
      %vm5242 = vcmp.eq.s32.totalorder %v4985, %v4990
      %vm5243 = vcmp.eq.s32.totalorder %v4985, %v4991
      %vm5244 = vcmp.eq.s32.totalorder %v4986, %v4990
      %vm5245 = vcmp.eq.s32.totalorder %v4986, %v4991
      %v5246 = vsel %vm4992, 1, 0
      %v5247 = vsel %vm4993, 1, 0
      %v5248 = vsel %vm4994, 1, 0
      %v5249 = vsel %vm4995, 1, 0
      %v5250 = vsel %vm4996, 1, 0
      %v5251 = vsel %vm4997, 1, 0
      %v5252 = vsel %vm4998, 1, 0
      %v5253 = vsel %vm4999, 1, 0
      %v5254 = vsel %vm5000, 1, 0
      %v5255 = vsel %vm5001, 1, 0
      %v5256 = vsel %vm5002, 1, 0
      %v5257 = vsel %vm5003, 1, 0
      %v5258 = vsel %vm5004, 1, 0
      %v5259 = vsel %vm5005, 1, 0
      %v5260 = vsel %vm5006, 1, 0
      %v5261 = vsel %vm5007, 1, 0
      %v5262 = vsel %vm5008, 1, 0
      %v5263 = vsel %vm5009, 1, 0
      %v5264 = vsel %vm5010, 1, 0
      %v5265 = vsel %vm5011, 1, 0
      %v5266 = vsel %vm5012, 1, 0
      %v5267 = vsel %vm5013, 1, 0
      %v5268 = vsel %vm5014, 1, 0
      %v5269 = vsel %vm5015, 1, 0
      %v5270 = vsel %vm5016, 1, 0
      %v5271 = vsel %vm5017, 1, 0
      %v5272 = vsel %vm5018, 1, 0
      %v5273 = vsel %vm5019, 1, 0
      %v5274 = vsel %vm5020, 1, 0
      %v5275 = vsel %vm5021, 1, 0
      %v5276 = vsel %vm5022, 1, 0
      %v5277 = vsel %vm5023, 1, 0
      %v5278 = vsel %vm5024, 1, 0
      %v5279 = vsel %vm5025, 1, 0
      %v5280 = vsel %vm5026, 1, 0
      %v5281 = vsel %vm5027, 1, 0
      %v5282 = vsel %vm5028, 1, 0
      %v5283 = vsel %vm5029, 1, 0
      %v5284 = vsel %vm5030, 1, 0
      %v5285 = vsel %vm5031, 1, 0
      %v5286 = vsel %vm5032, 1, 0
      %v5287 = vsel %vm5033, 1, 0
      %v5288 = vsel %vm5034, 1, 0
      %v5289 = vsel %vm5035, 1, 0
      %v5290 = vsel %vm5036, 1, 0
      %v5291 = vsel %vm5037, 1, 0
      %v5292 = vsel %vm5038, 1, 0
      %v5293 = vsel %vm5039, 1, 0
      %v5294 = vsel %vm5040, 1, 0
      %v5295 = vsel %vm5041, 1, 0
      %v5296 = vsel %vm5042, 1, 0
      %v5297 = vsel %vm5043, 1, 0
      %v5298 = vsel %vm5044, 1, 0
      %v5299 = vsel %vm5045, 1, 0
      %v5300 = vsel %vm5046, 1, 0
      %v5301 = vsel %vm5047, 1, 0
      %v5302 = vsel %vm5048, 1, 0
      %v5303 = vsel %vm5049, 1, 0
      %v5304 = vsel %vm5050, 1, 0
      %v5305 = vsel %vm5051, 1, 0
      %v5306 = vsel %vm5052, 1, 0
      %v5307 = vsel %vm5053, 1, 0
      %v5308 = vsel %vm5054, 1, 0
      %v5309 = vsel %vm5055, 1, 0
      %v5310 = vsel %vm5056, 1, 0
      %v5311 = vsel %vm5057, 1, 0
      %v5312 = vsel %vm5058, 1, 0
      %v5313 = vsel %vm5059, 1, 0
      %v5314 = vsel %vm5060, 1, 0
      %v5315 = vsel %vm5061, 1, 0
      %v5316 = vsel %vm5062, 1, 0
      %v5317 = vsel %vm5063, 1, 0
      %v5318 = vsel %vm5064, 1, 0
      %v5319 = vsel %vm5065, 1, 0
      %v5320 = vsel %vm5066, 1, 0
      %v5321 = vsel %vm5067, 1, 0
      %v5322 = vsel %vm5068, 1, 0
      %v5323 = vsel %vm5069, 1, 0
      %v5324 = vsel %vm5070, 1, 0
      %v5325 = vsel %vm5071, 1, 0
      %v5326 = vsel %vm5072, 1, 0
      %v5327 = vsel %vm5073, 1, 0
      %v5328 = vsel %vm5074, 1, 0
      %v5329 = vsel %vm5075, 1, 0
      %v5330 = vsel %vm5076, 1, 0
      %v5331 = vsel %vm5077, 1, 0
      %v5332 = vsel %vm5078, 1, 0
      %v5333 = vsel %vm5079, 1, 0
      %v5334 = vsel %vm5080, 1, 0
      %v5335 = vsel %vm5081, 1, 0
      %v5336 = vsel %vm5082, 1, 0
      %v5337 = vsel %vm5083, 1, 0
      %v5338 = vsel %vm5084, 1, 0
      %v5339 = vsel %vm5085, 1, 0
      %v5340 = vsel %vm5086, 1, 0
      %v5341 = vsel %vm5087, 1, 0
      %v5342 = vsel %vm5088, 1, 0
      %v5343 = vsel %vm5089, 1, 0
      %v5344 = vsel %vm5090, 1, 0
      %v5345 = vsel %vm5091, 1, 0
      %v5346 = vsel %vm5092, 1, 0
      %v5347 = vsel %vm5093, 1, 0
      %v5348 = vsel %vm5094, 1, 0
      %v5349 = vsel %vm5095, 1, 0
      %v5350 = vsel %vm5096, 1, 0
      %v5351 = vsel %vm5097, 1, 0
      %v5352 = vsel %vm5098, 1, 0
      %v5353 = vsel %vm5099, 1, 0
      %v5354 = vsel %vm5100, 1, 0
      %v5355 = vsel %vm5101, 1, 0
      %v5356 = vsel %vm5102, 1, 0
      %v5357 = vsel %vm5103, 1, 0
      %v5358 = vsel %vm5104, 1, 0
      %v5359 = vsel %vm5105, 1, 0
      %v5360 = vsel %vm5106, 1, 0
      %v5361 = vsel %vm5107, 1, 0
      %v5362 = vsel %vm5108, 1, 0
      %v5363 = vsel %vm5109, 1, 0
      %v5364 = vsel %vm5110, 1, 0
      %v5365 = vsel %vm5111, 1, 0
      %v5366 = vsel %vm5112, 1, 0
      %v5367 = vsel %vm5113, 1, 0
      %v5368 = vsel %vm5114, 1, 0
      %v5369 = vsel %vm5115, 1, 0
      %v5370 = vsel %vm5116, 1, 0
      %v5371 = vsel %vm5117, 1, 0
      %v5372 = vsel %vm5118, 1, 0
      %v5373 = vsel %vm5119, 1, 0
      %v5374 = vsel %vm5120, 1, 0
      %v5375 = vsel %vm5121, 1, 0
      %v5376 = vsel %vm5122, 1, 0
      %v5377 = vsel %vm5123, 1, 0
      %v5378 = vsel %vm5124, 1, 0
      %v5379 = vsel %vm5125, 1, 0
      %v5380 = vsel %vm5126, 1, 0
      %v5381 = vsel %vm5127, 1, 0
      %v5382 = vsel %vm5128, 1, 0
      %v5383 = vsel %vm5129, 1, 0
      %v5384 = vsel %vm5130, 1, 0
      %v5385 = vsel %vm5131, 1, 0
      %v5386 = vsel %vm5132, 1, 0
      %v5387 = vsel %vm5133, 1, 0
      %v5388 = vsel %vm5134, 1, 0
      %v5389 = vsel %vm5135, 1, 0
      %v5390 = vsel %vm5136, 1, 0
      %v5391 = vsel %vm5137, 1, 0
      %v5392 = vsel %vm5138, 1, 0
      %v5393 = vsel %vm5139, 1, 0
      %v5394 = vsel %vm5140, 1, 0
      %v5395 = vsel %vm5141, 1, 0
      %v5396 = vsel %vm5142, 1, 0
      %v5397 = vsel %vm5143, 1, 0
      %v5398 = vsel %vm5144, 1, 0
      %v5399 = vsel %vm5145, 1, 0
      %v5400 = vsel %vm5146, 1, 0
      %v5401 = vsel %vm5147, 1, 0
      %v5402 = vsel %vm5148, 1, 0
      %v5403 = vsel %vm5149, 1, 0
      %v5404 = vsel %vm5150, 1, 0
      %v5405 = vsel %vm5151, 1, 0
      %v5406 = vsel %vm5152, 1, 0
      %v5407 = vsel %vm5153, 1, 0
      %v5408 = vsel %vm5154, 1, 0
      %v5409 = vsel %vm5155, 1, 0
      %v5410 = vsel %vm5156, 1, 0
      %v5411 = vsel %vm5157, 1, 0
      %v5412 = vsel %vm5158, 1, 0
      %v5413 = vsel %vm5159, 1, 0
      %v5414 = vsel %vm5160, 1, 0
      %v5415 = vsel %vm5161, 1, 0
      %v5416 = vsel %vm5162, 1, 0
      %v5417 = vsel %vm5163, 1, 0
      %v5418 = vsel %vm5164, 1, 0
      %v5419 = vsel %vm5165, 1, 0
      %v5420 = vsel %vm5166, 1, 0
      %v5421 = vsel %vm5167, 1, 0
      %v5422 = vsel %vm5168, 1, 0
      %v5423 = vsel %vm5169, 1, 0
      %v5424 = vsel %vm5170, 1, 0
      %v5425 = vsel %vm5171, 1, 0
      %v5426 = vsel %vm5172, 1, 0
      %v5427 = vsel %vm5173, 1, 0
      %v5428 = vsel %vm5174, 1, 0
      %v5429 = vsel %vm5175, 1, 0
      %v5430 = vsel %vm5176, 1, 0
      %v5431 = vsel %vm5177, 1, 0
      %v5432 = vsel %vm5178, 1, 0
      %v5433 = vsel %vm5179, 1, 0
      %v5434 = vsel %vm5180, 1, 0
      %v5435 = vsel %vm5181, 1, 0
      %v5436 = vsel %vm5182, 1, 0
      %v5437 = vsel %vm5183, 1, 0
      %v5438 = vsel %vm5184, 1, 0
      %v5439 = vsel %vm5185, 1, 0
      %v5440 = vsel %vm5186, 1, 0
      %v5441 = vsel %vm5187, 1, 0
      %v5442 = vsel %vm5188, 1, 0
      %v5443 = vsel %vm5189, 1, 0
      %v5444 = vsel %vm5190, 1, 0
      %v5445 = vsel %vm5191, 1, 0
      %v5446 = vsel %vm5192, 1, 0
      %v5447 = vsel %vm5193, 1, 0
      %v5448 = vsel %vm5194, 1, 0
      %v5449 = vsel %vm5195, 1, 0
      %v5450 = vsel %vm5196, 1, 0
      %v5451 = vsel %vm5197, 1, 0
      %v5452 = vsel %vm5198, 1, 0
      %v5453 = vsel %vm5199, 1, 0
      %v5454 = vsel %vm5200, 1, 0
      %v5455 = vsel %vm5201, 1, 0
      %v5456 = vsel %vm5202, 1, 0
      %v5457 = vsel %vm5203, 1, 0
      %v5458 = vsel %vm5204, 1, 0
      %v5459 = vsel %vm5205, 1, 0
      %v5460 = vsel %vm5206, 1, 0
      %v5461 = vsel %vm5207, 1, 0
      %v5462 = vsel %vm5208, 1, 0
      %v5463 = vsel %vm5209, 1, 0
      %v5464 = vsel %vm5210, 1, 0
      %v5465 = vsel %vm5211, 1, 0
      %v5466 = vsel %vm5212, 1, 0
      %v5467 = vsel %vm5213, 1, 0
      %v5468 = vsel %vm5214, 1, 0
      %v5469 = vsel %vm5215, 1, 0
      %v5470 = vsel %vm5216, 1, 0
      %v5471 = vsel %vm5217, 1, 0
      %v5472 = vsel %vm5218, 1, 0
      %v5473 = vsel %vm5219, 1, 0
      %v5474 = vsel %vm5220, 1, 0
      %v5475 = vsel %vm5221, 1, 0
      %v5476 = vsel %vm5222, 1, 0
      %v5477 = vsel %vm5223, 1, 0
      %v5478 = vsel %vm5224, 1, 0
      %v5479 = vsel %vm5225, 1, 0
      %v5480 = vsel %vm5226, 1, 0
      %v5481 = vsel %vm5227, 1, 0
      %v5482 = vsel %vm5228, 1, 0
      %v5483 = vsel %vm5229, 1, 0
      %v5484 = vsel %vm5230, 1, 0
      %v5485 = vsel %vm5231, 1, 0
      %v5486 = vsel %vm5232, 1, 0
      %v5487 = vsel %vm5233, 1, 0
      %v5488 = vsel %vm5234, 1, 0
      %v5489 = vsel %vm5235, 1, 0
      %v5490 = vsel %vm5236, 1, 0
      %v5491 = vsel %vm5237, 1, 0
      %v5492 = vsel %vm5238, 1, 0
      %v5493 = vsel %vm5239, 1, 0
      %v5494 = vsel %vm5240, 1, 0
      %v5495 = vsel %vm5241, 1, 0
      %v5496 = vsel %vm5242, 1, 0
      %v5497 = vsel %vm5243, 1, 0
      %v5498 = vsel %vm5244, 1, 0
      %v5499 = vsel %vm5245, 1, 0
      %v5500 = vcvt.s32.f32 %v5246
      %v5501 = vcvt.s32.f32 %v5247
      %v5502 = vcvt.s32.f32 %v5248
      %v5503 = vcvt.s32.f32 %v5249
      %v5504 = vcvt.s32.f32 %v5250
      %v5505 = vcvt.s32.f32 %v5251
      %v5506 = vcvt.s32.f32 %v5252
      %v5507 = vcvt.s32.f32 %v5253
      %v5508 = vcvt.s32.f32 %v5254
      %v5509 = vcvt.s32.f32 %v5255
      %v5510 = vcvt.s32.f32 %v5256
      %v5511 = vcvt.s32.f32 %v5257
      %v5512 = vcvt.s32.f32 %v5258
      %v5513 = vcvt.s32.f32 %v5259
      %v5514 = vcvt.s32.f32 %v5260
      %v5515 = vcvt.s32.f32 %v5261
      %v5516 = vcvt.s32.f32 %v5262
      %v5517 = vcvt.s32.f32 %v5263
      %v5518 = vcvt.s32.f32 %v5264
      %v5519 = vcvt.s32.f32 %v5265
      %v5520 = vcvt.s32.f32 %v5266
      %v5521 = vcvt.s32.f32 %v5267
      %v5522 = vcvt.s32.f32 %v5268
      %v5523 = vcvt.s32.f32 %v5269
      %v5524 = vcvt.s32.f32 %v5270
      %v5525 = vcvt.s32.f32 %v5271
      %v5526 = vcvt.s32.f32 %v5272
      %v5527 = vcvt.s32.f32 %v5273
      %v5528 = vcvt.s32.f32 %v5274
      %v5529 = vcvt.s32.f32 %v5275
      %v5530 = vcvt.s32.f32 %v5276
      %v5531 = vcvt.s32.f32 %v5277
      %v5532 = vcvt.s32.f32 %v5278
      %v5533 = vcvt.s32.f32 %v5279
      %v5534 = vcvt.s32.f32 %v5280
      %v5535 = vcvt.s32.f32 %v5281
      %v5536 = vcvt.s32.f32 %v5282
      %v5537 = vcvt.s32.f32 %v5283
      %v5538 = vcvt.s32.f32 %v5284
      %v5539 = vcvt.s32.f32 %v5285
      %v5540 = vcvt.s32.f32 %v5286
      %v5541 = vcvt.s32.f32 %v5287
      %v5542 = vcvt.s32.f32 %v5288
      %v5543 = vcvt.s32.f32 %v5289
      %v5544 = vcvt.s32.f32 %v5290
      %v5545 = vcvt.s32.f32 %v5291
      %v5546 = vcvt.s32.f32 %v5292
      %v5547 = vcvt.s32.f32 %v5293
      %v5548 = vcvt.s32.f32 %v5294
      %v5549 = vcvt.s32.f32 %v5295
      %v5550 = vcvt.s32.f32 %v5296
      %v5551 = vcvt.s32.f32 %v5297
      %v5552 = vcvt.s32.f32 %v5298
      %v5553 = vcvt.s32.f32 %v5299
      %v5554 = vcvt.s32.f32 %v5300
      %v5555 = vcvt.s32.f32 %v5301
      %v5556 = vcvt.s32.f32 %v5302
      %v5557 = vcvt.s32.f32 %v5303
      %v5558 = vcvt.s32.f32 %v5304
      %v5559 = vcvt.s32.f32 %v5305
      %v5560 = vcvt.s32.f32 %v5306
      %v5561 = vcvt.s32.f32 %v5307
      %v5562 = vcvt.s32.f32 %v5308
      %v5563 = vcvt.s32.f32 %v5309
      %v5564 = vcvt.s32.f32 %v5310
      %v5565 = vcvt.s32.f32 %v5311
      %v5566 = vcvt.s32.f32 %v5312
      %v5567 = vcvt.s32.f32 %v5313
      %v5568 = vcvt.s32.f32 %v5314
      %v5569 = vcvt.s32.f32 %v5315
      %v5570 = vcvt.s32.f32 %v5316
      %v5571 = vcvt.s32.f32 %v5317
      %v5572 = vcvt.s32.f32 %v5318
      %v5573 = vcvt.s32.f32 %v5319
      %v5574 = vcvt.s32.f32 %v5320
      %v5575 = vcvt.s32.f32 %v5321
      %v5576 = vcvt.s32.f32 %v5322
      %v5577 = vcvt.s32.f32 %v5323
      %v5578 = vcvt.s32.f32 %v5324
      %v5579 = vcvt.s32.f32 %v5325
      %v5580 = vcvt.s32.f32 %v5326
      %v5581 = vcvt.s32.f32 %v5327
      %v5582 = vcvt.s32.f32 %v5328
      %v5583 = vcvt.s32.f32 %v5329
      %v5584 = vcvt.s32.f32 %v5330
      %v5585 = vcvt.s32.f32 %v5331
      %v5586 = vcvt.s32.f32 %v5332
      %v5587 = vcvt.s32.f32 %v5333
      %v5588 = vcvt.s32.f32 %v5334
      %v5589 = vcvt.s32.f32 %v5335
      %v5590 = vcvt.s32.f32 %v5336
      %v5591 = vcvt.s32.f32 %v5337
      %v5592 = vcvt.s32.f32 %v5338
      %v5593 = vcvt.s32.f32 %v5339
      %v5594 = vcvt.s32.f32 %v5340
      %v5595 = vcvt.s32.f32 %v5341
      %v5596 = vcvt.s32.f32 %v5342
      %v5597 = vcvt.s32.f32 %v5343
      %v5598 = vcvt.s32.f32 %v5344
      %v5599 = vcvt.s32.f32 %v5345
      %v5600 = vcvt.s32.f32 %v5346
      %v5601 = vcvt.s32.f32 %v5347
      %v5602 = vcvt.s32.f32 %v5348
      %v5603 = vcvt.s32.f32 %v5349
      %v5604 = vcvt.s32.f32 %v5350
      %v5605 = vcvt.s32.f32 %v5351
      %v5606 = vcvt.s32.f32 %v5352
      %v5607 = vcvt.s32.f32 %v5353
      %v5608 = vcvt.s32.f32 %v5354
      %v5609 = vcvt.s32.f32 %v5355
      %v5610 = vcvt.s32.f32 %v5356
      %v5611 = vcvt.s32.f32 %v5357
      %v5612 = vcvt.s32.f32 %v5358
      %v5613 = vcvt.s32.f32 %v5359
      %v5614 = vcvt.s32.f32 %v5360
      %v5615 = vcvt.s32.f32 %v5361
      %v5616 = vcvt.s32.f32 %v5362
      %v5617 = vcvt.s32.f32 %v5363
      %v5618 = vcvt.s32.f32 %v5364
      %v5619 = vcvt.s32.f32 %v5365
      %v5620 = vcvt.s32.f32 %v5366
      %v5621 = vcvt.s32.f32 %v5367
      %v5622 = vcvt.s32.f32 %v5368
      %v5623 = vcvt.s32.f32 %v5369
      %v5624 = vcvt.s32.f32 %v5370
      %v5625 = vcvt.s32.f32 %v5371
      %v5626 = vcvt.s32.f32 %v5372
      %v5627 = vcvt.s32.f32 %v5373
      %v5628 = vcvt.s32.f32 %v5374
      %v5629 = vcvt.s32.f32 %v5375
      %v5630 = vcvt.s32.f32 %v5376
      %v5631 = vcvt.s32.f32 %v5377
      %v5632 = vcvt.s32.f32 %v5378
      %v5633 = vcvt.s32.f32 %v5379
      %v5634 = vcvt.s32.f32 %v5380
      %v5635 = vcvt.s32.f32 %v5381
      %v5636 = vcvt.s32.f32 %v5382
      %v5637 = vcvt.s32.f32 %v5383
      %v5638 = vcvt.s32.f32 %v5384
      %v5639 = vcvt.s32.f32 %v5385
      %v5640 = vcvt.s32.f32 %v5386
      %v5641 = vcvt.s32.f32 %v5387
      %v5642 = vcvt.s32.f32 %v5388
      %v5643 = vcvt.s32.f32 %v5389
      %v5644 = vcvt.s32.f32 %v5390
      %v5645 = vcvt.s32.f32 %v5391
      %v5646 = vcvt.s32.f32 %v5392
      %v5647 = vcvt.s32.f32 %v5393
      %v5648 = vcvt.s32.f32 %v5394
      %v5649 = vcvt.s32.f32 %v5395
      %v5650 = vcvt.s32.f32 %v5396
      %v5651 = vcvt.s32.f32 %v5397
      %v5652 = vcvt.s32.f32 %v5398
      %v5653 = vcvt.s32.f32 %v5399
      %v5654 = vcvt.s32.f32 %v5400
      %v5655 = vcvt.s32.f32 %v5401
      %v5656 = vcvt.s32.f32 %v5402
      %v5657 = vcvt.s32.f32 %v5403
      %v5658 = vcvt.s32.f32 %v5404
      %v5659 = vcvt.s32.f32 %v5405
      %v5660 = vcvt.s32.f32 %v5406
      %v5661 = vcvt.s32.f32 %v5407
      %v5662 = vcvt.s32.f32 %v5408
      %v5663 = vcvt.s32.f32 %v5409
      %v5664 = vcvt.s32.f32 %v5410
      %v5665 = vcvt.s32.f32 %v5411
      %v5666 = vcvt.s32.f32 %v5412
      %v5667 = vcvt.s32.f32 %v5413
      %v5668 = vcvt.s32.f32 %v5414
      %v5669 = vcvt.s32.f32 %v5415
      %v5670 = vcvt.s32.f32 %v5416
      %v5671 = vcvt.s32.f32 %v5417
      %v5672 = vcvt.s32.f32 %v5418
      %v5673 = vcvt.s32.f32 %v5419
      %v5674 = vcvt.s32.f32 %v5420
      %v5675 = vcvt.s32.f32 %v5421
      %v5676 = vcvt.s32.f32 %v5422
      %v5677 = vcvt.s32.f32 %v5423
      %v5678 = vcvt.s32.f32 %v5424
      %v5679 = vcvt.s32.f32 %v5425
      %v5680 = vcvt.s32.f32 %v5426
      %v5681 = vcvt.s32.f32 %v5427
      %v5682 = vcvt.s32.f32 %v5428
      %v5683 = vcvt.s32.f32 %v5429
      %v5684 = vcvt.s32.f32 %v5430
      %v5685 = vcvt.s32.f32 %v5431
      %v5686 = vcvt.s32.f32 %v5432
      %v5687 = vcvt.s32.f32 %v5433
      %v5688 = vcvt.s32.f32 %v5434
      %v5689 = vcvt.s32.f32 %v5435
      %v5690 = vcvt.s32.f32 %v5436
      %v5691 = vcvt.s32.f32 %v5437
      %v5692 = vcvt.s32.f32 %v5438
      %v5693 = vcvt.s32.f32 %v5439
      %v5694 = vcvt.s32.f32 %v5440
      %v5695 = vcvt.s32.f32 %v5441
      %v5696 = vcvt.s32.f32 %v5442
      %v5697 = vcvt.s32.f32 %v5443
      %v5698 = vcvt.s32.f32 %v5444
      %v5699 = vcvt.s32.f32 %v5445
      %v5700 = vcvt.s32.f32 %v5446
      %v5701 = vcvt.s32.f32 %v5447
      %v5702 = vcvt.s32.f32 %v5448
      %v5703 = vcvt.s32.f32 %v5449
      %v5704 = vcvt.s32.f32 %v5450
      %v5705 = vcvt.s32.f32 %v5451
      %v5706 = vcvt.s32.f32 %v5452
      %v5707 = vcvt.s32.f32 %v5453
      %v5708 = vcvt.s32.f32 %v5454
      %v5709 = vcvt.s32.f32 %v5455
      %v5710 = vcvt.s32.f32 %v5456
      %v5711 = vcvt.s32.f32 %v5457
      %v5712 = vcvt.s32.f32 %v5458
      %v5713 = vcvt.s32.f32 %v5459
      %v5714 = vcvt.s32.f32 %v5460
      %v5715 = vcvt.s32.f32 %v5461
      %v5716 = vcvt.s32.f32 %v5462
      %v5717 = vcvt.s32.f32 %v5463
      %v5718 = vcvt.s32.f32 %v5464
      %v5719 = vcvt.s32.f32 %v5465
      %v5720 = vcvt.s32.f32 %v5466
      %v5721 = vcvt.s32.f32 %v5467
      %v5722 = vcvt.s32.f32 %v5468
      %v5723 = vcvt.s32.f32 %v5469
      %v5724 = vcvt.s32.f32 %v5470
      %v5725 = vcvt.s32.f32 %v5471
      %v5726 = vcvt.s32.f32 %v5472
      %v5727 = vcvt.s32.f32 %v5473
      %v5728 = vcvt.s32.f32 %v5474
      %v5729 = vcvt.s32.f32 %v5475
      %v5730 = vcvt.s32.f32 %v5476
      %v5731 = vcvt.s32.f32 %v5477
      %v5732 = vcvt.s32.f32 %v5478
      %v5733 = vcvt.s32.f32 %v5479
      %v5734 = vcvt.s32.f32 %v5480
      %v5735 = vcvt.s32.f32 %v5481
      %v5736 = vcvt.s32.f32 %v5482
      %v5737 = vcvt.s32.f32 %v5483
      %v5738 = vcvt.s32.f32 %v5484
      %v5739 = vcvt.s32.f32 %v5485
      %v5740 = vcvt.s32.f32 %v5486
      %v5741 = vcvt.s32.f32 %v5487
      %v5742 = vcvt.s32.f32 %v5488
      %v5743 = vcvt.s32.f32 %v5489
      %v5744 = vcvt.s32.f32 %v5490
      %v5745 = vcvt.s32.f32 %v5491
      %v5746 = vcvt.s32.f32 %v5492
      %v5747 = vcvt.s32.f32 %v5493
      %v5748 = vcvt.s32.f32 %v5494
      %v5749 = vcvt.s32.f32 %v5495
      %v5750 = vcvt.s32.f32 %v5496
      %v5751 = vcvt.s32.f32 %v5497
      %v5752 = vcvt.s32.f32 %v5498
      %v5753 = vcvt.s32.f32 %v5499
      %vm5754 = vcmask 949248
      %v5756 = vsel %vm5754, %v4842, 0
      %v5759 = vsel %vm5754, %v4850, 0
      %v5762 = vsel %vm5754, %v4858, 0
      %vm5764 = vcmask 1043456
      %v5766 = vsel %vm5764, %v5752, 0
      %v5769 = vsel %vm5764, %v5753, 0
      %5771 = vmatprep.subr.mxu0 %v5501
      %5772 = vmatpush1.msra.mxu0 %v5500
      %5773 = vmatprep.subr.mxu0 %v5503
      %5774 = vmatpush1.msra.mxu0 %v5502
      %5775 = vmatprep.subr.mxu0 %v5505
      %5776 = vmatpush1.msra.mxu0 %v5504
      %5777 = vmatprep.subr.mxu0 %v5507
      %5778 = vmatpush1.msra.mxu0 %v5506
      %5779 = vmatprep.subr.mxu0 %v5509
      %5780 = vmatpush1.msra.mxu0 %v5508
      %5781 = vmatprep.subr.mxu0 %v5511
      %5782 = vmatpush1.msra.mxu0 %v5510
      %5783 = vmatprep.subr.mxu0 %v5513
      %5784 = vmatpush1.msra.mxu0 %v5512
      %5785 = vmatprep.subr.mxu0 %v5515
      %5786 = vmatpush1.msra.mxu0 %v5514
      %5787 = vmatprep.subr.mxu0 %v5517
      %5788 = vmatpush1.msra.mxu0 %v5516
      %5789 = vmatprep.subr.mxu0 %v5519
      %5790 = vmatpush1.msra.mxu0 %v5518
      %5791 = vmatprep.subr.mxu0 %v5521
      %5792 = vmatpush1.msra.mxu0 %v5520
      %5793 = vmatprep.subr.mxu0 %v5523
      %5794 = vmatpush1.msra.mxu0 %v5522
      %5795 = vmatprep.subr.mxu0 %v5525
      %5796 = vmatpush1.msra.mxu0 %v5524
      %5797 = vmatprep.subr.mxu0 %v5527
      %5798 = vmatpush1.msra.mxu0 %v5526
      %5799 = vmatprep.subr.mxu0 %v5529
      %5800 = vmatpush1.msra.mxu0 %v5528
      %5801 = vmatprep.subr.mxu0 %v5531
      %5802 = vmatpush1.msra.mxu0 %v5530
      %5803 = vmatprep.subr.mxu0 %v5533
      %5804 = vmatpush1.msra.mxu0 %v5532
      %5805 = vmatprep.subr.mxu0 %v5535
      %5806 = vmatpush1.msra.mxu0 %v5534
      %5807 = vmatprep.subr.mxu0 %v5537
      %5808 = vmatpush1.msra.mxu0 %v5536
      %5809 = vmatprep.subr.mxu0 %v5539
      %5810 = vmatpush1.msra.mxu0 %v5538
      %5811 = vmatprep.subr.mxu0 %v5541
      %5812 = vmatpush1.msra.mxu0 %v5540
      %5813 = vmatprep.subr.mxu0 %v5543
      %5814 = vmatpush1.msra.mxu0 %v5542
      %5815 = vmatprep.subr.mxu0 %v5545
      %5816 = vmatpush1.msra.mxu0 %v5544
      %5817 = vmatprep.subr.mxu0 %v5547
      %5818 = vmatpush1.msra.mxu0 %v5546
      %5819 = vmatprep.subr.mxu0 %v5549
      %5820 = vmatpush1.msra.mxu0 %v5548
      %5821 = vmatprep.subr.mxu0 %v5551
      %5822 = vmatpush1.msra.mxu0 %v5550
      %5823 = vmatprep.subr.mxu0 %v5553
      %5824 = vmatpush1.msra.mxu0 %v5552
      %5825 = vmatprep.subr.mxu0 %v5555
      %5826 = vmatpush1.msra.mxu0 %v5554
      %5827 = vmatprep.subr.mxu0 %v5557
      %5828 = vmatpush1.msra.mxu0 %v5556
      %5829 = vmatprep.subr.mxu0 %v5559
      %5830 = vmatpush1.msra.mxu0 %v5558
      %5831 = vmatprep.subr.mxu0 %v5561
      %5832 = vmatpush1.msra.mxu0 %v5560
      %5833 = vmatprep.subr.mxu0 %v5563
      %5834 = vmatpush1.msra.mxu0 %v5562
      %5835 = vmatprep.mubr.f32.mxu0 %v4836
      %5836 = vmatmul.mubr.f32.gmra.mrb[0].mxu0 %v4835
      %v5837 = vpop.f32.mrb[0].mxu0
      %v5838 = vadd.f32 0.0, %v5837
      %v5839 = vpop.f32.mrb[0].mxu0
      %v5840 = vadd.f32 0.0, %v5839
      %5841 = vmatprep.mubr.f32.mxu0 %v4844
      %5842 = vmatmul.mubr.f32.gmra.mrb[0].mxu0 %v4843
      %v5843 = vpop.f32.mrb[0].mxu0
      %v5844 = vadd.f32 0.0, %v5843
      %v5845 = vpop.f32.mrb[0].mxu0
      %v5846 = vadd.f32 0.0, %v5845
      %5847 = vmatprep.mubr.f32.mxu0 %v4852
      %5848 = vmatmul.mubr.f32.gmra.mrb[0].mxu0 %v4851
      %v5849 = vpop.f32.mrb[0].mxu0
      %v5850 = vadd.f32 0.0, %v5849
      %v5851 = vpop.f32.mrb[0].mxu0
      %v5852 = vadd.f32 0.0, %v5851
      %5853 = vdwg.mxu0
      %5854 = vmatprep.subr.mxu0 %v5565
      %5855 = vmatpush1.msra.mxu0 %v5564
      %5856 = vmatprep.subr.mxu0 %v5567
      %5857 = vmatpush1.msra.mxu0 %v5566
      %5858 = vmatprep.subr.mxu0 %v5569
      %5859 = vmatpush1.msra.mxu0 %v5568
      %5860 = vmatprep.subr.mxu0 %v5571
      %5861 = vmatpush1.msra.mxu0 %v5570
      %5862 = vmatprep.subr.mxu0 %v5573
      %5863 = vmatpush1.msra.mxu0 %v5572
      %5864 = vmatprep.subr.mxu0 %v5575
      %5865 = vmatpush1.msra.mxu0 %v5574
      %5866 = vmatprep.subr.mxu0 %v5577
      %5867 = vmatpush1.msra.mxu0 %v5576
      %5868 = vmatprep.subr.mxu0 %v5579
      %5869 = vmatpush1.msra.mxu0 %v5578
      %5870 = vmatprep.subr.mxu0 %v5581
      %5871 = vmatpush1.msra.mxu0 %v5580
      %5872 = vmatprep.subr.mxu0 %v5583
      %5873 = vmatpush1.msra.mxu0 %v5582
      %5874 = vmatprep.subr.mxu0 %v5585
      %5875 = vmatpush1.msra.mxu0 %v5584
      %5876 = vmatprep.subr.mxu0 %v5587
      %5877 = vmatpush1.msra.mxu0 %v5586
      %5878 = vmatprep.subr.mxu0 %v5589
      %5879 = vmatpush1.msra.mxu0 %v5588
      %5880 = vmatprep.subr.mxu0 %v5591
      %5881 = vmatpush1.msra.mxu0 %v5590
      %5882 = vmatprep.subr.mxu0 %v5593
      %5883 = vmatpush1.msra.mxu0 %v5592
      %5884 = vmatprep.subr.mxu0 %v5595
      %5885 = vmatpush1.msra.mxu0 %v5594
      %5886 = vmatprep.subr.mxu0 %v5597
      %5887 = vmatpush1.msra.mxu0 %v5596
      %5888 = vmatprep.subr.mxu0 %v5599
      %5889 = vmatpush1.msra.mxu0 %v5598
      %5890 = vmatprep.subr.mxu0 %v5601
      %5891 = vmatpush1.msra.mxu0 %v5600
      %5892 = vmatprep.subr.mxu0 %v5603
      %5893 = vmatpush1.msra.mxu0 %v5602
      %5894 = vmatprep.subr.mxu0 %v5605
      %5895 = vmatpush1.msra.mxu0 %v5604
      %5896 = vmatprep.subr.mxu0 %v5607
      %5897 = vmatpush1.msra.mxu0 %v5606
      %5898 = vmatprep.subr.mxu0 %v5609
      %5899 = vmatpush1.msra.mxu0 %v5608
      %5900 = vmatprep.subr.mxu0 %v5611
      %5901 = vmatpush1.msra.mxu0 %v5610
      %5902 = vmatprep.subr.mxu0 %v5613
      %5903 = vmatpush1.msra.mxu0 %v5612
      %5904 = vmatprep.subr.mxu0 %v5615
      %5905 = vmatpush1.msra.mxu0 %v5614
      %5906 = vmatprep.subr.mxu0 %v5617
      %5907 = vmatpush1.msra.mxu0 %v5616
      %5908 = vmatprep.subr.mxu0 %v5619
      %5909 = vmatpush1.msra.mxu0 %v5618
      %5910 = vmatprep.subr.mxu0 %v5621
      %5911 = vmatpush1.msra.mxu0 %v5620
      %5912 = vmatprep.subr.mxu0 %v5623
      %5913 = vmatpush1.msra.mxu0 %v5622
      %5914 = vmatprep.subr.mxu0 %v5625
      %5915 = vmatpush1.msra.mxu0 %v5624
      %5916 = vmatprep.subr.mxu0 %v5627
      %5917 = vmatpush1.msra.mxu0 %v5626
      %5918 = vmatprep.mubr.f32.mxu0 %v4838
      %5919 = vmatmul.mubr.f32.gmra.mrb[0].mxu0 %v4837
      %v5920 = vpop.f32.mrb[0].mxu0
      %v5921 = vadd.f32 %v5838, %v5920
      %v5922 = vpop.f32.mrb[0].mxu0
      %v5923 = vadd.f32 %v5840, %v5922
      %5924 = vmatprep.mubr.f32.mxu0 %v4846
      %5925 = vmatmul.mubr.f32.gmra.mrb[0].mxu0 %v4845
      %v5926 = vpop.f32.mrb[0].mxu0
      %v5927 = vadd.f32 %v5844, %v5926
      %v5928 = vpop.f32.mrb[0].mxu0
      %v5929 = vadd.f32 %v5846, %v5928
      %5930 = vmatprep.mubr.f32.mxu0 %v4854
      %5931 = vmatmul.mubr.f32.gmra.mrb[0].mxu0 %v4853
      %v5932 = vpop.f32.mrb[0].mxu0
      %v5933 = vadd.f32 %v5850, %v5932
      %v5934 = vpop.f32.mrb[0].mxu0
      %v5935 = vadd.f32 %v5852, %v5934
      %5936 = vdwg.mxu0
      %5937 = vmatprep.subr.mxu0 %v5629
      %5938 = vmatpush1.msra.mxu0 %v5628
      %5939 = vmatprep.subr.mxu0 %v5631
      %5940 = vmatpush1.msra.mxu0 %v5630
      %5941 = vmatprep.subr.mxu0 %v5633
      %5942 = vmatpush1.msra.mxu0 %v5632
      %5943 = vmatprep.subr.mxu0 %v5635
      %5944 = vmatpush1.msra.mxu0 %v5634
      %5945 = vmatprep.subr.mxu0 %v5637
      %5946 = vmatpush1.msra.mxu0 %v5636
      %5947 = vmatprep.subr.mxu0 %v5639
      %5948 = vmatpush1.msra.mxu0 %v5638
      %5949 = vmatprep.subr.mxu0 %v5641
      %5950 = vmatpush1.msra.mxu0 %v5640
      %5951 = vmatprep.subr.mxu0 %v5643
      %5952 = vmatpush1.msra.mxu0 %v5642
      %5953 = vmatprep.subr.mxu0 %v5645
      %5954 = vmatpush1.msra.mxu0 %v5644
      %5955 = vmatprep.subr.mxu0 %v5647
      %5956 = vmatpush1.msra.mxu0 %v5646
      %5957 = vmatprep.subr.mxu0 %v5649
      %5958 = vmatpush1.msra.mxu0 %v5648
      %5959 = vmatprep.subr.mxu0 %v5651
      %5960 = vmatpush1.msra.mxu0 %v5650
      %5961 = vmatprep.subr.mxu0 %v5653
      %5962 = vmatpush1.msra.mxu0 %v5652
      %5963 = vmatprep.subr.mxu0 %v5655
      %5964 = vmatpush1.msra.mxu0 %v5654
      %5965 = vmatprep.subr.mxu0 %v5657
      %5966 = vmatpush1.msra.mxu0 %v5656
      %5967 = vmatprep.subr.mxu0 %v5659
      %5968 = vmatpush1.msra.mxu0 %v5658
      %5969 = vmatprep.subr.mxu0 %v5661
      %5970 = vmatpush1.msra.mxu0 %v5660
      %5971 = vmatprep.subr.mxu0 %v5663
      %5972 = vmatpush1.msra.mxu0 %v5662
      %5973 = vmatprep.subr.mxu0 %v5665
      %5974 = vmatpush1.msra.mxu0 %v5664
      %5975 = vmatprep.subr.mxu0 %v5667
      %5976 = vmatpush1.msra.mxu0 %v5666
      %5977 = vmatprep.subr.mxu0 %v5669
      %5978 = vmatpush1.msra.mxu0 %v5668
      %5979 = vmatprep.subr.mxu0 %v5671
      %5980 = vmatpush1.msra.mxu0 %v5670
      %5981 = vmatprep.subr.mxu0 %v5673
      %5982 = vmatpush1.msra.mxu0 %v5672
      %5983 = vmatprep.subr.mxu0 %v5675
      %5984 = vmatpush1.msra.mxu0 %v5674
      %5985 = vmatprep.subr.mxu0 %v5677
      %5986 = vmatpush1.msra.mxu0 %v5676
      %5987 = vmatprep.subr.mxu0 %v5679
      %5988 = vmatpush1.msra.mxu0 %v5678
      %5989 = vmatprep.subr.mxu0 %v5681
      %5990 = vmatpush1.msra.mxu0 %v5680
      %5991 = vmatprep.subr.mxu0 %v5683
      %5992 = vmatpush1.msra.mxu0 %v5682
      %5993 = vmatprep.subr.mxu0 %v5685
      %5994 = vmatpush1.msra.mxu0 %v5684
      %5995 = vmatprep.subr.mxu0 %v5687
      %5996 = vmatpush1.msra.mxu0 %v5686
      %5997 = vmatprep.subr.mxu0 %v5689
      %5998 = vmatpush1.msra.mxu0 %v5688
      %5999 = vmatprep.subr.mxu0 %v5691
      %6000 = vmatpush1.msra.mxu0 %v5690
      %6001 = vmatprep.mubr.f32.mxu0 %v4840
      %6002 = vmatmul.mubr.f32.gmra.mrb[0].mxu0 %v4839
      %v6003 = vpop.f32.mrb[0].mxu0
      %v6004 = vadd.f32 %v5921, %v6003
      %v6005 = vpop.f32.mrb[0].mxu0
      %v6006 = vadd.f32 %v5923, %v6005
      %6007 = vmatprep.mubr.f32.mxu0 %v4848
      %6008 = vmatmul.mubr.f32.gmra.mrb[0].mxu0 %v4847
      %v6009 = vpop.f32.mrb[0].mxu0
      %v6010 = vadd.f32 %v5927, %v6009
      %v6011 = vpop.f32.mrb[0].mxu0
      %v6012 = vadd.f32 %v5929, %v6011
      %6013 = vmatprep.mubr.f32.mxu0 %v4856
      %6014 = vmatmul.mubr.f32.gmra.mrb[0].mxu0 %v4855
      %v6015 = vpop.f32.mrb[0].mxu0
      %v6016 = vadd.f32 %v5933, %v6015
      %v6017 = vpop.f32.mrb[0].mxu0
      %v6018 = vadd.f32 %v5935, %v6017
      %6019 = vdwg.mxu0
      %6020 = vmatprep.subr.mxu0 %v5693
      %6021 = vmatpush1.msra.mxu0 %v5692
      %6022 = vmatprep.subr.mxu0 %v5695
      %6023 = vmatpush1.msra.mxu0 %v5694
      %6024 = vmatprep.subr.mxu0 %v5697
      %6025 = vmatpush1.msra.mxu0 %v5696
      %6026 = vmatprep.subr.mxu0 %v5699
      %6027 = vmatpush1.msra.mxu0 %v5698
      %6028 = vmatprep.subr.mxu0 %v5701
      %6029 = vmatpush1.msra.mxu0 %v5700
      %6030 = vmatprep.subr.mxu0 %v5703
      %6031 = vmatpush1.msra.mxu0 %v5702
      %6032 = vmatprep.subr.mxu0 %v5705
      %6033 = vmatpush1.msra.mxu0 %v5704
      %6034 = vmatprep.subr.mxu0 %v5707
      %6035 = vmatpush1.msra.mxu0 %v5706
      %6036 = vmatprep.subr.mxu0 %v5709
      %6037 = vmatpush1.msra.mxu0 %v5708
      %6038 = vmatprep.subr.mxu0 %v5711
      %6039 = vmatpush1.msra.mxu0 %v5710
      %6040 = vmatprep.subr.mxu0 %v5713
      %6041 = vmatpush1.msra.mxu0 %v5712
      %6042 = vmatprep.subr.mxu0 %v5715
      %6043 = vmatpush1.msra.mxu0 %v5714
      %6044 = vmatprep.subr.mxu0 %v5717
      %6045 = vmatpush1.msra.mxu0 %v5716
      %6046 = vmatprep.subr.mxu0 %v5719
      %6047 = vmatpush1.msra.mxu0 %v5718
      %6048 = vmatprep.subr.mxu0 %v5721
      %6049 = vmatpush1.msra.mxu0 %v5720
      %6050 = vmatprep.subr.mxu0 %v5723
      %6051 = vmatpush1.msra.mxu0 %v5722
      %6052 = vmatprep.subr.mxu0 %v5725
      %6053 = vmatpush1.msra.mxu0 %v5724
      %6054 = vmatprep.subr.mxu0 %v5727
      %6055 = vmatpush1.msra.mxu0 %v5726
      %6056 = vmatprep.subr.mxu0 %v5729
      %6057 = vmatpush1.msra.mxu0 %v5728
      %6058 = vmatprep.subr.mxu0 %v5731
      %6059 = vmatpush1.msra.mxu0 %v5730
      %6060 = vmatprep.subr.mxu0 %v5733
      %6061 = vmatpush1.msra.mxu0 %v5732
      %6062 = vmatprep.subr.mxu0 %v5735
      %6063 = vmatpush1.msra.mxu0 %v5734
      %6064 = vmatprep.subr.mxu0 %v5737
      %6065 = vmatpush1.msra.mxu0 %v5736
      %6066 = vmatprep.subr.mxu0 %v5739
      %6067 = vmatpush1.msra.mxu0 %v5738
      %6068 = vmatprep.subr.mxu0 %v5741
      %6069 = vmatpush1.msra.mxu0 %v5740
      %6070 = vmatprep.subr.mxu0 %v5743
      %6071 = vmatpush1.msra.mxu0 %v5742
      %6072 = vmatprep.subr.mxu0 %v5745
      %6073 = vmatpush1.msra.mxu0 %v5744
      %6074 = vmatprep.subr.mxu0 %v5747
      %6075 = vmatpush1.msra.mxu0 %v5746
      %6076 = vmatprep.subr.mxu0 %v5749
      %6077 = vmatpush1.msra.mxu0 %v5748
      %6078 = vmatprep.subr.mxu0 %v5751
      %6079 = vmatpush1.msra.mxu0 %v5750
      %6080 = vmatprep.subr.mxu0 %v5769
      %6081 = vmatpush1.msra.mxu0 %v5766
      %6082 = vmatprep.subr.mxu0 0.0
      %6083 = vmatpush1.msra.mxu0 0.0
      %6084 = vmatprep.mubr.f32.mxu0 %v5756
      %6085 = vmatmul.mubr.f32.gmra.mrb[0].mxu0 %v4841
      %v6086 = vpop.f32.mrb[0].mxu0
      %v6087 = vadd.f32 %v6004, %v6086
      %v6088 = vpop.f32.mrb[0].mxu0
      %v6089 = vadd.f32 %v6006, %v6088
      %6090 = vmatprep.mubr.f32.mxu0 %v5759
      %6091 = vmatmul.mubr.f32.gmra.mrb[0].mxu0 %v4849
      %v6092 = vpop.f32.mrb[0].mxu0
      %v6093 = vadd.f32 %v6010, %v6092
      %v6094 = vpop.f32.mrb[0].mxu0
      %v6095 = vadd.f32 %v6012, %v6094
      %6096 = vmatprep.mubr.f32.mxu0 %v5762
      %6097 = vmatmul.mubr.f32.gmra.mrb[0].mxu0 %v4857
      %v6098 = vpop.f32.mrb[0].mxu0
      %v6099 = vadd.f32 %v6016, %v6098
      %v6100 = vpop.f32.mrb[0].mxu0
      %v6101 = vadd.f32 %v6018, %v6100
      %6102 = vdwg.mxu0
      %v6103 = vld [vmem:[%s3] sm:$0xff]
      %v6104 = vld [vmem:[%s3 + $0x8] sm:$0xff]
      %v6105 = vld [vmem:[%s3 + $0x10] sm:$0xff]
      %v6106 = vld [vmem:[%s3 + $0x18] sm:$0xff]
      %v6107 = vld [vmem:[%s3 + $0x20] sm:$0xff]
      %s6108 = scalar_lea.vmem %s3, 40
      %v6109 = vld [vmem:[%s6108] sm:$0xff]
      %v6110 = vld [vmem:[%s6108 + $0x8] sm:$0xff]
      %v6111 = vld [vmem:[%s6108 + $0x10] sm:$0xff]
      %v6112 = vld [vmem:[%s6108 + $0x18] sm:$0xff]
      %v6113 = vld [vmem:[%s6108 + $0x20] sm:$0xff]
      %6120 = vrot.lane.b32.xlu0 %v6087, 127
      %v6121 = vpop.permute.xlu0 %6120
      %6122 = vrot.lane.b32.xlu0 %v6089, 127
      %v6123 = vpop.permute.xlu0 %6122
      %6124 = vrot.lane.b32.xlu0 %v6093, 127
      %v6125 = vpop.permute.xlu0 %6124
      %6126 = vrot.lane.b32.xlu0 %v6095, 127
      %v6127 = vpop.permute.xlu0 %6126
      %6128 = vrot.lane.b32.xlu0 %v6099, 127
      %v6129 = vpop.permute.xlu0 %6128
      %6130 = vrot.lane.b32.xlu0 %v6101, 127
      %v6131 = vpop.permute.xlu0 %6130
      %v6132 = vsel %vm422, %v6121, %v6123
      %v6133 = vsel %vm422, %v6125, %v6127
      %v6134 = vsel %vm422, %v6129, %v6131
      %vm6139 = vcmask 162816
      %v6141 = vsel %vm6139, %v6109, 0
      %v6144 = vsel %vm6139, %v6110, 0
      %v6147 = vsel %vm6139, %v6111, 0
      %v6150 = vsel %vm6139, %v6112, 0
      %v6153 = vsel %vm6139, %v6113, 0
      %v6155 = vsel %vm5764, %v6134, 0
      %v6157 = vsel %vm5764, %v6131, 0
      %6159 = vmatprep.subr.mxu0 %v6123
      %6160 = vmatpush1.msra.mxu0 %v6132
      %6161 = vmatprep.subr.mxu0 %v6127
      %6162 = vmatpush1.msra.mxu0 %v6133
      %6163 = vmatprep.subr.mxu0 %v6157
      %6164 = vmatpush1.msra.mxu0 %v6155
      %6165 = vmatprep.subr.mxu0 0.0
      %6166 = vmatpush1.msra.mxu0 0.0
      %6167 = vmatprep.subr.mxu0 0.0
      %6168 = vmatpush1.msra.mxu0 0.0
      %6169 = vmatprep.subr.mxu0 0.0
      %6170 = vmatpush1.msra.mxu0 0.0
      %6171 = vmatprep.subr.mxu0 0.0
      %6172 = vmatpush1.msra.mxu0 0.0
      %6173 = vmatprep.subr.mxu0 0.0
      %6174 = vmatpush1.msra.mxu0 0.0
      %6175 = vmatprep.subr.mxu0 0.0
      %6176 = vmatpush1.msra.mxu0 0.0
      %6177 = vmatprep.subr.mxu0 0.0
      %6178 = vmatpush1.msra.mxu0 0.0
      %6179 = vmatprep.subr.mxu0 0.0
      %6180 = vmatpush1.msra.mxu0 0.0
      %6181 = vmatprep.subr.mxu0 0.0
      %6182 = vmatpush1.msra.mxu0 0.0
      %6183 = vmatprep.subr.mxu0 0.0
      %6184 = vmatpush1.msra.mxu0 0.0
      %6185 = vmatprep.subr.mxu0 0.0
      %6186 = vmatpush1.msra.mxu0 0.0
      %6187 = vmatprep.subr.mxu0 0.0
      %6188 = vmatpush1.msra.mxu0 0.0
      %6189 = vmatprep.subr.mxu0 0.0
      %6190 = vmatpush1.msra.mxu0 0.0
      %6191 = vmatprep.subr.mxu0 0.0
      %6192 = vmatpush1.msra.mxu0 0.0
      %6193 = vmatprep.subr.mxu0 0.0
      %6194 = vmatpush1.msra.mxu0 0.0
      %6195 = vmatprep.subr.mxu0 0.0
      %6196 = vmatpush1.msra.mxu0 0.0
      %6197 = vmatprep.subr.mxu0 0.0
      %6198 = vmatpush1.msra.mxu0 0.0
      %6199 = vmatprep.subr.mxu0 0.0
      %6200 = vmatpush1.msra.mxu0 0.0
      %6201 = vmatprep.subr.mxu0 0.0
      %6202 = vmatpush1.msra.mxu0 0.0
      %6203 = vmatprep.subr.mxu0 0.0
      %6204 = vmatpush1.msra.mxu0 0.0
      %6205 = vmatprep.subr.mxu0 0.0
      %6206 = vmatpush1.msra.mxu0 0.0
      %6207 = vmatprep.subr.mxu0 0.0
      %6208 = vmatpush1.msra.mxu0 0.0
      %6209 = vmatprep.subr.mxu0 0.0
      %6210 = vmatpush1.msra.mxu0 0.0
      %6211 = vmatprep.subr.mxu0 0.0
      %6212 = vmatpush1.msra.mxu0 0.0
      %6213 = vmatprep.subr.mxu0 0.0
      %6214 = vmatpush1.msra.mxu0 0.0
      %6215 = vmatprep.subr.mxu0 0.0
      %6216 = vmatpush1.msra.mxu0 0.0
      %6217 = vmatprep.subr.mxu0 0.0
      %6218 = vmatpush1.msra.mxu0 0.0
      %6219 = vmatprep.subr.mxu0 0.0
      %6220 = vmatpush1.msra.mxu0 0.0
      %6221 = vmatprep.subr.mxu0 0.0
      %6222 = vmatpush1.msra.mxu0 0.0
      %6223 = vmatprep.mubr.f32.mxu0 0.0
      %6224 = vmatmul.mubr.f32.gmra.mrb[0].mxu0 %v6141
      %v6225 = vpop.f32.mrb[0].mxu0
      %v6226 = vadd.f32 0.0, %v6225
      %v6227 = vpop.f32.mrb[0].mxu0
      %v6228 = vadd.f32 0.0, %v6227
      %6229 = vmatprep.mubr.f32.mxu0 0.0
      %6230 = vmatmul.mubr.f32.gmra.mrb[0].mxu0 %v6144
      %v6231 = vpop.f32.mrb[0].mxu0
      %v6232 = vadd.f32 0.0, %v6231
      %v6233 = vpop.f32.mrb[0].mxu0
      %v6234 = vadd.f32 0.0, %v6233
      %6235 = vmatprep.mubr.f32.mxu0 0.0
      %6236 = vmatmul.mubr.f32.gmra.mrb[0].mxu0 %v6147
      %v6237 = vpop.f32.mrb[0].mxu0
      %v6238 = vadd.f32 0.0, %v6237
      %v6239 = vpop.f32.mrb[0].mxu0
      %v6240 = vadd.f32 0.0, %v6239
      %6241 = vmatprep.mubr.f32.mxu0 0.0
      %6242 = vmatmul.mubr.f32.gmra.mrb[0].mxu0 %v6150
      %v6243 = vpop.f32.mrb[0].mxu0
      %v6244 = vadd.f32 0.0, %v6243
      %v6245 = vpop.f32.mrb[0].mxu0
      %v6246 = vadd.f32 0.0, %v6245
      %6247 = vmatprep.mubr.f32.mxu0 0.0
      %6248 = vmatmul.mubr.f32.gmra.mrb[0].mxu0 %v6153
      %v6249 = vpop.f32.mrb[0].mxu0
      %v6250 = vadd.f32 0.0, %v6249
      %v6251 = vpop.f32.mrb[0].mxu0
      %v6252 = vadd.f32 0.0, %v6251
      %6253 = vdwg.mxu0
      %v6255 = vsel %vm6139, %v6103, 0
      %v6258 = vsel %vm6139, %v6104, 0
      %v6261 = vsel %vm6139, %v6105, 0
      %v6264 = vsel %vm6139, %v6106, 0
      %v6267 = vsel %vm6139, %v6107, 0
      %v6269 = vsel %vm5764, %v6099, 0
      %v6271 = vsel %vm5764, %v6101, 0
      %6273 = vmatprep.subr.mxu0 %v6089
      %6274 = vmatpush1.msra.mxu0 %v6087
      %6275 = vmatprep.subr.mxu0 %v6095
      %6276 = vmatpush1.msra.mxu0 %v6093
      %6277 = vmatprep.subr.mxu0 %v6271
      %6278 = vmatpush1.msra.mxu0 %v6269
      %6279 = vmatprep.subr.mxu0 0.0
      %6280 = vmatpush1.msra.mxu0 0.0
      %6281 = vmatprep.subr.mxu0 0.0
      %6282 = vmatpush1.msra.mxu0 0.0
      %6283 = vmatprep.subr.mxu0 0.0
      %6284 = vmatpush1.msra.mxu0 0.0
      %6285 = vmatprep.subr.mxu0 0.0
      %6286 = vmatpush1.msra.mxu0 0.0
      %6287 = vmatprep.subr.mxu0 0.0
      %6288 = vmatpush1.msra.mxu0 0.0
      %6289 = vmatprep.subr.mxu0 0.0
      %6290 = vmatpush1.msra.mxu0 0.0
      %6291 = vmatprep.subr.mxu0 0.0
      %6292 = vmatpush1.msra.mxu0 0.0
      %6293 = vmatprep.subr.mxu0 0.0
      %6294 = vmatpush1.msra.mxu0 0.0
      %6295 = vmatprep.subr.mxu0 0.0
      %6296 = vmatpush1.msra.mxu0 0.0
      %6297 = vmatprep.subr.mxu0 0.0
      %6298 = vmatpush1.msra.mxu0 0.0
      %6299 = vmatprep.subr.mxu0 0.0
      %6300 = vmatpush1.msra.mxu0 0.0
      %6301 = vmatprep.subr.mxu0 0.0
      %6302 = vmatpush1.msra.mxu0 0.0
      %6303 = vmatprep.subr.mxu0 0.0
      %6304 = vmatpush1.msra.mxu0 0.0
      %6305 = vmatprep.subr.mxu0 0.0
      %6306 = vmatpush1.msra.mxu0 0.0
      %6307 = vmatprep.subr.mxu0 0.0
      %6308 = vmatpush1.msra.mxu0 0.0
      %6309 = vmatprep.subr.mxu0 0.0
      %6310 = vmatpush1.msra.mxu0 0.0
      %6311 = vmatprep.subr.mxu0 0.0
      %6312 = vmatpush1.msra.mxu0 0.0
      %6313 = vmatprep.subr.mxu0 0.0
      %6314 = vmatpush1.msra.mxu0 0.0
      %6315 = vmatprep.subr.mxu0 0.0
      %6316 = vmatpush1.msra.mxu0 0.0
      %6317 = vmatprep.subr.mxu0 0.0
      %6318 = vmatpush1.msra.mxu0 0.0
      %6319 = vmatprep.subr.mxu0 0.0
      %6320 = vmatpush1.msra.mxu0 0.0
      %6321 = vmatprep.subr.mxu0 0.0
      %6322 = vmatpush1.msra.mxu0 0.0
      %6323 = vmatprep.subr.mxu0 0.0
      %6324 = vmatpush1.msra.mxu0 0.0
      %6325 = vmatprep.subr.mxu0 0.0
      %6326 = vmatpush1.msra.mxu0 0.0
      %6327 = vmatprep.subr.mxu0 0.0
      %6328 = vmatpush1.msra.mxu0 0.0
      %6329 = vmatprep.subr.mxu0 0.0
      %6330 = vmatpush1.msra.mxu0 0.0
      %6331 = vmatprep.subr.mxu0 0.0
      %6332 = vmatpush1.msra.mxu0 0.0
      %6333 = vmatprep.subr.mxu0 0.0
      %6334 = vmatpush1.msra.mxu0 0.0
      %6335 = vmatprep.subr.mxu0 0.0
      %6336 = vmatpush1.msra.mxu0 0.0
      %6337 = vmatprep.mubr.f32.mxu0 0.0
      %6338 = vmatmul.mubr.f32.gmra.mrb[0].mxu0 %v6255
      %v6339 = vpop.f32.mrb[0].mxu0
      %v6340 = vadd.f32 %v6226, %v6339
      %v6341 = vpop.f32.mrb[0].mxu0
      %v6342 = vadd.f32 %v6228, %v6341
      %6343 = vmatprep.mubr.f32.mxu0 0.0
      %6344 = vmatmul.mubr.f32.gmra.mrb[0].mxu0 %v6258
      %v6345 = vpop.f32.mrb[0].mxu0
      %v6346 = vadd.f32 %v6232, %v6345
      %v6347 = vpop.f32.mrb[0].mxu0
      %v6348 = vadd.f32 %v6234, %v6347
      %6349 = vmatprep.mubr.f32.mxu0 0.0
      %6350 = vmatmul.mubr.f32.gmra.mrb[0].mxu0 %v6261
      %v6351 = vpop.f32.mrb[0].mxu0
      %v6352 = vadd.f32 %v6238, %v6351
      %v6353 = vpop.f32.mrb[0].mxu0
      %v6354 = vadd.f32 %v6240, %v6353
      %6355 = vmatprep.mubr.f32.mxu0 0.0
      %6356 = vmatmul.mubr.f32.gmra.mrb[0].mxu0 %v6264
      %v6357 = vpop.f32.mrb[0].mxu0
      %v6358 = vadd.f32 %v6244, %v6357
      %v6359 = vpop.f32.mrb[0].mxu0
      %v6360 = vadd.f32 %v6246, %v6359
      %6361 = vmatprep.mubr.f32.mxu0 0.0
      %6362 = vmatmul.mubr.f32.gmra.mrb[0].mxu0 %v6267
      %v6363 = vpop.f32.mrb[0].mxu0
      %v6364 = vadd.f32 %v6250, %v6363
      %v6365 = vpop.f32.mrb[0].mxu0
      %v6366 = vadd.f32 %v6252, %v6365
      %6367 = vdwg.mxu0
      %s6368 = scalar_lea.vmem %s3, 80
      %v6369 = vld [vmem:[%s6368] sm:$0xff]
      %v6370 = vld [vmem:[%s6368 + $0x8] sm:$0xff]
      %v6371 = vld [vmem:[%s6368 + $0x10] sm:$0xff]
      %v6372 = vld [vmem:[%s6368 + $0x18] sm:$0xff]
      %v6373 = vld [vmem:[%s6368 + $0x20] sm:$0xff]
      %6374 = vrot.lane.b32.xlu0 %v6087, 126
      %v6375 = vpop.permute.xlu0 %6374
      %6376 = vrot.lane.b32.xlu0 %v6089, 126
      %v6377 = vpop.permute.xlu0 %6376
      %6378 = vrot.lane.b32.xlu0 %v6093, 126
      %v6379 = vpop.permute.xlu0 %6378
      %6380 = vrot.lane.b32.xlu0 %v6095, 126
      %v6381 = vpop.permute.xlu0 %6380
      %6382 = vrot.lane.b32.xlu0 %v6099, 126
      %v6383 = vpop.permute.xlu0 %6382
      %6384 = vrot.lane.b32.xlu0 %v6101, 126
      %v6385 = vpop.permute.xlu0 %6384
      %v6386 = vsel %vm1166, %v6375, %v6377
      %v6387 = vsel %vm1166, %v6379, %v6381
      %v6388 = vsel %vm1166, %v6383, %v6385
      %v6394 = vsel %vm6139, %v6369, 0
      %v6397 = vsel %vm6139, %v6370, 0
      %v6400 = vsel %vm6139, %v6371, 0
      %v6403 = vsel %vm6139, %v6372, 0
      %v6406 = vsel %vm6139, %v6373, 0
      %v6408 = vsel %vm5764, %v6388, 0
      %v6410 = vsel %vm5764, %v6385, 0
      %6412 = vmatprep.subr.mxu0 %v6377
      %6413 = vmatpush1.msra.mxu0 %v6386
      %6414 = vmatprep.subr.mxu0 %v6381
      %6415 = vmatpush1.msra.mxu0 %v6387
      %6416 = vmatprep.subr.mxu0 %v6410
      %6417 = vmatpush1.msra.mxu0 %v6408
      %6418 = vmatprep.subr.mxu0 0.0
      %6419 = vmatpush1.msra.mxu0 0.0
      %6420 = vmatprep.subr.mxu0 0.0
      %6421 = vmatpush1.msra.mxu0 0.0
      %6422 = vmatprep.subr.mxu0 0.0
      %6423 = vmatpush1.msra.mxu0 0.0
      %6424 = vmatprep.subr.mxu0 0.0
      %6425 = vmatpush1.msra.mxu0 0.0
      %6426 = vmatprep.subr.mxu0 0.0
      %6427 = vmatpush1.msra.mxu0 0.0
      %6428 = vmatprep.subr.mxu0 0.0
      %6429 = vmatpush1.msra.mxu0 0.0
      %6430 = vmatprep.subr.mxu0 0.0
      %6431 = vmatpush1.msra.mxu0 0.0
      %6432 = vmatprep.subr.mxu0 0.0
      %6433 = vmatpush1.msra.mxu0 0.0
      %6434 = vmatprep.subr.mxu0 0.0
      %6435 = vmatpush1.msra.mxu0 0.0
      %6436 = vmatprep.subr.mxu0 0.0
      %6437 = vmatpush1.msra.mxu0 0.0
      %6438 = vmatprep.subr.mxu0 0.0
      %6439 = vmatpush1.msra.mxu0 0.0
      %6440 = vmatprep.subr.mxu0 0.0
      %6441 = vmatpush1.msra.mxu0 0.0
      %6442 = vmatprep.subr.mxu0 0.0
      %6443 = vmatpush1.msra.mxu0 0.0
      %6444 = vmatprep.subr.mxu0 0.0
      %6445 = vmatpush1.msra.mxu0 0.0
      %6446 = vmatprep.subr.mxu0 0.0
      %6447 = vmatpush1.msra.mxu0 0.0
      %6448 = vmatprep.subr.mxu0 0.0
      %6449 = vmatpush1.msra.mxu0 0.0
      %6450 = vmatprep.subr.mxu0 0.0
      %6451 = vmatpush1.msra.mxu0 0.0
      %6452 = vmatprep.subr.mxu0 0.0
      %6453 = vmatpush1.msra.mxu0 0.0
      %6454 = vmatprep.subr.mxu0 0.0
      %6455 = vmatpush1.msra.mxu0 0.0
      %6456 = vmatprep.subr.mxu0 0.0
      %6457 = vmatpush1.msra.mxu0 0.0
      %6458 = vmatprep.subr.mxu0 0.0
      %6459 = vmatpush1.msra.mxu0 0.0
      %6460 = vmatprep.subr.mxu0 0.0
      %6461 = vmatpush1.msra.mxu0 0.0
      %6462 = vmatprep.subr.mxu0 0.0
      %6463 = vmatpush1.msra.mxu0 0.0
      %6464 = vmatprep.subr.mxu0 0.0
      %6465 = vmatpush1.msra.mxu0 0.0
      %6466 = vmatprep.subr.mxu0 0.0
      %6467 = vmatpush1.msra.mxu0 0.0
      %6468 = vmatprep.subr.mxu0 0.0
      %6469 = vmatpush1.msra.mxu0 0.0
      %6470 = vmatprep.subr.mxu0 0.0
      %6471 = vmatpush1.msra.mxu0 0.0
      %6472 = vmatprep.subr.mxu0 0.0
      %6473 = vmatpush1.msra.mxu0 0.0
      %6474 = vmatprep.subr.mxu0 0.0
      %6475 = vmatpush1.msra.mxu0 0.0
      %6476 = vmatprep.mubr.f32.mxu0 0.0
      %6477 = vmatmul.mubr.f32.gmra.mrb[0].mxu0 %v6394
      %v6478 = vpop.f32.mrb[0].mxu0
      %v6479 = vadd.f32 0.0, %v6478
      %v6480 = vpop.f32.mrb[0].mxu0
      %v6481 = vadd.f32 0.0, %v6480
      %6482 = vmatprep.mubr.f32.mxu0 0.0
      %6483 = vmatmul.mubr.f32.gmra.mrb[0].mxu0 %v6397
      %v6484 = vpop.f32.mrb[0].mxu0
      %v6485 = vadd.f32 0.0, %v6484
      %v6486 = vpop.f32.mrb[0].mxu0
      %v6487 = vadd.f32 0.0, %v6486
      %6488 = vmatprep.mubr.f32.mxu0 0.0
      %6489 = vmatmul.mubr.f32.gmra.mrb[0].mxu0 %v6400
      %v6490 = vpop.f32.mrb[0].mxu0
      %v6491 = vadd.f32 0.0, %v6490
      %v6492 = vpop.f32.mrb[0].mxu0
      %v6493 = vadd.f32 0.0, %v6492
      %6494 = vmatprep.mubr.f32.mxu0 0.0
      %6495 = vmatmul.mubr.f32.gmra.mrb[0].mxu0 %v6403
      %v6496 = vpop.f32.mrb[0].mxu0
      %v6497 = vadd.f32 0.0, %v6496
      %v6498 = vpop.f32.mrb[0].mxu0
      %v6499 = vadd.f32 0.0, %v6498
      %6500 = vmatprep.mubr.f32.mxu0 0.0
      %6501 = vmatmul.mubr.f32.gmra.mrb[0].mxu0 %v6406
      %v6502 = vpop.f32.mrb[0].mxu0
      %v6503 = vadd.f32 0.0, %v6502
      %v6504 = vpop.f32.mrb[0].mxu0
      %v6505 = vadd.f32 0.0, %v6504
      %6506 = vdwg.mxu0
      %v6507 = vadd.f32 %v6340, %v6479
      %v6508 = vadd.f32 %v6342, %v6481
      %v6509 = vadd.f32 %v6346, %v6485
      %v6510 = vadd.f32 %v6348, %v6487
      %v6511 = vadd.f32 %v6352, %v6491
      %v6512 = vadd.f32 %v6354, %v6493
      %v6513 = vadd.f32 %v6358, %v6497
      %v6514 = vadd.f32 %v6360, %v6499
      %v6515 = vadd.f32 %v6364, %v6503
      %v6516 = vadd.f32 %v6366, %v6505
      %s6517 = scalar_lea.vmem %s3, 120
      %v6518 = vld [vmem:[%s6517] sm:$0xff]
      %v6519 = vld [vmem:[%s6517 + $0x8] sm:$0xff]
      %v6520 = vld [vmem:[%s6517 + $0x10] sm:$0xff]
      %v6521 = vld [vmem:[%s6517 + $0x18] sm:$0xff]
      %v6522 = vld [vmem:[%s6517 + $0x20] sm:$0xff]
      %6523 = vrot.lane.b32.xlu0 %v6087, 125
      %v6524 = vpop.permute.xlu0 %6523
      %6525 = vrot.lane.b32.xlu0 %v6089, 125
      %v6526 = vpop.permute.xlu0 %6525
      %6527 = vrot.lane.b32.xlu0 %v6093, 125
      %v6528 = vpop.permute.xlu0 %6527
      %6529 = vrot.lane.b32.xlu0 %v6095, 125
      %v6530 = vpop.permute.xlu0 %6529
      %6531 = vrot.lane.b32.xlu0 %v6099, 125
      %v6532 = vpop.permute.xlu0 %6531
      %6533 = vrot.lane.b32.xlu0 %v6101, 125
      %v6534 = vpop.permute.xlu0 %6533
      %v6535 = vsel %vm1575, %v6524, %v6526
      %v6536 = vsel %vm1575, %v6528, %v6530
      %v6537 = vsel %vm1575, %v6532, %v6534
      %v6543 = vsel %vm6139, %v6518, 0
      %v6546 = vsel %vm6139, %v6519, 0
      %v6549 = vsel %vm6139, %v6520, 0
      %v6552 = vsel %vm6139, %v6521, 0
      %v6555 = vsel %vm6139, %v6522, 0
      %v6557 = vsel %vm5764, %v6537, 0
      %v6559 = vsel %vm5764, %v6534, 0
      %6561 = vmatprep.subr.mxu0 %v6526
      %6562 = vmatpush1.msra.mxu0 %v6535
      %6563 = vmatprep.subr.mxu0 %v6530
      %6564 = vmatpush1.msra.mxu0 %v6536
      %6565 = vmatprep.subr.mxu0 %v6559
      %6566 = vmatpush1.msra.mxu0 %v6557
      %6567 = vmatprep.subr.mxu0 0.0
      %6568 = vmatpush1.msra.mxu0 0.0
      %6569 = vmatprep.subr.mxu0 0.0
      %6570 = vmatpush1.msra.mxu0 0.0
      %6571 = vmatprep.subr.mxu0 0.0
      %6572 = vmatpush1.msra.mxu0 0.0
      %6573 = vmatprep.subr.mxu0 0.0
      %6574 = vmatpush1.msra.mxu0 0.0
      %6575 = vmatprep.subr.mxu0 0.0
      %6576 = vmatpush1.msra.mxu0 0.0
      %6577 = vmatprep.subr.mxu0 0.0
      %6578 = vmatpush1.msra.mxu0 0.0
      %6579 = vmatprep.subr.mxu0 0.0
      %6580 = vmatpush1.msra.mxu0 0.0
      %6581 = vmatprep.subr.mxu0 0.0
      %6582 = vmatpush1.msra.mxu0 0.0
      %6583 = vmatprep.subr.mxu0 0.0
      %6584 = vmatpush1.msra.mxu0 0.0
      %6585 = vmatprep.subr.mxu0 0.0
      %6586 = vmatpush1.msra.mxu0 0.0
      %6587 = vmatprep.subr.mxu0 0.0
      %6588 = vmatpush1.msra.mxu0 0.0
      %6589 = vmatprep.subr.mxu0 0.0
      %6590 = vmatpush1.msra.mxu0 0.0
      %6591 = vmatprep.subr.mxu0 0.0
      %6592 = vmatpush1.msra.mxu0 0.0
      %6593 = vmatprep.subr.mxu0 0.0
      %6594 = vmatpush1.msra.mxu0 0.0
      %6595 = vmatprep.subr.mxu0 0.0
      %6596 = vmatpush1.msra.mxu0 0.0
      %6597 = vmatprep.subr.mxu0 0.0
      %6598 = vmatpush1.msra.mxu0 0.0
      %6599 = vmatprep.subr.mxu0 0.0
      %6600 = vmatpush1.msra.mxu0 0.0
      %6601 = vmatprep.subr.mxu0 0.0
      %6602 = vmatpush1.msra.mxu0 0.0
      %6603 = vmatprep.subr.mxu0 0.0
      %6604 = vmatpush1.msra.mxu0 0.0
      %6605 = vmatprep.subr.mxu0 0.0
      %6606 = vmatpush1.msra.mxu0 0.0
      %6607 = vmatprep.subr.mxu0 0.0
      %6608 = vmatpush1.msra.mxu0 0.0
      %6609 = vmatprep.subr.mxu0 0.0
      %6610 = vmatpush1.msra.mxu0 0.0
      %6611 = vmatprep.subr.mxu0 0.0
      %6612 = vmatpush1.msra.mxu0 0.0
      %6613 = vmatprep.subr.mxu0 0.0
      %6614 = vmatpush1.msra.mxu0 0.0
      %6615 = vmatprep.subr.mxu0 0.0
      %6616 = vmatpush1.msra.mxu0 0.0
      %6617 = vmatprep.subr.mxu0 0.0
      %6618 = vmatpush1.msra.mxu0 0.0
      %6619 = vmatprep.subr.mxu0 0.0
      %6620 = vmatpush1.msra.mxu0 0.0
      %6621 = vmatprep.subr.mxu0 0.0
      %6622 = vmatpush1.msra.mxu0 0.0
      %6623 = vmatprep.subr.mxu0 0.0
      %6624 = vmatpush1.msra.mxu0 0.0
      %6625 = vmatprep.mubr.f32.mxu0 0.0
      %6626 = vmatmul.mubr.f32.gmra.mrb[0].mxu0 %v6543
      %v6627 = vpop.f32.mrb[0].mxu0
      %v6628 = vadd.f32 0.0, %v6627
      %v6629 = vpop.f32.mrb[0].mxu0
      %v6630 = vadd.f32 0.0, %v6629
      %6631 = vmatprep.mubr.f32.mxu0 0.0
      %6632 = vmatmul.mubr.f32.gmra.mrb[0].mxu0 %v6546
      %v6633 = vpop.f32.mrb[0].mxu0
      %v6634 = vadd.f32 0.0, %v6633
      %v6635 = vpop.f32.mrb[0].mxu0
      %v6636 = vadd.f32 0.0, %v6635
      %6637 = vmatprep.mubr.f32.mxu0 0.0
      %6638 = vmatmul.mubr.f32.gmra.mrb[0].mxu0 %v6549
      %v6639 = vpop.f32.mrb[0].mxu0
      %v6640 = vadd.f32 0.0, %v6639
      %v6641 = vpop.f32.mrb[0].mxu0
      %v6642 = vadd.f32 0.0, %v6641
      %6643 = vmatprep.mubr.f32.mxu0 0.0
      %6644 = vmatmul.mubr.f32.gmra.mrb[0].mxu0 %v6552
      %v6645 = vpop.f32.mrb[0].mxu0
      %v6646 = vadd.f32 0.0, %v6645
      %v6647 = vpop.f32.mrb[0].mxu0
      %v6648 = vadd.f32 0.0, %v6647
      %6649 = vmatprep.mubr.f32.mxu0 0.0
      %6650 = vmatmul.mubr.f32.gmra.mrb[0].mxu0 %v6555
      %v6651 = vpop.f32.mrb[0].mxu0
      %v6652 = vadd.f32 0.0, %v6651
      %v6653 = vpop.f32.mrb[0].mxu0
      %v6654 = vadd.f32 0.0, %v6653
      %6655 = vdwg.mxu0
      %v6656 = vadd.f32 %v6507, %v6628
      %v6657 = vadd.f32 %v6508, %v6630
      %v6658 = vadd.f32 %v6509, %v6634
      %v6659 = vadd.f32 %v6510, %v6636
      %v6660 = vadd.f32 %v6511, %v6640
      %v6661 = vadd.f32 %v6512, %v6642
      %v6662 = vadd.f32 %v6513, %v6646
      %v6663 = vadd.f32 %v6514, %v6648
      %v6664 = vadd.f32 %v6515, %v6652
      %v6665 = vadd.f32 %v6516, %v6654
      %s6666 = scalar_lea.vmem %s3, 160
      %v6667 = vld [vmem:[%s6666] sm:$0xff]
      %v6668 = vld [vmem:[%s6666 + $0x8] sm:$0xff]
      %v6669 = vld [vmem:[%s6666 + $0x10] sm:$0xff]
      %v6670 = vld [vmem:[%s6666 + $0x18] sm:$0xff]
      %v6671 = vld [vmem:[%s6666 + $0x20] sm:$0xff]
      %6672 = vrot.lane.b32.xlu0 %v6087, 124
      %v6673 = vpop.permute.xlu0 %6672
      %6674 = vrot.lane.b32.xlu0 %v6089, 124
      %v6675 = vpop.permute.xlu0 %6674
      %6676 = vrot.lane.b32.xlu0 %v6093, 124
      %v6677 = vpop.permute.xlu0 %6676
      %6678 = vrot.lane.b32.xlu0 %v6095, 124
      %v6679 = vpop.permute.xlu0 %6678
      %6680 = vrot.lane.b32.xlu0 %v6099, 124
      %v6681 = vpop.permute.xlu0 %6680
      %6682 = vrot.lane.b32.xlu0 %v6101, 124
      %v6683 = vpop.permute.xlu0 %6682
      %v6684 = vsel %vm1984, %v6673, %v6675
      %v6685 = vsel %vm1984, %v6677, %v6679
      %v6686 = vsel %vm1984, %v6681, %v6683
      %v6692 = vsel %vm6139, %v6667, 0
      %v6695 = vsel %vm6139, %v6668, 0
      %v6698 = vsel %vm6139, %v6669, 0
      %v6701 = vsel %vm6139, %v6670, 0
      %v6704 = vsel %vm6139, %v6671, 0
      %v6706 = vsel %vm5764, %v6686, 0
      %v6708 = vsel %vm5764, %v6683, 0
      %6710 = vmatprep.subr.mxu0 %v6675
      %6711 = vmatpush1.msra.mxu0 %v6684
      %6712 = vmatprep.subr.mxu0 %v6679
      %6713 = vmatpush1.msra.mxu0 %v6685
      %6714 = vmatprep.subr.mxu0 %v6708
      %6715 = vmatpush1.msra.mxu0 %v6706
      %6716 = vmatprep.subr.mxu0 0.0
      %6717 = vmatpush1.msra.mxu0 0.0
      %6718 = vmatprep.subr.mxu0 0.0
      %6719 = vmatpush1.msra.mxu0 0.0
      %6720 = vmatprep.subr.mxu0 0.0
      %6721 = vmatpush1.msra.mxu0 0.0
      %6722 = vmatprep.subr.mxu0 0.0
      %6723 = vmatpush1.msra.mxu0 0.0
      %6724 = vmatprep.subr.mxu0 0.0
      %6725 = vmatpush1.msra.mxu0 0.0
      %6726 = vmatprep.subr.mxu0 0.0
      %6727 = vmatpush1.msra.mxu0 0.0
      %6728 = vmatprep.subr.mxu0 0.0
      %6729 = vmatpush1.msra.mxu0 0.0
      %6730 = vmatprep.subr.mxu0 0.0
      %6731 = vmatpush1.msra.mxu0 0.0
      %6732 = vmatprep.subr.mxu0 0.0
      %6733 = vmatpush1.msra.mxu0 0.0
      %6734 = vmatprep.subr.mxu0 0.0
      %6735 = vmatpush1.msra.mxu0 0.0
      %6736 = vmatprep.subr.mxu0 0.0
      %6737 = vmatpush1.msra.mxu0 0.0
      %6738 = vmatprep.subr.mxu0 0.0
      %6739 = vmatpush1.msra.mxu0 0.0
      %6740 = vmatprep.subr.mxu0 0.0
      %6741 = vmatpush1.msra.mxu0 0.0
      %6742 = vmatprep.subr.mxu0 0.0
      %6743 = vmatpush1.msra.mxu0 0.0
      %6744 = vmatprep.subr.mxu0 0.0
      %6745 = vmatpush1.msra.mxu0 0.0
      %6746 = vmatprep.subr.mxu0 0.0
      %6747 = vmatpush1.msra.mxu0 0.0
      %6748 = vmatprep.subr.mxu0 0.0
      %6749 = vmatpush1.msra.mxu0 0.0
      %6750 = vmatprep.subr.mxu0 0.0
      %6751 = vmatpush1.msra.mxu0 0.0
      %6752 = vmatprep.subr.mxu0 0.0
      %6753 = vmatpush1.msra.mxu0 0.0
      %6754 = vmatprep.subr.mxu0 0.0
      %6755 = vmatpush1.msra.mxu0 0.0
      %6756 = vmatprep.subr.mxu0 0.0
      %6757 = vmatpush1.msra.mxu0 0.0
      %6758 = vmatprep.subr.mxu0 0.0
      %6759 = vmatpush1.msra.mxu0 0.0
      %6760 = vmatprep.subr.mxu0 0.0
      %6761 = vmatpush1.msra.mxu0 0.0
      %6762 = vmatprep.subr.mxu0 0.0
      %6763 = vmatpush1.msra.mxu0 0.0
      %6764 = vmatprep.subr.mxu0 0.0
      %6765 = vmatpush1.msra.mxu0 0.0
      %6766 = vmatprep.subr.mxu0 0.0
      %6767 = vmatpush1.msra.mxu0 0.0
      %6768 = vmatprep.subr.mxu0 0.0
      %6769 = vmatpush1.msra.mxu0 0.0
      %6770 = vmatprep.subr.mxu0 0.0
      %6771 = vmatpush1.msra.mxu0 0.0
      %6772 = vmatprep.subr.mxu0 0.0
      %6773 = vmatpush1.msra.mxu0 0.0
      %6774 = vmatprep.mubr.f32.mxu0 0.0
      %6775 = vmatmul.mubr.f32.gmra.mrb[0].mxu0 %v6692
      %v6776 = vpop.f32.mrb[0].mxu0
      %v6777 = vadd.f32 0.0, %v6776
      %v6778 = vpop.f32.mrb[0].mxu0
      %v6779 = vadd.f32 0.0, %v6778
      %6780 = vmatprep.mubr.f32.mxu0 0.0
      %6781 = vmatmul.mubr.f32.gmra.mrb[0].mxu0 %v6695
      %v6782 = vpop.f32.mrb[0].mxu0
      %v6783 = vadd.f32 0.0, %v6782
      %v6784 = vpop.f32.mrb[0].mxu0
      %v6785 = vadd.f32 0.0, %v6784
      %6786 = vmatprep.mubr.f32.mxu0 0.0
      %6787 = vmatmul.mubr.f32.gmra.mrb[0].mxu0 %v6698
      %v6788 = vpop.f32.mrb[0].mxu0
      %v6789 = vadd.f32 0.0, %v6788
      %v6790 = vpop.f32.mrb[0].mxu0
      %v6791 = vadd.f32 0.0, %v6790
      %6792 = vmatprep.mubr.f32.mxu0 0.0
      %6793 = vmatmul.mubr.f32.gmra.mrb[0].mxu0 %v6701
      %v6794 = vpop.f32.mrb[0].mxu0
      %v6795 = vadd.f32 0.0, %v6794
      %v6796 = vpop.f32.mrb[0].mxu0
      %v6797 = vadd.f32 0.0, %v6796
      %6798 = vmatprep.mubr.f32.mxu0 0.0
      %6799 = vmatmul.mubr.f32.gmra.mrb[0].mxu0 %v6704
      %v6800 = vpop.f32.mrb[0].mxu0
      %v6801 = vadd.f32 0.0, %v6800
      %v6802 = vpop.f32.mrb[0].mxu0
      %v6803 = vadd.f32 0.0, %v6802
      %6804 = vdwg.mxu0
      %v6805 = vadd.f32 %v6656, %v6777
      %v6806 = vadd.f32 %v6657, %v6779
      %v6807 = vadd.f32 %v6658, %v6783
      %v6808 = vadd.f32 %v6659, %v6785
      %v6809 = vadd.f32 %v6660, %v6789
      %v6810 = vadd.f32 %v6661, %v6791
      %v6811 = vadd.f32 %v6662, %v6795
      %v6812 = vadd.f32 %v6663, %v6797
      %v6813 = vadd.f32 %v6664, %v6801
      %v6814 = vadd.f32 %v6665, %v6803
      %v6815 = vld [vmem:[%s4] sm:$0xff]
      %v6816 = vld [vmem:[%s4 + $0x8] sm:$0xff]
      %v6817 = vld [vmem:[%s4 + $0x10] sm:$0xff]
      %v6818 = vld [vmem:[%s4 + $0x18] sm:$0xff]
      %v6819 = vld [vmem:[%s4 + $0x20] sm:$0xff]
      %6821 = vset.pattern.permute.xlu0 0
      %6822 = vperm.xlu0 %6821, %v6815
      %v6823 = vpop.permute.xlu0 %6822
      %6826 = vset.pattern.permute.xlu0 0
      %6827 = vperm.xlu0 %6826, %v6816
      %v6828 = vpop.permute.xlu0 %6827
      %6831 = vset.pattern.permute.xlu0 0
      %6832 = vperm.xlu0 %6831, %v6817
      %v6833 = vpop.permute.xlu0 %6832
      %6836 = vset.pattern.permute.xlu0 0
      %6837 = vperm.xlu0 %6836, %v6818
      %v6838 = vpop.permute.xlu0 %6837
      %6841 = vset.pattern.permute.xlu0 0
      %6842 = vperm.xlu0 %6841, %v6819
      %v6843 = vpop.permute.xlu0 %6842
      %v6845 = vadd.f32 %v6805, %v6823
      %v6846 = vadd.f32 %v6806, %v6823
      %v6847 = vadd.f32 %v6807, %v6828
      %v6848 = vadd.f32 %v6808, %v6828
      %v6849 = vadd.f32 %v6809, %v6833
      %v6850 = vadd.f32 %v6810, %v6833
      %v6851 = vadd.f32 %v6811, %v6838
      %v6852 = vadd.f32 %v6812, %v6838
      %v6853 = vadd.f32 %v6813, %v6843
      %v6854 = vadd.f32 %v6814, %v6843
      %v6855 = vmax.f32 %v6845, 0.0
      %v6856 = vmax.f32 %v6846, 0.0
      %v6857 = vmax.f32 %v6847, 0.0
      %v6858 = vmax.f32 %v6848, 0.0
      %v6859 = vmax.f32 %v6849, 0.0
      %v6860 = vmax.f32 %v6850, 0.0
      %v6861 = vmax.f32 %v6851, 0.0
      %v6862 = vmax.f32 %v6852, 0.0
      %v6863 = vmax.f32 %v6853, 0.0
      %v6864 = vmax.f32 %v6854, 0.0
      %6875 = vrot.lane.b32.xlu0 %v6855, 127
      %v6876 = vpop.permute.xlu0 %6875
      %6877 = vrot.lane.b32.xlu0 %v6856, 127
      %v6878 = vpop.permute.xlu0 %6877
      %6879 = vrot.lane.b32.xlu0 %v6857, 127
      %v6880 = vpop.permute.xlu0 %6879
      %6881 = vrot.lane.b32.xlu0 %v6858, 127
      %v6882 = vpop.permute.xlu0 %6881
      %6883 = vrot.lane.b32.xlu0 %v6859, 127
      %v6884 = vpop.permute.xlu0 %6883
      %6885 = vrot.lane.b32.xlu0 %v6860, 127
      %v6886 = vpop.permute.xlu0 %6885
      %6887 = vrot.lane.b32.xlu0 %v6861, 127
      %v6888 = vpop.permute.xlu0 %6887
      %6889 = vrot.lane.b32.xlu0 %v6862, 127
      %v6890 = vpop.permute.xlu0 %6889
      %6891 = vrot.lane.b32.xlu0 %v6863, 127
      %v6892 = vpop.permute.xlu0 %6891
      %6893 = vrot.lane.b32.xlu0 %v6864, 127
      %v6894 = vpop.permute.xlu0 %6893
      %v6895 = vsel %vm422, %v6876, %v6878
      %v6896 = vsel %vm422, %v6880, %v6882
      %v6897 = vsel %vm422, %v6884, %v6886
      %v6898 = vsel %vm422, %v6888, %v6890
      %v6899 = vsel %vm422, %v6892, %v6894
      %v6910 = vmax.f32 %v6855, %v6895
      %v6911 = vmax.f32 %v6856, %v6878
      %v6912 = vmax.f32 %v6857, %v6896
      %v6913 = vmax.f32 %v6858, %v6882
      %v6914 = vmax.f32 %v6859, %v6897
      %v6915 = vmax.f32 %v6860, %v6886
      %v6916 = vmax.f32 %v6861, %v6898
      %v6917 = vmax.f32 %v6862, %v6890
      %v6918 = vmax.f32 %v6863, %v6899
      %v6919 = vmax.f32 %v6864, %v6894
      %6920 = vrot.lane.b32.xlu0 %v6855, 126
      %v6921 = vpop.permute.xlu0 %6920
      %6922 = vrot.lane.b32.xlu0 %v6856, 126
      %v6923 = vpop.permute.xlu0 %6922
      %6924 = vrot.lane.b32.xlu0 %v6857, 126
      %v6925 = vpop.permute.xlu0 %6924
      %6926 = vrot.lane.b32.xlu0 %v6858, 126
      %v6927 = vpop.permute.xlu0 %6926
      %6928 = vrot.lane.b32.xlu0 %v6859, 126
      %v6929 = vpop.permute.xlu0 %6928
      %6930 = vrot.lane.b32.xlu0 %v6860, 126
      %v6931 = vpop.permute.xlu0 %6930
      %6932 = vrot.lane.b32.xlu0 %v6861, 126
      %v6933 = vpop.permute.xlu0 %6932
      %6934 = vrot.lane.b32.xlu0 %v6862, 126
      %v6935 = vpop.permute.xlu0 %6934
      %6936 = vrot.lane.b32.xlu0 %v6863, 126
      %v6937 = vpop.permute.xlu0 %6936
      %6938 = vrot.lane.b32.xlu0 %v6864, 126
      %v6939 = vpop.permute.xlu0 %6938
      %v6940 = vsel %vm1166, %v6921, %v6923
      %v6941 = vsel %vm1166, %v6925, %v6927
      %v6942 = vsel %vm1166, %v6929, %v6931
      %v6943 = vsel %vm1166, %v6933, %v6935
      %v6944 = vsel %vm1166, %v6937, %v6939
      %v6955 = vmax.f32 %v6910, %v6940
      %v6956 = vmax.f32 %v6911, %v6923
      %v6957 = vmax.f32 %v6912, %v6941
      %v6958 = vmax.f32 %v6913, %v6927
      %v6959 = vmax.f32 %v6914, %v6942
      %v6960 = vmax.f32 %v6915, %v6931
      %v6961 = vmax.f32 %v6916, %v6943
      %v6962 = vmax.f32 %v6917, %v6935
      %v6963 = vmax.f32 %v6918, %v6944
      %v6964 = vmax.f32 %v6919, %v6939
      %6965 = vrot.lane.b32.xlu0 %v6855, 125
      %v6966 = vpop.permute.xlu0 %6965
      %6967 = vrot.lane.b32.xlu0 %v6856, 125
      %v6968 = vpop.permute.xlu0 %6967
      %6969 = vrot.lane.b32.xlu0 %v6857, 125
      %v6970 = vpop.permute.xlu0 %6969
      %6971 = vrot.lane.b32.xlu0 %v6858, 125
      %v6972 = vpop.permute.xlu0 %6971
      %6973 = vrot.lane.b32.xlu0 %v6859, 125
      %v6974 = vpop.permute.xlu0 %6973
      %6975 = vrot.lane.b32.xlu0 %v6860, 125
      %v6976 = vpop.permute.xlu0 %6975
      %6977 = vrot.lane.b32.xlu0 %v6861, 125
      %v6978 = vpop.permute.xlu0 %6977
      %6979 = vrot.lane.b32.xlu0 %v6862, 125
      %v6980 = vpop.permute.xlu0 %6979
      %6981 = vrot.lane.b32.xlu0 %v6863, 125
      %v6982 = vpop.permute.xlu0 %6981
      %6983 = vrot.lane.b32.xlu0 %v6864, 125
      %v6984 = vpop.permute.xlu0 %6983
      %v6985 = vsel %vm1575, %v6966, %v6968
      %v6986 = vsel %vm1575, %v6970, %v6972
      %v6987 = vsel %vm1575, %v6974, %v6976
      %v6988 = vsel %vm1575, %v6978, %v6980
      %v6989 = vsel %vm1575, %v6982, %v6984
      %v7000 = vmax.f32 %v6955, %v6985
      %v7001 = vmax.f32 %v6956, %v6968
      %v7002 = vmax.f32 %v6957, %v6986
      %v7003 = vmax.f32 %v6958, %v6972
      %v7004 = vmax.f32 %v6959, %v6987
      %v7005 = vmax.f32 %v6960, %v6976
      %v7006 = vmax.f32 %v6961, %v6988
      %v7007 = vmax.f32 %v6962, %v6980
      %v7008 = vmax.f32 %v6963, %v6989
      %v7009 = vmax.f32 %v6964, %v6984
      %vm7010 = vcmask 965632
      %v7012 = vsel %vm7010, %v7001, 0
      %v7015 = vsel %vm7010, %v7003, 0
      %v7018 = vsel %vm7010, %v7005, 0
      %v7021 = vsel %vm7010, %v7007, 0
      %v7024 = vsel %vm7010, %v7009, 0
      %vm7026 = vcmask 1045504
      %v7028 = vsel %vm7026, %v5560, 0
      %7030 = vmatprep.subr.mxu0 0.0
      %7031 = vmatpush1.msra.mxu0 %v5500
      %7032 = vmatprep.subr.mxu0 0.0
      %7033 = vmatpush1.msra.mxu0 %v5502
      %7034 = vmatprep.subr.mxu0 0.0
      %7035 = vmatpush1.msra.mxu0 %v5504
      %7036 = vmatprep.subr.mxu0 0.0
      %7037 = vmatpush1.msra.mxu0 %v5506
      %7038 = vmatprep.subr.mxu0 0.0
      %7039 = vmatpush1.msra.mxu0 %v5508
      %7040 = vmatprep.subr.mxu0 0.0
      %7041 = vmatpush1.msra.mxu0 %v5510
      %7042 = vmatprep.subr.mxu0 0.0
      %7043 = vmatpush1.msra.mxu0 %v5512
      %7044 = vmatprep.subr.mxu0 0.0
      %7045 = vmatpush1.msra.mxu0 %v5514
      %7046 = vmatprep.subr.mxu0 0.0
      %7047 = vmatpush1.msra.mxu0 %v5516
      %7048 = vmatprep.subr.mxu0 0.0
      %7049 = vmatpush1.msra.mxu0 %v5518
      %7050 = vmatprep.subr.mxu0 0.0
      %7051 = vmatpush1.msra.mxu0 %v5520
      %7052 = vmatprep.subr.mxu0 0.0
      %7053 = vmatpush1.msra.mxu0 %v5522
      %7054 = vmatprep.subr.mxu0 0.0
      %7055 = vmatpush1.msra.mxu0 %v5524
      %7056 = vmatprep.subr.mxu0 0.0
      %7057 = vmatpush1.msra.mxu0 %v5526
      %7058 = vmatprep.subr.mxu0 0.0
      %7059 = vmatpush1.msra.mxu0 %v5528
      %7060 = vmatprep.subr.mxu0 0.0
      %7061 = vmatpush1.msra.mxu0 %v5530
      %7062 = vmatprep.subr.mxu0 0.0
      %7063 = vmatpush1.msra.mxu0 %v5532
      %7064 = vmatprep.subr.mxu0 0.0
      %7065 = vmatpush1.msra.mxu0 %v5534
      %7066 = vmatprep.subr.mxu0 0.0
      %7067 = vmatpush1.msra.mxu0 %v5536
      %7068 = vmatprep.subr.mxu0 0.0
      %7069 = vmatpush1.msra.mxu0 %v5538
      %7070 = vmatprep.subr.mxu0 0.0
      %7071 = vmatpush1.msra.mxu0 %v5540
      %7072 = vmatprep.subr.mxu0 0.0
      %7073 = vmatpush1.msra.mxu0 %v5542
      %7074 = vmatprep.subr.mxu0 0.0
      %7075 = vmatpush1.msra.mxu0 %v5544
      %7076 = vmatprep.subr.mxu0 0.0
      %7077 = vmatpush1.msra.mxu0 %v5546
      %7078 = vmatprep.subr.mxu0 0.0
      %7079 = vmatpush1.msra.mxu0 %v5548
      %7080 = vmatprep.subr.mxu0 0.0
      %7081 = vmatpush1.msra.mxu0 %v5550
      %7082 = vmatprep.subr.mxu0 0.0
      %7083 = vmatpush1.msra.mxu0 %v5552
      %7084 = vmatprep.subr.mxu0 0.0
      %7085 = vmatpush1.msra.mxu0 %v5554
      %7086 = vmatprep.subr.mxu0 0.0
      %7087 = vmatpush1.msra.mxu0 %v5556
      %7088 = vmatprep.subr.mxu0 0.0
      %7089 = vmatpush1.msra.mxu0 %v5558
      %7090 = vmatprep.subr.mxu0 0.0
      %7091 = vmatpush1.msra.mxu0 %v7028
      %7092 = vmatprep.subr.mxu0 0.0
      %7093 = vmatpush1.msra.mxu0 0.0
      %7094 = vmatprep.mubr.f32.mxu0 %v7012
      %7095 = vmatmul.mubr.f32.gmra.mrb[0].mxu0 %v7000
      %v7096 = vpop.f32.mrb[0].mxu0
      %v7097 = vadd.f32 0.0, %v7096
      %v7098 = vpop.f32.mrb[0].mxu0
      %7099 = vmatprep.mubr.f32.mxu0 %v7015
      %7100 = vmatmul.mubr.f32.gmra.mrb[0].mxu0 %v7002
      %v7101 = vpop.f32.mrb[0].mxu0
      %v7102 = vadd.f32 0.0, %v7101
      %v7103 = vpop.f32.mrb[0].mxu0
      %7104 = vmatprep.mubr.f32.mxu0 %v7018
      %7105 = vmatmul.mubr.f32.gmra.mrb[0].mxu0 %v7004
      %v7106 = vpop.f32.mrb[0].mxu0
      %v7107 = vadd.f32 0.0, %v7106
      %v7108 = vpop.f32.mrb[0].mxu0
      %7109 = vmatprep.mubr.f32.mxu0 %v7021
      %7110 = vmatmul.mubr.f32.gmra.mrb[0].mxu0 %v7006
      %v7111 = vpop.f32.mrb[0].mxu0
      %v7112 = vadd.f32 0.0, %v7111
      %v7113 = vpop.f32.mrb[0].mxu0
      %7114 = vmatprep.mubr.f32.mxu0 %v7024
      %7115 = vmatmul.mubr.f32.gmra.mrb[0].mxu0 %v7008
      %v7116 = vpop.f32.mrb[0].mxu0
      %v7117 = vadd.f32 0.0, %v7116
      %v7118 = vpop.f32.mrb[0].mxu0
      %7119 = vdwg.mxu0
      %v7120 = vld [vmem:[%s5] sm:$0xff]
      %v7121 = vld [vmem:[%s5 + $0x8] sm:$0xff]
      %v7122 = vld [vmem:[%s5 + $0x10] sm:$0xff]
      %v7123 = vld [vmem:[%s5 + $0x18] sm:$0xff]
      %v7124 = vld [vmem:[%s5 + $0x20] sm:$0xff]
      %v7125 = vld [vmem:[%s5 + $0x28] sm:$0xff]
      %v7126 = vld [vmem:[%s5 + $0x30] sm:$0xff]
      %v7127 = vld [vmem:[%s5 + $0x38] sm:$0xff]
      %v7128 = vld [vmem:[%s5 + $0x40] sm:$0xff]
      %v7129 = vld [vmem:[%s5 + $0x48] sm:$0xff]
      %s7130 = scalar_lea.vmem %s5, 80
      %v7131 = vld [vmem:[%s7130] sm:$0xff]
      %v7132 = vld [vmem:[%s7130 + $0x8] sm:$0xff]
      %v7133 = vld [vmem:[%s7130 + $0x10] sm:$0xff]
      %v7134 = vld [vmem:[%s7130 + $0x18] sm:$0xff]
      %v7135 = vld [vmem:[%s7130 + $0x20] sm:$0xff]
      %v7136 = vld [vmem:[%s7130 + $0x28] sm:$0xff]
      %v7137 = vld [vmem:[%s7130 + $0x30] sm:$0xff]
      %v7138 = vld [vmem:[%s7130 + $0x38] sm:$0xff]
      %v7139 = vld [vmem:[%s7130 + $0x40] sm:$0xff]
      %v7140 = vld [vmem:[%s7130 + $0x48] sm:$0xff]
      %7146 = vrot.lane.b32.xlu0 %v7097, 127
      %v7147 = vpop.permute.xlu0 %7146
      %7148 = vrot.lane.b32.xlu0 %v7102, 127
      %v7149 = vpop.permute.xlu0 %7148
      %7150 = vrot.lane.b32.xlu0 %v7107, 127
      %v7151 = vpop.permute.xlu0 %7150
      %7152 = vrot.lane.b32.xlu0 %v7112, 127
      %v7153 = vpop.permute.xlu0 %7152
      %7154 = vrot.lane.b32.xlu0 %v7117, 127
      %v7155 = vpop.permute.xlu0 %7154
      %vm7161 = vcmask 326656
      %v7163 = vsel %vm7161, %v7131, 0
      %v7166 = vsel %vm7161, %v7132, 0
      %v7169 = vsel %vm7161, %v7133, 0
      %v7172 = vsel %vm7161, %v7134, 0
      %v7175 = vsel %vm7161, %v7135, 0
      %v7178 = vsel %vm7161, %v7136, 0
      %v7181 = vsel %vm7161, %v7137, 0
      %v7184 = vsel %vm7161, %v7138, 0
      %v7187 = vsel %vm7161, %v7139, 0
      %v7190 = vsel %vm7161, %v7140, 0
      %7192 = vmatprep.subr.mxu0 0.0
      %7193 = vmatpush1.msra.mxu0 %v7147
      %7194 = vmatprep.subr.mxu0 0.0
      %7195 = vmatpush1.msra.mxu0 %v7149
      %7196 = vmatprep.subr.mxu0 0.0
      %7197 = vmatpush1.msra.mxu0 %v7151
      %7198 = vmatprep.subr.mxu0 0.0
      %7199 = vmatpush1.msra.mxu0 %v7153
      %7200 = vmatprep.subr.mxu0 0.0
      %7201 = vmatpush1.msra.mxu0 %v7155
      %7202 = vmatprep.subr.mxu0 0.0
      %7203 = vmatpush1.msra.mxu0 0.0
      %7204 = vmatprep.subr.mxu0 0.0
      %7205 = vmatpush1.msra.mxu0 0.0
      %7206 = vmatprep.subr.mxu0 0.0
      %7207 = vmatpush1.msra.mxu0 0.0
      %7208 = vmatprep.subr.mxu0 0.0
      %7209 = vmatpush1.msra.mxu0 0.0
      %7210 = vmatprep.subr.mxu0 0.0
      %7211 = vmatpush1.msra.mxu0 0.0
      %7212 = vmatprep.subr.mxu0 0.0
      %7213 = vmatpush1.msra.mxu0 0.0
      %7214 = vmatprep.subr.mxu0 0.0
      %7215 = vmatpush1.msra.mxu0 0.0
      %7216 = vmatprep.subr.mxu0 0.0
      %7217 = vmatpush1.msra.mxu0 0.0
      %7218 = vmatprep.subr.mxu0 0.0
      %7219 = vmatpush1.msra.mxu0 0.0
      %7220 = vmatprep.subr.mxu0 0.0
      %7221 = vmatpush1.msra.mxu0 0.0
      %7222 = vmatprep.subr.mxu0 0.0
      %7223 = vmatpush1.msra.mxu0 0.0
      %7224 = vmatprep.subr.mxu0 0.0
      %7225 = vmatpush1.msra.mxu0 0.0
      %7226 = vmatprep.subr.mxu0 0.0
      %7227 = vmatpush1.msra.mxu0 0.0
      %7228 = vmatprep.subr.mxu0 0.0
      %7229 = vmatpush1.msra.mxu0 0.0
      %7230 = vmatprep.subr.mxu0 0.0
      %7231 = vmatpush1.msra.mxu0 0.0
      %7232 = vmatprep.subr.mxu0 0.0
      %7233 = vmatpush1.msra.mxu0 0.0
      %7234 = vmatprep.subr.mxu0 0.0
      %7235 = vmatpush1.msra.mxu0 0.0
      %7236 = vmatprep.subr.mxu0 0.0
      %7237 = vmatpush1.msra.mxu0 0.0
      %7238 = vmatprep.subr.mxu0 0.0
      %7239 = vmatpush1.msra.mxu0 0.0
      %7240 = vmatprep.subr.mxu0 0.0
      %7241 = vmatpush1.msra.mxu0 0.0
      %7242 = vmatprep.subr.mxu0 0.0
      %7243 = vmatpush1.msra.mxu0 0.0
      %7244 = vmatprep.subr.mxu0 0.0
      %7245 = vmatpush1.msra.mxu0 0.0
      %7246 = vmatprep.subr.mxu0 0.0
      %7247 = vmatpush1.msra.mxu0 0.0
      %7248 = vmatprep.subr.mxu0 0.0
      %7249 = vmatpush1.msra.mxu0 0.0
      %7250 = vmatprep.subr.mxu0 0.0
      %7251 = vmatpush1.msra.mxu0 0.0
      %7252 = vmatprep.subr.mxu0 0.0
      %7253 = vmatpush1.msra.mxu0 0.0
      %7254 = vmatprep.subr.mxu0 0.0
      %7255 = vmatpush1.msra.mxu0 0.0
      %7256 = vmatprep.mubr.f32.mxu0 0.0
      %7257 = vmatmul.mubr.f32.gmra.mrb[0].mxu0 %v7163
      %v7258 = vpop.f32.mrb[0].mxu0
      %v7259 = vadd.f32 0.0, %v7258
      %v7260 = vpop.f32.mrb[0].mxu0
      %7261 = vmatprep.mubr.f32.mxu0 0.0
      %7262 = vmatmul.mubr.f32.gmra.mrb[0].mxu0 %v7166
      %v7263 = vpop.f32.mrb[0].mxu0
      %v7264 = vadd.f32 0.0, %v7263
      %v7265 = vpop.f32.mrb[0].mxu0
      %7266 = vmatprep.mubr.f32.mxu0 0.0
      %7267 = vmatmul.mubr.f32.gmra.mrb[0].mxu0 %v7169
      %v7268 = vpop.f32.mrb[0].mxu0
      %v7269 = vadd.f32 0.0, %v7268
      %v7270 = vpop.f32.mrb[0].mxu0
      %7271 = vmatprep.mubr.f32.mxu0 0.0
      %7272 = vmatmul.mubr.f32.gmra.mrb[0].mxu0 %v7172
      %v7273 = vpop.f32.mrb[0].mxu0
      %v7274 = vadd.f32 0.0, %v7273
      %v7275 = vpop.f32.mrb[0].mxu0
      %7276 = vmatprep.mubr.f32.mxu0 0.0
      %7277 = vmatmul.mubr.f32.gmra.mrb[0].mxu0 %v7175
      %v7278 = vpop.f32.mrb[0].mxu0
      %v7279 = vadd.f32 0.0, %v7278
      %v7280 = vpop.f32.mrb[0].mxu0
      %7281 = vmatprep.mubr.f32.mxu0 0.0
      %7282 = vmatmul.mubr.f32.gmra.mrb[0].mxu0 %v7178
      %v7283 = vpop.f32.mrb[0].mxu0
      %v7284 = vadd.f32 0.0, %v7283
      %v7285 = vpop.f32.mrb[0].mxu0
      %7286 = vmatprep.mubr.f32.mxu0 0.0
      %7287 = vmatmul.mubr.f32.gmra.mrb[0].mxu0 %v7181
      %v7288 = vpop.f32.mrb[0].mxu0
      %v7289 = vadd.f32 0.0, %v7288
      %v7290 = vpop.f32.mrb[0].mxu0
      %7291 = vmatprep.mubr.f32.mxu0 0.0
      %7292 = vmatmul.mubr.f32.gmra.mrb[0].mxu0 %v7184
      %v7293 = vpop.f32.mrb[0].mxu0
      %v7294 = vadd.f32 0.0, %v7293
      %v7295 = vpop.f32.mrb[0].mxu0
      %7296 = vmatprep.mubr.f32.mxu0 0.0
      %7297 = vmatmul.mubr.f32.gmra.mrb[0].mxu0 %v7187
      %v7298 = vpop.f32.mrb[0].mxu0
      %v7299 = vadd.f32 0.0, %v7298
      %v7300 = vpop.f32.mrb[0].mxu0
      %7301 = vmatprep.mubr.f32.mxu0 0.0
      %7302 = vmatmul.mubr.f32.gmra.mrb[0].mxu0 %v7190
      %v7303 = vpop.f32.mrb[0].mxu0
      %v7304 = vadd.f32 0.0, %v7303
      %v7305 = vpop.f32.mrb[0].mxu0
      %7306 = vdwg.mxu0
      %v7308 = vsel %vm7161, %v7120, 0
      %v7311 = vsel %vm7161, %v7121, 0
      %v7314 = vsel %vm7161, %v7122, 0
      %v7317 = vsel %vm7161, %v7123, 0
      %v7320 = vsel %vm7161, %v7124, 0
      %v7323 = vsel %vm7161, %v7125, 0
      %v7326 = vsel %vm7161, %v7126, 0
      %v7329 = vsel %vm7161, %v7127, 0
      %v7332 = vsel %vm7161, %v7128, 0
      %v7335 = vsel %vm7161, %v7129, 0
      %7337 = vmatprep.subr.mxu0 0.0
      %7338 = vmatpush1.msra.mxu0 %v7097
      %7339 = vmatprep.subr.mxu0 0.0
      %7340 = vmatpush1.msra.mxu0 %v7102
      %7341 = vmatprep.subr.mxu0 0.0
      %7342 = vmatpush1.msra.mxu0 %v7107
      %7343 = vmatprep.subr.mxu0 0.0
      %7344 = vmatpush1.msra.mxu0 %v7112
      %7345 = vmatprep.subr.mxu0 0.0
      %7346 = vmatpush1.msra.mxu0 %v7117
      %7347 = vmatprep.subr.mxu0 0.0
      %7348 = vmatpush1.msra.mxu0 0.0
      %7349 = vmatprep.subr.mxu0 0.0
      %7350 = vmatpush1.msra.mxu0 0.0
      %7351 = vmatprep.subr.mxu0 0.0
      %7352 = vmatpush1.msra.mxu0 0.0
      %7353 = vmatprep.subr.mxu0 0.0
      %7354 = vmatpush1.msra.mxu0 0.0
      %7355 = vmatprep.subr.mxu0 0.0
      %7356 = vmatpush1.msra.mxu0 0.0
      %7357 = vmatprep.subr.mxu0 0.0
      %7358 = vmatpush1.msra.mxu0 0.0
      %7359 = vmatprep.subr.mxu0 0.0
      %7360 = vmatpush1.msra.mxu0 0.0
      %7361 = vmatprep.subr.mxu0 0.0
      %7362 = vmatpush1.msra.mxu0 0.0
      %7363 = vmatprep.subr.mxu0 0.0
      %7364 = vmatpush1.msra.mxu0 0.0
      %7365 = vmatprep.subr.mxu0 0.0
      %7366 = vmatpush1.msra.mxu0 0.0
      %7367 = vmatprep.subr.mxu0 0.0
      %7368 = vmatpush1.msra.mxu0 0.0
      %7369 = vmatprep.subr.mxu0 0.0
      %7370 = vmatpush1.msra.mxu0 0.0
      %7371 = vmatprep.subr.mxu0 0.0
      %7372 = vmatpush1.msra.mxu0 0.0
      %7373 = vmatprep.subr.mxu0 0.0
      %7374 = vmatpush1.msra.mxu0 0.0
      %7375 = vmatprep.subr.mxu0 0.0
      %7376 = vmatpush1.msra.mxu0 0.0
      %7377 = vmatprep.subr.mxu0 0.0
      %7378 = vmatpush1.msra.mxu0 0.0
      %7379 = vmatprep.subr.mxu0 0.0
      %7380 = vmatpush1.msra.mxu0 0.0
      %7381 = vmatprep.subr.mxu0 0.0
      %7382 = vmatpush1.msra.mxu0 0.0
      %7383 = vmatprep.subr.mxu0 0.0
      %7384 = vmatpush1.msra.mxu0 0.0
      %7385 = vmatprep.subr.mxu0 0.0
      %7386 = vmatpush1.msra.mxu0 0.0
      %7387 = vmatprep.subr.mxu0 0.0
      %7388 = vmatpush1.msra.mxu0 0.0
      %7389 = vmatprep.subr.mxu0 0.0
      %7390 = vmatpush1.msra.mxu0 0.0
      %7391 = vmatprep.subr.mxu0 0.0
      %7392 = vmatpush1.msra.mxu0 0.0
      %7393 = vmatprep.subr.mxu0 0.0
      %7394 = vmatpush1.msra.mxu0 0.0
      %7395 = vmatprep.subr.mxu0 0.0
      %7396 = vmatpush1.msra.mxu0 0.0
      %7397 = vmatprep.subr.mxu0 0.0
      %7398 = vmatpush1.msra.mxu0 0.0
      %7399 = vmatprep.subr.mxu0 0.0
      %7400 = vmatpush1.msra.mxu0 0.0
      %7401 = vmatprep.mubr.f32.mxu0 0.0
      %7402 = vmatmul.mubr.f32.gmra.mrb[0].mxu0 %v7308
      %v7403 = vpop.f32.mrb[0].mxu0
      %v7404 = vadd.f32 %v7259, %v7403
      %v7405 = vpop.f32.mrb[0].mxu0
      %7406 = vmatprep.mubr.f32.mxu0 0.0
      %7407 = vmatmul.mubr.f32.gmra.mrb[0].mxu0 %v7311
      %v7408 = vpop.f32.mrb[0].mxu0
      %v7409 = vadd.f32 %v7264, %v7408
      %v7410 = vpop.f32.mrb[0].mxu0
      %7411 = vmatprep.mubr.f32.mxu0 0.0
      %7412 = vmatmul.mubr.f32.gmra.mrb[0].mxu0 %v7314
      %v7413 = vpop.f32.mrb[0].mxu0
      %v7414 = vadd.f32 %v7269, %v7413
      %v7415 = vpop.f32.mrb[0].mxu0
      %7416 = vmatprep.mubr.f32.mxu0 0.0
      %7417 = vmatmul.mubr.f32.gmra.mrb[0].mxu0 %v7317
      %v7418 = vpop.f32.mrb[0].mxu0
      %v7419 = vadd.f32 %v7274, %v7418
      %v7420 = vpop.f32.mrb[0].mxu0
      %7421 = vmatprep.mubr.f32.mxu0 0.0
      %7422 = vmatmul.mubr.f32.gmra.mrb[0].mxu0 %v7320
      %v7423 = vpop.f32.mrb[0].mxu0
      %v7424 = vadd.f32 %v7279, %v7423
      %v7425 = vpop.f32.mrb[0].mxu0
      %7426 = vmatprep.mubr.f32.mxu0 0.0
      %7427 = vmatmul.mubr.f32.gmra.mrb[0].mxu0 %v7323
      %v7428 = vpop.f32.mrb[0].mxu0
      %v7429 = vadd.f32 %v7284, %v7428
      %v7430 = vpop.f32.mrb[0].mxu0
      %7431 = vmatprep.mubr.f32.mxu0 0.0
      %7432 = vmatmul.mubr.f32.gmra.mrb[0].mxu0 %v7326
      %v7433 = vpop.f32.mrb[0].mxu0
      %v7434 = vadd.f32 %v7289, %v7433
      %v7435 = vpop.f32.mrb[0].mxu0
      %7436 = vmatprep.mubr.f32.mxu0 0.0
      %7437 = vmatmul.mubr.f32.gmra.mrb[0].mxu0 %v7329
      %v7438 = vpop.f32.mrb[0].mxu0
      %v7439 = vadd.f32 %v7294, %v7438
      %v7440 = vpop.f32.mrb[0].mxu0
      %7441 = vmatprep.mubr.f32.mxu0 0.0
      %7442 = vmatmul.mubr.f32.gmra.mrb[0].mxu0 %v7332
      %v7443 = vpop.f32.mrb[0].mxu0
      %v7444 = vadd.f32 %v7299, %v7443
      %v7445 = vpop.f32.mrb[0].mxu0
      %7446 = vmatprep.mubr.f32.mxu0 0.0
      %7447 = vmatmul.mubr.f32.gmra.mrb[0].mxu0 %v7335
      %v7448 = vpop.f32.mrb[0].mxu0
      %v7449 = vadd.f32 %v7304, %v7448
      %v7450 = vpop.f32.mrb[0].mxu0
      %7451 = vdwg.mxu0
      %s7452 = scalar_lea.vmem %s5, 160
      %v7453 = vld [vmem:[%s7452] sm:$0xff]
      %v7454 = vld [vmem:[%s7452 + $0x8] sm:$0xff]
      %v7455 = vld [vmem:[%s7452 + $0x10] sm:$0xff]
      %v7456 = vld [vmem:[%s7452 + $0x18] sm:$0xff]
      %v7457 = vld [vmem:[%s7452 + $0x20] sm:$0xff]
      %v7458 = vld [vmem:[%s7452 + $0x28] sm:$0xff]
      %v7459 = vld [vmem:[%s7452 + $0x30] sm:$0xff]
      %v7460 = vld [vmem:[%s7452 + $0x38] sm:$0xff]
      %v7461 = vld [vmem:[%s7452 + $0x40] sm:$0xff]
      %v7462 = vld [vmem:[%s7452 + $0x48] sm:$0xff]
      %7463 = vrot.lane.b32.xlu0 %v7097, 126
      %v7464 = vpop.permute.xlu0 %7463
      %7465 = vrot.lane.b32.xlu0 %v7102, 126
      %v7466 = vpop.permute.xlu0 %7465
      %7467 = vrot.lane.b32.xlu0 %v7107, 126
      %v7468 = vpop.permute.xlu0 %7467
      %7469 = vrot.lane.b32.xlu0 %v7112, 126
      %v7470 = vpop.permute.xlu0 %7469
      %7471 = vrot.lane.b32.xlu0 %v7117, 126
      %v7472 = vpop.permute.xlu0 %7471
      %v7479 = vsel %vm7161, %v7453, 0
      %v7482 = vsel %vm7161, %v7454, 0
      %v7485 = vsel %vm7161, %v7455, 0
      %v7488 = vsel %vm7161, %v7456, 0
      %v7491 = vsel %vm7161, %v7457, 0
      %v7494 = vsel %vm7161, %v7458, 0
      %v7497 = vsel %vm7161, %v7459, 0
      %v7500 = vsel %vm7161, %v7460, 0
      %v7503 = vsel %vm7161, %v7461, 0
      %v7506 = vsel %vm7161, %v7462, 0
      %7508 = vmatprep.subr.mxu0 0.0
      %7509 = vmatpush1.msra.mxu0 %v7464
      %7510 = vmatprep.subr.mxu0 0.0
      %7511 = vmatpush1.msra.mxu0 %v7466
      %7512 = vmatprep.subr.mxu0 0.0
      %7513 = vmatpush1.msra.mxu0 %v7468
      %7514 = vmatprep.subr.mxu0 0.0
      %7515 = vmatpush1.msra.mxu0 %v7470
      %7516 = vmatprep.subr.mxu0 0.0
      %7517 = vmatpush1.msra.mxu0 %v7472
      %7518 = vmatprep.subr.mxu0 0.0
      %7519 = vmatpush1.msra.mxu0 0.0
      %7520 = vmatprep.subr.mxu0 0.0
      %7521 = vmatpush1.msra.mxu0 0.0
      %7522 = vmatprep.subr.mxu0 0.0
      %7523 = vmatpush1.msra.mxu0 0.0
      %7524 = vmatprep.subr.mxu0 0.0
      %7525 = vmatpush1.msra.mxu0 0.0
      %7526 = vmatprep.subr.mxu0 0.0
      %7527 = vmatpush1.msra.mxu0 0.0
      %7528 = vmatprep.subr.mxu0 0.0
      %7529 = vmatpush1.msra.mxu0 0.0
      %7530 = vmatprep.subr.mxu0 0.0
      %7531 = vmatpush1.msra.mxu0 0.0
      %7532 = vmatprep.subr.mxu0 0.0
      %7533 = vmatpush1.msra.mxu0 0.0
      %7534 = vmatprep.subr.mxu0 0.0
      %7535 = vmatpush1.msra.mxu0 0.0
      %7536 = vmatprep.subr.mxu0 0.0
      %7537 = vmatpush1.msra.mxu0 0.0
      %7538 = vmatprep.subr.mxu0 0.0
      %7539 = vmatpush1.msra.mxu0 0.0
      %7540 = vmatprep.subr.mxu0 0.0
      %7541 = vmatpush1.msra.mxu0 0.0
      %7542 = vmatprep.subr.mxu0 0.0
      %7543 = vmatpush1.msra.mxu0 0.0
      %7544 = vmatprep.subr.mxu0 0.0
      %7545 = vmatpush1.msra.mxu0 0.0
      %7546 = vmatprep.subr.mxu0 0.0
      %7547 = vmatpush1.msra.mxu0 0.0
      %7548 = vmatprep.subr.mxu0 0.0
      %7549 = vmatpush1.msra.mxu0 0.0
      %7550 = vmatprep.subr.mxu0 0.0
      %7551 = vmatpush1.msra.mxu0 0.0
      %7552 = vmatprep.subr.mxu0 0.0
      %7553 = vmatpush1.msra.mxu0 0.0
      %7554 = vmatprep.subr.mxu0 0.0
      %7555 = vmatpush1.msra.mxu0 0.0
      %7556 = vmatprep.subr.mxu0 0.0
      %7557 = vmatpush1.msra.mxu0 0.0
      %7558 = vmatprep.subr.mxu0 0.0
      %7559 = vmatpush1.msra.mxu0 0.0
      %7560 = vmatprep.subr.mxu0 0.0
      %7561 = vmatpush1.msra.mxu0 0.0
      %7562 = vmatprep.subr.mxu0 0.0
      %7563 = vmatpush1.msra.mxu0 0.0
      %7564 = vmatprep.subr.mxu0 0.0
      %7565 = vmatpush1.msra.mxu0 0.0
      %7566 = vmatprep.subr.mxu0 0.0
      %7567 = vmatpush1.msra.mxu0 0.0
      %7568 = vmatprep.subr.mxu0 0.0
      %7569 = vmatpush1.msra.mxu0 0.0
      %7570 = vmatprep.subr.mxu0 0.0
      %7571 = vmatpush1.msra.mxu0 0.0
      %7572 = vmatprep.mubr.f32.mxu0 0.0
      %7573 = vmatmul.mubr.f32.gmra.mrb[0].mxu0 %v7479
      %v7574 = vpop.f32.mrb[0].mxu0
      %v7575 = vadd.f32 0.0, %v7574
      %v7576 = vpop.f32.mrb[0].mxu0
      %7577 = vmatprep.mubr.f32.mxu0 0.0
      %7578 = vmatmul.mubr.f32.gmra.mrb[0].mxu0 %v7482
      %v7579 = vpop.f32.mrb[0].mxu0
      %v7580 = vadd.f32 0.0, %v7579
      %v7581 = vpop.f32.mrb[0].mxu0
      %7582 = vmatprep.mubr.f32.mxu0 0.0
      %7583 = vmatmul.mubr.f32.gmra.mrb[0].mxu0 %v7485
      %v7584 = vpop.f32.mrb[0].mxu0
      %v7585 = vadd.f32 0.0, %v7584
      %v7586 = vpop.f32.mrb[0].mxu0
      %7587 = vmatprep.mubr.f32.mxu0 0.0
      %7588 = vmatmul.mubr.f32.gmra.mrb[0].mxu0 %v7488
      %v7589 = vpop.f32.mrb[0].mxu0
      %v7590 = vadd.f32 0.0, %v7589
      %v7591 = vpop.f32.mrb[0].mxu0
      %7592 = vmatprep.mubr.f32.mxu0 0.0
      %7593 = vmatmul.mubr.f32.gmra.mrb[0].mxu0 %v7491
      %v7594 = vpop.f32.mrb[0].mxu0
      %v7595 = vadd.f32 0.0, %v7594
      %v7596 = vpop.f32.mrb[0].mxu0
      %7597 = vmatprep.mubr.f32.mxu0 0.0
      %7598 = vmatmul.mubr.f32.gmra.mrb[0].mxu0 %v7494
      %v7599 = vpop.f32.mrb[0].mxu0
      %v7600 = vadd.f32 0.0, %v7599
      %v7601 = vpop.f32.mrb[0].mxu0
      %7602 = vmatprep.mubr.f32.mxu0 0.0
      %7603 = vmatmul.mubr.f32.gmra.mrb[0].mxu0 %v7497
      %v7604 = vpop.f32.mrb[0].mxu0
      %v7605 = vadd.f32 0.0, %v7604
      %v7606 = vpop.f32.mrb[0].mxu0
      %7607 = vmatprep.mubr.f32.mxu0 0.0
      %7608 = vmatmul.mubr.f32.gmra.mrb[0].mxu0 %v7500
      %v7609 = vpop.f32.mrb[0].mxu0
      %v7610 = vadd.f32 0.0, %v7609
      %v7611 = vpop.f32.mrb[0].mxu0
      %7612 = vmatprep.mubr.f32.mxu0 0.0
      %7613 = vmatmul.mubr.f32.gmra.mrb[0].mxu0 %v7503
      %v7614 = vpop.f32.mrb[0].mxu0
      %v7615 = vadd.f32 0.0, %v7614
      %v7616 = vpop.f32.mrb[0].mxu0
      %7617 = vmatprep.mubr.f32.mxu0 0.0
      %7618 = vmatmul.mubr.f32.gmra.mrb[0].mxu0 %v7506
      %v7619 = vpop.f32.mrb[0].mxu0
      %v7620 = vadd.f32 0.0, %v7619
      %v7621 = vpop.f32.mrb[0].mxu0
      %7622 = vdwg.mxu0
      %v7623 = vadd.f32 %v7404, %v7575
      %v7624 = vadd.f32 %v7409, %v7580
      %v7625 = vadd.f32 %v7414, %v7585
      %v7626 = vadd.f32 %v7419, %v7590
      %v7627 = vadd.f32 %v7424, %v7595
      %v7628 = vadd.f32 %v7429, %v7600
      %v7629 = vadd.f32 %v7434, %v7605
      %v7630 = vadd.f32 %v7439, %v7610
      %v7631 = vadd.f32 %v7444, %v7615
      %v7632 = vadd.f32 %v7449, %v7620
      %s7633 = scalar_lea.vmem %s5, 240
      %v7634 = vld [vmem:[%s7633] sm:$0xff]
      %v7635 = vld [vmem:[%s7633 + $0x8] sm:$0xff]
      %v7636 = vld [vmem:[%s7633 + $0x10] sm:$0xff]
      %v7637 = vld [vmem:[%s7633 + $0x18] sm:$0xff]
      %v7638 = vld [vmem:[%s7633 + $0x20] sm:$0xff]
      %v7639 = vld [vmem:[%s7633 + $0x28] sm:$0xff]
      %v7640 = vld [vmem:[%s7633 + $0x30] sm:$0xff]
      %v7641 = vld [vmem:[%s7633 + $0x38] sm:$0xff]
      %v7642 = vld [vmem:[%s7633 + $0x40] sm:$0xff]
      %v7643 = vld [vmem:[%s7633 + $0x48] sm:$0xff]
      %7644 = vrot.lane.b32.xlu0 %v7097, 125
      %v7645 = vpop.permute.xlu0 %7644
      %7646 = vrot.lane.b32.xlu0 %v7102, 125
      %v7647 = vpop.permute.xlu0 %7646
      %7648 = vrot.lane.b32.xlu0 %v7107, 125
      %v7649 = vpop.permute.xlu0 %7648
      %7650 = vrot.lane.b32.xlu0 %v7112, 125
      %v7651 = vpop.permute.xlu0 %7650
      %7652 = vrot.lane.b32.xlu0 %v7117, 125
      %v7653 = vpop.permute.xlu0 %7652
      %v7660 = vsel %vm7161, %v7634, 0
      %v7663 = vsel %vm7161, %v7635, 0
      %v7666 = vsel %vm7161, %v7636, 0
      %v7669 = vsel %vm7161, %v7637, 0
      %v7672 = vsel %vm7161, %v7638, 0
      %v7675 = vsel %vm7161, %v7639, 0
      %v7678 = vsel %vm7161, %v7640, 0
      %v7681 = vsel %vm7161, %v7641, 0
      %v7684 = vsel %vm7161, %v7642, 0
      %v7687 = vsel %vm7161, %v7643, 0
      %7689 = vmatprep.subr.mxu0 0.0
      %7690 = vmatpush1.msra.mxu0 %v7645
      %7691 = vmatprep.subr.mxu0 0.0
      %7692 = vmatpush1.msra.mxu0 %v7647
      %7693 = vmatprep.subr.mxu0 0.0
      %7694 = vmatpush1.msra.mxu0 %v7649
      %7695 = vmatprep.subr.mxu0 0.0
      %7696 = vmatpush1.msra.mxu0 %v7651
      %7697 = vmatprep.subr.mxu0 0.0
      %7698 = vmatpush1.msra.mxu0 %v7653
      %7699 = vmatprep.subr.mxu0 0.0
      %7700 = vmatpush1.msra.mxu0 0.0
      %7701 = vmatprep.subr.mxu0 0.0
      %7702 = vmatpush1.msra.mxu0 0.0
      %7703 = vmatprep.subr.mxu0 0.0
      %7704 = vmatpush1.msra.mxu0 0.0
      %7705 = vmatprep.subr.mxu0 0.0
      %7706 = vmatpush1.msra.mxu0 0.0
      %7707 = vmatprep.subr.mxu0 0.0
      %7708 = vmatpush1.msra.mxu0 0.0
      %7709 = vmatprep.subr.mxu0 0.0
      %7710 = vmatpush1.msra.mxu0 0.0
      %7711 = vmatprep.subr.mxu0 0.0
      %7712 = vmatpush1.msra.mxu0 0.0
      %7713 = vmatprep.subr.mxu0 0.0
      %7714 = vmatpush1.msra.mxu0 0.0
      %7715 = vmatprep.subr.mxu0 0.0
      %7716 = vmatpush1.msra.mxu0 0.0
      %7717 = vmatprep.subr.mxu0 0.0
      %7718 = vmatpush1.msra.mxu0 0.0
      %7719 = vmatprep.subr.mxu0 0.0
      %7720 = vmatpush1.msra.mxu0 0.0
      %7721 = vmatprep.subr.mxu0 0.0
      %7722 = vmatpush1.msra.mxu0 0.0
      %7723 = vmatprep.subr.mxu0 0.0
      %7724 = vmatpush1.msra.mxu0 0.0
      %7725 = vmatprep.subr.mxu0 0.0
      %7726 = vmatpush1.msra.mxu0 0.0
      %7727 = vmatprep.subr.mxu0 0.0
      %7728 = vmatpush1.msra.mxu0 0.0
      %7729 = vmatprep.subr.mxu0 0.0
      %7730 = vmatpush1.msra.mxu0 0.0
      %7731 = vmatprep.subr.mxu0 0.0
      %7732 = vmatpush1.msra.mxu0 0.0
      %7733 = vmatprep.subr.mxu0 0.0
      %7734 = vmatpush1.msra.mxu0 0.0
      %7735 = vmatprep.subr.mxu0 0.0
      %7736 = vmatpush1.msra.mxu0 0.0
      %7737 = vmatprep.subr.mxu0 0.0
      %7738 = vmatpush1.msra.mxu0 0.0
      %7739 = vmatprep.subr.mxu0 0.0
      %7740 = vmatpush1.msra.mxu0 0.0
      %7741 = vmatprep.subr.mxu0 0.0
      %7742 = vmatpush1.msra.mxu0 0.0
      %7743 = vmatprep.subr.mxu0 0.0
      %7744 = vmatpush1.msra.mxu0 0.0
      %7745 = vmatprep.subr.mxu0 0.0
      %7746 = vmatpush1.msra.mxu0 0.0
      %7747 = vmatprep.subr.mxu0 0.0
      %7748 = vmatpush1.msra.mxu0 0.0
      %7749 = vmatprep.subr.mxu0 0.0
      %7750 = vmatpush1.msra.mxu0 0.0
      %7751 = vmatprep.subr.mxu0 0.0
      %7752 = vmatpush1.msra.mxu0 0.0
      %7753 = vmatprep.mubr.f32.mxu0 0.0
      %7754 = vmatmul.mubr.f32.gmra.mrb[0].mxu0 %v7660
      %v7755 = vpop.f32.mrb[0].mxu0
      %v7756 = vadd.f32 0.0, %v7755
      %v7757 = vpop.f32.mrb[0].mxu0
      %7758 = vmatprep.mubr.f32.mxu0 0.0
      %7759 = vmatmul.mubr.f32.gmra.mrb[0].mxu0 %v7663
      %v7760 = vpop.f32.mrb[0].mxu0
      %v7761 = vadd.f32 0.0, %v7760
      %v7762 = vpop.f32.mrb[0].mxu0
      %7763 = vmatprep.mubr.f32.mxu0 0.0
      %7764 = vmatmul.mubr.f32.gmra.mrb[0].mxu0 %v7666
      %v7765 = vpop.f32.mrb[0].mxu0
      %v7766 = vadd.f32 0.0, %v7765
      %v7767 = vpop.f32.mrb[0].mxu0
      %7768 = vmatprep.mubr.f32.mxu0 0.0
      %7769 = vmatmul.mubr.f32.gmra.mrb[0].mxu0 %v7669
      %v7770 = vpop.f32.mrb[0].mxu0
      %v7771 = vadd.f32 0.0, %v7770
      %v7772 = vpop.f32.mrb[0].mxu0
      %7773 = vmatprep.mubr.f32.mxu0 0.0
      %7774 = vmatmul.mubr.f32.gmra.mrb[0].mxu0 %v7672
      %v7775 = vpop.f32.mrb[0].mxu0
      %v7776 = vadd.f32 0.0, %v7775
      %v7777 = vpop.f32.mrb[0].mxu0
      %7778 = vmatprep.mubr.f32.mxu0 0.0
      %7779 = vmatmul.mubr.f32.gmra.mrb[0].mxu0 %v7675
      %v7780 = vpop.f32.mrb[0].mxu0
      %v7781 = vadd.f32 0.0, %v7780
      %v7782 = vpop.f32.mrb[0].mxu0
      %7783 = vmatprep.mubr.f32.mxu0 0.0
      %7784 = vmatmul.mubr.f32.gmra.mrb[0].mxu0 %v7678
      %v7785 = vpop.f32.mrb[0].mxu0
      %v7786 = vadd.f32 0.0, %v7785
      %v7787 = vpop.f32.mrb[0].mxu0
      %7788 = vmatprep.mubr.f32.mxu0 0.0
      %7789 = vmatmul.mubr.f32.gmra.mrb[0].mxu0 %v7681
      %v7790 = vpop.f32.mrb[0].mxu0
      %v7791 = vadd.f32 0.0, %v7790
      %v7792 = vpop.f32.mrb[0].mxu0
      %7793 = vmatprep.mubr.f32.mxu0 0.0
      %7794 = vmatmul.mubr.f32.gmra.mrb[0].mxu0 %v7684
      %v7795 = vpop.f32.mrb[0].mxu0
      %v7796 = vadd.f32 0.0, %v7795
      %v7797 = vpop.f32.mrb[0].mxu0
      %7798 = vmatprep.mubr.f32.mxu0 0.0
      %7799 = vmatmul.mubr.f32.gmra.mrb[0].mxu0 %v7687
      %v7800 = vpop.f32.mrb[0].mxu0
      %v7801 = vadd.f32 0.0, %v7800
      %v7802 = vpop.f32.mrb[0].mxu0
      %7803 = vdwg.mxu0
      %v7804 = vadd.f32 %v7623, %v7756
      %v7805 = vadd.f32 %v7624, %v7761
      %v7806 = vadd.f32 %v7625, %v7766
      %v7807 = vadd.f32 %v7626, %v7771
      %v7808 = vadd.f32 %v7627, %v7776
      %v7809 = vadd.f32 %v7628, %v7781
      %v7810 = vadd.f32 %v7629, %v7786
      %v7811 = vadd.f32 %v7630, %v7791
      %v7812 = vadd.f32 %v7631, %v7796
      %v7813 = vadd.f32 %v7632, %v7801
      %s7814 = scalar_lea.vmem %s5, 320
      %v7815 = vld [vmem:[%s7814] sm:$0xff]
      %v7816 = vld [vmem:[%s7814 + $0x8] sm:$0xff]
      %v7817 = vld [vmem:[%s7814 + $0x10] sm:$0xff]
      %v7818 = vld [vmem:[%s7814 + $0x18] sm:$0xff]
      %v7819 = vld [vmem:[%s7814 + $0x20] sm:$0xff]
      %v7820 = vld [vmem:[%s7814 + $0x28] sm:$0xff]
      %v7821 = vld [vmem:[%s7814 + $0x30] sm:$0xff]
      %v7822 = vld [vmem:[%s7814 + $0x38] sm:$0xff]
      %v7823 = vld [vmem:[%s7814 + $0x40] sm:$0xff]
      %v7824 = vld [vmem:[%s7814 + $0x48] sm:$0xff]
      %7825 = vrot.lane.b32.xlu0 %v7097, 124
      %v7826 = vpop.permute.xlu0 %7825
      %7827 = vrot.lane.b32.xlu0 %v7102, 124
      %v7828 = vpop.permute.xlu0 %7827
      %7829 = vrot.lane.b32.xlu0 %v7107, 124
      %v7830 = vpop.permute.xlu0 %7829
      %7831 = vrot.lane.b32.xlu0 %v7112, 124
      %v7832 = vpop.permute.xlu0 %7831
      %7833 = vrot.lane.b32.xlu0 %v7117, 124
      %v7834 = vpop.permute.xlu0 %7833
      %v7841 = vsel %vm7161, %v7815, 0
      %v7844 = vsel %vm7161, %v7816, 0
      %v7847 = vsel %vm7161, %v7817, 0
      %v7850 = vsel %vm7161, %v7818, 0
      %v7853 = vsel %vm7161, %v7819, 0
      %v7856 = vsel %vm7161, %v7820, 0
      %v7859 = vsel %vm7161, %v7821, 0
      %v7862 = vsel %vm7161, %v7822, 0
      %v7865 = vsel %vm7161, %v7823, 0
      %v7868 = vsel %vm7161, %v7824, 0
      %7870 = vmatprep.subr.mxu0 0.0
      %7871 = vmatpush1.msra.mxu0 %v7826
      %7872 = vmatprep.subr.mxu0 0.0
      %7873 = vmatpush1.msra.mxu0 %v7828
      %7874 = vmatprep.subr.mxu0 0.0
      %7875 = vmatpush1.msra.mxu0 %v7830
      %7876 = vmatprep.subr.mxu0 0.0
      %7877 = vmatpush1.msra.mxu0 %v7832
      %7878 = vmatprep.subr.mxu0 0.0
      %7879 = vmatpush1.msra.mxu0 %v7834
      %7880 = vmatprep.subr.mxu0 0.0
      %7881 = vmatpush1.msra.mxu0 0.0
      %7882 = vmatprep.subr.mxu0 0.0
      %7883 = vmatpush1.msra.mxu0 0.0
      %7884 = vmatprep.subr.mxu0 0.0
      %7885 = vmatpush1.msra.mxu0 0.0
      %7886 = vmatprep.subr.mxu0 0.0
      %7887 = vmatpush1.msra.mxu0 0.0
      %7888 = vmatprep.subr.mxu0 0.0
      %7889 = vmatpush1.msra.mxu0 0.0
      %7890 = vmatprep.subr.mxu0 0.0
      %7891 = vmatpush1.msra.mxu0 0.0
      %7892 = vmatprep.subr.mxu0 0.0
      %7893 = vmatpush1.msra.mxu0 0.0
      %7894 = vmatprep.subr.mxu0 0.0
      %7895 = vmatpush1.msra.mxu0 0.0
      %7896 = vmatprep.subr.mxu0 0.0
      %7897 = vmatpush1.msra.mxu0 0.0
      %7898 = vmatprep.subr.mxu0 0.0
      %7899 = vmatpush1.msra.mxu0 0.0
      %7900 = vmatprep.subr.mxu0 0.0
      %7901 = vmatpush1.msra.mxu0 0.0
      %7902 = vmatprep.subr.mxu0 0.0
      %7903 = vmatpush1.msra.mxu0 0.0
      %7904 = vmatprep.subr.mxu0 0.0
      %7905 = vmatpush1.msra.mxu0 0.0
      %7906 = vmatprep.subr.mxu0 0.0
      %7907 = vmatpush1.msra.mxu0 0.0
      %7908 = vmatprep.subr.mxu0 0.0
      %7909 = vmatpush1.msra.mxu0 0.0
      %7910 = vmatprep.subr.mxu0 0.0
      %7911 = vmatpush1.msra.mxu0 0.0
      %7912 = vmatprep.subr.mxu0 0.0
      %7913 = vmatpush1.msra.mxu0 0.0
      %7914 = vmatprep.subr.mxu0 0.0
      %7915 = vmatpush1.msra.mxu0 0.0
      %7916 = vmatprep.subr.mxu0 0.0
      %7917 = vmatpush1.msra.mxu0 0.0
      %7918 = vmatprep.subr.mxu0 0.0
      %7919 = vmatpush1.msra.mxu0 0.0
      %7920 = vmatprep.subr.mxu0 0.0
      %7921 = vmatpush1.msra.mxu0 0.0
      %7922 = vmatprep.subr.mxu0 0.0
      %7923 = vmatpush1.msra.mxu0 0.0
      %7924 = vmatprep.subr.mxu0 0.0
      %7925 = vmatpush1.msra.mxu0 0.0
      %7926 = vmatprep.subr.mxu0 0.0
      %7927 = vmatpush1.msra.mxu0 0.0
      %7928 = vmatprep.subr.mxu0 0.0
      %7929 = vmatpush1.msra.mxu0 0.0
      %7930 = vmatprep.subr.mxu0 0.0
      %7931 = vmatpush1.msra.mxu0 0.0
      %7932 = vmatprep.subr.mxu0 0.0
      %7933 = vmatpush1.msra.mxu0 0.0
      %7934 = vmatprep.mubr.f32.mxu0 0.0
      %7935 = vmatmul.mubr.f32.gmra.mrb[0].mxu0 %v7841
      %v7936 = vpop.f32.mrb[0].mxu0
      %v7937 = vadd.f32 0.0, %v7936
      %v7938 = vpop.f32.mrb[0].mxu0
      %7939 = vmatprep.mubr.f32.mxu0 0.0
      %7940 = vmatmul.mubr.f32.gmra.mrb[0].mxu0 %v7844
      %v7941 = vpop.f32.mrb[0].mxu0
      %v7942 = vadd.f32 0.0, %v7941
      %v7943 = vpop.f32.mrb[0].mxu0
      %7944 = vmatprep.mubr.f32.mxu0 0.0
      %7945 = vmatmul.mubr.f32.gmra.mrb[0].mxu0 %v7847
      %v7946 = vpop.f32.mrb[0].mxu0
      %v7947 = vadd.f32 0.0, %v7946
      %v7948 = vpop.f32.mrb[0].mxu0
      %7949 = vmatprep.mubr.f32.mxu0 0.0
      %7950 = vmatmul.mubr.f32.gmra.mrb[0].mxu0 %v7850
      %v7951 = vpop.f32.mrb[0].mxu0
      %v7952 = vadd.f32 0.0, %v7951
      %v7953 = vpop.f32.mrb[0].mxu0
      %7954 = vmatprep.mubr.f32.mxu0 0.0
      %7955 = vmatmul.mubr.f32.gmra.mrb[0].mxu0 %v7853
      %v7956 = vpop.f32.mrb[0].mxu0
      %v7957 = vadd.f32 0.0, %v7956
      %v7958 = vpop.f32.mrb[0].mxu0
      %7959 = vmatprep.mubr.f32.mxu0 0.0
      %7960 = vmatmul.mubr.f32.gmra.mrb[0].mxu0 %v7856
      %v7961 = vpop.f32.mrb[0].mxu0
      %v7962 = vadd.f32 0.0, %v7961
      %v7963 = vpop.f32.mrb[0].mxu0
      %7964 = vmatprep.mubr.f32.mxu0 0.0
      %7965 = vmatmul.mubr.f32.gmra.mrb[0].mxu0 %v7859
      %v7966 = vpop.f32.mrb[0].mxu0
      %v7967 = vadd.f32 0.0, %v7966
      %v7968 = vpop.f32.mrb[0].mxu0
      %7969 = vmatprep.mubr.f32.mxu0 0.0
      %7970 = vmatmul.mubr.f32.gmra.mrb[0].mxu0 %v7862
      %v7971 = vpop.f32.mrb[0].mxu0
      %v7972 = vadd.f32 0.0, %v7971
      %v7973 = vpop.f32.mrb[0].mxu0
      %7974 = vmatprep.mubr.f32.mxu0 0.0
      %7975 = vmatmul.mubr.f32.gmra.mrb[0].mxu0 %v7865
      %v7976 = vpop.f32.mrb[0].mxu0
      %v7977 = vadd.f32 0.0, %v7976
      %v7978 = vpop.f32.mrb[0].mxu0
      %7979 = vmatprep.mubr.f32.mxu0 0.0
      %7980 = vmatmul.mubr.f32.gmra.mrb[0].mxu0 %v7868
      %v7981 = vpop.f32.mrb[0].mxu0
      %v7982 = vadd.f32 0.0, %v7981
      %v7983 = vpop.f32.mrb[0].mxu0
      %7984 = vdwg.mxu0
      %v7985 = vadd.f32 %v7804, %v7937
      %v7986 = vadd.f32 %v7805, %v7942
      %v7987 = vadd.f32 %v7806, %v7947
      %v7988 = vadd.f32 %v7807, %v7952
      %v7989 = vadd.f32 %v7808, %v7957
      %v7990 = vadd.f32 %v7809, %v7962
      %v7991 = vadd.f32 %v7810, %v7967
      %v7992 = vadd.f32 %v7811, %v7972
      %v7993 = vadd.f32 %v7812, %v7977
      %v7994 = vadd.f32 %v7813, %v7982
      %v7995 = vld [vmem:[%s6] sm:$0xff]
      %v7996 = vld [vmem:[%s6 + $0x8] sm:$0xff]
      %v7997 = vld [vmem:[%s6 + $0x10] sm:$0xff]
      %v7998 = vld [vmem:[%s6 + $0x18] sm:$0xff]
      %v7999 = vld [vmem:[%s6 + $0x20] sm:$0xff]
      %v8000 = vld [vmem:[%s6 + $0x28] sm:$0xff]
      %v8001 = vld [vmem:[%s6 + $0x30] sm:$0xff]
      %v8002 = vld [vmem:[%s6 + $0x38] sm:$0xff]
      %v8003 = vld [vmem:[%s6 + $0x40] sm:$0xff]
      %v8004 = vld [vmem:[%s6 + $0x48] sm:$0xff]
      %8006 = vset.pattern.permute.xlu0 0
      %8007 = vperm.xlu0 %8006, %v7995
      %v8008 = vpop.permute.xlu0 %8007
      %8011 = vset.pattern.permute.xlu0 0
      %8012 = vperm.xlu0 %8011, %v7996
      %v8013 = vpop.permute.xlu0 %8012
      %8016 = vset.pattern.permute.xlu0 0
      %8017 = vperm.xlu0 %8016, %v7997
      %v8018 = vpop.permute.xlu0 %8017
      %8021 = vset.pattern.permute.xlu0 0
      %8022 = vperm.xlu0 %8021, %v7998
      %v8023 = vpop.permute.xlu0 %8022
      %8026 = vset.pattern.permute.xlu0 0
      %8027 = vperm.xlu0 %8026, %v7999
      %v8028 = vpop.permute.xlu0 %8027
      %8031 = vset.pattern.permute.xlu0 0
      %8032 = vperm.xlu0 %8031, %v8000
      %v8033 = vpop.permute.xlu0 %8032
      %8036 = vset.pattern.permute.xlu0 0
      %8037 = vperm.xlu0 %8036, %v8001
      %v8038 = vpop.permute.xlu0 %8037
      %8041 = vset.pattern.permute.xlu0 0
      %8042 = vperm.xlu0 %8041, %v8002
      %v8043 = vpop.permute.xlu0 %8042
      %8046 = vset.pattern.permute.xlu0 0
      %8047 = vperm.xlu0 %8046, %v8003
      %v8048 = vpop.permute.xlu0 %8047
      %8051 = vset.pattern.permute.xlu0 0
      %8052 = vperm.xlu0 %8051, %v8004
      %v8053 = vpop.permute.xlu0 %8052
      %v8055 = vadd.f32 %v7985, %v8008
      %v8056 = vadd.f32 %v7986, %v8013
      %v8057 = vadd.f32 %v7987, %v8018
      %v8058 = vadd.f32 %v7988, %v8023
      %v8059 = vadd.f32 %v7989, %v8028
      %v8060 = vadd.f32 %v7990, %v8033
      %v8061 = vadd.f32 %v7991, %v8038
      %v8062 = vadd.f32 %v7992, %v8043
      %v8063 = vadd.f32 %v7993, %v8048
      %v8064 = vadd.f32 %v7994, %v8053
      %v8065 = vmax.f32 %v8055, 0.0
      %v8066 = vmax.f32 %v8056, 0.0
      %v8067 = vmax.f32 %v8057, 0.0
      %v8068 = vmax.f32 %v8058, 0.0
      %v8069 = vmax.f32 %v8059, 0.0
      %v8070 = vmax.f32 %v8060, 0.0
      %v8071 = vmax.f32 %v8061, 0.0
      %v8072 = vmax.f32 %v8062, 0.0
      %v8073 = vmax.f32 %v8063, 0.0
      %v8074 = vmax.f32 %v8064, 0.0
      %8085 = vrot.lane.b32.xlu0 %v8065, 127
      %v8086 = vpop.permute.xlu0 %8085
      %8087 = vrot.lane.b32.xlu0 %v8066, 127
      %v8088 = vpop.permute.xlu0 %8087
      %8089 = vrot.lane.b32.xlu0 %v8067, 127
      %v8090 = vpop.permute.xlu0 %8089
      %8091 = vrot.lane.b32.xlu0 %v8068, 127
      %v8092 = vpop.permute.xlu0 %8091
      %8093 = vrot.lane.b32.xlu0 %v8069, 127
      %v8094 = vpop.permute.xlu0 %8093
      %8095 = vrot.lane.b32.xlu0 %v8070, 127
      %v8096 = vpop.permute.xlu0 %8095
      %8097 = vrot.lane.b32.xlu0 %v8071, 127
      %v8098 = vpop.permute.xlu0 %8097
      %8099 = vrot.lane.b32.xlu0 %v8072, 127
      %v8100 = vpop.permute.xlu0 %8099
      %8101 = vrot.lane.b32.xlu0 %v8073, 127
      %v8102 = vpop.permute.xlu0 %8101
      %8103 = vrot.lane.b32.xlu0 %v8074, 127
      %v8104 = vpop.permute.xlu0 %8103
      %v8115 = vmax.f32 %v8065, %v8086
      %v8116 = vmax.f32 %v8066, %v8088
      %v8117 = vmax.f32 %v8067, %v8090
      %v8118 = vmax.f32 %v8068, %v8092
      %v8119 = vmax.f32 %v8069, %v8094
      %v8120 = vmax.f32 %v8070, %v8096
      %v8121 = vmax.f32 %v8071, %v8098
      %v8122 = vmax.f32 %v8072, %v8100
      %v8123 = vmax.f32 %v8073, %v8102
      %v8124 = vmax.f32 %v8074, %v8104
      %8125 = vrot.lane.b32.xlu0 %v8065, 126
      %v8126 = vpop.permute.xlu0 %8125
      %8127 = vrot.lane.b32.xlu0 %v8066, 126
      %v8128 = vpop.permute.xlu0 %8127
      %8129 = vrot.lane.b32.xlu0 %v8067, 126
      %v8130 = vpop.permute.xlu0 %8129
      %8131 = vrot.lane.b32.xlu0 %v8068, 126
      %v8132 = vpop.permute.xlu0 %8131
      %8133 = vrot.lane.b32.xlu0 %v8069, 126
      %v8134 = vpop.permute.xlu0 %8133
      %8135 = vrot.lane.b32.xlu0 %v8070, 126
      %v8136 = vpop.permute.xlu0 %8135
      %8137 = vrot.lane.b32.xlu0 %v8071, 126
      %v8138 = vpop.permute.xlu0 %8137
      %8139 = vrot.lane.b32.xlu0 %v8072, 126
      %v8140 = vpop.permute.xlu0 %8139
      %8141 = vrot.lane.b32.xlu0 %v8073, 126
      %v8142 = vpop.permute.xlu0 %8141
      %8143 = vrot.lane.b32.xlu0 %v8074, 126
      %v8144 = vpop.permute.xlu0 %8143
      %v8155 = vmax.f32 %v8115, %v8126
      %v8156 = vmax.f32 %v8116, %v8128
      %v8157 = vmax.f32 %v8117, %v8130
      %v8158 = vmax.f32 %v8118, %v8132
      %v8159 = vmax.f32 %v8119, %v8134
      %v8160 = vmax.f32 %v8120, %v8136
      %v8161 = vmax.f32 %v8121, %v8138
      %v8162 = vmax.f32 %v8122, %v8140
      %v8163 = vmax.f32 %v8123, %v8142
      %v8164 = vmax.f32 %v8124, %v8144
      %8165 = vrot.lane.b32.xlu0 %v8065, 125
      %v8166 = vpop.permute.xlu0 %8165
      %8167 = vrot.lane.b32.xlu0 %v8066, 125
      %v8168 = vpop.permute.xlu0 %8167
      %8169 = vrot.lane.b32.xlu0 %v8067, 125
      %v8170 = vpop.permute.xlu0 %8169
      %8171 = vrot.lane.b32.xlu0 %v8068, 125
      %v8172 = vpop.permute.xlu0 %8171
      %8173 = vrot.lane.b32.xlu0 %v8069, 125
      %v8174 = vpop.permute.xlu0 %8173
      %8175 = vrot.lane.b32.xlu0 %v8070, 125
      %v8176 = vpop.permute.xlu0 %8175
      %8177 = vrot.lane.b32.xlu0 %v8071, 125
      %v8178 = vpop.permute.xlu0 %8177
      %8179 = vrot.lane.b32.xlu0 %v8072, 125
      %v8180 = vpop.permute.xlu0 %8179
      %8181 = vrot.lane.b32.xlu0 %v8073, 125
      %v8182 = vpop.permute.xlu0 %8181
      %8183 = vrot.lane.b32.xlu0 %v8074, 125
      %v8184 = vpop.permute.xlu0 %8183
      %v8195 = vmax.f32 %v8155, %v8166
      %v8196 = vmax.f32 %v8156, %v8168
      %v8197 = vmax.f32 %v8157, %v8170
      %v8198 = vmax.f32 %v8158, %v8172
      %v8199 = vmax.f32 %v8159, %v8174
      %v8200 = vmax.f32 %v8160, %v8176
      %v8201 = vmax.f32 %v8161, %v8178
      %v8202 = vmax.f32 %v8162, %v8180
      %v8203 = vmax.f32 %v8163, %v8182
      %v8204 = vmax.f32 %v8164, %v8184
      %8205 = vrot.lane.b32.xlu0 %v8065, 124
      %v8206 = vpop.permute.xlu0 %8205
      %8207 = vrot.lane.b32.xlu0 %v8066, 124
      %v8208 = vpop.permute.xlu0 %8207
      %8209 = vrot.lane.b32.xlu0 %v8067, 124
      %v8210 = vpop.permute.xlu0 %8209
      %8211 = vrot.lane.b32.xlu0 %v8068, 124
      %v8212 = vpop.permute.xlu0 %8211
      %8213 = vrot.lane.b32.xlu0 %v8069, 124
      %v8214 = vpop.permute.xlu0 %8213
      %8215 = vrot.lane.b32.xlu0 %v8070, 124
      %v8216 = vpop.permute.xlu0 %8215
      %8217 = vrot.lane.b32.xlu0 %v8071, 124
      %v8218 = vpop.permute.xlu0 %8217
      %8219 = vrot.lane.b32.xlu0 %v8072, 124
      %v8220 = vpop.permute.xlu0 %8219
      %8221 = vrot.lane.b32.xlu0 %v8073, 124
      %v8222 = vpop.permute.xlu0 %8221
      %8223 = vrot.lane.b32.xlu0 %v8074, 124
      %v8224 = vpop.permute.xlu0 %8223
      %v8235 = vmax.f32 %v8195, %v8206
      %v8236 = vmax.f32 %v8196, %v8208
      %v8237 = vmax.f32 %v8197, %v8210
      %v8238 = vmax.f32 %v8198, %v8212
      %v8239 = vmax.f32 %v8199, %v8214
      %v8240 = vmax.f32 %v8200, %v8216
      %v8241 = vmax.f32 %v8201, %v8218
      %v8242 = vmax.f32 %v8202, %v8220
      %v8243 = vmax.f32 %v8203, %v8222
      %v8244 = vmax.f32 %v8204, %v8224
      %8245 = vrot.lane.b32.xlu0 %v8065, 123
      %v8246 = vpop.permute.xlu0 %8245
      %8247 = vrot.lane.b32.xlu0 %v8066, 123
      %v8248 = vpop.permute.xlu0 %8247
      %8249 = vrot.lane.b32.xlu0 %v8067, 123
      %v8250 = vpop.permute.xlu0 %8249
      %8251 = vrot.lane.b32.xlu0 %v8068, 123
      %v8252 = vpop.permute.xlu0 %8251
      %8253 = vrot.lane.b32.xlu0 %v8069, 123
      %v8254 = vpop.permute.xlu0 %8253
      %8255 = vrot.lane.b32.xlu0 %v8070, 123
      %v8256 = vpop.permute.xlu0 %8255
      %8257 = vrot.lane.b32.xlu0 %v8071, 123
      %v8258 = vpop.permute.xlu0 %8257
      %8259 = vrot.lane.b32.xlu0 %v8072, 123
      %v8260 = vpop.permute.xlu0 %8259
      %8261 = vrot.lane.b32.xlu0 %v8073, 123
      %v8262 = vpop.permute.xlu0 %8261
      %8263 = vrot.lane.b32.xlu0 %v8074, 123
      %v8264 = vpop.permute.xlu0 %8263
      %v8275 = vmax.f32 %v8235, %v8246
      %v8276 = vmax.f32 %v8236, %v8248
      %v8277 = vmax.f32 %v8237, %v8250
      %v8278 = vmax.f32 %v8238, %v8252
      %v8279 = vmax.f32 %v8239, %v8254
      %v8280 = vmax.f32 %v8240, %v8256
      %v8281 = vmax.f32 %v8241, %v8258
      %v8282 = vmax.f32 %v8242, %v8260
      %v8283 = vmax.f32 %v8243, %v8262
      %v8284 = vmax.f32 %v8244, %v8264
      %8285 = vrot.lane.b32.xlu0 %v8065, 122
      %v8286 = vpop.permute.xlu0 %8285
      %8287 = vrot.lane.b32.xlu0 %v8066, 122
      %v8288 = vpop.permute.xlu0 %8287
      %8289 = vrot.lane.b32.xlu0 %v8067, 122
      %v8290 = vpop.permute.xlu0 %8289
      %8291 = vrot.lane.b32.xlu0 %v8068, 122
      %v8292 = vpop.permute.xlu0 %8291
      %8293 = vrot.lane.b32.xlu0 %v8069, 122
      %v8294 = vpop.permute.xlu0 %8293
      %8295 = vrot.lane.b32.xlu0 %v8070, 122
      %v8296 = vpop.permute.xlu0 %8295
      %8297 = vrot.lane.b32.xlu0 %v8071, 122
      %v8298 = vpop.permute.xlu0 %8297
      %8299 = vrot.lane.b32.xlu0 %v8072, 122
      %v8300 = vpop.permute.xlu0 %8299
      %8301 = vrot.lane.b32.xlu0 %v8073, 122
      %v8302 = vpop.permute.xlu0 %8301
      %8303 = vrot.lane.b32.xlu0 %v8074, 122
      %v8304 = vpop.permute.xlu0 %8303
      %v8315 = vmax.f32 %v8275, %v8286
      %v8316 = vmax.f32 %v8276, %v8288
      %v8317 = vmax.f32 %v8277, %v8290
      %v8318 = vmax.f32 %v8278, %v8292
      %v8319 = vmax.f32 %v8279, %v8294
      %v8320 = vmax.f32 %v8280, %v8296
      %v8321 = vmax.f32 %v8281, %v8298
      %v8322 = vmax.f32 %v8282, %v8300
      %v8323 = vmax.f32 %v8283, %v8302
      %v8324 = vmax.f32 %v8284, %v8304
      %8325 = vrot.lane.b32.xlu0 %v8065, 121
      %v8326 = vpop.permute.xlu0 %8325
      %8327 = vrot.lane.b32.xlu0 %v8066, 121
      %v8328 = vpop.permute.xlu0 %8327
      %8329 = vrot.lane.b32.xlu0 %v8067, 121
      %v8330 = vpop.permute.xlu0 %8329
      %8331 = vrot.lane.b32.xlu0 %v8068, 121
      %v8332 = vpop.permute.xlu0 %8331
      %8333 = vrot.lane.b32.xlu0 %v8069, 121
      %v8334 = vpop.permute.xlu0 %8333
      %8335 = vrot.lane.b32.xlu0 %v8070, 121
      %v8336 = vpop.permute.xlu0 %8335
      %8337 = vrot.lane.b32.xlu0 %v8071, 121
      %v8338 = vpop.permute.xlu0 %8337
      %8339 = vrot.lane.b32.xlu0 %v8072, 121
      %v8340 = vpop.permute.xlu0 %8339
      %8341 = vrot.lane.b32.xlu0 %v8073, 121
      %v8342 = vpop.permute.xlu0 %8341
      %8343 = vrot.lane.b32.xlu0 %v8074, 121
      %v8344 = vpop.permute.xlu0 %8343
      %v8355 = vmax.f32 %v8315, %v8326
      %v8356 = vmax.f32 %v8316, %v8328
      %v8357 = vmax.f32 %v8317, %v8330
      %v8358 = vmax.f32 %v8318, %v8332
      %v8359 = vmax.f32 %v8319, %v8334
      %v8360 = vmax.f32 %v8320, %v8336
      %v8361 = vmax.f32 %v8321, %v8338
      %v8362 = vmax.f32 %v8322, %v8340
      %v8363 = vmax.f32 %v8323, %v8342
      %v8364 = vmax.f32 %v8324, %v8344
      %v8365 = vmul.u32 %v4988, 8
      %vm8366 = vcmp.eq.s32.totalorder %v4860, %v8365
      %vm8367 = vcmp.eq.s32.totalorder %v4861, %v8365
      %vm8368 = vcmp.eq.s32.totalorder %v4862, %v8365
      %vm8369 = vcmp.eq.s32.totalorder %v4863, %v8365
      %vm8370 = vcmp.eq.s32.totalorder %v4864, %v8365
      %vm8371 = vcmp.eq.s32.totalorder %v4865, %v8365
      %vm8372 = vcmp.eq.s32.totalorder %v4866, %v8365
      %v8373 = vsel %vm8366, 1, 0
      %v8374 = vsel %vm8367, 1, 0
      %v8375 = vsel %vm8368, 1, 0
      %v8376 = vsel %vm8369, 1, 0
      %v8377 = vsel %vm8370, 1, 0
      %v8378 = vsel %vm8371, 1, 0
      %v8379 = vsel %vm8372, 1, 0
      %v8380 = vcvt.s32.f32 %v8373
      %v8381 = vcvt.s32.f32 %v8374
      %v8382 = vcvt.s32.f32 %v8375
      %v8383 = vcvt.s32.f32 %v8376
      %v8384 = vcvt.s32.f32 %v8377
      %v8385 = vcvt.s32.f32 %v8378
      %v8386 = vcvt.s32.f32 %v8379
      %vm8387 = vcmask 416768
      %v8389 = vsel %vm8387, %v8355, 0
      %v8392 = vsel %vm8387, %v8356, 0
      %v8395 = vsel %vm8387, %v8357, 0
      %v8398 = vsel %vm8387, %v8358, 0
      %v8401 = vsel %vm8387, %v8359, 0
      %v8404 = vsel %vm8387, %v8360, 0
      %v8407 = vsel %vm8387, %v8361, 0
      %v8410 = vsel %vm8387, %v8362, 0
      %v8413 = vsel %vm8387, %v8363, 0
      %v8416 = vsel %vm8387, %v8364, 0
      %v8419 = vsel %vm440, %v8386, 0
      %8421 = vmatprep.subr.mxu0 0.0
      %8422 = vmatpush1.msra.mxu0 %v8380
      %8423 = vmatprep.subr.mxu0 0.0
      %8424 = vmatpush1.msra.mxu0 %v8381
      %8425 = vmatprep.subr.mxu0 0.0
      %8426 = vmatpush1.msra.mxu0 %v8382
      %8427 = vmatprep.subr.mxu0 0.0
      %8428 = vmatpush1.msra.mxu0 %v8383
      %8429 = vmatprep.subr.mxu0 0.0
      %8430 = vmatpush1.msra.mxu0 %v8384
      %8431 = vmatprep.subr.mxu0 0.0
      %8432 = vmatpush1.msra.mxu0 %v8385
      %8433 = vmatprep.subr.mxu0 0.0
      %8434 = vmatpush1.msra.mxu0 %v8419
      %8435 = vmatprep.subr.mxu0 0.0
      %8436 = vmatpush1.msra.mxu0 0.0
      %8437 = vmatprep.subr.mxu0 0.0
      %8438 = vmatpush1.msra.mxu0 0.0
      %8439 = vmatprep.subr.mxu0 0.0
      %8440 = vmatpush1.msra.mxu0 0.0
      %8441 = vmatprep.subr.mxu0 0.0
      %8442 = vmatpush1.msra.mxu0 0.0
      %8443 = vmatprep.subr.mxu0 0.0
      %8444 = vmatpush1.msra.mxu0 0.0
      %8445 = vmatprep.subr.mxu0 0.0
      %8446 = vmatpush1.msra.mxu0 0.0
      %8447 = vmatprep.subr.mxu0 0.0
      %8448 = vmatpush1.msra.mxu0 0.0
      %8449 = vmatprep.subr.mxu0 0.0
      %8450 = vmatpush1.msra.mxu0 0.0
      %8451 = vmatprep.subr.mxu0 0.0
      %8452 = vmatpush1.msra.mxu0 0.0
      %8453 = vmatprep.subr.mxu0 0.0
      %8454 = vmatpush1.msra.mxu0 0.0
      %8455 = vmatprep.subr.mxu0 0.0
      %8456 = vmatpush1.msra.mxu0 0.0
      %8457 = vmatprep.subr.mxu0 0.0
      %8458 = vmatpush1.msra.mxu0 0.0
      %8459 = vmatprep.subr.mxu0 0.0
      %8460 = vmatpush1.msra.mxu0 0.0
      %8461 = vmatprep.subr.mxu0 0.0
      %8462 = vmatpush1.msra.mxu0 0.0
      %8463 = vmatprep.subr.mxu0 0.0
      %8464 = vmatpush1.msra.mxu0 0.0
      %8465 = vmatprep.subr.mxu0 0.0
      %8466 = vmatpush1.msra.mxu0 0.0
      %8467 = vmatprep.subr.mxu0 0.0
      %8468 = vmatpush1.msra.mxu0 0.0
      %8469 = vmatprep.subr.mxu0 0.0
      %8470 = vmatpush1.msra.mxu0 0.0
      %8471 = vmatprep.subr.mxu0 0.0
      %8472 = vmatpush1.msra.mxu0 0.0
      %8473 = vmatprep.subr.mxu0 0.0
      %8474 = vmatpush1.msra.mxu0 0.0
      %8475 = vmatprep.subr.mxu0 0.0
      %8476 = vmatpush1.msra.mxu0 0.0
      %8477 = vmatprep.subr.mxu0 0.0
      %8478 = vmatpush1.msra.mxu0 0.0
      %8479 = vmatprep.subr.mxu0 0.0
      %8480 = vmatpush1.msra.mxu0 0.0
      %8481 = vmatprep.subr.mxu0 0.0
      %8482 = vmatpush1.msra.mxu0 0.0
      %8483 = vmatprep.subr.mxu0 0.0
      %8484 = vmatpush1.msra.mxu0 0.0
      %8485 = vmatprep.mubr.f32.mxu0 0.0
      %8486 = vmatmul.mubr.f32.gmra.mrb[0].mxu0 %v8389
      %v8487 = vpop.f32.mrb[0].mxu0
      %v8488 = vadd.f32 0.0, %v8487
      %v8489 = vpop.f32.mrb[0].mxu0
      %8490 = vmatprep.mubr.f32.mxu0 0.0
      %8491 = vmatmul.mubr.f32.gmra.mrb[0].mxu0 %v8392
      %v8492 = vpop.f32.mrb[0].mxu0
      %v8493 = vadd.f32 0.0, %v8492
      %v8494 = vpop.f32.mrb[0].mxu0
      %8495 = vmatprep.mubr.f32.mxu0 0.0
      %8496 = vmatmul.mubr.f32.gmra.mrb[0].mxu0 %v8395
      %v8497 = vpop.f32.mrb[0].mxu0
      %v8498 = vadd.f32 0.0, %v8497
      %v8499 = vpop.f32.mrb[0].mxu0
      %8500 = vmatprep.mubr.f32.mxu0 0.0
      %8501 = vmatmul.mubr.f32.gmra.mrb[0].mxu0 %v8398
      %v8502 = vpop.f32.mrb[0].mxu0
      %v8503 = vadd.f32 0.0, %v8502
      %v8504 = vpop.f32.mrb[0].mxu0
      %8505 = vmatprep.mubr.f32.mxu0 0.0
      %8506 = vmatmul.mubr.f32.gmra.mrb[0].mxu0 %v8401
      %v8507 = vpop.f32.mrb[0].mxu0
      %v8508 = vadd.f32 0.0, %v8507
      %v8509 = vpop.f32.mrb[0].mxu0
      %8510 = vmatprep.mubr.f32.mxu0 0.0
      %8511 = vmatmul.mubr.f32.gmra.mrb[0].mxu0 %v8404
      %v8512 = vpop.f32.mrb[0].mxu0
      %v8513 = vadd.f32 0.0, %v8512
      %v8514 = vpop.f32.mrb[0].mxu0
      %8515 = vmatprep.mubr.f32.mxu0 0.0
      %8516 = vmatmul.mubr.f32.gmra.mrb[0].mxu0 %v8407
      %v8517 = vpop.f32.mrb[0].mxu0
      %v8518 = vadd.f32 0.0, %v8517
      %v8519 = vpop.f32.mrb[0].mxu0
      %8520 = vmatprep.mubr.f32.mxu0 0.0
      %8521 = vmatmul.mubr.f32.gmra.mrb[0].mxu0 %v8410
      %v8522 = vpop.f32.mrb[0].mxu0
      %v8523 = vadd.f32 0.0, %v8522
      %v8524 = vpop.f32.mrb[0].mxu0
      %8525 = vmatprep.mubr.f32.mxu0 0.0
      %8526 = vmatmul.mubr.f32.gmra.mrb[0].mxu0 %v8413
      %v8527 = vpop.f32.mrb[0].mxu0
      %v8528 = vadd.f32 0.0, %v8527
      %v8529 = vpop.f32.mrb[0].mxu0
      %8530 = vmatprep.mubr.f32.mxu0 0.0
      %8531 = vmatmul.mubr.f32.gmra.mrb[0].mxu0 %v8416
      %v8532 = vpop.f32.mrb[0].mxu0
      %v8533 = vadd.f32 0.0, %v8532
      %v8534 = vpop.f32.mrb[0].mxu0
      %8535 = vdwg.mxu0
      %v8536 = vld [vmem:[%s8] sm:$0xff]
      %v8537 = vld [vmem:[%s8 + $0x8] sm:$0xff]
      %v8538 = vld [vmem:[%s8 + $0x10] sm:$0xff]
      %v8539 = vld [vmem:[%s8 + $0x18] sm:$0xff]
      %v8540 = vld [vmem:[%s8 + $0x20] sm:$0xff]
      %v8541 = vld [vmem:[%s8 + $0x28] sm:$0xff]
      %v8542 = vld [vmem:[%s8 + $0x30] sm:$0xff]
      %v8543 = vld [vmem:[%s8 + $0x38] sm:$0xff]
      %v8544 = vld [vmem:[%s8 + $0x40] sm:$0xff]
      %v8545 = vld [vmem:[%s8 + $0x48] sm:$0xff]
      %v8546 = vld [vmem:[%s8 + $0x50] sm:$0xff]
      %v8547 = vld [vmem:[%s8 + $0x58] sm:$0xff]
      %v8548 = vld [vmem:[%s8 + $0x60] sm:$0xff]
      %v8549 = vld [vmem:[%s8 + $0x68] sm:$0xff]
      %v8550 = vld [vmem:[%s8 + $0x70] sm:$0xff]
      %v8551 = vld [vmem:[%s8 + $0x78] sm:$0xff]
      %v8552 = vld [vmem:[%s8 + $0x80] sm:$0xff]
      %v8553 = vld [vmem:[%s8 + $0x88] sm:$0xff]
      %v8554 = vld [vmem:[%s8 + $0x90] sm:$0xff]
      %v8555 = vld [vmem:[%s8 + $0x98] sm:$0xff]
      %v8556 = vld [vmem:[%s8 + $0xa0] sm:$0xff]
      %v8557 = vld [vmem:[%s8 + $0xa8] sm:$0xff]
      %v8558 = vld [vmem:[%s8 + $0xb0] sm:$0xff]
      %v8559 = vld [vmem:[%s8 + $0xb8] sm:$0xff]
      %v8560 = vld [vmem:[%s8 + $0xc0] sm:$0xff]
      %v8561 = vld [vmem:[%s8 + $0xc8] sm:$0xff]
      %v8562 = vld [vmem:[%s8 + $0xd0] sm:$0xff]
      %v8563 = vld [vmem:[%s8 + $0xd8] sm:$0xff]
      %v8564 = vld [vmem:[%s7] sm:$0xff]
      %v8565 = vld [vmem:[%s7 + $0x8] sm:$0xff]
      %v8566 = vld [vmem:[%s7 + $0x10] sm:$0xff]
      %v8567 = vld [vmem:[%s7 + $0x18] sm:$0xff]
      %v8568 = vld [vmem:[%s7 + $0x20] sm:$0xff]
      %v8569 = vld [vmem:[%s7 + $0x28] sm:$0xff]
      %v8570 = vld [vmem:[%s7 + $0x30] sm:$0xff]
      %v8571 = vld [vmem:[%s7 + $0x38] sm:$0xff]
      %v8572 = vld [vmem:[%s7 + $0x40] sm:$0xff]
      %v8573 = vld [vmem:[%s7 + $0x48] sm:$0xff]
      %v8574 = vld [vmem:[%s7 + $0x50] sm:$0xff]
      %v8575 = vld [vmem:[%s7 + $0x58] sm:$0xff]
      %v8576 = vld [vmem:[%s7 + $0x60] sm:$0xff]
      %v8577 = vld [vmem:[%s7 + $0x68] sm:$0xff]
      %v8578 = vld [vmem:[%s7 + $0x70] sm:$0xff]
      %v8579 = vld [vmem:[%s7 + $0x78] sm:$0xff]
      %v8580 = vld [vmem:[%s7 + $0x80] sm:$0xff]
      %v8581 = vld [vmem:[%s7 + $0x88] sm:$0xff]
      %v8582 = vld [vmem:[%s7 + $0x90] sm:$0xff]
      %v8583 = vld [vmem:[%s7 + $0x98] sm:$0xff]
      %v8584 = vld [vmem:[%s7 + $0xa0] sm:$0xff]
      %v8585 = vld [vmem:[%s7 + $0xa8] sm:$0xff]
      %v8586 = vld [vmem:[%s7 + $0xb0] sm:$0xff]
      %v8587 = vld [vmem:[%s7 + $0xb8] sm:$0xff]
      %v8588 = vld [vmem:[%s7 + $0xc0] sm:$0xff]
      %v8589 = vld [vmem:[%s7 + $0xc8] sm:$0xff]
      %v8590 = vld [vmem:[%s7 + $0xd0] sm:$0xff]
      %v8591 = vld [vmem:[%s7 + $0xd8] sm:$0xff]
      %vm8592 = vcmask 654336
      %v8594 = vsel %vm8592, %v8564, 0
      %v8597 = vsel %vm8592, %v8565, 0
      %v8600 = vsel %vm8592, %v8566, 0
      %v8603 = vsel %vm8592, %v8567, 0
      %v8606 = vsel %vm8592, %v8568, 0
      %v8609 = vsel %vm8592, %v8569, 0
      %v8612 = vsel %vm8592, %v8570, 0
      %v8615 = vsel %vm8592, %v8571, 0
      %v8618 = vsel %vm8592, %v8572, 0
      %v8621 = vsel %vm8592, %v8573, 0
      %v8624 = vsel %vm8592, %v8574, 0
      %v8627 = vsel %vm8592, %v8575, 0
      %v8630 = vsel %vm8592, %v8576, 0
      %v8633 = vsel %vm8592, %v8577, 0
      %v8636 = vsel %vm8592, %v8578, 0
      %v8639 = vsel %vm8592, %v8579, 0
      %v8642 = vsel %vm8592, %v8580, 0
      %v8645 = vsel %vm8592, %v8581, 0
      %v8648 = vsel %vm8592, %v8582, 0
      %v8651 = vsel %vm8592, %v8583, 0
      %v8654 = vsel %vm8592, %v8584, 0
      %v8657 = vsel %vm8592, %v8585, 0
      %v8660 = vsel %vm8592, %v8586, 0
      %v8663 = vsel %vm8592, %v8587, 0
      %v8666 = vsel %vm8592, %v8588, 0
      %v8669 = vsel %vm8592, %v8589, 0
      %v8672 = vsel %vm8592, %v8590, 0
      %v8675 = vsel %vm8592, %v8591, 0
      %8677 = vmatprep.subr.mxu0 0.0
      %8678 = vmatpush1.msra.mxu0 %v8488
      %8679 = vmatprep.subr.mxu0 0.0
      %8680 = vmatpush1.msra.mxu0 %v8493
      %8681 = vmatprep.subr.mxu0 0.0
      %8682 = vmatpush1.msra.mxu0 %v8498
      %8683 = vmatprep.subr.mxu0 0.0
      %8684 = vmatpush1.msra.mxu0 %v8503
      %8685 = vmatprep.subr.mxu0 0.0
      %8686 = vmatpush1.msra.mxu0 %v8508
      %8687 = vmatprep.subr.mxu0 0.0
      %8688 = vmatpush1.msra.mxu0 %v8513
      %8689 = vmatprep.subr.mxu0 0.0
      %8690 = vmatpush1.msra.mxu0 %v8518
      %8691 = vmatprep.subr.mxu0 0.0
      %8692 = vmatpush1.msra.mxu0 %v8523
      %8693 = vmatprep.subr.mxu0 0.0
      %8694 = vmatpush1.msra.mxu0 %v8528
      %8695 = vmatprep.subr.mxu0 0.0
      %8696 = vmatpush1.msra.mxu0 %v8533
      %8697 = vmatprep.subr.mxu0 0.0
      %8698 = vmatpush1.msra.mxu0 0.0
      %8699 = vmatprep.subr.mxu0 0.0
      %8700 = vmatpush1.msra.mxu0 0.0
      %8701 = vmatprep.subr.mxu0 0.0
      %8702 = vmatpush1.msra.mxu0 0.0
      %8703 = vmatprep.subr.mxu0 0.0
      %8704 = vmatpush1.msra.mxu0 0.0
      %8705 = vmatprep.subr.mxu0 0.0
      %8706 = vmatpush1.msra.mxu0 0.0
      %8707 = vmatprep.subr.mxu0 0.0
      %8708 = vmatpush1.msra.mxu0 0.0
      %8709 = vmatprep.subr.mxu0 0.0
      %8710 = vmatpush1.msra.mxu0 0.0
      %8711 = vmatprep.subr.mxu0 0.0
      %8712 = vmatpush1.msra.mxu0 0.0
      %8713 = vmatprep.subr.mxu0 0.0
      %8714 = vmatpush1.msra.mxu0 0.0
      %8715 = vmatprep.subr.mxu0 0.0
      %8716 = vmatpush1.msra.mxu0 0.0
      %8717 = vmatprep.subr.mxu0 0.0
      %8718 = vmatpush1.msra.mxu0 0.0
      %8719 = vmatprep.subr.mxu0 0.0
      %8720 = vmatpush1.msra.mxu0 0.0
      %8721 = vmatprep.subr.mxu0 0.0
      %8722 = vmatpush1.msra.mxu0 0.0
      %8723 = vmatprep.subr.mxu0 0.0
      %8724 = vmatpush1.msra.mxu0 0.0
      %8725 = vmatprep.subr.mxu0 0.0
      %8726 = vmatpush1.msra.mxu0 0.0
      %8727 = vmatprep.subr.mxu0 0.0
      %8728 = vmatpush1.msra.mxu0 0.0
      %8729 = vmatprep.subr.mxu0 0.0
      %8730 = vmatpush1.msra.mxu0 0.0
      %8731 = vmatprep.subr.mxu0 0.0
      %8732 = vmatpush1.msra.mxu0 0.0
      %8733 = vmatprep.subr.mxu0 0.0
      %8734 = vmatpush1.msra.mxu0 0.0
      %8735 = vmatprep.subr.mxu0 0.0
      %8736 = vmatpush1.msra.mxu0 0.0
      %8737 = vmatprep.subr.mxu0 0.0
      %8738 = vmatpush1.msra.mxu0 0.0
      %8739 = vmatprep.subr.mxu0 0.0
      %8740 = vmatpush1.msra.mxu0 0.0
      %8741 = vmatprep.mubr.f32.mxu0 0.0
      %8742 = vmatmul.mubr.f32.gmra.mrb[0].mxu0 %v8594
      %v8743 = vpop.f32.mrb[0].mxu0
      %v8744 = vadd.f32 0.0, %v8743
      %v8745 = vpop.f32.mrb[0].mxu0
      %8746 = vmatprep.mubr.f32.mxu0 0.0
      %8747 = vmatmul.mubr.f32.gmra.mrb[0].mxu0 %v8597
      %v8748 = vpop.f32.mrb[0].mxu0
      %v8749 = vadd.f32 0.0, %v8748
      %v8750 = vpop.f32.mrb[0].mxu0
      %8751 = vmatprep.mubr.f32.mxu0 0.0
      %8752 = vmatmul.mubr.f32.gmra.mrb[0].mxu0 %v8600
      %v8753 = vpop.f32.mrb[0].mxu0
      %v8754 = vadd.f32 0.0, %v8753
      %v8755 = vpop.f32.mrb[0].mxu0
      %8756 = vmatprep.mubr.f32.mxu0 0.0
      %8757 = vmatmul.mubr.f32.gmra.mrb[0].mxu0 %v8603
      %v8758 = vpop.f32.mrb[0].mxu0
      %v8759 = vadd.f32 0.0, %v8758
      %v8760 = vpop.f32.mrb[0].mxu0
      %8761 = vmatprep.mubr.f32.mxu0 0.0
      %8762 = vmatmul.mubr.f32.gmra.mrb[0].mxu0 %v8606
      %v8763 = vpop.f32.mrb[0].mxu0
      %v8764 = vadd.f32 0.0, %v8763
      %v8765 = vpop.f32.mrb[0].mxu0
      %8766 = vmatprep.mubr.f32.mxu0 0.0
      %8767 = vmatmul.mubr.f32.gmra.mrb[0].mxu0 %v8609
      %v8768 = vpop.f32.mrb[0].mxu0
      %v8769 = vadd.f32 0.0, %v8768
      %v8770 = vpop.f32.mrb[0].mxu0
      %8771 = vmatprep.mubr.f32.mxu0 0.0
      %8772 = vmatmul.mubr.f32.gmra.mrb[0].mxu0 %v8612
      %v8773 = vpop.f32.mrb[0].mxu0
      %v8774 = vadd.f32 0.0, %v8773
      %v8775 = vpop.f32.mrb[0].mxu0
      %8776 = vmatprep.mubr.f32.mxu0 0.0
      %8777 = vmatmul.mubr.f32.gmra.mrb[0].mxu0 %v8615
      %v8778 = vpop.f32.mrb[0].mxu0
      %v8779 = vadd.f32 0.0, %v8778
      %v8780 = vpop.f32.mrb[0].mxu0
      %8781 = vmatprep.mubr.f32.mxu0 0.0
      %8782 = vmatmul.mubr.f32.gmra.mrb[0].mxu0 %v8618
      %v8783 = vpop.f32.mrb[0].mxu0
      %v8784 = vadd.f32 0.0, %v8783
      %v8785 = vpop.f32.mrb[0].mxu0
      %8786 = vmatprep.mubr.f32.mxu0 0.0
      %8787 = vmatmul.mubr.f32.gmra.mrb[0].mxu0 %v8621
      %v8788 = vpop.f32.mrb[0].mxu0
      %v8789 = vadd.f32 0.0, %v8788
      %v8790 = vpop.f32.mrb[0].mxu0
      %8791 = vmatprep.mubr.f32.mxu0 0.0
      %8792 = vmatmul.mubr.f32.gmra.mrb[0].mxu0 %v8624
      %v8793 = vpop.f32.mrb[0].mxu0
      %v8794 = vadd.f32 0.0, %v8793
      %v8795 = vpop.f32.mrb[0].mxu0
      %8796 = vmatprep.mubr.f32.mxu0 0.0
      %8797 = vmatmul.mubr.f32.gmra.mrb[0].mxu0 %v8627
      %v8798 = vpop.f32.mrb[0].mxu0
      %v8799 = vadd.f32 0.0, %v8798
      %v8800 = vpop.f32.mrb[0].mxu0
      %8801 = vmatprep.mubr.f32.mxu0 0.0
      %8802 = vmatmul.mubr.f32.gmra.mrb[0].mxu0 %v8630
      %v8803 = vpop.f32.mrb[0].mxu0
      %v8804 = vadd.f32 0.0, %v8803
      %v8805 = vpop.f32.mrb[0].mxu0
      %8806 = vmatprep.mubr.f32.mxu0 0.0
      %8807 = vmatmul.mubr.f32.gmra.mrb[0].mxu0 %v8633
      %v8808 = vpop.f32.mrb[0].mxu0
      %v8809 = vadd.f32 0.0, %v8808
      %v8810 = vpop.f32.mrb[0].mxu0
      %8811 = vmatprep.mubr.f32.mxu0 0.0
      %8812 = vmatmul.mubr.f32.gmra.mrb[0].mxu0 %v8636
      %v8813 = vpop.f32.mrb[0].mxu0
      %v8814 = vadd.f32 0.0, %v8813
      %v8815 = vpop.f32.mrb[0].mxu0
      %8816 = vmatprep.mubr.f32.mxu0 0.0
      %8817 = vmatmul.mubr.f32.gmra.mrb[0].mxu0 %v8639
      %v8818 = vpop.f32.mrb[0].mxu0
      %v8819 = vadd.f32 0.0, %v8818
      %v8820 = vpop.f32.mrb[0].mxu0
      %8821 = vmatprep.mubr.f32.mxu0 0.0
      %8822 = vmatmul.mubr.f32.gmra.mrb[0].mxu0 %v8642
      %v8823 = vpop.f32.mrb[0].mxu0
      %v8824 = vadd.f32 0.0, %v8823
      %v8825 = vpop.f32.mrb[0].mxu0
      %8826 = vmatprep.mubr.f32.mxu0 0.0
      %8827 = vmatmul.mubr.f32.gmra.mrb[0].mxu0 %v8645
      %v8828 = vpop.f32.mrb[0].mxu0
      %v8829 = vadd.f32 0.0, %v8828
      %v8830 = vpop.f32.mrb[0].mxu0
      %8831 = vmatprep.mubr.f32.mxu0 0.0
      %8832 = vmatmul.mubr.f32.gmra.mrb[0].mxu0 %v8648
      %v8833 = vpop.f32.mrb[0].mxu0
      %v8834 = vadd.f32 0.0, %v8833
      %v8835 = vpop.f32.mrb[0].mxu0
      %8836 = vmatprep.mubr.f32.mxu0 0.0
      %8837 = vmatmul.mubr.f32.gmra.mrb[0].mxu0 %v8651
      %v8838 = vpop.f32.mrb[0].mxu0
      %v8839 = vadd.f32 0.0, %v8838
      %v8840 = vpop.f32.mrb[0].mxu0
      %8841 = vmatprep.mubr.f32.mxu0 0.0
      %8842 = vmatmul.mubr.f32.gmra.mrb[0].mxu0 %v8654
      %v8843 = vpop.f32.mrb[0].mxu0
      %v8844 = vadd.f32 0.0, %v8843
      %v8845 = vpop.f32.mrb[0].mxu0
      %8846 = vmatprep.mubr.f32.mxu0 0.0
      %8847 = vmatmul.mubr.f32.gmra.mrb[0].mxu0 %v8657
      %v8848 = vpop.f32.mrb[0].mxu0
      %v8849 = vadd.f32 0.0, %v8848
      %v8850 = vpop.f32.mrb[0].mxu0
      %8851 = vmatprep.mubr.f32.mxu0 0.0
      %8852 = vmatmul.mubr.f32.gmra.mrb[0].mxu0 %v8660
      %v8853 = vpop.f32.mrb[0].mxu0
      %v8854 = vadd.f32 0.0, %v8853
      %v8855 = vpop.f32.mrb[0].mxu0
      %8856 = vmatprep.mubr.f32.mxu0 0.0
      %8857 = vmatmul.mubr.f32.gmra.mrb[0].mxu0 %v8663
      %v8858 = vpop.f32.mrb[0].mxu0
      %v8859 = vadd.f32 0.0, %v8858
      %v8860 = vpop.f32.mrb[0].mxu0
      %8861 = vmatprep.mubr.f32.mxu0 0.0
      %8862 = vmatmul.mubr.f32.gmra.mrb[0].mxu0 %v8666
      %v8863 = vpop.f32.mrb[0].mxu0
      %v8864 = vadd.f32 0.0, %v8863
      %v8865 = vpop.f32.mrb[0].mxu0
      %8866 = vmatprep.mubr.f32.mxu0 0.0
      %8867 = vmatmul.mubr.f32.gmra.mrb[0].mxu0 %v8669
      %v8868 = vpop.f32.mrb[0].mxu0
      %v8869 = vadd.f32 0.0, %v8868
      %v8870 = vpop.f32.mrb[0].mxu0
      %8871 = vmatprep.mubr.f32.mxu0 0.0
      %8872 = vmatmul.mubr.f32.gmra.mrb[0].mxu0 %v8672
      %v8873 = vpop.f32.mrb[0].mxu0
      %v8874 = vadd.f32 0.0, %v8873
      %v8875 = vpop.f32.mrb[0].mxu0
      %8876 = vmatprep.mubr.f32.mxu0 0.0
      %8877 = vmatmul.mubr.f32.gmra.mrb[0].mxu0 %v8675
      %v8878 = vpop.f32.mrb[0].mxu0
      %v8879 = vadd.f32 0.0, %v8878
      %v8880 = vpop.f32.mrb[0].mxu0
      %8881 = vdwg.mxu0
      %v8882 = vadd.f32 %v8536, %v8744
      %v8883 = vadd.f32 %v8537, %v8749
      %v8884 = vadd.f32 %v8538, %v8754
      %v8885 = vadd.f32 %v8539, %v8759
      %v8886 = vadd.f32 %v8540, %v8764
      %v8887 = vadd.f32 %v8541, %v8769
      %v8888 = vadd.f32 %v8542, %v8774
      %v8889 = vadd.f32 %v8543, %v8779
      %v8890 = vadd.f32 %v8544, %v8784
      %v8891 = vadd.f32 %v8545, %v8789
      %v8892 = vadd.f32 %v8546, %v8794
      %v8893 = vadd.f32 %v8547, %v8799
      %v8894 = vadd.f32 %v8548, %v8804
      %v8895 = vadd.f32 %v8549, %v8809
      %v8896 = vadd.f32 %v8550, %v8814
      %v8897 = vadd.f32 %v8551, %v8819
      %v8898 = vadd.f32 %v8552, %v8824
      %v8899 = vadd.f32 %v8553, %v8829
      %v8900 = vadd.f32 %v8554, %v8834
      %v8901 = vadd.f32 %v8555, %v8839
      %v8902 = vadd.f32 %v8556, %v8844
      %v8903 = vadd.f32 %v8557, %v8849
      %v8904 = vadd.f32 %v8558, %v8854
      %v8905 = vadd.f32 %v8559, %v8859
      %v8906 = vadd.f32 %v8560, %v8864
      %v8907 = vadd.f32 %v8561, %v8869
      %v8908 = vadd.f32 %v8562, %v8874
      %v8909 = vadd.f32 %v8563, %v8879
      %s8910 = scalar_lea.vmem %s7, 224
      %v8911 = vld [vmem:[%s8910] sm:$0xff]
      %v8912 = vld [vmem:[%s8910 + $0x8] sm:$0xff]
      %v8913 = vld [vmem:[%s8910 + $0x10] sm:$0xff]
      %v8914 = vld [vmem:[%s8910 + $0x18] sm:$0xff]
      %v8915 = vld [vmem:[%s8910 + $0x20] sm:$0xff]
      %v8916 = vld [vmem:[%s8910 + $0x28] sm:$0xff]
      %v8917 = vld [vmem:[%s8910 + $0x30] sm:$0xff]
      %v8918 = vld [vmem:[%s8910 + $0x38] sm:$0xff]
      %v8919 = vld [vmem:[%s8910 + $0x40] sm:$0xff]
      %v8920 = vld [vmem:[%s8910 + $0x48] sm:$0xff]
      %v8921 = vld [vmem:[%s8910 + $0x50] sm:$0xff]
      %v8922 = vld [vmem:[%s8910 + $0x58] sm:$0xff]
      %v8923 = vld [vmem:[%s8910 + $0x60] sm:$0xff]
      %v8924 = vld [vmem:[%s8910 + $0x68] sm:$0xff]
      %v8925 = vld [vmem:[%s8910 + $0x70] sm:$0xff]
      %v8926 = vld [vmem:[%s8910 + $0x78] sm:$0xff]
      %v8927 = vld [vmem:[%s8910 + $0x80] sm:$0xff]
      %v8928 = vld [vmem:[%s8910 + $0x88] sm:$0xff]
      %v8929 = vld [vmem:[%s8910 + $0x90] sm:$0xff]
      %v8930 = vld [vmem:[%s8910 + $0x98] sm:$0xff]
      %v8931 = vld [vmem:[%s8910 + $0xa0] sm:$0xff]
      %v8932 = vld [vmem:[%s8910 + $0xa8] sm:$0xff]
      %v8933 = vld [vmem:[%s8910 + $0xb0] sm:$0xff]
      %v8934 = vld [vmem:[%s8910 + $0xb8] sm:$0xff]
      %v8935 = vld [vmem:[%s8910 + $0xc0] sm:$0xff]
      %v8936 = vld [vmem:[%s8910 + $0xc8] sm:$0xff]
      %v8937 = vld [vmem:[%s8910 + $0xd0] sm:$0xff]
      %v8938 = vld [vmem:[%s8910 + $0xd8] sm:$0xff]
      %8949 = vrot.lane.b32.xlu0 %v8488, 127
      %v8950 = vpop.permute.xlu0 %8949
      %8951 = vrot.lane.b32.xlu0 %v8493, 127
      %v8952 = vpop.permute.xlu0 %8951
      %8953 = vrot.lane.b32.xlu0 %v8498, 127
      %v8954 = vpop.permute.xlu0 %8953
      %8955 = vrot.lane.b32.xlu0 %v8503, 127
      %v8956 = vpop.permute.xlu0 %8955
      %8957 = vrot.lane.b32.xlu0 %v8508, 127
      %v8958 = vpop.permute.xlu0 %8957
      %8959 = vrot.lane.b32.xlu0 %v8513, 127
      %v8960 = vpop.permute.xlu0 %8959
      %8961 = vrot.lane.b32.xlu0 %v8518, 127
      %v8962 = vpop.permute.xlu0 %8961
      %8963 = vrot.lane.b32.xlu0 %v8523, 127
      %v8964 = vpop.permute.xlu0 %8963
      %8965 = vrot.lane.b32.xlu0 %v8528, 127
      %v8966 = vpop.permute.xlu0 %8965
      %8967 = vrot.lane.b32.xlu0 %v8533, 127
      %v8968 = vpop.permute.xlu0 %8967
      %v8980 = vsel %vm8592, %v8911, 0
      %v8983 = vsel %vm8592, %v8912, 0
      %v8986 = vsel %vm8592, %v8913, 0
      %v8989 = vsel %vm8592, %v8914, 0
      %v8992 = vsel %vm8592, %v8915, 0
      %v8995 = vsel %vm8592, %v8916, 0
      %v8998 = vsel %vm8592, %v8917, 0
      %v9001 = vsel %vm8592, %v8918, 0
      %v9004 = vsel %vm8592, %v8919, 0
      %v9007 = vsel %vm8592, %v8920, 0
      %v9010 = vsel %vm8592, %v8921, 0
      %v9013 = vsel %vm8592, %v8922, 0
      %v9016 = vsel %vm8592, %v8923, 0
      %v9019 = vsel %vm8592, %v8924, 0
      %v9022 = vsel %vm8592, %v8925, 0
      %v9025 = vsel %vm8592, %v8926, 0
      %v9028 = vsel %vm8592, %v8927, 0
      %v9031 = vsel %vm8592, %v8928, 0
      %v9034 = vsel %vm8592, %v8929, 0
      %v9037 = vsel %vm8592, %v8930, 0
      %v9040 = vsel %vm8592, %v8931, 0
      %v9043 = vsel %vm8592, %v8932, 0
      %v9046 = vsel %vm8592, %v8933, 0
      %v9049 = vsel %vm8592, %v8934, 0
      %v9052 = vsel %vm8592, %v8935, 0
      %v9055 = vsel %vm8592, %v8936, 0
      %v9058 = vsel %vm8592, %v8937, 0
      %v9061 = vsel %vm8592, %v8938, 0
      %9063 = vmatprep.subr.mxu0 0.0
      %9064 = vmatpush1.msra.mxu0 %v8950
      %9065 = vmatprep.subr.mxu0 0.0
      %9066 = vmatpush1.msra.mxu0 %v8952
      %9067 = vmatprep.subr.mxu0 0.0
      %9068 = vmatpush1.msra.mxu0 %v8954
      %9069 = vmatprep.subr.mxu0 0.0
      %9070 = vmatpush1.msra.mxu0 %v8956
      %9071 = vmatprep.subr.mxu0 0.0
      %9072 = vmatpush1.msra.mxu0 %v8958
      %9073 = vmatprep.subr.mxu0 0.0
      %9074 = vmatpush1.msra.mxu0 %v8960
      %9075 = vmatprep.subr.mxu0 0.0
      %9076 = vmatpush1.msra.mxu0 %v8962
      %9077 = vmatprep.subr.mxu0 0.0
      %9078 = vmatpush1.msra.mxu0 %v8964
      %9079 = vmatprep.subr.mxu0 0.0
      %9080 = vmatpush1.msra.mxu0 %v8966
      %9081 = vmatprep.subr.mxu0 0.0
      %9082 = vmatpush1.msra.mxu0 %v8968
      %9083 = vmatprep.subr.mxu0 0.0
      %9084 = vmatpush1.msra.mxu0 0.0
      %9085 = vmatprep.subr.mxu0 0.0
      %9086 = vmatpush1.msra.mxu0 0.0
      %9087 = vmatprep.subr.mxu0 0.0
      %9088 = vmatpush1.msra.mxu0 0.0
      %9089 = vmatprep.subr.mxu0 0.0
      %9090 = vmatpush1.msra.mxu0 0.0
      %9091 = vmatprep.subr.mxu0 0.0
      %9092 = vmatpush1.msra.mxu0 0.0
      %9093 = vmatprep.subr.mxu0 0.0
      %9094 = vmatpush1.msra.mxu0 0.0
      %9095 = vmatprep.subr.mxu0 0.0
      %9096 = vmatpush1.msra.mxu0 0.0
      %9097 = vmatprep.subr.mxu0 0.0
      %9098 = vmatpush1.msra.mxu0 0.0
      %9099 = vmatprep.subr.mxu0 0.0
      %9100 = vmatpush1.msra.mxu0 0.0
      %9101 = vmatprep.subr.mxu0 0.0
      %9102 = vmatpush1.msra.mxu0 0.0
      %9103 = vmatprep.subr.mxu0 0.0
      %9104 = vmatpush1.msra.mxu0 0.0
      %9105 = vmatprep.subr.mxu0 0.0
      %9106 = vmatpush1.msra.mxu0 0.0
      %9107 = vmatprep.subr.mxu0 0.0
      %9108 = vmatpush1.msra.mxu0 0.0
      %9109 = vmatprep.subr.mxu0 0.0
      %9110 = vmatpush1.msra.mxu0 0.0
      %9111 = vmatprep.subr.mxu0 0.0
      %9112 = vmatpush1.msra.mxu0 0.0
      %9113 = vmatprep.subr.mxu0 0.0
      %9114 = vmatpush1.msra.mxu0 0.0
      %9115 = vmatprep.subr.mxu0 0.0
      %9116 = vmatpush1.msra.mxu0 0.0
      %9117 = vmatprep.subr.mxu0 0.0
      %9118 = vmatpush1.msra.mxu0 0.0
      %9119 = vmatprep.subr.mxu0 0.0
      %9120 = vmatpush1.msra.mxu0 0.0
      %9121 = vmatprep.subr.mxu0 0.0
      %9122 = vmatpush1.msra.mxu0 0.0
      %9123 = vmatprep.subr.mxu0 0.0
      %9124 = vmatpush1.msra.mxu0 0.0
      %9125 = vmatprep.subr.mxu0 0.0
      %9126 = vmatpush1.msra.mxu0 0.0
      %9127 = vmatprep.mubr.f32.mxu0 0.0
      %9128 = vmatmul.mubr.f32.gmra.mrb[0].mxu0 %v8980
      %v9129 = vpop.f32.mrb[0].mxu0
      %v9130 = vadd.f32 0.0, %v9129
      %v9131 = vpop.f32.mrb[0].mxu0
      %9132 = vmatprep.mubr.f32.mxu0 0.0
      %9133 = vmatmul.mubr.f32.gmra.mrb[0].mxu0 %v8983
      %v9134 = vpop.f32.mrb[0].mxu0
      %v9135 = vadd.f32 0.0, %v9134
      %v9136 = vpop.f32.mrb[0].mxu0
      %9137 = vmatprep.mubr.f32.mxu0 0.0
      %9138 = vmatmul.mubr.f32.gmra.mrb[0].mxu0 %v8986
      %v9139 = vpop.f32.mrb[0].mxu0
      %v9140 = vadd.f32 0.0, %v9139
      %v9141 = vpop.f32.mrb[0].mxu0
      %9142 = vmatprep.mubr.f32.mxu0 0.0
      %9143 = vmatmul.mubr.f32.gmra.mrb[0].mxu0 %v8989
      %v9144 = vpop.f32.mrb[0].mxu0
      %v9145 = vadd.f32 0.0, %v9144
      %v9146 = vpop.f32.mrb[0].mxu0
      %9147 = vmatprep.mubr.f32.mxu0 0.0
      %9148 = vmatmul.mubr.f32.gmra.mrb[0].mxu0 %v8992
      %v9149 = vpop.f32.mrb[0].mxu0
      %v9150 = vadd.f32 0.0, %v9149
      %v9151 = vpop.f32.mrb[0].mxu0
      %9152 = vmatprep.mubr.f32.mxu0 0.0
      %9153 = vmatmul.mubr.f32.gmra.mrb[0].mxu0 %v8995
      %v9154 = vpop.f32.mrb[0].mxu0
      %v9155 = vadd.f32 0.0, %v9154
      %v9156 = vpop.f32.mrb[0].mxu0
      %9157 = vmatprep.mubr.f32.mxu0 0.0
      %9158 = vmatmul.mubr.f32.gmra.mrb[0].mxu0 %v8998
      %v9159 = vpop.f32.mrb[0].mxu0
      %v9160 = vadd.f32 0.0, %v9159
      %v9161 = vpop.f32.mrb[0].mxu0
      %9162 = vmatprep.mubr.f32.mxu0 0.0
      %9163 = vmatmul.mubr.f32.gmra.mrb[0].mxu0 %v9001
      %v9164 = vpop.f32.mrb[0].mxu0
      %v9165 = vadd.f32 0.0, %v9164
      %v9166 = vpop.f32.mrb[0].mxu0
      %9167 = vmatprep.mubr.f32.mxu0 0.0
      %9168 = vmatmul.mubr.f32.gmra.mrb[0].mxu0 %v9004
      %v9169 = vpop.f32.mrb[0].mxu0
      %v9170 = vadd.f32 0.0, %v9169
      %v9171 = vpop.f32.mrb[0].mxu0
      %9172 = vmatprep.mubr.f32.mxu0 0.0
      %9173 = vmatmul.mubr.f32.gmra.mrb[0].mxu0 %v9007
      %v9174 = vpop.f32.mrb[0].mxu0
      %v9175 = vadd.f32 0.0, %v9174
      %v9176 = vpop.f32.mrb[0].mxu0
      %9177 = vmatprep.mubr.f32.mxu0 0.0
      %9178 = vmatmul.mubr.f32.gmra.mrb[0].mxu0 %v9010
      %v9179 = vpop.f32.mrb[0].mxu0
      %v9180 = vadd.f32 0.0, %v9179
      %v9181 = vpop.f32.mrb[0].mxu0
      %9182 = vmatprep.mubr.f32.mxu0 0.0
      %9183 = vmatmul.mubr.f32.gmra.mrb[0].mxu0 %v9013
      %v9184 = vpop.f32.mrb[0].mxu0
      %v9185 = vadd.f32 0.0, %v9184
      %v9186 = vpop.f32.mrb[0].mxu0
      %9187 = vmatprep.mubr.f32.mxu0 0.0
      %9188 = vmatmul.mubr.f32.gmra.mrb[0].mxu0 %v9016
      %v9189 = vpop.f32.mrb[0].mxu0
      %v9190 = vadd.f32 0.0, %v9189
      %v9191 = vpop.f32.mrb[0].mxu0
      %9192 = vmatprep.mubr.f32.mxu0 0.0
      %9193 = vmatmul.mubr.f32.gmra.mrb[0].mxu0 %v9019
      %v9194 = vpop.f32.mrb[0].mxu0
      %v9195 = vadd.f32 0.0, %v9194
      %v9196 = vpop.f32.mrb[0].mxu0
      %9197 = vmatprep.mubr.f32.mxu0 0.0
      %9198 = vmatmul.mubr.f32.gmra.mrb[0].mxu0 %v9022
      %v9199 = vpop.f32.mrb[0].mxu0
      %v9200 = vadd.f32 0.0, %v9199
      %v9201 = vpop.f32.mrb[0].mxu0
      %9202 = vmatprep.mubr.f32.mxu0 0.0
      %9203 = vmatmul.mubr.f32.gmra.mrb[0].mxu0 %v9025
      %v9204 = vpop.f32.mrb[0].mxu0
      %v9205 = vadd.f32 0.0, %v9204
      %v9206 = vpop.f32.mrb[0].mxu0
      %9207 = vmatprep.mubr.f32.mxu0 0.0
      %9208 = vmatmul.mubr.f32.gmra.mrb[0].mxu0 %v9028
      %v9209 = vpop.f32.mrb[0].mxu0
      %v9210 = vadd.f32 0.0, %v9209
      %v9211 = vpop.f32.mrb[0].mxu0
      %9212 = vmatprep.mubr.f32.mxu0 0.0
      %9213 = vmatmul.mubr.f32.gmra.mrb[0].mxu0 %v9031
      %v9214 = vpop.f32.mrb[0].mxu0
      %v9215 = vadd.f32 0.0, %v9214
      %v9216 = vpop.f32.mrb[0].mxu0
      %9217 = vmatprep.mubr.f32.mxu0 0.0
      %9218 = vmatmul.mubr.f32.gmra.mrb[0].mxu0 %v9034
      %v9219 = vpop.f32.mrb[0].mxu0
      %v9220 = vadd.f32 0.0, %v9219
      %v9221 = vpop.f32.mrb[0].mxu0
      %9222 = vmatprep.mubr.f32.mxu0 0.0
      %9223 = vmatmul.mubr.f32.gmra.mrb[0].mxu0 %v9037
      %v9224 = vpop.f32.mrb[0].mxu0
      %v9225 = vadd.f32 0.0, %v9224
      %v9226 = vpop.f32.mrb[0].mxu0
      %9227 = vmatprep.mubr.f32.mxu0 0.0
      %9228 = vmatmul.mubr.f32.gmra.mrb[0].mxu0 %v9040
      %v9229 = vpop.f32.mrb[0].mxu0
      %v9230 = vadd.f32 0.0, %v9229
      %v9231 = vpop.f32.mrb[0].mxu0
      %9232 = vmatprep.mubr.f32.mxu0 0.0
      %9233 = vmatmul.mubr.f32.gmra.mrb[0].mxu0 %v9043
      %v9234 = vpop.f32.mrb[0].mxu0
      %v9235 = vadd.f32 0.0, %v9234
      %v9236 = vpop.f32.mrb[0].mxu0
      %9237 = vmatprep.mubr.f32.mxu0 0.0
      %9238 = vmatmul.mubr.f32.gmra.mrb[0].mxu0 %v9046
      %v9239 = vpop.f32.mrb[0].mxu0
      %v9240 = vadd.f32 0.0, %v9239
      %v9241 = vpop.f32.mrb[0].mxu0
      %9242 = vmatprep.mubr.f32.mxu0 0.0
      %9243 = vmatmul.mubr.f32.gmra.mrb[0].mxu0 %v9049
      %v9244 = vpop.f32.mrb[0].mxu0
      %v9245 = vadd.f32 0.0, %v9244
      %v9246 = vpop.f32.mrb[0].mxu0
      %9247 = vmatprep.mubr.f32.mxu0 0.0
      %9248 = vmatmul.mubr.f32.gmra.mrb[0].mxu0 %v9052
      %v9249 = vpop.f32.mrb[0].mxu0
      %v9250 = vadd.f32 0.0, %v9249
      %v9251 = vpop.f32.mrb[0].mxu0
      %9252 = vmatprep.mubr.f32.mxu0 0.0
      %9253 = vmatmul.mubr.f32.gmra.mrb[0].mxu0 %v9055
      %v9254 = vpop.f32.mrb[0].mxu0
      %v9255 = vadd.f32 0.0, %v9254
      %v9256 = vpop.f32.mrb[0].mxu0
      %9257 = vmatprep.mubr.f32.mxu0 0.0
      %9258 = vmatmul.mubr.f32.gmra.mrb[0].mxu0 %v9058
      %v9259 = vpop.f32.mrb[0].mxu0
      %v9260 = vadd.f32 0.0, %v9259
      %v9261 = vpop.f32.mrb[0].mxu0
      %9262 = vmatprep.mubr.f32.mxu0 0.0
      %9263 = vmatmul.mubr.f32.gmra.mrb[0].mxu0 %v9061
      %v9264 = vpop.f32.mrb[0].mxu0
      %v9265 = vadd.f32 0.0, %v9264
      %v9266 = vpop.f32.mrb[0].mxu0
      %9267 = vdwg.mxu0
      %v9268 = vadd.f32 %v8882, %v9130
      %v9269 = vadd.f32 %v8883, %v9135
      %v9270 = vadd.f32 %v8884, %v9140
      %v9271 = vadd.f32 %v8885, %v9145
      %v9272 = vadd.f32 %v8886, %v9150
      %v9273 = vadd.f32 %v8887, %v9155
      %v9274 = vadd.f32 %v8888, %v9160
      %v9275 = vadd.f32 %v8889, %v9165
      %v9276 = vadd.f32 %v8890, %v9170
      %v9277 = vadd.f32 %v8891, %v9175
      %v9278 = vadd.f32 %v8892, %v9180
      %v9279 = vadd.f32 %v8893, %v9185
      %v9280 = vadd.f32 %v8894, %v9190
      %v9281 = vadd.f32 %v8895, %v9195
      %v9282 = vadd.f32 %v8896, %v9200
      %v9283 = vadd.f32 %v8897, %v9205
      %v9284 = vadd.f32 %v8898, %v9210
      %v9285 = vadd.f32 %v8899, %v9215
      %v9286 = vadd.f32 %v8900, %v9220
      %v9287 = vadd.f32 %v8901, %v9225
      %v9288 = vadd.f32 %v8902, %v9230
      %v9289 = vadd.f32 %v8903, %v9235
      %v9290 = vadd.f32 %v8904, %v9240
      %v9291 = vadd.f32 %v8905, %v9245
      %v9292 = vadd.f32 %v8906, %v9250
      %v9293 = vadd.f32 %v8907, %v9255
      %v9294 = vadd.f32 %v8908, %v9260
      %v9295 = vadd.f32 %v8909, %v9265
      %s9296 = scalar_lea.vmem %s7, 448
      %v9297 = vld [vmem:[%s9296] sm:$0xff]
      %v9298 = vld [vmem:[%s9296 + $0x8] sm:$0xff]
      %v9299 = vld [vmem:[%s9296 + $0x10] sm:$0xff]
      %v9300 = vld [vmem:[%s9296 + $0x18] sm:$0xff]
      %v9301 = vld [vmem:[%s9296 + $0x20] sm:$0xff]
      %v9302 = vld [vmem:[%s9296 + $0x28] sm:$0xff]
      %v9303 = vld [vmem:[%s9296 + $0x30] sm:$0xff]
      %v9304 = vld [vmem:[%s9296 + $0x38] sm:$0xff]
      %v9305 = vld [vmem:[%s9296 + $0x40] sm:$0xff]
      %v9306 = vld [vmem:[%s9296 + $0x48] sm:$0xff]
      %v9307 = vld [vmem:[%s9296 + $0x50] sm:$0xff]
      %v9308 = vld [vmem:[%s9296 + $0x58] sm:$0xff]
      %v9309 = vld [vmem:[%s9296 + $0x60] sm:$0xff]
      %v9310 = vld [vmem:[%s9296 + $0x68] sm:$0xff]
      %v9311 = vld [vmem:[%s9296 + $0x70] sm:$0xff]
      %v9312 = vld [vmem:[%s9296 + $0x78] sm:$0xff]
      %v9313 = vld [vmem:[%s9296 + $0x80] sm:$0xff]
      %v9314 = vld [vmem:[%s9296 + $0x88] sm:$0xff]
      %v9315 = vld [vmem:[%s9296 + $0x90] sm:$0xff]
      %v9316 = vld [vmem:[%s9296 + $0x98] sm:$0xff]
      %v9317 = vld [vmem:[%s9296 + $0xa0] sm:$0xff]
      %v9318 = vld [vmem:[%s9296 + $0xa8] sm:$0xff]
      %v9319 = vld [vmem:[%s9296 + $0xb0] sm:$0xff]
      %v9320 = vld [vmem:[%s9296 + $0xb8] sm:$0xff]
      %v9321 = vld [vmem:[%s9296 + $0xc0] sm:$0xff]
      %v9322 = vld [vmem:[%s9296 + $0xc8] sm:$0xff]
      %v9323 = vld [vmem:[%s9296 + $0xd0] sm:$0xff]
      %v9324 = vld [vmem:[%s9296 + $0xd8] sm:$0xff]
      %9325 = vrot.lane.b32.xlu0 %v8488, 126
      %v9326 = vpop.permute.xlu0 %9325
      %9327 = vrot.lane.b32.xlu0 %v8493, 126
      %v9328 = vpop.permute.xlu0 %9327
      %9329 = vrot.lane.b32.xlu0 %v8498, 126
      %v9330 = vpop.permute.xlu0 %9329
      %9331 = vrot.lane.b32.xlu0 %v8503, 126
      %v9332 = vpop.permute.xlu0 %9331
      %9333 = vrot.lane.b32.xlu0 %v8508, 126
      %v9334 = vpop.permute.xlu0 %9333
      %9335 = vrot.lane.b32.xlu0 %v8513, 126
      %v9336 = vpop.permute.xlu0 %9335
      %9337 = vrot.lane.b32.xlu0 %v8518, 126
      %v9338 = vpop.permute.xlu0 %9337
      %9339 = vrot.lane.b32.xlu0 %v8523, 126
      %v9340 = vpop.permute.xlu0 %9339
      %9341 = vrot.lane.b32.xlu0 %v8528, 126
      %v9342 = vpop.permute.xlu0 %9341
      %9343 = vrot.lane.b32.xlu0 %v8533, 126
      %v9344 = vpop.permute.xlu0 %9343
      %v9356 = vsel %vm8592, %v9297, 0
      %v9359 = vsel %vm8592, %v9298, 0
      %v9362 = vsel %vm8592, %v9299, 0
      %v9365 = vsel %vm8592, %v9300, 0
      %v9368 = vsel %vm8592, %v9301, 0
      %v9371 = vsel %vm8592, %v9302, 0
      %v9374 = vsel %vm8592, %v9303, 0
      %v9377 = vsel %vm8592, %v9304, 0
      %v9380 = vsel %vm8592, %v9305, 0
      %v9383 = vsel %vm8592, %v9306, 0
      %v9386 = vsel %vm8592, %v9307, 0
      %v9389 = vsel %vm8592, %v9308, 0
      %v9392 = vsel %vm8592, %v9309, 0
      %v9395 = vsel %vm8592, %v9310, 0
      %v9398 = vsel %vm8592, %v9311, 0
      %v9401 = vsel %vm8592, %v9312, 0
      %v9404 = vsel %vm8592, %v9313, 0
      %v9407 = vsel %vm8592, %v9314, 0
      %v9410 = vsel %vm8592, %v9315, 0
      %v9413 = vsel %vm8592, %v9316, 0
      %v9416 = vsel %vm8592, %v9317, 0
      %v9419 = vsel %vm8592, %v9318, 0
      %v9422 = vsel %vm8592, %v9319, 0
      %v9425 = vsel %vm8592, %v9320, 0
      %v9428 = vsel %vm8592, %v9321, 0
      %v9431 = vsel %vm8592, %v9322, 0
      %v9434 = vsel %vm8592, %v9323, 0
      %v9437 = vsel %vm8592, %v9324, 0
      %9439 = vmatprep.subr.mxu0 0.0
      %9440 = vmatpush1.msra.mxu0 %v9326
      %9441 = vmatprep.subr.mxu0 0.0
      %9442 = vmatpush1.msra.mxu0 %v9328
      %9443 = vmatprep.subr.mxu0 0.0
      %9444 = vmatpush1.msra.mxu0 %v9330
      %9445 = vmatprep.subr.mxu0 0.0
      %9446 = vmatpush1.msra.mxu0 %v9332
      %9447 = vmatprep.subr.mxu0 0.0
      %9448 = vmatpush1.msra.mxu0 %v9334
      %9449 = vmatprep.subr.mxu0 0.0
      %9450 = vmatpush1.msra.mxu0 %v9336
      %9451 = vmatprep.subr.mxu0 0.0
      %9452 = vmatpush1.msra.mxu0 %v9338
      %9453 = vmatprep.subr.mxu0 0.0
      %9454 = vmatpush1.msra.mxu0 %v9340
      %9455 = vmatprep.subr.mxu0 0.0
      %9456 = vmatpush1.msra.mxu0 %v9342
      %9457 = vmatprep.subr.mxu0 0.0
      %9458 = vmatpush1.msra.mxu0 %v9344
      %9459 = vmatprep.subr.mxu0 0.0
      %9460 = vmatpush1.msra.mxu0 0.0
      %9461 = vmatprep.subr.mxu0 0.0
      %9462 = vmatpush1.msra.mxu0 0.0
      %9463 = vmatprep.subr.mxu0 0.0
      %9464 = vmatpush1.msra.mxu0 0.0
      %9465 = vmatprep.subr.mxu0 0.0
      %9466 = vmatpush1.msra.mxu0 0.0
      %9467 = vmatprep.subr.mxu0 0.0
      %9468 = vmatpush1.msra.mxu0 0.0
      %9469 = vmatprep.subr.mxu0 0.0
      %9470 = vmatpush1.msra.mxu0 0.0
      %9471 = vmatprep.subr.mxu0 0.0
      %9472 = vmatpush1.msra.mxu0 0.0
      %9473 = vmatprep.subr.mxu0 0.0
      %9474 = vmatpush1.msra.mxu0 0.0
      %9475 = vmatprep.subr.mxu0 0.0
      %9476 = vmatpush1.msra.mxu0 0.0
      %9477 = vmatprep.subr.mxu0 0.0
      %9478 = vmatpush1.msra.mxu0 0.0
      %9479 = vmatprep.subr.mxu0 0.0
      %9480 = vmatpush1.msra.mxu0 0.0
      %9481 = vmatprep.subr.mxu0 0.0
      %9482 = vmatpush1.msra.mxu0 0.0
      %9483 = vmatprep.subr.mxu0 0.0
      %9484 = vmatpush1.msra.mxu0 0.0
      %9485 = vmatprep.subr.mxu0 0.0
      %9486 = vmatpush1.msra.mxu0 0.0
      %9487 = vmatprep.subr.mxu0 0.0
      %9488 = vmatpush1.msra.mxu0 0.0
      %9489 = vmatprep.subr.mxu0 0.0
      %9490 = vmatpush1.msra.mxu0 0.0
      %9491 = vmatprep.subr.mxu0 0.0
      %9492 = vmatpush1.msra.mxu0 0.0
      %9493 = vmatprep.subr.mxu0 0.0
      %9494 = vmatpush1.msra.mxu0 0.0
      %9495 = vmatprep.subr.mxu0 0.0
      %9496 = vmatpush1.msra.mxu0 0.0
      %9497 = vmatprep.subr.mxu0 0.0
      %9498 = vmatpush1.msra.mxu0 0.0
      %9499 = vmatprep.subr.mxu0 0.0
      %9500 = vmatpush1.msra.mxu0 0.0
      %9501 = vmatprep.subr.mxu0 0.0
      %9502 = vmatpush1.msra.mxu0 0.0
      %9503 = vmatprep.mubr.f32.mxu0 0.0
      %9504 = vmatmul.mubr.f32.gmra.mrb[0].mxu0 %v9356
      %v9505 = vpop.f32.mrb[0].mxu0
      %v9506 = vadd.f32 0.0, %v9505
      %v9507 = vpop.f32.mrb[0].mxu0
      %9508 = vmatprep.mubr.f32.mxu0 0.0
      %9509 = vmatmul.mubr.f32.gmra.mrb[0].mxu0 %v9359
      %v9510 = vpop.f32.mrb[0].mxu0
      %v9511 = vadd.f32 0.0, %v9510
      %v9512 = vpop.f32.mrb[0].mxu0
      %9513 = vmatprep.mubr.f32.mxu0 0.0
      %9514 = vmatmul.mubr.f32.gmra.mrb[0].mxu0 %v9362
      %v9515 = vpop.f32.mrb[0].mxu0
      %v9516 = vadd.f32 0.0, %v9515
      %v9517 = vpop.f32.mrb[0].mxu0
      %9518 = vmatprep.mubr.f32.mxu0 0.0
      %9519 = vmatmul.mubr.f32.gmra.mrb[0].mxu0 %v9365
      %v9520 = vpop.f32.mrb[0].mxu0
      %v9521 = vadd.f32 0.0, %v9520
      %v9522 = vpop.f32.mrb[0].mxu0
      %9523 = vmatprep.mubr.f32.mxu0 0.0
      %9524 = vmatmul.mubr.f32.gmra.mrb[0].mxu0 %v9368
      %v9525 = vpop.f32.mrb[0].mxu0
      %v9526 = vadd.f32 0.0, %v9525
      %v9527 = vpop.f32.mrb[0].mxu0
      %9528 = vmatprep.mubr.f32.mxu0 0.0
      %9529 = vmatmul.mubr.f32.gmra.mrb[0].mxu0 %v9371
      %v9530 = vpop.f32.mrb[0].mxu0
      %v9531 = vadd.f32 0.0, %v9530
      %v9532 = vpop.f32.mrb[0].mxu0
      %9533 = vmatprep.mubr.f32.mxu0 0.0
      %9534 = vmatmul.mubr.f32.gmra.mrb[0].mxu0 %v9374
      %v9535 = vpop.f32.mrb[0].mxu0
      %v9536 = vadd.f32 0.0, %v9535
      %v9537 = vpop.f32.mrb[0].mxu0
      %9538 = vmatprep.mubr.f32.mxu0 0.0
      %9539 = vmatmul.mubr.f32.gmra.mrb[0].mxu0 %v9377
      %v9540 = vpop.f32.mrb[0].mxu0
      %v9541 = vadd.f32 0.0, %v9540
      %v9542 = vpop.f32.mrb[0].mxu0
      %9543 = vmatprep.mubr.f32.mxu0 0.0
      %9544 = vmatmul.mubr.f32.gmra.mrb[0].mxu0 %v9380
      %v9545 = vpop.f32.mrb[0].mxu0
      %v9546 = vadd.f32 0.0, %v9545
      %v9547 = vpop.f32.mrb[0].mxu0
      %9548 = vmatprep.mubr.f32.mxu0 0.0
      %9549 = vmatmul.mubr.f32.gmra.mrb[0].mxu0 %v9383
      %v9550 = vpop.f32.mrb[0].mxu0
      %v9551 = vadd.f32 0.0, %v9550
      %v9552 = vpop.f32.mrb[0].mxu0
      %9553 = vmatprep.mubr.f32.mxu0 0.0
      %9554 = vmatmul.mubr.f32.gmra.mrb[0].mxu0 %v9386
      %v9555 = vpop.f32.mrb[0].mxu0
      %v9556 = vadd.f32 0.0, %v9555
      %v9557 = vpop.f32.mrb[0].mxu0
      %9558 = vmatprep.mubr.f32.mxu0 0.0
      %9559 = vmatmul.mubr.f32.gmra.mrb[0].mxu0 %v9389
      %v9560 = vpop.f32.mrb[0].mxu0
      %v9561 = vadd.f32 0.0, %v9560
      %v9562 = vpop.f32.mrb[0].mxu0
      %9563 = vmatprep.mubr.f32.mxu0 0.0
      %9564 = vmatmul.mubr.f32.gmra.mrb[0].mxu0 %v9392
      %v9565 = vpop.f32.mrb[0].mxu0
      %v9566 = vadd.f32 0.0, %v9565
      %v9567 = vpop.f32.mrb[0].mxu0
      %9568 = vmatprep.mubr.f32.mxu0 0.0
      %9569 = vmatmul.mubr.f32.gmra.mrb[0].mxu0 %v9395
      %v9570 = vpop.f32.mrb[0].mxu0
      %v9571 = vadd.f32 0.0, %v9570
      %v9572 = vpop.f32.mrb[0].mxu0
      %9573 = vmatprep.mubr.f32.mxu0 0.0
      %9574 = vmatmul.mubr.f32.gmra.mrb[0].mxu0 %v9398
      %v9575 = vpop.f32.mrb[0].mxu0
      %v9576 = vadd.f32 0.0, %v9575
      %v9577 = vpop.f32.mrb[0].mxu0
      %9578 = vmatprep.mubr.f32.mxu0 0.0
      %9579 = vmatmul.mubr.f32.gmra.mrb[0].mxu0 %v9401
      %v9580 = vpop.f32.mrb[0].mxu0
      %v9581 = vadd.f32 0.0, %v9580
      %v9582 = vpop.f32.mrb[0].mxu0
      %9583 = vmatprep.mubr.f32.mxu0 0.0
      %9584 = vmatmul.mubr.f32.gmra.mrb[0].mxu0 %v9404
      %v9585 = vpop.f32.mrb[0].mxu0
      %v9586 = vadd.f32 0.0, %v9585
      %v9587 = vpop.f32.mrb[0].mxu0
      %9588 = vmatprep.mubr.f32.mxu0 0.0
      %9589 = vmatmul.mubr.f32.gmra.mrb[0].mxu0 %v9407
      %v9590 = vpop.f32.mrb[0].mxu0
      %v9591 = vadd.f32 0.0, %v9590
      %v9592 = vpop.f32.mrb[0].mxu0
      %9593 = vmatprep.mubr.f32.mxu0 0.0
      %9594 = vmatmul.mubr.f32.gmra.mrb[0].mxu0 %v9410
      %v9595 = vpop.f32.mrb[0].mxu0
      %v9596 = vadd.f32 0.0, %v9595
      %v9597 = vpop.f32.mrb[0].mxu0
      %9598 = vmatprep.mubr.f32.mxu0 0.0
      %9599 = vmatmul.mubr.f32.gmra.mrb[0].mxu0 %v9413
      %v9600 = vpop.f32.mrb[0].mxu0
      %v9601 = vadd.f32 0.0, %v9600
      %v9602 = vpop.f32.mrb[0].mxu0
      %9603 = vmatprep.mubr.f32.mxu0 0.0
      %9604 = vmatmul.mubr.f32.gmra.mrb[0].mxu0 %v9416
      %v9605 = vpop.f32.mrb[0].mxu0
      %v9606 = vadd.f32 0.0, %v9605
      %v9607 = vpop.f32.mrb[0].mxu0
      %9608 = vmatprep.mubr.f32.mxu0 0.0
      %9609 = vmatmul.mubr.f32.gmra.mrb[0].mxu0 %v9419
      %v9610 = vpop.f32.mrb[0].mxu0
      %v9611 = vadd.f32 0.0, %v9610
      %v9612 = vpop.f32.mrb[0].mxu0
      %9613 = vmatprep.mubr.f32.mxu0 0.0
      %9614 = vmatmul.mubr.f32.gmra.mrb[0].mxu0 %v9422
      %v9615 = vpop.f32.mrb[0].mxu0
      %v9616 = vadd.f32 0.0, %v9615
      %v9617 = vpop.f32.mrb[0].mxu0
      %9618 = vmatprep.mubr.f32.mxu0 0.0
      %9619 = vmatmul.mubr.f32.gmra.mrb[0].mxu0 %v9425
      %v9620 = vpop.f32.mrb[0].mxu0
      %v9621 = vadd.f32 0.0, %v9620
      %v9622 = vpop.f32.mrb[0].mxu0
      %9623 = vmatprep.mubr.f32.mxu0 0.0
      %9624 = vmatmul.mubr.f32.gmra.mrb[0].mxu0 %v9428
      %v9625 = vpop.f32.mrb[0].mxu0
      %v9626 = vadd.f32 0.0, %v9625
      %v9627 = vpop.f32.mrb[0].mxu0
      %9628 = vmatprep.mubr.f32.mxu0 0.0
      %9629 = vmatmul.mubr.f32.gmra.mrb[0].mxu0 %v9431
      %v9630 = vpop.f32.mrb[0].mxu0
      %v9631 = vadd.f32 0.0, %v9630
      %v9632 = vpop.f32.mrb[0].mxu0
      %9633 = vmatprep.mubr.f32.mxu0 0.0
      %9634 = vmatmul.mubr.f32.gmra.mrb[0].mxu0 %v9434
      %v9635 = vpop.f32.mrb[0].mxu0
      %v9636 = vadd.f32 0.0, %v9635
      %v9637 = vpop.f32.mrb[0].mxu0
      %9638 = vmatprep.mubr.f32.mxu0 0.0
      %9639 = vmatmul.mubr.f32.gmra.mrb[0].mxu0 %v9437
      %v9640 = vpop.f32.mrb[0].mxu0
      %v9641 = vadd.f32 0.0, %v9640
      %v9642 = vpop.f32.mrb[0].mxu0
      %9643 = vdwg.mxu0
      %v9644 = vadd.f32 %v9268, %v9506
      %v9645 = vadd.f32 %v9269, %v9511
      %v9646 = vadd.f32 %v9270, %v9516
      %v9647 = vadd.f32 %v9271, %v9521
      %v9648 = vadd.f32 %v9272, %v9526
      %v9649 = vadd.f32 %v9273, %v9531
      %v9650 = vadd.f32 %v9274, %v9536
      %v9651 = vadd.f32 %v9275, %v9541
      %v9652 = vadd.f32 %v9276, %v9546
      %v9653 = vadd.f32 %v9277, %v9551
      %v9654 = vadd.f32 %v9278, %v9556
      %v9655 = vadd.f32 %v9279, %v9561
      %v9656 = vadd.f32 %v9280, %v9566
      %v9657 = vadd.f32 %v9281, %v9571
      %v9658 = vadd.f32 %v9282, %v9576
      %v9659 = vadd.f32 %v9283, %v9581
      %v9660 = vadd.f32 %v9284, %v9586
      %v9661 = vadd.f32 %v9285, %v9591
      %v9662 = vadd.f32 %v9286, %v9596
      %v9663 = vadd.f32 %v9287, %v9601
      %v9664 = vadd.f32 %v9288, %v9606
      %v9665 = vadd.f32 %v9289, %v9611
      %v9666 = vadd.f32 %v9290, %v9616
      %v9667 = vadd.f32 %v9291, %v9621
      %v9668 = vadd.f32 %v9292, %v9626
      %v9669 = vadd.f32 %v9293, %v9631
      %v9670 = vadd.f32 %v9294, %v9636
      %v9671 = vadd.f32 %v9295, %v9641
      %s9672 = scalar_lea.vmem %s7, 672
      %v9673 = vld [vmem:[%s9672] sm:$0xff]
      %v9674 = vld [vmem:[%s9672 + $0x8] sm:$0xff]
      %v9675 = vld [vmem:[%s9672 + $0x10] sm:$0xff]
      %v9676 = vld [vmem:[%s9672 + $0x18] sm:$0xff]
      %v9677 = vld [vmem:[%s9672 + $0x20] sm:$0xff]
      %v9678 = vld [vmem:[%s9672 + $0x28] sm:$0xff]
      %v9679 = vld [vmem:[%s9672 + $0x30] sm:$0xff]
      %v9680 = vld [vmem:[%s9672 + $0x38] sm:$0xff]
      %v9681 = vld [vmem:[%s9672 + $0x40] sm:$0xff]
      %v9682 = vld [vmem:[%s9672 + $0x48] sm:$0xff]
      %v9683 = vld [vmem:[%s9672 + $0x50] sm:$0xff]
      %v9684 = vld [vmem:[%s9672 + $0x58] sm:$0xff]
      %v9685 = vld [vmem:[%s9672 + $0x60] sm:$0xff]
      %v9686 = vld [vmem:[%s9672 + $0x68] sm:$0xff]
      %v9687 = vld [vmem:[%s9672 + $0x70] sm:$0xff]
      %v9688 = vld [vmem:[%s9672 + $0x78] sm:$0xff]
      %v9689 = vld [vmem:[%s9672 + $0x80] sm:$0xff]
      %v9690 = vld [vmem:[%s9672 + $0x88] sm:$0xff]
      %v9691 = vld [vmem:[%s9672 + $0x90] sm:$0xff]
      %v9692 = vld [vmem:[%s9672 + $0x98] sm:$0xff]
      %v9693 = vld [vmem:[%s9672 + $0xa0] sm:$0xff]
      %v9694 = vld [vmem:[%s9672 + $0xa8] sm:$0xff]
      %v9695 = vld [vmem:[%s9672 + $0xb0] sm:$0xff]
      %v9696 = vld [vmem:[%s9672 + $0xb8] sm:$0xff]
      %v9697 = vld [vmem:[%s9672 + $0xc0] sm:$0xff]
      %v9698 = vld [vmem:[%s9672 + $0xc8] sm:$0xff]
      %v9699 = vld [vmem:[%s9672 + $0xd0] sm:$0xff]
      %v9700 = vld [vmem:[%s9672 + $0xd8] sm:$0xff]
      %9701 = vrot.lane.b32.xlu0 %v8488, 125
      %v9702 = vpop.permute.xlu0 %9701
      %9703 = vrot.lane.b32.xlu0 %v8493, 125
      %v9704 = vpop.permute.xlu0 %9703
      %9705 = vrot.lane.b32.xlu0 %v8498, 125
      %v9706 = vpop.permute.xlu0 %9705
      %9707 = vrot.lane.b32.xlu0 %v8503, 125
      %v9708 = vpop.permute.xlu0 %9707
      %9709 = vrot.lane.b32.xlu0 %v8508, 125
      %v9710 = vpop.permute.xlu0 %9709
      %9711 = vrot.lane.b32.xlu0 %v8513, 125
      %v9712 = vpop.permute.xlu0 %9711
      %9713 = vrot.lane.b32.xlu0 %v8518, 125
      %v9714 = vpop.permute.xlu0 %9713
      %9715 = vrot.lane.b32.xlu0 %v8523, 125
      %v9716 = vpop.permute.xlu0 %9715
      %9717 = vrot.lane.b32.xlu0 %v8528, 125
      %v9718 = vpop.permute.xlu0 %9717
      %9719 = vrot.lane.b32.xlu0 %v8533, 125
      %v9720 = vpop.permute.xlu0 %9719
      %v9732 = vsel %vm8592, %v9673, 0
      %v9735 = vsel %vm8592, %v9674, 0
      %v9738 = vsel %vm8592, %v9675, 0
      %v9741 = vsel %vm8592, %v9676, 0
      %v9744 = vsel %vm8592, %v9677, 0
      %v9747 = vsel %vm8592, %v9678, 0
      %v9750 = vsel %vm8592, %v9679, 0
      %v9753 = vsel %vm8592, %v9680, 0
      %v9756 = vsel %vm8592, %v9681, 0
      %v9759 = vsel %vm8592, %v9682, 0
      %v9762 = vsel %vm8592, %v9683, 0
      %v9765 = vsel %vm8592, %v9684, 0
      %v9768 = vsel %vm8592, %v9685, 0
      %v9771 = vsel %vm8592, %v9686, 0
      %v9774 = vsel %vm8592, %v9687, 0
      %v9777 = vsel %vm8592, %v9688, 0
      %v9780 = vsel %vm8592, %v9689, 0
      %v9783 = vsel %vm8592, %v9690, 0
      %v9786 = vsel %vm8592, %v9691, 0
      %v9789 = vsel %vm8592, %v9692, 0
      %v9792 = vsel %vm8592, %v9693, 0
      %v9795 = vsel %vm8592, %v9694, 0
      %v9798 = vsel %vm8592, %v9695, 0
      %v9801 = vsel %vm8592, %v9696, 0
      %v9804 = vsel %vm8592, %v9697, 0
      %v9807 = vsel %vm8592, %v9698, 0
      %v9810 = vsel %vm8592, %v9699, 0
      %v9813 = vsel %vm8592, %v9700, 0
      %9815 = vmatprep.subr.mxu0 0.0
      %9816 = vmatpush1.msra.mxu0 %v9702
      %9817 = vmatprep.subr.mxu0 0.0
      %9818 = vmatpush1.msra.mxu0 %v9704
      %9819 = vmatprep.subr.mxu0 0.0
      %9820 = vmatpush1.msra.mxu0 %v9706
      %9821 = vmatprep.subr.mxu0 0.0
      %9822 = vmatpush1.msra.mxu0 %v9708
      %9823 = vmatprep.subr.mxu0 0.0
      %9824 = vmatpush1.msra.mxu0 %v9710
      %9825 = vmatprep.subr.mxu0 0.0
      %9826 = vmatpush1.msra.mxu0 %v9712
      %9827 = vmatprep.subr.mxu0 0.0
      %9828 = vmatpush1.msra.mxu0 %v9714
      %9829 = vmatprep.subr.mxu0 0.0
      %9830 = vmatpush1.msra.mxu0 %v9716
      %9831 = vmatprep.subr.mxu0 0.0
      %9832 = vmatpush1.msra.mxu0 %v9718
      %9833 = vmatprep.subr.mxu0 0.0
      %9834 = vmatpush1.msra.mxu0 %v9720
      %9835 = vmatprep.subr.mxu0 0.0
      %9836 = vmatpush1.msra.mxu0 0.0
      %9837 = vmatprep.subr.mxu0 0.0
      %9838 = vmatpush1.msra.mxu0 0.0
      %9839 = vmatprep.subr.mxu0 0.0
      %9840 = vmatpush1.msra.mxu0 0.0
      %9841 = vmatprep.subr.mxu0 0.0
      %9842 = vmatpush1.msra.mxu0 0.0
      %9843 = vmatprep.subr.mxu0 0.0
      %9844 = vmatpush1.msra.mxu0 0.0
      %9845 = vmatprep.subr.mxu0 0.0
      %9846 = vmatpush1.msra.mxu0 0.0
      %9847 = vmatprep.subr.mxu0 0.0
      %9848 = vmatpush1.msra.mxu0 0.0
      %9849 = vmatprep.subr.mxu0 0.0
      %9850 = vmatpush1.msra.mxu0 0.0
      %9851 = vmatprep.subr.mxu0 0.0
      %9852 = vmatpush1.msra.mxu0 0.0
      %9853 = vmatprep.subr.mxu0 0.0
      %9854 = vmatpush1.msra.mxu0 0.0
      %9855 = vmatprep.subr.mxu0 0.0
      %9856 = vmatpush1.msra.mxu0 0.0
      %9857 = vmatprep.subr.mxu0 0.0
      %9858 = vmatpush1.msra.mxu0 0.0
      %9859 = vmatprep.subr.mxu0 0.0
      %9860 = vmatpush1.msra.mxu0 0.0
      %9861 = vmatprep.subr.mxu0 0.0
      %9862 = vmatpush1.msra.mxu0 0.0
      %9863 = vmatprep.subr.mxu0 0.0
      %9864 = vmatpush1.msra.mxu0 0.0
      %9865 = vmatprep.subr.mxu0 0.0
      %9866 = vmatpush1.msra.mxu0 0.0
      %9867 = vmatprep.subr.mxu0 0.0
      %9868 = vmatpush1.msra.mxu0 0.0
      %9869 = vmatprep.subr.mxu0 0.0
      %9870 = vmatpush1.msra.mxu0 0.0
      %9871 = vmatprep.subr.mxu0 0.0
      %9872 = vmatpush1.msra.mxu0 0.0
      %9873 = vmatprep.subr.mxu0 0.0
      %9874 = vmatpush1.msra.mxu0 0.0
      %9875 = vmatprep.subr.mxu0 0.0
      %9876 = vmatpush1.msra.mxu0 0.0
      %9877 = vmatprep.subr.mxu0 0.0
      %9878 = vmatpush1.msra.mxu0 0.0
      %9879 = vmatprep.mubr.f32.mxu0 0.0
      %9880 = vmatmul.mubr.f32.gmra.mrb[0].mxu0 %v9732
      %v9881 = vpop.f32.mrb[0].mxu0
      %v9882 = vadd.f32 0.0, %v9881
      %v9883 = vpop.f32.mrb[0].mxu0
      %9884 = vmatprep.mubr.f32.mxu0 0.0
      %9885 = vmatmul.mubr.f32.gmra.mrb[0].mxu0 %v9735
      %v9886 = vpop.f32.mrb[0].mxu0
      %v9887 = vadd.f32 0.0, %v9886
      %v9888 = vpop.f32.mrb[0].mxu0
      %9889 = vmatprep.mubr.f32.mxu0 0.0
      %9890 = vmatmul.mubr.f32.gmra.mrb[0].mxu0 %v9738
      %v9891 = vpop.f32.mrb[0].mxu0
      %v9892 = vadd.f32 0.0, %v9891
      %v9893 = vpop.f32.mrb[0].mxu0
      %9894 = vmatprep.mubr.f32.mxu0 0.0
      %9895 = vmatmul.mubr.f32.gmra.mrb[0].mxu0 %v9741
      %v9896 = vpop.f32.mrb[0].mxu0
      %v9897 = vadd.f32 0.0, %v9896
      %v9898 = vpop.f32.mrb[0].mxu0
      %9899 = vmatprep.mubr.f32.mxu0 0.0
      %9900 = vmatmul.mubr.f32.gmra.mrb[0].mxu0 %v9744
      %v9901 = vpop.f32.mrb[0].mxu0
      %v9902 = vadd.f32 0.0, %v9901
      %v9903 = vpop.f32.mrb[0].mxu0
      %9904 = vmatprep.mubr.f32.mxu0 0.0
      %9905 = vmatmul.mubr.f32.gmra.mrb[0].mxu0 %v9747
      %v9906 = vpop.f32.mrb[0].mxu0
      %v9907 = vadd.f32 0.0, %v9906
      %v9908 = vpop.f32.mrb[0].mxu0
      %9909 = vmatprep.mubr.f32.mxu0 0.0
      %9910 = vmatmul.mubr.f32.gmra.mrb[0].mxu0 %v9750
      %v9911 = vpop.f32.mrb[0].mxu0
      %v9912 = vadd.f32 0.0, %v9911
      %v9913 = vpop.f32.mrb[0].mxu0
      %9914 = vmatprep.mubr.f32.mxu0 0.0
      %9915 = vmatmul.mubr.f32.gmra.mrb[0].mxu0 %v9753
      %v9916 = vpop.f32.mrb[0].mxu0
      %v9917 = vadd.f32 0.0, %v9916
      %v9918 = vpop.f32.mrb[0].mxu0
      %9919 = vmatprep.mubr.f32.mxu0 0.0
      %9920 = vmatmul.mubr.f32.gmra.mrb[0].mxu0 %v9756
      %v9921 = vpop.f32.mrb[0].mxu0
      %v9922 = vadd.f32 0.0, %v9921
      %v9923 = vpop.f32.mrb[0].mxu0
      %9924 = vmatprep.mubr.f32.mxu0 0.0
      %9925 = vmatmul.mubr.f32.gmra.mrb[0].mxu0 %v9759
      %v9926 = vpop.f32.mrb[0].mxu0
      %v9927 = vadd.f32 0.0, %v9926
      %v9928 = vpop.f32.mrb[0].mxu0
      %9929 = vmatprep.mubr.f32.mxu0 0.0
      %9930 = vmatmul.mubr.f32.gmra.mrb[0].mxu0 %v9762
      %v9931 = vpop.f32.mrb[0].mxu0
      %v9932 = vadd.f32 0.0, %v9931
      %v9933 = vpop.f32.mrb[0].mxu0
      %9934 = vmatprep.mubr.f32.mxu0 0.0
      %9935 = vmatmul.mubr.f32.gmra.mrb[0].mxu0 %v9765
      %v9936 = vpop.f32.mrb[0].mxu0
      %v9937 = vadd.f32 0.0, %v9936
      %v9938 = vpop.f32.mrb[0].mxu0
      %9939 = vmatprep.mubr.f32.mxu0 0.0
      %9940 = vmatmul.mubr.f32.gmra.mrb[0].mxu0 %v9768
      %v9941 = vpop.f32.mrb[0].mxu0
      %v9942 = vadd.f32 0.0, %v9941
      %v9943 = vpop.f32.mrb[0].mxu0
      %9944 = vmatprep.mubr.f32.mxu0 0.0
      %9945 = vmatmul.mubr.f32.gmra.mrb[0].mxu0 %v9771
      %v9946 = vpop.f32.mrb[0].mxu0
      %v9947 = vadd.f32 0.0, %v9946
      %v9948 = vpop.f32.mrb[0].mxu0
      %9949 = vmatprep.mubr.f32.mxu0 0.0
      %9950 = vmatmul.mubr.f32.gmra.mrb[0].mxu0 %v9774
      %v9951 = vpop.f32.mrb[0].mxu0
      %v9952 = vadd.f32 0.0, %v9951
      %v9953 = vpop.f32.mrb[0].mxu0
      %9954 = vmatprep.mubr.f32.mxu0 0.0
      %9955 = vmatmul.mubr.f32.gmra.mrb[0].mxu0 %v9777
      %v9956 = vpop.f32.mrb[0].mxu0
      %v9957 = vadd.f32 0.0, %v9956
      %v9958 = vpop.f32.mrb[0].mxu0
      %9959 = vmatprep.mubr.f32.mxu0 0.0
      %9960 = vmatmul.mubr.f32.gmra.mrb[0].mxu0 %v9780
      %v9961 = vpop.f32.mrb[0].mxu0
      %v9962 = vadd.f32 0.0, %v9961
      %v9963 = vpop.f32.mrb[0].mxu0
      %9964 = vmatprep.mubr.f32.mxu0 0.0
      %9965 = vmatmul.mubr.f32.gmra.mrb[0].mxu0 %v9783
      %v9966 = vpop.f32.mrb[0].mxu0
      %v9967 = vadd.f32 0.0, %v9966
      %v9968 = vpop.f32.mrb[0].mxu0
      %9969 = vmatprep.mubr.f32.mxu0 0.0
      %9970 = vmatmul.mubr.f32.gmra.mrb[0].mxu0 %v9786
      %v9971 = vpop.f32.mrb[0].mxu0
      %v9972 = vadd.f32 0.0, %v9971
      %v9973 = vpop.f32.mrb[0].mxu0
      %9974 = vmatprep.mubr.f32.mxu0 0.0
      %9975 = vmatmul.mubr.f32.gmra.mrb[0].mxu0 %v9789
      %v9976 = vpop.f32.mrb[0].mxu0
      %v9977 = vadd.f32 0.0, %v9976
      %v9978 = vpop.f32.mrb[0].mxu0
      %9979 = vmatprep.mubr.f32.mxu0 0.0
      %9980 = vmatmul.mubr.f32.gmra.mrb[0].mxu0 %v9792
      %v9981 = vpop.f32.mrb[0].mxu0
      %v9982 = vadd.f32 0.0, %v9981
      %v9983 = vpop.f32.mrb[0].mxu0
      %9984 = vmatprep.mubr.f32.mxu0 0.0
      %9985 = vmatmul.mubr.f32.gmra.mrb[0].mxu0 %v9795
      %v9986 = vpop.f32.mrb[0].mxu0
      %v9987 = vadd.f32 0.0, %v9986
      %v9988 = vpop.f32.mrb[0].mxu0
      %9989 = vmatprep.mubr.f32.mxu0 0.0
      %9990 = vmatmul.mubr.f32.gmra.mrb[0].mxu0 %v9798
      %v9991 = vpop.f32.mrb[0].mxu0
      %v9992 = vadd.f32 0.0, %v9991
      %v9993 = vpop.f32.mrb[0].mxu0
      %9994 = vmatprep.mubr.f32.mxu0 0.0
      %9995 = vmatmul.mubr.f32.gmra.mrb[0].mxu0 %v9801
      %v9996 = vpop.f32.mrb[0].mxu0
      %v9997 = vadd.f32 0.0, %v9996
      %v9998 = vpop.f32.mrb[0].mxu0
      %9999 = vmatprep.mubr.f32.mxu0 0.0
      %10000 = vmatmul.mubr.f32.gmra.mrb[0].mxu0 %v9804
      %v10001 = vpop.f32.mrb[0].mxu0
      %v10002 = vadd.f32 0.0, %v10001
      %v10003 = vpop.f32.mrb[0].mxu0
      %10004 = vmatprep.mubr.f32.mxu0 0.0
      %10005 = vmatmul.mubr.f32.gmra.mrb[0].mxu0 %v9807
      %v10006 = vpop.f32.mrb[0].mxu0
      %v10007 = vadd.f32 0.0, %v10006
      %v10008 = vpop.f32.mrb[0].mxu0
      %10009 = vmatprep.mubr.f32.mxu0 0.0
      %10010 = vmatmul.mubr.f32.gmra.mrb[0].mxu0 %v9810
      %v10011 = vpop.f32.mrb[0].mxu0
      %v10012 = vadd.f32 0.0, %v10011
      %v10013 = vpop.f32.mrb[0].mxu0
      %10014 = vmatprep.mubr.f32.mxu0 0.0
      %10015 = vmatmul.mubr.f32.gmra.mrb[0].mxu0 %v9813
      %v10016 = vpop.f32.mrb[0].mxu0
      %v10017 = vadd.f32 0.0, %v10016
      %v10018 = vpop.f32.mrb[0].mxu0
      %10019 = vdwg.mxu0
      %v10020 = vadd.f32 %v9644, %v9882
      %v10021 = vadd.f32 %v9645, %v9887
      %v10022 = vadd.f32 %v9646, %v9892
      %v10023 = vadd.f32 %v9647, %v9897
      %v10024 = vadd.f32 %v9648, %v9902
      %v10025 = vadd.f32 %v9649, %v9907
      %v10026 = vadd.f32 %v9650, %v9912
      %v10027 = vadd.f32 %v9651, %v9917
      %v10028 = vadd.f32 %v9652, %v9922
      %v10029 = vadd.f32 %v9653, %v9927
      %v10030 = vadd.f32 %v9654, %v9932
      %v10031 = vadd.f32 %v9655, %v9937
      %v10032 = vadd.f32 %v9656, %v9942
      %v10033 = vadd.f32 %v9657, %v9947
      %v10034 = vadd.f32 %v9658, %v9952
      %v10035 = vadd.f32 %v9659, %v9957
      %v10036 = vadd.f32 %v9660, %v9962
      %v10037 = vadd.f32 %v9661, %v9967
      %v10038 = vadd.f32 %v9662, %v9972
      %v10039 = vadd.f32 %v9663, %v9977
      %v10040 = vadd.f32 %v9664, %v9982
      %v10041 = vadd.f32 %v9665, %v9987
      %v10042 = vadd.f32 %v9666, %v9992
      %v10043 = vadd.f32 %v9667, %v9997
      %v10044 = vadd.f32 %v9668, %v10002
      %v10045 = vadd.f32 %v9669, %v10007
      %v10046 = vadd.f32 %v9670, %v10012
      %v10047 = vadd.f32 %v9671, %v10017
      %s10048 = scalar_lea.vmem %s7, 896
      %v10049 = vld [vmem:[%s10048] sm:$0xff]
      %v10050 = vld [vmem:[%s10048 + $0x8] sm:$0xff]
      %v10051 = vld [vmem:[%s10048 + $0x10] sm:$0xff]
      %v10052 = vld [vmem:[%s10048 + $0x18] sm:$0xff]
      %v10053 = vld [vmem:[%s10048 + $0x20] sm:$0xff]
      %v10054 = vld [vmem:[%s10048 + $0x28] sm:$0xff]
      %v10055 = vld [vmem:[%s10048 + $0x30] sm:$0xff]
      %v10056 = vld [vmem:[%s10048 + $0x38] sm:$0xff]
      %v10057 = vld [vmem:[%s10048 + $0x40] sm:$0xff]
      %v10058 = vld [vmem:[%s10048 + $0x48] sm:$0xff]
      %v10059 = vld [vmem:[%s10048 + $0x50] sm:$0xff]
      %v10060 = vld [vmem:[%s10048 + $0x58] sm:$0xff]
      %v10061 = vld [vmem:[%s10048 + $0x60] sm:$0xff]
      %v10062 = vld [vmem:[%s10048 + $0x68] sm:$0xff]
      %v10063 = vld [vmem:[%s10048 + $0x70] sm:$0xff]
      %v10064 = vld [vmem:[%s10048 + $0x78] sm:$0xff]
      %v10065 = vld [vmem:[%s10048 + $0x80] sm:$0xff]
      %v10066 = vld [vmem:[%s10048 + $0x88] sm:$0xff]
      %v10067 = vld [vmem:[%s10048 + $0x90] sm:$0xff]
      %v10068 = vld [vmem:[%s10048 + $0x98] sm:$0xff]
      %v10069 = vld [vmem:[%s10048 + $0xa0] sm:$0xff]
      %v10070 = vld [vmem:[%s10048 + $0xa8] sm:$0xff]
      %v10071 = vld [vmem:[%s10048 + $0xb0] sm:$0xff]
      %v10072 = vld [vmem:[%s10048 + $0xb8] sm:$0xff]
      %v10073 = vld [vmem:[%s10048 + $0xc0] sm:$0xff]
      %v10074 = vld [vmem:[%s10048 + $0xc8] sm:$0xff]
      %v10075 = vld [vmem:[%s10048 + $0xd0] sm:$0xff]
      %v10076 = vld [vmem:[%s10048 + $0xd8] sm:$0xff]
      %10077 = vrot.lane.b32.xlu0 %v8488, 124
      %v10078 = vpop.permute.xlu0 %10077
      %10079 = vrot.lane.b32.xlu0 %v8493, 124
      %v10080 = vpop.permute.xlu0 %10079
      %10081 = vrot.lane.b32.xlu0 %v8498, 124
      %v10082 = vpop.permute.xlu0 %10081
      %10083 = vrot.lane.b32.xlu0 %v8503, 124
      %v10084 = vpop.permute.xlu0 %10083
      %10085 = vrot.lane.b32.xlu0 %v8508, 124
      %v10086 = vpop.permute.xlu0 %10085
      %10087 = vrot.lane.b32.xlu0 %v8513, 124
      %v10088 = vpop.permute.xlu0 %10087
      %10089 = vrot.lane.b32.xlu0 %v8518, 124
      %v10090 = vpop.permute.xlu0 %10089
      %10091 = vrot.lane.b32.xlu0 %v8523, 124
      %v10092 = vpop.permute.xlu0 %10091
      %10093 = vrot.lane.b32.xlu0 %v8528, 124
      %v10094 = vpop.permute.xlu0 %10093
      %10095 = vrot.lane.b32.xlu0 %v8533, 124
      %v10096 = vpop.permute.xlu0 %10095
      %v10108 = vsel %vm8592, %v10049, 0
      %v10111 = vsel %vm8592, %v10050, 0
      %v10114 = vsel %vm8592, %v10051, 0
      %v10117 = vsel %vm8592, %v10052, 0
      %v10120 = vsel %vm8592, %v10053, 0
      %v10123 = vsel %vm8592, %v10054, 0
      %v10126 = vsel %vm8592, %v10055, 0
      %v10129 = vsel %vm8592, %v10056, 0
      %v10132 = vsel %vm8592, %v10057, 0
      %v10135 = vsel %vm8592, %v10058, 0
      %v10138 = vsel %vm8592, %v10059, 0
      %v10141 = vsel %vm8592, %v10060, 0
      %v10144 = vsel %vm8592, %v10061, 0
      %v10147 = vsel %vm8592, %v10062, 0
      %v10150 = vsel %vm8592, %v10063, 0
      %v10153 = vsel %vm8592, %v10064, 0
      %v10156 = vsel %vm8592, %v10065, 0
      %v10159 = vsel %vm8592, %v10066, 0
      %v10162 = vsel %vm8592, %v10067, 0
      %v10165 = vsel %vm8592, %v10068, 0
      %v10168 = vsel %vm8592, %v10069, 0
      %v10171 = vsel %vm8592, %v10070, 0
      %v10174 = vsel %vm8592, %v10071, 0
      %v10177 = vsel %vm8592, %v10072, 0
      %v10180 = vsel %vm8592, %v10073, 0
      %v10183 = vsel %vm8592, %v10074, 0
      %v10186 = vsel %vm8592, %v10075, 0
      %v10189 = vsel %vm8592, %v10076, 0
      %10191 = vmatprep.subr.mxu0 0.0
      %10192 = vmatpush1.msra.mxu0 %v10078
      %10193 = vmatprep.subr.mxu0 0.0
      %10194 = vmatpush1.msra.mxu0 %v10080
      %10195 = vmatprep.subr.mxu0 0.0
      %10196 = vmatpush1.msra.mxu0 %v10082
      %10197 = vmatprep.subr.mxu0 0.0
      %10198 = vmatpush1.msra.mxu0 %v10084
      %10199 = vmatprep.subr.mxu0 0.0
      %10200 = vmatpush1.msra.mxu0 %v10086
      %10201 = vmatprep.subr.mxu0 0.0
      %10202 = vmatpush1.msra.mxu0 %v10088
      %10203 = vmatprep.subr.mxu0 0.0
      %10204 = vmatpush1.msra.mxu0 %v10090
      %10205 = vmatprep.subr.mxu0 0.0
      %10206 = vmatpush1.msra.mxu0 %v10092
      %10207 = vmatprep.subr.mxu0 0.0
      %10208 = vmatpush1.msra.mxu0 %v10094
      %10209 = vmatprep.subr.mxu0 0.0
      %10210 = vmatpush1.msra.mxu0 %v10096
      %10211 = vmatprep.subr.mxu0 0.0
      %10212 = vmatpush1.msra.mxu0 0.0
      %10213 = vmatprep.subr.mxu0 0.0
      %10214 = vmatpush1.msra.mxu0 0.0
      %10215 = vmatprep.subr.mxu0 0.0
      %10216 = vmatpush1.msra.mxu0 0.0
      %10217 = vmatprep.subr.mxu0 0.0
      %10218 = vmatpush1.msra.mxu0 0.0
      %10219 = vmatprep.subr.mxu0 0.0
      %10220 = vmatpush1.msra.mxu0 0.0
      %10221 = vmatprep.subr.mxu0 0.0
      %10222 = vmatpush1.msra.mxu0 0.0
      %10223 = vmatprep.subr.mxu0 0.0
      %10224 = vmatpush1.msra.mxu0 0.0
      %10225 = vmatprep.subr.mxu0 0.0
      %10226 = vmatpush1.msra.mxu0 0.0
      %10227 = vmatprep.subr.mxu0 0.0
      %10228 = vmatpush1.msra.mxu0 0.0
      %10229 = vmatprep.subr.mxu0 0.0
      %10230 = vmatpush1.msra.mxu0 0.0
      %10231 = vmatprep.subr.mxu0 0.0
      %10232 = vmatpush1.msra.mxu0 0.0
      %10233 = vmatprep.subr.mxu0 0.0
      %10234 = vmatpush1.msra.mxu0 0.0
      %10235 = vmatprep.subr.mxu0 0.0
      %10236 = vmatpush1.msra.mxu0 0.0
      %10237 = vmatprep.subr.mxu0 0.0
      %10238 = vmatpush1.msra.mxu0 0.0
      %10239 = vmatprep.subr.mxu0 0.0
      %10240 = vmatpush1.msra.mxu0 0.0
      %10241 = vmatprep.subr.mxu0 0.0
      %10242 = vmatpush1.msra.mxu0 0.0
      %10243 = vmatprep.subr.mxu0 0.0
      %10244 = vmatpush1.msra.mxu0 0.0
      %10245 = vmatprep.subr.mxu0 0.0
      %10246 = vmatpush1.msra.mxu0 0.0
      %10247 = vmatprep.subr.mxu0 0.0
      %10248 = vmatpush1.msra.mxu0 0.0
      %10249 = vmatprep.subr.mxu0 0.0
      %10250 = vmatpush1.msra.mxu0 0.0
      %10251 = vmatprep.subr.mxu0 0.0
      %10252 = vmatpush1.msra.mxu0 0.0
      %10253 = vmatprep.subr.mxu0 0.0
      %10254 = vmatpush1.msra.mxu0 0.0
      %10255 = vmatprep.mubr.f32.mxu0 0.0
      %10256 = vmatmul.mubr.f32.gmra.mrb[0].mxu0 %v10108
      %v10257 = vpop.f32.mrb[0].mxu0
      %v10258 = vadd.f32 0.0, %v10257
      %v10259 = vpop.f32.mrb[0].mxu0
      %10260 = vmatprep.mubr.f32.mxu0 0.0
      %10261 = vmatmul.mubr.f32.gmra.mrb[0].mxu0 %v10111
      %v10262 = vpop.f32.mrb[0].mxu0
      %v10263 = vadd.f32 0.0, %v10262
      %v10264 = vpop.f32.mrb[0].mxu0
      %10265 = vmatprep.mubr.f32.mxu0 0.0
      %10266 = vmatmul.mubr.f32.gmra.mrb[0].mxu0 %v10114
      %v10267 = vpop.f32.mrb[0].mxu0
      %v10268 = vadd.f32 0.0, %v10267
      %v10269 = vpop.f32.mrb[0].mxu0
      %10270 = vmatprep.mubr.f32.mxu0 0.0
      %10271 = vmatmul.mubr.f32.gmra.mrb[0].mxu0 %v10117
      %v10272 = vpop.f32.mrb[0].mxu0
      %v10273 = vadd.f32 0.0, %v10272
      %v10274 = vpop.f32.mrb[0].mxu0
      %10275 = vmatprep.mubr.f32.mxu0 0.0
      %10276 = vmatmul.mubr.f32.gmra.mrb[0].mxu0 %v10120
      %v10277 = vpop.f32.mrb[0].mxu0
      %v10278 = vadd.f32 0.0, %v10277
      %v10279 = vpop.f32.mrb[0].mxu0
      %10280 = vmatprep.mubr.f32.mxu0 0.0
      %10281 = vmatmul.mubr.f32.gmra.mrb[0].mxu0 %v10123
      %v10282 = vpop.f32.mrb[0].mxu0
      %v10283 = vadd.f32 0.0, %v10282
      %v10284 = vpop.f32.mrb[0].mxu0
      %10285 = vmatprep.mubr.f32.mxu0 0.0
      %10286 = vmatmul.mubr.f32.gmra.mrb[0].mxu0 %v10126
      %v10287 = vpop.f32.mrb[0].mxu0
      %v10288 = vadd.f32 0.0, %v10287
      %v10289 = vpop.f32.mrb[0].mxu0
      %10290 = vmatprep.mubr.f32.mxu0 0.0
      %10291 = vmatmul.mubr.f32.gmra.mrb[0].mxu0 %v10129
      %v10292 = vpop.f32.mrb[0].mxu0
      %v10293 = vadd.f32 0.0, %v10292
      %v10294 = vpop.f32.mrb[0].mxu0
      %10295 = vmatprep.mubr.f32.mxu0 0.0
      %10296 = vmatmul.mubr.f32.gmra.mrb[0].mxu0 %v10132
      %v10297 = vpop.f32.mrb[0].mxu0
      %v10298 = vadd.f32 0.0, %v10297
      %v10299 = vpop.f32.mrb[0].mxu0
      %10300 = vmatprep.mubr.f32.mxu0 0.0
      %10301 = vmatmul.mubr.f32.gmra.mrb[0].mxu0 %v10135
      %v10302 = vpop.f32.mrb[0].mxu0
      %v10303 = vadd.f32 0.0, %v10302
      %v10304 = vpop.f32.mrb[0].mxu0
      %10305 = vmatprep.mubr.f32.mxu0 0.0
      %10306 = vmatmul.mubr.f32.gmra.mrb[0].mxu0 %v10138
      %v10307 = vpop.f32.mrb[0].mxu0
      %v10308 = vadd.f32 0.0, %v10307
      %v10309 = vpop.f32.mrb[0].mxu0
      %10310 = vmatprep.mubr.f32.mxu0 0.0
      %10311 = vmatmul.mubr.f32.gmra.mrb[0].mxu0 %v10141
      %v10312 = vpop.f32.mrb[0].mxu0
      %v10313 = vadd.f32 0.0, %v10312
      %v10314 = vpop.f32.mrb[0].mxu0
      %10315 = vmatprep.mubr.f32.mxu0 0.0
      %10316 = vmatmul.mubr.f32.gmra.mrb[0].mxu0 %v10144
      %v10317 = vpop.f32.mrb[0].mxu0
      %v10318 = vadd.f32 0.0, %v10317
      %v10319 = vpop.f32.mrb[0].mxu0
      %10320 = vmatprep.mubr.f32.mxu0 0.0
      %10321 = vmatmul.mubr.f32.gmra.mrb[0].mxu0 %v10147
      %v10322 = vpop.f32.mrb[0].mxu0
      %v10323 = vadd.f32 0.0, %v10322
      %v10324 = vpop.f32.mrb[0].mxu0
      %10325 = vmatprep.mubr.f32.mxu0 0.0
      %10326 = vmatmul.mubr.f32.gmra.mrb[0].mxu0 %v10150
      %v10327 = vpop.f32.mrb[0].mxu0
      %v10328 = vadd.f32 0.0, %v10327
      %v10329 = vpop.f32.mrb[0].mxu0
      %10330 = vmatprep.mubr.f32.mxu0 0.0
      %10331 = vmatmul.mubr.f32.gmra.mrb[0].mxu0 %v10153
      %v10332 = vpop.f32.mrb[0].mxu0
      %v10333 = vadd.f32 0.0, %v10332
      %v10334 = vpop.f32.mrb[0].mxu0
      %10335 = vmatprep.mubr.f32.mxu0 0.0
      %10336 = vmatmul.mubr.f32.gmra.mrb[0].mxu0 %v10156
      %v10337 = vpop.f32.mrb[0].mxu0
      %v10338 = vadd.f32 0.0, %v10337
      %v10339 = vpop.f32.mrb[0].mxu0
      %10340 = vmatprep.mubr.f32.mxu0 0.0
      %10341 = vmatmul.mubr.f32.gmra.mrb[0].mxu0 %v10159
      %v10342 = vpop.f32.mrb[0].mxu0
      %v10343 = vadd.f32 0.0, %v10342
      %v10344 = vpop.f32.mrb[0].mxu0
      %10345 = vmatprep.mubr.f32.mxu0 0.0
      %10346 = vmatmul.mubr.f32.gmra.mrb[0].mxu0 %v10162
      %v10347 = vpop.f32.mrb[0].mxu0
      %v10348 = vadd.f32 0.0, %v10347
      %v10349 = vpop.f32.mrb[0].mxu0
      %10350 = vmatprep.mubr.f32.mxu0 0.0
      %10351 = vmatmul.mubr.f32.gmra.mrb[0].mxu0 %v10165
      %v10352 = vpop.f32.mrb[0].mxu0
      %v10353 = vadd.f32 0.0, %v10352
      %v10354 = vpop.f32.mrb[0].mxu0
      %10355 = vmatprep.mubr.f32.mxu0 0.0
      %10356 = vmatmul.mubr.f32.gmra.mrb[0].mxu0 %v10168
      %v10357 = vpop.f32.mrb[0].mxu0
      %v10358 = vadd.f32 0.0, %v10357
      %v10359 = vpop.f32.mrb[0].mxu0
      %10360 = vmatprep.mubr.f32.mxu0 0.0
      %10361 = vmatmul.mubr.f32.gmra.mrb[0].mxu0 %v10171
      %v10362 = vpop.f32.mrb[0].mxu0
      %v10363 = vadd.f32 0.0, %v10362
      %v10364 = vpop.f32.mrb[0].mxu0
      %10365 = vmatprep.mubr.f32.mxu0 0.0
      %10366 = vmatmul.mubr.f32.gmra.mrb[0].mxu0 %v10174
      %v10367 = vpop.f32.mrb[0].mxu0
      %v10368 = vadd.f32 0.0, %v10367
      %v10369 = vpop.f32.mrb[0].mxu0
      %10370 = vmatprep.mubr.f32.mxu0 0.0
      %10371 = vmatmul.mubr.f32.gmra.mrb[0].mxu0 %v10177
      %v10372 = vpop.f32.mrb[0].mxu0
      %v10373 = vadd.f32 0.0, %v10372
      %v10374 = vpop.f32.mrb[0].mxu0
      %10375 = vmatprep.mubr.f32.mxu0 0.0
      %10376 = vmatmul.mubr.f32.gmra.mrb[0].mxu0 %v10180
      %v10377 = vpop.f32.mrb[0].mxu0
      %v10378 = vadd.f32 0.0, %v10377
      %v10379 = vpop.f32.mrb[0].mxu0
      %10380 = vmatprep.mubr.f32.mxu0 0.0
      %10381 = vmatmul.mubr.f32.gmra.mrb[0].mxu0 %v10183
      %v10382 = vpop.f32.mrb[0].mxu0
      %v10383 = vadd.f32 0.0, %v10382
      %v10384 = vpop.f32.mrb[0].mxu0
      %10385 = vmatprep.mubr.f32.mxu0 0.0
      %10386 = vmatmul.mubr.f32.gmra.mrb[0].mxu0 %v10186
      %v10387 = vpop.f32.mrb[0].mxu0
      %v10388 = vadd.f32 0.0, %v10387
      %v10389 = vpop.f32.mrb[0].mxu0
      %10390 = vmatprep.mubr.f32.mxu0 0.0
      %10391 = vmatmul.mubr.f32.gmra.mrb[0].mxu0 %v10189
      %v10392 = vpop.f32.mrb[0].mxu0
      %v10393 = vadd.f32 0.0, %v10392
      %v10394 = vpop.f32.mrb[0].mxu0
      %10395 = vdwg.mxu0
      %v10396 = vadd.f32 %v10020, %v10258
      %v10397 = vadd.f32 %v10021, %v10263
      %v10398 = vadd.f32 %v10022, %v10268
      %v10399 = vadd.f32 %v10023, %v10273
      %v10400 = vadd.f32 %v10024, %v10278
      %v10401 = vadd.f32 %v10025, %v10283
      %v10402 = vadd.f32 %v10026, %v10288
      %v10403 = vadd.f32 %v10027, %v10293
      %v10404 = vadd.f32 %v10028, %v10298
      %v10405 = vadd.f32 %v10029, %v10303
      %v10406 = vadd.f32 %v10030, %v10308
      %v10407 = vadd.f32 %v10031, %v10313
      %v10408 = vadd.f32 %v10032, %v10318
      %v10409 = vadd.f32 %v10033, %v10323
      %v10410 = vadd.f32 %v10034, %v10328
      %v10411 = vadd.f32 %v10035, %v10333
      %v10412 = vadd.f32 %v10036, %v10338
      %v10413 = vadd.f32 %v10037, %v10343
      %v10414 = vadd.f32 %v10038, %v10348
      %v10415 = vadd.f32 %v10039, %v10353
      %v10416 = vadd.f32 %v10040, %v10358
      %v10417 = vadd.f32 %v10041, %v10363
      %v10418 = vadd.f32 %v10042, %v10368
      %v10419 = vadd.f32 %v10043, %v10373
      %v10420 = vadd.f32 %v10044, %v10378
      %v10421 = vadd.f32 %v10045, %v10383
      %v10422 = vadd.f32 %v10046, %v10388
      %v10423 = vadd.f32 %v10047, %v10393
      %s10424 = scalar_lea.vmem %s7, 1120
      %v10425 = vld [vmem:[%s10424] sm:$0xff]
      %v10426 = vld [vmem:[%s10424 + $0x8] sm:$0xff]
      %v10427 = vld [vmem:[%s10424 + $0x10] sm:$0xff]
      %v10428 = vld [vmem:[%s10424 + $0x18] sm:$0xff]
      %v10429 = vld [vmem:[%s10424 + $0x20] sm:$0xff]
      %v10430 = vld [vmem:[%s10424 + $0x28] sm:$0xff]
      %v10431 = vld [vmem:[%s10424 + $0x30] sm:$0xff]
      %v10432 = vld [vmem:[%s10424 + $0x38] sm:$0xff]
      %v10433 = vld [vmem:[%s10424 + $0x40] sm:$0xff]
      %v10434 = vld [vmem:[%s10424 + $0x48] sm:$0xff]
      %v10435 = vld [vmem:[%s10424 + $0x50] sm:$0xff]
      %v10436 = vld [vmem:[%s10424 + $0x58] sm:$0xff]
      %v10437 = vld [vmem:[%s10424 + $0x60] sm:$0xff]
      %v10438 = vld [vmem:[%s10424 + $0x68] sm:$0xff]
      %v10439 = vld [vmem:[%s10424 + $0x70] sm:$0xff]
      %v10440 = vld [vmem:[%s10424 + $0x78] sm:$0xff]
      %v10441 = vld [vmem:[%s10424 + $0x80] sm:$0xff]
      %v10442 = vld [vmem:[%s10424 + $0x88] sm:$0xff]
      %v10443 = vld [vmem:[%s10424 + $0x90] sm:$0xff]
      %v10444 = vld [vmem:[%s10424 + $0x98] sm:$0xff]
      %v10445 = vld [vmem:[%s10424 + $0xa0] sm:$0xff]
      %v10446 = vld [vmem:[%s10424 + $0xa8] sm:$0xff]
      %v10447 = vld [vmem:[%s10424 + $0xb0] sm:$0xff]
      %v10448 = vld [vmem:[%s10424 + $0xb8] sm:$0xff]
      %v10449 = vld [vmem:[%s10424 + $0xc0] sm:$0xff]
      %v10450 = vld [vmem:[%s10424 + $0xc8] sm:$0xff]
      %v10451 = vld [vmem:[%s10424 + $0xd0] sm:$0xff]
      %v10452 = vld [vmem:[%s10424 + $0xd8] sm:$0xff]
      %10453 = vrot.lane.b32.xlu0 %v8488, 123
      %v10454 = vpop.permute.xlu0 %10453
      %10455 = vrot.lane.b32.xlu0 %v8493, 123
      %v10456 = vpop.permute.xlu0 %10455
      %10457 = vrot.lane.b32.xlu0 %v8498, 123
      %v10458 = vpop.permute.xlu0 %10457
      %10459 = vrot.lane.b32.xlu0 %v8503, 123
      %v10460 = vpop.permute.xlu0 %10459
      %10461 = vrot.lane.b32.xlu0 %v8508, 123
      %v10462 = vpop.permute.xlu0 %10461
      %10463 = vrot.lane.b32.xlu0 %v8513, 123
      %v10464 = vpop.permute.xlu0 %10463
      %10465 = vrot.lane.b32.xlu0 %v8518, 123
      %v10466 = vpop.permute.xlu0 %10465
      %10467 = vrot.lane.b32.xlu0 %v8523, 123
      %v10468 = vpop.permute.xlu0 %10467
      %10469 = vrot.lane.b32.xlu0 %v8528, 123
      %v10470 = vpop.permute.xlu0 %10469
      %10471 = vrot.lane.b32.xlu0 %v8533, 123
      %v10472 = vpop.permute.xlu0 %10471
      %v10484 = vsel %vm8592, %v10425, 0
      %v10487 = vsel %vm8592, %v10426, 0
      %v10490 = vsel %vm8592, %v10427, 0
      %v10493 = vsel %vm8592, %v10428, 0
      %v10496 = vsel %vm8592, %v10429, 0
      %v10499 = vsel %vm8592, %v10430, 0
      %v10502 = vsel %vm8592, %v10431, 0
      %v10505 = vsel %vm8592, %v10432, 0
      %v10508 = vsel %vm8592, %v10433, 0
      %v10511 = vsel %vm8592, %v10434, 0
      %v10514 = vsel %vm8592, %v10435, 0
      %v10517 = vsel %vm8592, %v10436, 0
      %v10520 = vsel %vm8592, %v10437, 0
      %v10523 = vsel %vm8592, %v10438, 0
      %v10526 = vsel %vm8592, %v10439, 0
      %v10529 = vsel %vm8592, %v10440, 0
      %v10532 = vsel %vm8592, %v10441, 0
      %v10535 = vsel %vm8592, %v10442, 0
      %v10538 = vsel %vm8592, %v10443, 0
      %v10541 = vsel %vm8592, %v10444, 0
      %v10544 = vsel %vm8592, %v10445, 0
      %v10547 = vsel %vm8592, %v10446, 0
      %v10550 = vsel %vm8592, %v10447, 0
      %v10553 = vsel %vm8592, %v10448, 0
      %v10556 = vsel %vm8592, %v10449, 0
      %v10559 = vsel %vm8592, %v10450, 0
      %v10562 = vsel %vm8592, %v10451, 0
      %v10565 = vsel %vm8592, %v10452, 0
      %10567 = vmatprep.subr.mxu0 0.0
      %10568 = vmatpush1.msra.mxu0 %v10454
      %10569 = vmatprep.subr.mxu0 0.0
      %10570 = vmatpush1.msra.mxu0 %v10456
      %10571 = vmatprep.subr.mxu0 0.0
      %10572 = vmatpush1.msra.mxu0 %v10458
      %10573 = vmatprep.subr.mxu0 0.0
      %10574 = vmatpush1.msra.mxu0 %v10460
      %10575 = vmatprep.subr.mxu0 0.0
      %10576 = vmatpush1.msra.mxu0 %v10462
      %10577 = vmatprep.subr.mxu0 0.0
      %10578 = vmatpush1.msra.mxu0 %v10464
      %10579 = vmatprep.subr.mxu0 0.0
      %10580 = vmatpush1.msra.mxu0 %v10466
      %10581 = vmatprep.subr.mxu0 0.0
      %10582 = vmatpush1.msra.mxu0 %v10468
      %10583 = vmatprep.subr.mxu0 0.0
      %10584 = vmatpush1.msra.mxu0 %v10470
      %10585 = vmatprep.subr.mxu0 0.0
      %10586 = vmatpush1.msra.mxu0 %v10472
      %10587 = vmatprep.subr.mxu0 0.0
      %10588 = vmatpush1.msra.mxu0 0.0
      %10589 = vmatprep.subr.mxu0 0.0
      %10590 = vmatpush1.msra.mxu0 0.0
      %10591 = vmatprep.subr.mxu0 0.0
      %10592 = vmatpush1.msra.mxu0 0.0
      %10593 = vmatprep.subr.mxu0 0.0
      %10594 = vmatpush1.msra.mxu0 0.0
      %10595 = vmatprep.subr.mxu0 0.0
      %10596 = vmatpush1.msra.mxu0 0.0
      %10597 = vmatprep.subr.mxu0 0.0
      %10598 = vmatpush1.msra.mxu0 0.0
      %10599 = vmatprep.subr.mxu0 0.0
      %10600 = vmatpush1.msra.mxu0 0.0
      %10601 = vmatprep.subr.mxu0 0.0
      %10602 = vmatpush1.msra.mxu0 0.0
      %10603 = vmatprep.subr.mxu0 0.0
      %10604 = vmatpush1.msra.mxu0 0.0
      %10605 = vmatprep.subr.mxu0 0.0
      %10606 = vmatpush1.msra.mxu0 0.0
      %10607 = vmatprep.subr.mxu0 0.0
      %10608 = vmatpush1.msra.mxu0 0.0
      %10609 = vmatprep.subr.mxu0 0.0
      %10610 = vmatpush1.msra.mxu0 0.0
      %10611 = vmatprep.subr.mxu0 0.0
      %10612 = vmatpush1.msra.mxu0 0.0
      %10613 = vmatprep.subr.mxu0 0.0
      %10614 = vmatpush1.msra.mxu0 0.0
      %10615 = vmatprep.subr.mxu0 0.0
      %10616 = vmatpush1.msra.mxu0 0.0
      %10617 = vmatprep.subr.mxu0 0.0
      %10618 = vmatpush1.msra.mxu0 0.0
      %10619 = vmatprep.subr.mxu0 0.0
      %10620 = vmatpush1.msra.mxu0 0.0
      %10621 = vmatprep.subr.mxu0 0.0
      %10622 = vmatpush1.msra.mxu0 0.0
      %10623 = vmatprep.subr.mxu0 0.0
      %10624 = vmatpush1.msra.mxu0 0.0
      %10625 = vmatprep.subr.mxu0 0.0
      %10626 = vmatpush1.msra.mxu0 0.0
      %10627 = vmatprep.subr.mxu0 0.0
      %10628 = vmatpush1.msra.mxu0 0.0
      %10629 = vmatprep.subr.mxu0 0.0
      %10630 = vmatpush1.msra.mxu0 0.0
      %10631 = vmatprep.mubr.f32.mxu0 0.0
      %10632 = vmatmul.mubr.f32.gmra.mrb[0].mxu0 %v10484
      %v10633 = vpop.f32.mrb[0].mxu0
      %v10634 = vadd.f32 0.0, %v10633
      %v10635 = vpop.f32.mrb[0].mxu0
      %10636 = vmatprep.mubr.f32.mxu0 0.0
      %10637 = vmatmul.mubr.f32.gmra.mrb[0].mxu0 %v10487
      %v10638 = vpop.f32.mrb[0].mxu0
      %v10639 = vadd.f32 0.0, %v10638
      %v10640 = vpop.f32.mrb[0].mxu0
      %10641 = vmatprep.mubr.f32.mxu0 0.0
      %10642 = vmatmul.mubr.f32.gmra.mrb[0].mxu0 %v10490
      %v10643 = vpop.f32.mrb[0].mxu0
      %v10644 = vadd.f32 0.0, %v10643
      %v10645 = vpop.f32.mrb[0].mxu0
      %10646 = vmatprep.mubr.f32.mxu0 0.0
      %10647 = vmatmul.mubr.f32.gmra.mrb[0].mxu0 %v10493
      %v10648 = vpop.f32.mrb[0].mxu0
      %v10649 = vadd.f32 0.0, %v10648
      %v10650 = vpop.f32.mrb[0].mxu0
      %10651 = vmatprep.mubr.f32.mxu0 0.0
      %10652 = vmatmul.mubr.f32.gmra.mrb[0].mxu0 %v10496
      %v10653 = vpop.f32.mrb[0].mxu0
      %v10654 = vadd.f32 0.0, %v10653
      %v10655 = vpop.f32.mrb[0].mxu0
      %10656 = vmatprep.mubr.f32.mxu0 0.0
      %10657 = vmatmul.mubr.f32.gmra.mrb[0].mxu0 %v10499
      %v10658 = vpop.f32.mrb[0].mxu0
      %v10659 = vadd.f32 0.0, %v10658
      %v10660 = vpop.f32.mrb[0].mxu0
      %10661 = vmatprep.mubr.f32.mxu0 0.0
      %10662 = vmatmul.mubr.f32.gmra.mrb[0].mxu0 %v10502
      %v10663 = vpop.f32.mrb[0].mxu0
      %v10664 = vadd.f32 0.0, %v10663
      %v10665 = vpop.f32.mrb[0].mxu0
      %10666 = vmatprep.mubr.f32.mxu0 0.0
      %10667 = vmatmul.mubr.f32.gmra.mrb[0].mxu0 %v10505
      %v10668 = vpop.f32.mrb[0].mxu0
      %v10669 = vadd.f32 0.0, %v10668
      %v10670 = vpop.f32.mrb[0].mxu0
      %10671 = vmatprep.mubr.f32.mxu0 0.0
      %10672 = vmatmul.mubr.f32.gmra.mrb[0].mxu0 %v10508
      %v10673 = vpop.f32.mrb[0].mxu0
      %v10674 = vadd.f32 0.0, %v10673
      %v10675 = vpop.f32.mrb[0].mxu0
      %10676 = vmatprep.mubr.f32.mxu0 0.0
      %10677 = vmatmul.mubr.f32.gmra.mrb[0].mxu0 %v10511
      %v10678 = vpop.f32.mrb[0].mxu0
      %v10679 = vadd.f32 0.0, %v10678
      %v10680 = vpop.f32.mrb[0].mxu0
      %10681 = vmatprep.mubr.f32.mxu0 0.0
      %10682 = vmatmul.mubr.f32.gmra.mrb[0].mxu0 %v10514
      %v10683 = vpop.f32.mrb[0].mxu0
      %v10684 = vadd.f32 0.0, %v10683
      %v10685 = vpop.f32.mrb[0].mxu0
      %10686 = vmatprep.mubr.f32.mxu0 0.0
      %10687 = vmatmul.mubr.f32.gmra.mrb[0].mxu0 %v10517
      %v10688 = vpop.f32.mrb[0].mxu0
      %v10689 = vadd.f32 0.0, %v10688
      %v10690 = vpop.f32.mrb[0].mxu0
      %10691 = vmatprep.mubr.f32.mxu0 0.0
      %10692 = vmatmul.mubr.f32.gmra.mrb[0].mxu0 %v10520
      %v10693 = vpop.f32.mrb[0].mxu0
      %v10694 = vadd.f32 0.0, %v10693
      %v10695 = vpop.f32.mrb[0].mxu0
      %10696 = vmatprep.mubr.f32.mxu0 0.0
      %10697 = vmatmul.mubr.f32.gmra.mrb[0].mxu0 %v10523
      %v10698 = vpop.f32.mrb[0].mxu0
      %v10699 = vadd.f32 0.0, %v10698
      %v10700 = vpop.f32.mrb[0].mxu0
      %10701 = vmatprep.mubr.f32.mxu0 0.0
      %10702 = vmatmul.mubr.f32.gmra.mrb[0].mxu0 %v10526
      %v10703 = vpop.f32.mrb[0].mxu0
      %v10704 = vadd.f32 0.0, %v10703
      %v10705 = vpop.f32.mrb[0].mxu0
      %10706 = vmatprep.mubr.f32.mxu0 0.0
      %10707 = vmatmul.mubr.f32.gmra.mrb[0].mxu0 %v10529
      %v10708 = vpop.f32.mrb[0].mxu0
      %v10709 = vadd.f32 0.0, %v10708
      %v10710 = vpop.f32.mrb[0].mxu0
      %10711 = vmatprep.mubr.f32.mxu0 0.0
      %10712 = vmatmul.mubr.f32.gmra.mrb[0].mxu0 %v10532
      %v10713 = vpop.f32.mrb[0].mxu0
      %v10714 = vadd.f32 0.0, %v10713
      %v10715 = vpop.f32.mrb[0].mxu0
      %10716 = vmatprep.mubr.f32.mxu0 0.0
      %10717 = vmatmul.mubr.f32.gmra.mrb[0].mxu0 %v10535
      %v10718 = vpop.f32.mrb[0].mxu0
      %v10719 = vadd.f32 0.0, %v10718
      %v10720 = vpop.f32.mrb[0].mxu0
      %10721 = vmatprep.mubr.f32.mxu0 0.0
      %10722 = vmatmul.mubr.f32.gmra.mrb[0].mxu0 %v10538
      %v10723 = vpop.f32.mrb[0].mxu0
      %v10724 = vadd.f32 0.0, %v10723
      %v10725 = vpop.f32.mrb[0].mxu0
      %10726 = vmatprep.mubr.f32.mxu0 0.0
      %10727 = vmatmul.mubr.f32.gmra.mrb[0].mxu0 %v10541
      %v10728 = vpop.f32.mrb[0].mxu0
      %v10729 = vadd.f32 0.0, %v10728
      %v10730 = vpop.f32.mrb[0].mxu0
      %10731 = vmatprep.mubr.f32.mxu0 0.0
      %10732 = vmatmul.mubr.f32.gmra.mrb[0].mxu0 %v10544
      %v10733 = vpop.f32.mrb[0].mxu0
      %v10734 = vadd.f32 0.0, %v10733
      %v10735 = vpop.f32.mrb[0].mxu0
      %10736 = vmatprep.mubr.f32.mxu0 0.0
      %10737 = vmatmul.mubr.f32.gmra.mrb[0].mxu0 %v10547
      %v10738 = vpop.f32.mrb[0].mxu0
      %v10739 = vadd.f32 0.0, %v10738
      %v10740 = vpop.f32.mrb[0].mxu0
      %10741 = vmatprep.mubr.f32.mxu0 0.0
      %10742 = vmatmul.mubr.f32.gmra.mrb[0].mxu0 %v10550
      %v10743 = vpop.f32.mrb[0].mxu0
      %v10744 = vadd.f32 0.0, %v10743
      %v10745 = vpop.f32.mrb[0].mxu0
      %10746 = vmatprep.mubr.f32.mxu0 0.0
      %10747 = vmatmul.mubr.f32.gmra.mrb[0].mxu0 %v10553
      %v10748 = vpop.f32.mrb[0].mxu0
      %v10749 = vadd.f32 0.0, %v10748
      %v10750 = vpop.f32.mrb[0].mxu0
      %10751 = vmatprep.mubr.f32.mxu0 0.0
      %10752 = vmatmul.mubr.f32.gmra.mrb[0].mxu0 %v10556
      %v10753 = vpop.f32.mrb[0].mxu0
      %v10754 = vadd.f32 0.0, %v10753
      %v10755 = vpop.f32.mrb[0].mxu0
      %10756 = vmatprep.mubr.f32.mxu0 0.0
      %10757 = vmatmul.mubr.f32.gmra.mrb[0].mxu0 %v10559
      %v10758 = vpop.f32.mrb[0].mxu0
      %v10759 = vadd.f32 0.0, %v10758
      %v10760 = vpop.f32.mrb[0].mxu0
      %10761 = vmatprep.mubr.f32.mxu0 0.0
      %10762 = vmatmul.mubr.f32.gmra.mrb[0].mxu0 %v10562
      %v10763 = vpop.f32.mrb[0].mxu0
      %v10764 = vadd.f32 0.0, %v10763
      %v10765 = vpop.f32.mrb[0].mxu0
      %10766 = vmatprep.mubr.f32.mxu0 0.0
      %10767 = vmatmul.mubr.f32.gmra.mrb[0].mxu0 %v10565
      %v10768 = vpop.f32.mrb[0].mxu0
      %v10769 = vadd.f32 0.0, %v10768
      %v10770 = vpop.f32.mrb[0].mxu0
      %10771 = vdwg.mxu0
      %v10772 = vadd.f32 %v10396, %v10634
      %v10773 = vadd.f32 %v10397, %v10639
      %v10774 = vadd.f32 %v10398, %v10644
      %v10775 = vadd.f32 %v10399, %v10649
      %v10776 = vadd.f32 %v10400, %v10654
      %v10777 = vadd.f32 %v10401, %v10659
      %v10778 = vadd.f32 %v10402, %v10664
      %v10779 = vadd.f32 %v10403, %v10669
      %v10780 = vadd.f32 %v10404, %v10674
      %v10781 = vadd.f32 %v10405, %v10679
      %v10782 = vadd.f32 %v10406, %v10684
      %v10783 = vadd.f32 %v10407, %v10689
      %v10784 = vadd.f32 %v10408, %v10694
      %v10785 = vadd.f32 %v10409, %v10699
      %v10786 = vadd.f32 %v10410, %v10704
      %v10787 = vadd.f32 %v10411, %v10709
      %v10788 = vadd.f32 %v10412, %v10714
      %v10789 = vadd.f32 %v10413, %v10719
      %v10790 = vadd.f32 %v10414, %v10724
      %v10791 = vadd.f32 %v10415, %v10729
      %v10792 = vadd.f32 %v10416, %v10734
      %v10793 = vadd.f32 %v10417, %v10739
      %v10794 = vadd.f32 %v10418, %v10744
      %v10795 = vadd.f32 %v10419, %v10749
      %v10796 = vadd.f32 %v10420, %v10754
      %v10797 = vadd.f32 %v10421, %v10759
      %v10798 = vadd.f32 %v10422, %v10764
      %v10799 = vadd.f32 %v10423, %v10769
      %s10800 = scalar_lea.vmem %s7, 1344
      %v10801 = vld [vmem:[%s10800] sm:$0xff]
      %v10802 = vld [vmem:[%s10800 + $0x8] sm:$0xff]
      %v10803 = vld [vmem:[%s10800 + $0x10] sm:$0xff]
      %v10804 = vld [vmem:[%s10800 + $0x18] sm:$0xff]
      %v10805 = vld [vmem:[%s10800 + $0x20] sm:$0xff]
      %v10806 = vld [vmem:[%s10800 + $0x28] sm:$0xff]
      %v10807 = vld [vmem:[%s10800 + $0x30] sm:$0xff]
      %v10808 = vld [vmem:[%s10800 + $0x38] sm:$0xff]
      %v10809 = vld [vmem:[%s10800 + $0x40] sm:$0xff]
      %v10810 = vld [vmem:[%s10800 + $0x48] sm:$0xff]
      %v10811 = vld [vmem:[%s10800 + $0x50] sm:$0xff]
      %v10812 = vld [vmem:[%s10800 + $0x58] sm:$0xff]
      %v10813 = vld [vmem:[%s10800 + $0x60] sm:$0xff]
      %v10814 = vld [vmem:[%s10800 + $0x68] sm:$0xff]
      %v10815 = vld [vmem:[%s10800 + $0x70] sm:$0xff]
      %v10816 = vld [vmem:[%s10800 + $0x78] sm:$0xff]
      %v10817 = vld [vmem:[%s10800 + $0x80] sm:$0xff]
      %v10818 = vld [vmem:[%s10800 + $0x88] sm:$0xff]
      %v10819 = vld [vmem:[%s10800 + $0x90] sm:$0xff]
      %v10820 = vld [vmem:[%s10800 + $0x98] sm:$0xff]
      %v10821 = vld [vmem:[%s10800 + $0xa0] sm:$0xff]
      %v10822 = vld [vmem:[%s10800 + $0xa8] sm:$0xff]
      %v10823 = vld [vmem:[%s10800 + $0xb0] sm:$0xff]
      %v10824 = vld [vmem:[%s10800 + $0xb8] sm:$0xff]
      %v10825 = vld [vmem:[%s10800 + $0xc0] sm:$0xff]
      %v10826 = vld [vmem:[%s10800 + $0xc8] sm:$0xff]
      %v10827 = vld [vmem:[%s10800 + $0xd0] sm:$0xff]
      %v10828 = vld [vmem:[%s10800 + $0xd8] sm:$0xff]
      %10829 = vrot.lane.b32.xlu0 %v8488, 122
      %v10830 = vpop.permute.xlu0 %10829
      %10831 = vrot.lane.b32.xlu0 %v8493, 122
      %v10832 = vpop.permute.xlu0 %10831
      %10833 = vrot.lane.b32.xlu0 %v8498, 122
      %v10834 = vpop.permute.xlu0 %10833
      %10835 = vrot.lane.b32.xlu0 %v8503, 122
      %v10836 = vpop.permute.xlu0 %10835
      %10837 = vrot.lane.b32.xlu0 %v8508, 122
      %v10838 = vpop.permute.xlu0 %10837
      %10839 = vrot.lane.b32.xlu0 %v8513, 122
      %v10840 = vpop.permute.xlu0 %10839
      %10841 = vrot.lane.b32.xlu0 %v8518, 122
      %v10842 = vpop.permute.xlu0 %10841
      %10843 = vrot.lane.b32.xlu0 %v8523, 122
      %v10844 = vpop.permute.xlu0 %10843
      %10845 = vrot.lane.b32.xlu0 %v8528, 122
      %v10846 = vpop.permute.xlu0 %10845
      %10847 = vrot.lane.b32.xlu0 %v8533, 122
      %v10848 = vpop.permute.xlu0 %10847
      %v10860 = vsel %vm8592, %v10801, 0
      %v10863 = vsel %vm8592, %v10802, 0
      %v10866 = vsel %vm8592, %v10803, 0
      %v10869 = vsel %vm8592, %v10804, 0
      %v10872 = vsel %vm8592, %v10805, 0
      %v10875 = vsel %vm8592, %v10806, 0
      %v10878 = vsel %vm8592, %v10807, 0
      %v10881 = vsel %vm8592, %v10808, 0
      %v10884 = vsel %vm8592, %v10809, 0
      %v10887 = vsel %vm8592, %v10810, 0
      %v10890 = vsel %vm8592, %v10811, 0
      %v10893 = vsel %vm8592, %v10812, 0
      %v10896 = vsel %vm8592, %v10813, 0
      %v10899 = vsel %vm8592, %v10814, 0
      %v10902 = vsel %vm8592, %v10815, 0
      %v10905 = vsel %vm8592, %v10816, 0
      %v10908 = vsel %vm8592, %v10817, 0
      %v10911 = vsel %vm8592, %v10818, 0
      %v10914 = vsel %vm8592, %v10819, 0
      %v10917 = vsel %vm8592, %v10820, 0
      %v10920 = vsel %vm8592, %v10821, 0
      %v10923 = vsel %vm8592, %v10822, 0
      %v10926 = vsel %vm8592, %v10823, 0
      %v10929 = vsel %vm8592, %v10824, 0
      %v10932 = vsel %vm8592, %v10825, 0
      %v10935 = vsel %vm8592, %v10826, 0
      %v10938 = vsel %vm8592, %v10827, 0
      %v10941 = vsel %vm8592, %v10828, 0
      %10943 = vmatprep.subr.mxu0 0.0
      %10944 = vmatpush1.msra.mxu0 %v10830
      %10945 = vmatprep.subr.mxu0 0.0
      %10946 = vmatpush1.msra.mxu0 %v10832
      %10947 = vmatprep.subr.mxu0 0.0
      %10948 = vmatpush1.msra.mxu0 %v10834
      %10949 = vmatprep.subr.mxu0 0.0
      %10950 = vmatpush1.msra.mxu0 %v10836
      %10951 = vmatprep.subr.mxu0 0.0
      %10952 = vmatpush1.msra.mxu0 %v10838
      %10953 = vmatprep.subr.mxu0 0.0
      %10954 = vmatpush1.msra.mxu0 %v10840
      %10955 = vmatprep.subr.mxu0 0.0
      %10956 = vmatpush1.msra.mxu0 %v10842
      %10957 = vmatprep.subr.mxu0 0.0
      %10958 = vmatpush1.msra.mxu0 %v10844
      %10959 = vmatprep.subr.mxu0 0.0
      %10960 = vmatpush1.msra.mxu0 %v10846
      %10961 = vmatprep.subr.mxu0 0.0
      %10962 = vmatpush1.msra.mxu0 %v10848
      %10963 = vmatprep.subr.mxu0 0.0
      %10964 = vmatpush1.msra.mxu0 0.0
      %10965 = vmatprep.subr.mxu0 0.0
      %10966 = vmatpush1.msra.mxu0 0.0
      %10967 = vmatprep.subr.mxu0 0.0
      %10968 = vmatpush1.msra.mxu0 0.0
      %10969 = vmatprep.subr.mxu0 0.0
      %10970 = vmatpush1.msra.mxu0 0.0
      %10971 = vmatprep.subr.mxu0 0.0
      %10972 = vmatpush1.msra.mxu0 0.0
      %10973 = vmatprep.subr.mxu0 0.0
      %10974 = vmatpush1.msra.mxu0 0.0
      %10975 = vmatprep.subr.mxu0 0.0
      %10976 = vmatpush1.msra.mxu0 0.0
      %10977 = vmatprep.subr.mxu0 0.0
      %10978 = vmatpush1.msra.mxu0 0.0
      %10979 = vmatprep.subr.mxu0 0.0
      %10980 = vmatpush1.msra.mxu0 0.0
      %10981 = vmatprep.subr.mxu0 0.0
      %10982 = vmatpush1.msra.mxu0 0.0
      %10983 = vmatprep.subr.mxu0 0.0
      %10984 = vmatpush1.msra.mxu0 0.0
      %10985 = vmatprep.subr.mxu0 0.0
      %10986 = vmatpush1.msra.mxu0 0.0
      %10987 = vmatprep.subr.mxu0 0.0
      %10988 = vmatpush1.msra.mxu0 0.0
      %10989 = vmatprep.subr.mxu0 0.0
      %10990 = vmatpush1.msra.mxu0 0.0
      %10991 = vmatprep.subr.mxu0 0.0
      %10992 = vmatpush1.msra.mxu0 0.0
      %10993 = vmatprep.subr.mxu0 0.0
      %10994 = vmatpush1.msra.mxu0 0.0
      %10995 = vmatprep.subr.mxu0 0.0
      %10996 = vmatpush1.msra.mxu0 0.0
      %10997 = vmatprep.subr.mxu0 0.0
      %10998 = vmatpush1.msra.mxu0 0.0
      %10999 = vmatprep.subr.mxu0 0.0
      %11000 = vmatpush1.msra.mxu0 0.0
      %11001 = vmatprep.subr.mxu0 0.0
      %11002 = vmatpush1.msra.mxu0 0.0
      %11003 = vmatprep.subr.mxu0 0.0
      %11004 = vmatpush1.msra.mxu0 0.0
      %11005 = vmatprep.subr.mxu0 0.0
      %11006 = vmatpush1.msra.mxu0 0.0
      %11007 = vmatprep.mubr.f32.mxu0 0.0
      %11008 = vmatmul.mubr.f32.gmra.mrb[0].mxu0 %v10860
      %v11009 = vpop.f32.mrb[0].mxu0
      %v11010 = vadd.f32 0.0, %v11009
      %v11011 = vpop.f32.mrb[0].mxu0
      %11012 = vmatprep.mubr.f32.mxu0 0.0
      %11013 = vmatmul.mubr.f32.gmra.mrb[0].mxu0 %v10863
      %v11014 = vpop.f32.mrb[0].mxu0
      %v11015 = vadd.f32 0.0, %v11014
      %v11016 = vpop.f32.mrb[0].mxu0
      %11017 = vmatprep.mubr.f32.mxu0 0.0
      %11018 = vmatmul.mubr.f32.gmra.mrb[0].mxu0 %v10866
      %v11019 = vpop.f32.mrb[0].mxu0
      %v11020 = vadd.f32 0.0, %v11019
      %v11021 = vpop.f32.mrb[0].mxu0
      %11022 = vmatprep.mubr.f32.mxu0 0.0
      %11023 = vmatmul.mubr.f32.gmra.mrb[0].mxu0 %v10869
      %v11024 = vpop.f32.mrb[0].mxu0
      %v11025 = vadd.f32 0.0, %v11024
      %v11026 = vpop.f32.mrb[0].mxu0
      %11027 = vmatprep.mubr.f32.mxu0 0.0
      %11028 = vmatmul.mubr.f32.gmra.mrb[0].mxu0 %v10872
      %v11029 = vpop.f32.mrb[0].mxu0
      %v11030 = vadd.f32 0.0, %v11029
      %v11031 = vpop.f32.mrb[0].mxu0
      %11032 = vmatprep.mubr.f32.mxu0 0.0
      %11033 = vmatmul.mubr.f32.gmra.mrb[0].mxu0 %v10875
      %v11034 = vpop.f32.mrb[0].mxu0
      %v11035 = vadd.f32 0.0, %v11034
      %v11036 = vpop.f32.mrb[0].mxu0
      %11037 = vmatprep.mubr.f32.mxu0 0.0
      %11038 = vmatmul.mubr.f32.gmra.mrb[0].mxu0 %v10878
      %v11039 = vpop.f32.mrb[0].mxu0
      %v11040 = vadd.f32 0.0, %v11039
      %v11041 = vpop.f32.mrb[0].mxu0
      %11042 = vmatprep.mubr.f32.mxu0 0.0
      %11043 = vmatmul.mubr.f32.gmra.mrb[0].mxu0 %v10881
      %v11044 = vpop.f32.mrb[0].mxu0
      %v11045 = vadd.f32 0.0, %v11044
      %v11046 = vpop.f32.mrb[0].mxu0
      %11047 = vmatprep.mubr.f32.mxu0 0.0
      %11048 = vmatmul.mubr.f32.gmra.mrb[0].mxu0 %v10884
      %v11049 = vpop.f32.mrb[0].mxu0
      %v11050 = vadd.f32 0.0, %v11049
      %v11051 = vpop.f32.mrb[0].mxu0
      %11052 = vmatprep.mubr.f32.mxu0 0.0
      %11053 = vmatmul.mubr.f32.gmra.mrb[0].mxu0 %v10887
      %v11054 = vpop.f32.mrb[0].mxu0
      %v11055 = vadd.f32 0.0, %v11054
      %v11056 = vpop.f32.mrb[0].mxu0
      %11057 = vmatprep.mubr.f32.mxu0 0.0
      %11058 = vmatmul.mubr.f32.gmra.mrb[0].mxu0 %v10890
      %v11059 = vpop.f32.mrb[0].mxu0
      %v11060 = vadd.f32 0.0, %v11059
      %v11061 = vpop.f32.mrb[0].mxu0
      %11062 = vmatprep.mubr.f32.mxu0 0.0
      %11063 = vmatmul.mubr.f32.gmra.mrb[0].mxu0 %v10893
      %v11064 = vpop.f32.mrb[0].mxu0
      %v11065 = vadd.f32 0.0, %v11064
      %v11066 = vpop.f32.mrb[0].mxu0
      %11067 = vmatprep.mubr.f32.mxu0 0.0
      %11068 = vmatmul.mubr.f32.gmra.mrb[0].mxu0 %v10896
      %v11069 = vpop.f32.mrb[0].mxu0
      %v11070 = vadd.f32 0.0, %v11069
      %v11071 = vpop.f32.mrb[0].mxu0
      %11072 = vmatprep.mubr.f32.mxu0 0.0
      %11073 = vmatmul.mubr.f32.gmra.mrb[0].mxu0 %v10899
      %v11074 = vpop.f32.mrb[0].mxu0
      %v11075 = vadd.f32 0.0, %v11074
      %v11076 = vpop.f32.mrb[0].mxu0
      %11077 = vmatprep.mubr.f32.mxu0 0.0
      %11078 = vmatmul.mubr.f32.gmra.mrb[0].mxu0 %v10902
      %v11079 = vpop.f32.mrb[0].mxu0
      %v11080 = vadd.f32 0.0, %v11079
      %v11081 = vpop.f32.mrb[0].mxu0
      %11082 = vmatprep.mubr.f32.mxu0 0.0
      %11083 = vmatmul.mubr.f32.gmra.mrb[0].mxu0 %v10905
      %v11084 = vpop.f32.mrb[0].mxu0
      %v11085 = vadd.f32 0.0, %v11084
      %v11086 = vpop.f32.mrb[0].mxu0
      %11087 = vmatprep.mubr.f32.mxu0 0.0
      %11088 = vmatmul.mubr.f32.gmra.mrb[0].mxu0 %v10908
      %v11089 = vpop.f32.mrb[0].mxu0
      %v11090 = vadd.f32 0.0, %v11089
      %v11091 = vpop.f32.mrb[0].mxu0
      %11092 = vmatprep.mubr.f32.mxu0 0.0
      %11093 = vmatmul.mubr.f32.gmra.mrb[0].mxu0 %v10911
      %v11094 = vpop.f32.mrb[0].mxu0
      %v11095 = vadd.f32 0.0, %v11094
      %v11096 = vpop.f32.mrb[0].mxu0
      %11097 = vmatprep.mubr.f32.mxu0 0.0
      %11098 = vmatmul.mubr.f32.gmra.mrb[0].mxu0 %v10914
      %v11099 = vpop.f32.mrb[0].mxu0
      %v11100 = vadd.f32 0.0, %v11099
      %v11101 = vpop.f32.mrb[0].mxu0
      %11102 = vmatprep.mubr.f32.mxu0 0.0
      %11103 = vmatmul.mubr.f32.gmra.mrb[0].mxu0 %v10917
      %v11104 = vpop.f32.mrb[0].mxu0
      %v11105 = vadd.f32 0.0, %v11104
      %v11106 = vpop.f32.mrb[0].mxu0
      %11107 = vmatprep.mubr.f32.mxu0 0.0
      %11108 = vmatmul.mubr.f32.gmra.mrb[0].mxu0 %v10920
      %v11109 = vpop.f32.mrb[0].mxu0
      %v11110 = vadd.f32 0.0, %v11109
      %v11111 = vpop.f32.mrb[0].mxu0
      %11112 = vmatprep.mubr.f32.mxu0 0.0
      %11113 = vmatmul.mubr.f32.gmra.mrb[0].mxu0 %v10923
      %v11114 = vpop.f32.mrb[0].mxu0
      %v11115 = vadd.f32 0.0, %v11114
      %v11116 = vpop.f32.mrb[0].mxu0
      %11117 = vmatprep.mubr.f32.mxu0 0.0
      %11118 = vmatmul.mubr.f32.gmra.mrb[0].mxu0 %v10926
      %v11119 = vpop.f32.mrb[0].mxu0
      %v11120 = vadd.f32 0.0, %v11119
      %v11121 = vpop.f32.mrb[0].mxu0
      %11122 = vmatprep.mubr.f32.mxu0 0.0
      %11123 = vmatmul.mubr.f32.gmra.mrb[0].mxu0 %v10929
      %v11124 = vpop.f32.mrb[0].mxu0
      %v11125 = vadd.f32 0.0, %v11124
      %v11126 = vpop.f32.mrb[0].mxu0
      %11127 = vmatprep.mubr.f32.mxu0 0.0
      %11128 = vmatmul.mubr.f32.gmra.mrb[0].mxu0 %v10932
      %v11129 = vpop.f32.mrb[0].mxu0
      %v11130 = vadd.f32 0.0, %v11129
      %v11131 = vpop.f32.mrb[0].mxu0
      %11132 = vmatprep.mubr.f32.mxu0 0.0
      %11133 = vmatmul.mubr.f32.gmra.mrb[0].mxu0 %v10935
      %v11134 = vpop.f32.mrb[0].mxu0
      %v11135 = vadd.f32 0.0, %v11134
      %v11136 = vpop.f32.mrb[0].mxu0
      %11137 = vmatprep.mubr.f32.mxu0 0.0
      %11138 = vmatmul.mubr.f32.gmra.mrb[0].mxu0 %v10938
      %v11139 = vpop.f32.mrb[0].mxu0
      %v11140 = vadd.f32 0.0, %v11139
      %v11141 = vpop.f32.mrb[0].mxu0
      %11142 = vmatprep.mubr.f32.mxu0 0.0
      %11143 = vmatmul.mubr.f32.gmra.mrb[0].mxu0 %v10941
      %v11144 = vpop.f32.mrb[0].mxu0
      %v11145 = vadd.f32 0.0, %v11144
      %v11146 = vpop.f32.mrb[0].mxu0
      %11147 = vdwg.mxu0
      %v11148 = vadd.f32 %v10772, %v11010
      %v11149 = vadd.f32 %v10773, %v11015
      %v11150 = vadd.f32 %v10774, %v11020
      %v11151 = vadd.f32 %v10775, %v11025
      %v11152 = vadd.f32 %v10776, %v11030
      %v11153 = vadd.f32 %v10777, %v11035
      %v11154 = vadd.f32 %v10778, %v11040
      %v11155 = vadd.f32 %v10779, %v11045
      %v11156 = vadd.f32 %v10780, %v11050
      %v11157 = vadd.f32 %v10781, %v11055
      %v11158 = vadd.f32 %v10782, %v11060
      %v11159 = vadd.f32 %v10783, %v11065
      %v11160 = vadd.f32 %v10784, %v11070
      %v11161 = vadd.f32 %v10785, %v11075
      %v11162 = vadd.f32 %v10786, %v11080
      %v11163 = vadd.f32 %v10787, %v11085
      %v11164 = vadd.f32 %v10788, %v11090
      %v11165 = vadd.f32 %v10789, %v11095
      %v11166 = vadd.f32 %v10790, %v11100
      %v11167 = vadd.f32 %v10791, %v11105
      %v11168 = vadd.f32 %v10792, %v11110
      %v11169 = vadd.f32 %v10793, %v11115
      %v11170 = vadd.f32 %v10794, %v11120
      %v11171 = vadd.f32 %v10795, %v11125
      %v11172 = vadd.f32 %v10796, %v11130
      %v11173 = vadd.f32 %v10797, %v11135
      %v11174 = vadd.f32 %v10798, %v11140
      %v11175 = vadd.f32 %v10799, %v11145
      %v11176 = vmax.f32 %v11148, 0.0
      %v11177 = vmax.f32 %v11149, 0.0
      %v11178 = vmax.f32 %v11150, 0.0
      %v11179 = vmax.f32 %v11151, 0.0
      %v11180 = vmax.f32 %v11152, 0.0
      %v11181 = vmax.f32 %v11153, 0.0
      %v11182 = vmax.f32 %v11154, 0.0
      %v11183 = vmax.f32 %v11155, 0.0
      %v11184 = vmax.f32 %v11156, 0.0
      %v11185 = vmax.f32 %v11157, 0.0
      %v11186 = vmax.f32 %v11158, 0.0
      %v11187 = vmax.f32 %v11159, 0.0
      %v11188 = vmax.f32 %v11160, 0.0
      %v11189 = vmax.f32 %v11161, 0.0
      %v11190 = vmax.f32 %v11162, 0.0
      %v11191 = vmax.f32 %v11163, 0.0
      %v11192 = vmax.f32 %v11164, 0.0
      %v11193 = vmax.f32 %v11165, 0.0
      %v11194 = vmax.f32 %v11166, 0.0
      %v11195 = vmax.f32 %v11167, 0.0
      %v11196 = vmax.f32 %v11168, 0.0
      %v11197 = vmax.f32 %v11169, 0.0
      %v11198 = vmax.f32 %v11170, 0.0
      %v11199 = vmax.f32 %v11171, 0.0
      %v11200 = vmax.f32 %v11172, 0.0
      %v11201 = vmax.f32 %v11173, 0.0
      %v11202 = vmax.f32 %v11174, 0.0
      %v11203 = vmax.f32 %v11175, 0.0
      %v11204 = vld [vmem:[%s9] sm:$0xff]
      %v11205 = vld [vmem:[%s9 + $0x8] sm:$0xff]
      %v11206 = vld [vmem:[%s9 + $0x10] sm:$0x3]
      %v11207 = vld [vmem:[%s9 + $0x18] sm:$0x3]
      %v11208 = vld [vmem:[%s10] sm:$0xff]
      %v11209 = vld [vmem:[%s10 + $0x8] sm:$0x3]
      %vm11210 = vcmask 785408
      %v11212 = vsel %vm11210, %v11205, 0
      %v11215 = vsel %vm11210, %v11207, 0
      %11217 = vmatprep.subr.mxu0 0.0
      %11218 = vmatpush1.msra.mxu0 %v11176
      %11219 = vmatprep.subr.mxu0 0.0
      %11220 = vmatpush1.msra.mxu0 %v11177
      %11221 = vmatprep.subr.mxu0 0.0
      %11222 = vmatpush1.msra.mxu0 %v11178
      %11223 = vmatprep.subr.mxu0 0.0
      %11224 = vmatpush1.msra.mxu0 %v11179
      %11225 = vmatprep.subr.mxu0 0.0
      %11226 = vmatpush1.msra.mxu0 %v11180
      %11227 = vmatprep.subr.mxu0 0.0
      %11228 = vmatpush1.msra.mxu0 %v11181
      %11229 = vmatprep.subr.mxu0 0.0
      %11230 = vmatpush1.msra.mxu0 %v11182
      %11231 = vmatprep.subr.mxu0 0.0
      %11232 = vmatpush1.msra.mxu0 %v11183
      %11233 = vmatprep.subr.mxu0 0.0
      %11234 = vmatpush1.msra.mxu0 %v11184
      %11235 = vmatprep.subr.mxu0 0.0
      %11236 = vmatpush1.msra.mxu0 %v11185
      %11237 = vmatprep.subr.mxu0 0.0
      %11238 = vmatpush1.msra.mxu0 %v11186
      %11239 = vmatprep.subr.mxu0 0.0
      %11240 = vmatpush1.msra.mxu0 %v11187
      %11241 = vmatprep.subr.mxu0 0.0
      %11242 = vmatpush1.msra.mxu0 %v11188
      %11243 = vmatprep.subr.mxu0 0.0
      %11244 = vmatpush1.msra.mxu0 %v11189
      %11245 = vmatprep.subr.mxu0 0.0
      %11246 = vmatpush1.msra.mxu0 %v11190
      %11247 = vmatprep.subr.mxu0 0.0
      %11248 = vmatpush1.msra.mxu0 %v11191
      %11249 = vmatprep.subr.mxu0 0.0
      %11250 = vmatpush1.msra.mxu0 %v11192
      %11251 = vmatprep.subr.mxu0 0.0
      %11252 = vmatpush1.msra.mxu0 %v11193
      %11253 = vmatprep.subr.mxu0 0.0
      %11254 = vmatpush1.msra.mxu0 %v11194
      %11255 = vmatprep.subr.mxu0 0.0
      %11256 = vmatpush1.msra.mxu0 %v11195
      %11257 = vmatprep.subr.mxu0 0.0
      %11258 = vmatpush1.msra.mxu0 %v11196
      %11259 = vmatprep.subr.mxu0 0.0
      %11260 = vmatpush1.msra.mxu0 %v11197
      %11261 = vmatprep.subr.mxu0 0.0
      %11262 = vmatpush1.msra.mxu0 %v11198
      %11263 = vmatprep.subr.mxu0 0.0
      %11264 = vmatpush1.msra.mxu0 %v11199
      %11265 = vmatprep.subr.mxu0 0.0
      %11266 = vmatpush1.msra.mxu0 %v11200
      %11267 = vmatprep.subr.mxu0 0.0
      %11268 = vmatpush1.msra.mxu0 %v11201
      %11269 = vmatprep.subr.mxu0 0.0
      %11270 = vmatpush1.msra.mxu0 %v11202
      %11271 = vmatprep.subr.mxu0 0.0
      %11272 = vmatpush1.msra.mxu0 %v11203
      %11273 = vmatprep.subr.mxu0 0.0
      %11274 = vmatpush1.msra.mxu0 0.0
      %11275 = vmatprep.subr.mxu0 0.0
      %11276 = vmatpush1.msra.mxu0 0.0
      %11277 = vmatprep.subr.mxu0 0.0
      %11278 = vmatpush1.msra.mxu0 0.0
      %11279 = vmatprep.subr.mxu0 0.0
      %11280 = vmatpush1.msra.mxu0 0.0
      %11281 = vmatprep.mubr.f32.mxu0 %v11212
      %11282 = vmatmul.mubr.f32.gmra.mrb[0].mxu0 %v11204
      %v11283 = vpop.f32.mrb[0].mxu0
      %v11284 = vadd.f32 %v11208, %v11283
      %v11285 = vpop.f32.mrb[0].mxu0
      %11286 = vmatprep.mubr.f32.mxu0 %v11215
      %11287 = vmatmul.mubr.f32.gmra.mrb[0].mxu0 %v11206
      %v11288 = vpop.f32.mrb[0].mxu0
      %v11289 = vadd.f32 %v11209, %v11288
      %v11290 = vpop.f32.mrb[0].mxu0
      %11291 = vdwg.mxu0
      %vm11292 = vcmask 7168
      %v11293 = vsel %vm11292, %v11284, -inf
      %vm11294 = vcmask 1024
      %v11295 = vsel %vm11294, %v11289, -inf
      %v11296 = vmax.f32 %v11293, %v11295
      %v11297 = vrot.slane %v11296, 4
      %v11298 = vmax.f32 %v11296, %v11297
      %v11299 = vrot.slane %v11298, 2
      %v11300 = vmax.f32 %v11298, %v11299
      %v11301 = vrot.slane %v11300, 1
      %v11302 = vmax.f32 %v11300, %v11301
      %v11303 = vsub.f32 %v11284, %v11302
      %v11304 = vsub.f32 %v11289, %v11302
      %v11305 = vmul.f32 %v11303, 1.442695
      %v11306 = vpow.pop %v11305
      %v11307 = vmul.f32 %v11304, 1.442695
      %v11308 = vpow.pop %v11307
      %v11309 = vsel %vm11292, %v11306, 0.0
      %v11310 = vsel %vm11294, %v11308, 0.0
      %v11311 = vadd.f32 %v11309, %v11310
      %v11312 = vrot.slane %v11311, 4
      %v11313 = vadd.f32 %v11311, %v11312
      %v11314 = vrot.slane %v11313, 2
      %v11315 = vadd.f32 %v11313, %v11314
      %v11316 = vrot.slane %v11315, 1
      %v11317 = vadd.f32 %v11315, %v11316
      %v11318 = vrcp.pop %v11317
      %v11319 = vmul.f32 %v11306, %v11318
      %v11320 = vmul.f32 %v11308, %v11318
      %11321 = vst.msk [vmem:[%s386] sm:$0xff] %vm11292, %v11319
      %11322 = vst.msk [vmem:[%s386 + $0x8] sm:$0x3] %vm11294, %v11320
      %p11323 = scmp.lt.s32.totalorder %s22, 1
      %s11324 = scalar_select %p11323, %s22, 1
      %s11325 = smul.addr %s11324, 2
      %s11326 = smul.addr %s11325, 8
      %s11327 = scalar_lea.vmem %s11, %s11326
      // Predicated region
      $region65: #{classifier9_forward.1} parent=63 // pred_check
        %p11328 = pneg %p276
      $region66: #{classifier9_forward.1} parent=63 // pred_check_branch
        %11330 = sbr.rel (%p11328) target = $region68
      $region67: #{classifier9_forward.1} parent=63 // pred_region
        _
      $region68: #{classifier9_forward.1} parent=63 // pred_fallthru
        _
    $region64: #{classifier9_forward.1} parent=5 // pred_fallthru
      _
    %p11331 = scmp.le.s32.totalorder 2, %s17
    // Predicated region
    $region69: #{classifier9_forward.1} parent=5 // pred_check
      %p11332 = pneg %p11331
    $region70: #{classifier9_forward.1} parent=5 // pred_check_branch
      %11334 = sbr.rel (%p11332) target = $region72
    $region71: #{classifier9_forward.1} parent=5 // pred_region
      %s11335 = ssub.s32 %s17, 2
      // Predicated region
      $region73: #{classifier9_forward.1} parent=71 // pred_check
        %p11336 = pneg %p282
      $region74: #{classifier9_forward.1} parent=71 // pred_check_branch
        %11338 = sbr.rel (%p11336) target = $region76
      $region75: #{classifier9_forward.1} parent=71 // pred_region
        %p11339 = scmp.lt.s32.totalorder %s23, 1
        %s11340 = scalar_select %p11339, %s23, 1
        %s11341 = smul.addr %s11340, 2
        %s11342 = smul.addr %s11341, 8
        %s11343 = scalar_lea.vmem %s11, %s11342
      $region76: #{classifier9_forward.1} parent=71 // pred_fallthru
        _
    $region72: #{classifier9_forward.1} parent=5 // pred_fallthru
      _
  $region6: #{classifier9_forward.1} parent=0 // loop_footer
    %s21 = sadd.s32 1, %s17
  $region7: #{classifier9_forward.1} parent=0 // loop_footer_branch
    %16 = sbr.rel target = $region3
  $region8: #{classifier9_forward.1} parent=0 // loop_exit
    _

</llo_original>
